<compile_context>
chip_gen: v7x
topology: tpu7x:2x2x1
jax: 0.10.0
libtpu: 0.0.40
codegen_flags: <defaults>
</compile_context>

<pallas_src>
import jax
import jax.numpy as jnp
from jax.experimental import pallas as pl
from jax.experimental.pallas import tpu as pltpu

LANES = 128  # padded channel / feature width (lane-dense stores everywhere)


def _full_spec(shape):
    n = len(shape)
    return pl.BlockSpec(shape, lambda: (0,) * n)


# ---------------------------------------------------------------------------
# Kernel 1: conv1 (as matmul) + bias + ReLU + 2x2 max-pool.
#   p_ref : (4, Mp, 128) bf16  -- im2col patches, leading dim = pool corner,
#                                 K padded 75 -> 128 (lane-aligned contraction)
#   w_ref : (128, 128)   bf16  -- conv1 weights, K and OC zero-padded
#   b_ref : (1, 128)     f32   -- bias, zero-padded
#   o_ref : (Mp, 128)    bf16  -- pooled, ReLU'd output, rows = (b, py, px)
# Running max over corners keeps at most 2 f32 accumulators live.
# ---------------------------------------------------------------------------
def _conv1_relu_pool_kernel(p_ref, w_ref, b_ref, o_ref):
    w = w_ref[...]
    m = jnp.dot(p_ref[0], w, preferred_element_type=jnp.float32)
    m = jnp.maximum(m, jnp.dot(p_ref[1], w, preferred_element_type=jnp.float32))
    m = jnp.maximum(m, jnp.dot(p_ref[2], w, preferred_element_type=jnp.float32))
    m = jnp.maximum(m, jnp.dot(p_ref[3], w, preferred_element_type=jnp.float32))
    # pool(relu(conv)) == relu(pool(conv)); bias after max == bias before max.
    o_ref[...] = jnp.maximum(m + b_ref[...], 0.0).astype(o_ref.dtype)


def conv1_relu_pool(patches, w_pad, b_pad):
    mp = patches.shape[1]
    return pl.pallas_call(
        _conv1_relu_pool_kernel,
        out_shape=jax.ShapeDtypeStruct((mp, LANES), jnp.bfloat16),
        in_specs=[_full_spec(patches.shape),
                  _full_spec(w_pad.shape),
                  _full_spec(b_pad.shape)],
        out_specs=_full_spec((mp, LANES)),
    )(patches, w_pad, b_pad)


# ---------------------------------------------------------------------------
# Kernel 2: conv2 + bias + ReLU + 2x2 max-pool + full MLP head, fully fused.
#   p_ref   : (4, 25*B, 3200) bf16 -- conv2 patches per pool corner; rows are
#                                     ordered (spatial position s, batch b);
#                                     lanes = 25 (dy,dx) chunks of 128 channels
#   w2_ref  : (3200, 128) bf16     -- conv2 weights, per-(dy,dx) (128,128) blocks
#   b2_ref  : (1, 128)    f32
#   w1f_ref : (3200, 128) bf16     -- fc1 as 25 per-position (128,128) blocks
#   b1f_ref : (1, 128)    f32
#   w2f_ref : (128, 128)  bf16     -- fc2 (120->84), zero-padded
#   b2f_ref : (1, 128)    f32
#   w3f_ref : (128, 128)  bf16     -- fc3 (84->10), zero-padded
#   b3f_ref : (1, 128)    f32
#   o_ref   : (B, 128)    f32      -- logits, lane-dense; [:, :10] sliced outside
#   y2_ref  : (25*B, 128) bf16 VMEM scratch -- pooled conv2 activations
# ---------------------------------------------------------------------------
def _conv2_pool_mlp_kernel(p_ref, w2_ref, b2_ref, w1f_ref, b1f_ref,
                           w2f_ref, b2f_ref, w3f_ref, b3f_ref, o_ref, y2_ref):
    w2 = w2_ref[...]
    m = jnp.dot(p_ref[0], w2, preferred_element_type=jnp.float32)
    m = jnp.maximum(m, jnp.dot(p_ref[1], w2, preferred_element_type=jnp.float32))
    m = jnp.maximum(m, jnp.dot(p_ref[2], w2, preferred_element_type=jnp.float32))
    m = jnp.maximum(m, jnp.dot(p_ref[3], w2, preferred_element_type=jnp.float32))
    y2_ref[...] = jnp.maximum(m + b2_ref[...], 0.0).astype(y2_ref.dtype)

    nb = o_ref.shape[0]  # batch size (static)
    # fc1 as a sum over the 25 spatial positions: (nb,128) @ (128,128) blocks.
    h = jnp.zeros((nb, LANES), jnp.float32)
    for s in range(25):  # static unroll; all weight-block slices are 128-aligned
        h = h + jnp.dot(y2_ref[pl.ds(s * nb, nb), :],
                        w1f_ref[pl.ds(s * LANES, LANES), :],
                        preferred_element_type=jnp.float32)
    h = jnp.maximum(h + b1f_ref[...], 0.0).astype(jnp.bfloat16)
    h = jnp.maximum(jnp.dot(h, w2f_ref[...], preferred_element_type=jnp.float32)
                    + b2f_ref[...], 0.0).astype(jnp.bfloat16)
    o = jnp.dot(h, w3f_ref[...], preferred_element_type=jnp.float32) + b3f_ref[...]
    o_ref[...] = o.astype(o_ref.dtype)


def conv2_pool_mlp_head(patches, w2, b2, w1f, b1f, w2f, b2f, w3f, b3f):
    nb = patches.shape[1] // 25
    args = (patches, w2, b2, w1f, b1f, w2f, b2f, w3f, b3f)
    return pl.pallas_call(
        _conv2_pool_mlp_kernel,
        out_shape=jax.ShapeDtypeStruct((nb, LANES), jnp.float32),
        in_specs=[_full_spec(a.shape) for a in args],
        out_specs=_full_spec((nb, LANES)),
        scratch_shapes=[pltpu.VMEM((25 * nb, LANES), jnp.bfloat16)],
    )(*args)


# ---------------------------------------------------------------------------
# XLA glue: im2col patch building, grouped by 2x2 pool-window corner.
# Thin layout plumbing fused by XLA; all chunks are lane-aligned where it matters.
# ---------------------------------------------------------------------------
def _conv1_pool_patches(x_nhwc):
    """(B,32,32,3) -> (4, B*14*14, 128); lanes = (dy,dx,c) padded 75 -> 128."""
    B, H, W, _ = x_nhwc.shape
    oh, ow = H - 4, W - 4                                   # 28, 28
    cols = [x_nhwc[:, dy:dy + oh, dx:dx + ow, :]
            for dy in range(5) for dx in range(5)]
    patches = jnp.concatenate(cols, axis=-1)                # (B, 28, 28, 75)
    k = patches.shape[-1]
    patches = jnp.pad(patches, ((0, 0), (0, 0), (0, 0), (0, LANES - k)))
    corners = jnp.stack([patches[:, cy::2, cx::2, :]
                         for cy in range(2) for cx in range(2)], axis=0)
    return corners.reshape(4, B * (oh // 2) * (ow // 2), LANES)


def _conv2_pool_patches(y1):
    """(B,14,14,128) padded-channel map -> (4, 25*B, 3200).

    Rows are ordered (spatial position s=(py,px), batch b) so the fused kernel
    can take aligned per-position blocks for the fc1 accumulation; lanes are 25
    (dy,dx) chunks of the full 128-lane channel dim (no [..., :6] lane slice).
    """
    B = y1.shape[0]
    chunks = [y1[:, dy:dy + 10, dx:dx + 10, :]
              for dy in range(5) for dx in range(5)]
    p = jnp.concatenate(chunks, axis=-1)                    # (B, 10, 10, 3200)
    corners = jnp.stack([p[:, cy::2, cx::2, :]
                         for cy in range(2) for cx in range(2)], axis=0)
    corners = jnp.transpose(corners, (0, 2, 3, 1, 4))       # (4, 5, 5, B, 3200)
    return corners.reshape(4, 25 * B, 25 * LANES)


# ---------------------------------------------------------------------------
# Forward pass (mirrors Net.forward).  `p` is the output of prepare_params.
# ---------------------------------------------------------------------------
def lenet_forward(x_nchw, p):
    B = x_nchw.shape[0]
    x = jnp.transpose(x_nchw, (0, 2, 3, 1)).astype(jnp.bfloat16)   # NCHW -> NHWC

    pat1 = _conv1_pool_patches(x)                                  # (4, B*196, 128)
    y1 = conv1_relu_pool(pat1, p["conv1_w"], p["conv1_b"])         # (B*196, 128) bf16
    y1 = y1.reshape(B, 14, 14, LANES)                              # channels stay 128-padded

    pat2 = _conv2_pool_patches(y1)                                 # (4, 25*B, 3200)
    logits = conv2_pool_mlp_head(pat2, p["conv2_w"], p["conv2_b"],
                                 p["fc1_w"], p["fc1_b"],
                                 p["fc2_w"], p["fc2_b"],
                                 p["fc3_w"], p["fc3_b"])           # (B, 128) f32
    return logits[:, :10]                                          # slice outside the kernel


# ---------------------------------------------------------------------------
# Parameter preparation: PyTorch layouts -> kernel layouts (done once, not jitted).
# All padding is with zeros, so numerics are unchanged.
# ---------------------------------------------------------------------------
def prepare_params(tp):
    # conv1: rows = (dy,dx,c), K = 75 padded to 128; cols = out-channel padded to 128
    w1 = jnp.transpose(tp["conv1_w"], (2, 3, 1, 0)).reshape(75, 6)
    w1 = jnp.pad(w1, ((0, LANES - 75), (0, LANES - 6))).astype(jnp.bfloat16)
    b1 = jnp.pad(tp["conv1_b"], (0, LANES - 6)).reshape(1, LANES).astype(jnp.float32)

    # conv2: 25 per-(dy,dx) blocks of (128,128); rows = input channel (padded to 128)
    w2 = jnp.transpose(tp["conv2_w"], (2, 3, 1, 0))                # (5,5,6,16)
    w2 = jnp.pad(w2, ((0, 0), (0, 0), (0, LANES - 6), (0, LANES - 16)))
    w2 = w2.reshape(25 * LANES, LANES).astype(jnp.bfloat16)
    b2 = jnp.pad(tp["conv2_b"], (0, LANES - 16)).reshape(1, LANES).astype(jnp.float32)

    # fc1: 25 per-position (128,128) blocks.  PyTorch flatten index = c*25 + h*5 + w,
    # so block s=(h,w) has W1_s[c, j] = fc1_w[j, c*25 + s].
    f1 = tp["fc1_w"].reshape(120, 16, 5, 5)
    f1 = jnp.transpose(f1, (2, 3, 1, 0))                           # (5,5,16,120)
    f1 = jnp.pad(f1, ((0, 0), (0, 0), (0, LANES - 16), (0, LANES - 120)))
    f1 = f1.reshape(25 * LANES, LANES).astype(jnp.bfloat16)
    b1f = jnp.pad(tp["fc1_b"], (0, LANES - 120)).reshape(1, LANES).astype(jnp.float32)

    # fc2 / fc3: stored (in, out), zero-padded to (128, 128)
    f2 = jnp.pad(tp["fc2_w"].T, ((0, LANES - 120), (0, LANES - 84))).astype(jnp.bfloat16)
    b2f = jnp.pad(tp["fc2_b"], (0, LANES - 84)).reshape(1, LANES).astype(jnp.float32)
    f3 = jnp.pad(tp["fc3_w"].T, ((0, LANES - 84), (0, LANES - 10))).astype(jnp.bfloat16)
    b3f = jnp.pad(tp["fc3_b"], (0, LANES - 10)).reshape(1, LANES).astype(jnp.float32)

    return {
        "conv1_w": w1, "conv1_b": b1,
        "conv2_w": w2, "conv2_b": b2,
        "fc1_w": f1, "fc1_b": b1f,
        "fc2_w": f2, "fc2_b": b2f,
        "fc3_w": f3, "fc3_b": b3f,
    }


def init_params(key):
    """Deterministic PyTorch-default-style uniform init (PyTorch layouts)."""
    ks = jax.random.split(key, 10)

    def u(k, shape, fan_in):
        bound = 1.0 / (fan_in ** 0.5)
        return jax.random.uniform(k, shape, jnp.float32, -bound, bound)

    return {
        "conv1_w": u(ks[0], (6, 3, 5, 5), 3 * 25),  "conv1_b": u(ks[1], (6,), 3 * 25),
        "conv2_w": u(ks[2], (16, 6, 5, 5), 6 * 25), "conv2_b": u(ks[3], (16,), 6 * 25),
        "fc1_w": u(ks[4], (120, 400), 400),         "fc1_b": u(ks[5], (120,), 400),
        "fc2_w": u(ks[6], (84, 120), 120),          "fc2_b": u(ks[7], (84,), 120),
        "fc3_w": u(ks[8], (10, 84), 84),            "fc3_b": u(ks[9], (10,), 84),
    }


if __name__ == "__main__":
    key = jax.random.PRNGKey(0)
    pkey, xkey = jax.random.split(key)
    params = prepare_params(init_params(pkey))        # one-time layout prep
    # Forward implies 32x32 spatial input (16*5*5 flatten); small batch=2.
    x = jax.random.normal(xkey, (2, 3, 32, 32), jnp.float32)
    out = jax.jit(lenet_forward)(x, params)
    out = jax.block_until_ready(out)
    assert out.shape == (2, 10)
    print("KERNEL_OK")
</pallas_src>

<mosaic_0001>
module attributes {stable_mosaic.version = 11 : i64} {
  func.func @_conv1_relu_pool_kernel(%arg0: memref<4x392x128xbf16, #tpu.memory_space<vmem>>, %arg1: memref<128x128xbf16, #tpu.memory_space<vmem>>, %arg2: memref<1x128xf32, #tpu.memory_space<vmem>>, %arg3: memref<392x128xbf16, #tpu.memory_space<vmem>>) attributes {dimension_semantics = [], scalar_prefetch = 0 : i64, scratch_operands = 0 : i64, tpu.core_type = #tpu.core_type<tc>} {
    %c0 = arith.constant 0 : index
    %c0_0 = arith.constant 0 : index
    %0 = vector.load %arg1[%c0, %c0_0] : memref<128x128xbf16, #tpu.memory_space<vmem>>, vector<128x128xbf16>
    %c0_1 = arith.constant 0 : index
    %c0_2 = arith.constant 0 : index
    %c0_3 = arith.constant 0 : index
    %1 = vector.load %arg0[%c0_1, %c0_2, %c0_3] : memref<4x392x128xbf16, #tpu.memory_space<vmem>>, vector<1x392x128xbf16>
    %2 = vector.shape_cast %1 : vector<1x392x128xbf16> to vector<392x128xbf16>
    %cst = arith.constant dense<0.000000e+00> : vector<392x128xf32>
    %3 = tpu.matmul %2, %0, %cst {dimension_numbers = #tpu.dot_dimension_numbers<[1], [0], [0], [1], [0, 0, 1, 1], [], []>} : vector<392x128xbf16>, vector<128x128xbf16>, vector<392x128xf32> -> vector<392x128xf32>
    %c1 = arith.constant 1 : index
    %c0_4 = arith.constant 0 : index
    %c0_5 = arith.constant 0 : index
    %4 = vector.load %arg0[%c1, %c0_4, %c0_5] : memref<4x392x128xbf16, #tpu.memory_space<vmem>>, vector<1x392x128xbf16>
    %5 = vector.shape_cast %4 : vector<1x392x128xbf16> to vector<392x128xbf16>
    %cst_6 = arith.constant dense<0.000000e+00> : vector<392x128xf32>
    %6 = tpu.matmul %5, %0, %cst_6 {dimension_numbers = #tpu.dot_dimension_numbers<[1], [0], [0], [1], [0, 0, 1, 1], [], []>} : vector<392x128xbf16>, vector<128x128xbf16>, vector<392x128xf32> -> vector<392x128xf32>
    %7 = arith.maximumf %3, %6 : vector<392x128xf32>
    %c2 = arith.constant 2 : index
    %c0_7 = arith.constant 0 : index
    %c0_8 = arith.constant 0 : index
    %8 = vector.load %arg0[%c2, %c0_7, %c0_8] : memref<4x392x128xbf16, #tpu.memory_space<vmem>>, vector<1x392x128xbf16>
    %9 = vector.shape_cast %8 : vector<1x392x128xbf16> to vector<392x128xbf16>
    %cst_9 = arith.constant dense<0.000000e+00> : vector<392x128xf32>
    %10 = tpu.matmul %9, %0, %cst_9 {dimension_numbers = #tpu.dot_dimension_numbers<[1], [0], [0], [1], [0, 0, 1, 1], [], []>} : vector<392x128xbf16>, vector<128x128xbf16>, vector<392x128xf32> -> vector<392x128xf32>
    %11 = arith.maximumf %7, %10 : vector<392x128xf32>
    %c3 = arith.constant 3 : index
    %c0_10 = arith.constant 0 : index
    %c0_11 = arith.constant 0 : index
    %12 = vector.load %arg0[%c3, %c0_10, %c0_11] : memref<4x392x128xbf16, #tpu.memory_space<vmem>>, vector<1x392x128xbf16>
    %13 = vector.shape_cast %12 : vector<1x392x128xbf16> to vector<392x128xbf16>
    %cst_12 = arith.constant dense<0.000000e+00> : vector<392x128xf32>
    %14 = tpu.matmul %13, %0, %cst_12 {dimension_numbers = #tpu.dot_dimension_numbers<[1], [0], [0], [1], [0, 0, 1, 1], [], []>} : vector<392x128xbf16>, vector<128x128xbf16>, vector<392x128xf32> -> vector<392x128xf32>
    %15 = arith.maximumf %11, %14 : vector<392x128xf32>
    %c0_13 = arith.constant 0 : index
    %c0_14 = arith.constant 0 : index
    %16 = vector.load %arg2[%c0_13, %c0_14] : memref<1x128xf32, #tpu.memory_space<vmem>>, vector<1x128xf32>
    %17 = vector.broadcast %16 : vector<1x128xf32> to vector<392x128xf32>
    %18 = arith.addf %15, %17 : vector<392x128xf32>
    %cst_15 = arith.constant 0.000000e+00 : f32
    %19 = vector.broadcast %cst_15 : f32 to vector<392x128xf32>
    %20 = arith.maximumf %18, %19 : vector<392x128xf32>
    %21 = arith.truncf %20 : vector<392x128xf32> to vector<392x128xbf16>
    %c0_16 = arith.constant 0 : index
    %c0_17 = arith.constant 0 : index
    %22 = vector.load %arg3[%c0_16, %c0_17] : memref<392x128xbf16, #tpu.memory_space<vmem>>, vector<392x128xbf16>
    tpu.vector_store %arg3[%c0_16, %c0_17], %21 {strides = array<i32>} : memref<392x128xbf16, #tpu.memory_space<vmem>>, vector<392x128xbf16>,
    return
  }
}

module attributes {stable_mosaic.version = 11 : i64} {
  func.func @_conv2_pool_mlp_kernel(%arg0: memref<4x50x3200xbf16, #tpu.memory_space<vmem>>, %arg1: memref<3200x128xbf16, #tpu.memory_space<vmem>>, %arg2: memref<1x128xf32, #tpu.memory_space<vmem>>, %arg3: memref<3200x128xbf16, #tpu.memory_space<vmem>>, %arg4: memref<1x128xf32, #tpu.memory_space<vmem>>, %arg5: memref<128x128xbf16, #tpu.memory_space<vmem>>, %arg6: memref<1x128xf32, #tpu.memory_space<vmem>>, %arg7: memref<128x128xbf16, #tpu.memory_space<vmem>>, %arg8: memref<1x128xf32, #tpu.memory_space<vmem>>, %arg9: memref<2x128xf32, #tpu.memory_space<vmem>>, %arg10: memref<50x128xbf16, #tpu.memory_space<vmem>>) attributes {dimension_semantics = [], scalar_prefetch = 0 : i64, scratch_operands = 1 : i64, tpu.core_type = #tpu.core_type<tc>} {
    %c0 = arith.constant 0 : index
    %c0_0 = arith.constant 0 : index
    %0 = vector.load %arg1[%c0, %c0_0] : memref<3200x128xbf16, #tpu.memory_space<vmem>>, vector<3200x128xbf16>
    %c0_1 = arith.constant 0 : index
    %c0_2 = arith.constant 0 : index
    %c0_3 = arith.constant 0 : index
    %1 = vector.load %arg0[%c0_1, %c0_2, %c0_3] : memref<4x50x3200xbf16, #tpu.memory_space<vmem>>, vector<1x50x3200xbf16>
    %2 = vector.shape_cast %1 : vector<1x50x3200xbf16> to vector<50x3200xbf16>
    %cst = arith.constant dense<0.000000e+00> : vector<50x128xf32>
    %3 = tpu.matmul %2, %0, %cst {dimension_numbers = #tpu.dot_dimension_numbers<[1], [0], [0], [1], [0, 0, 1, 1], [], []>} : vector<50x3200xbf16>, vector<3200x128xbf16>, vector<50x128xf32> -> vector<50x128xf32>
    %c1 = arith.constant 1 : index
    %c0_4 = arith.constant 0 : index
    %c0_5 = arith.constant 0 : index
    %4 = vector.load %arg0[%c1, %c0_4, %c0_5] : memref<4x50x3200xbf16, #tpu.memory_space<vmem>>, vector<1x50x3200xbf16>
    %5 = vector.shape_cast %4 : vector<1x50x3200xbf16> to vector<50x3200xbf16>
    %cst_6 = arith.constant dense<0.000000e+00> : vector<50x128xf32>
    %6 = tpu.matmul %5, %0, %cst_6 {dimension_numbers = #tpu.dot_dimension_numbers<[1], [0], [0], [1], [0, 0, 1, 1], [], []>} : vector<50x3200xbf16>, vector<3200x128xbf16>, vector<50x128xf32> -> vector<50x128xf32>
    %7 = arith.maximumf %3, %6 : vector<50x128xf32>
    %c2 = arith.constant 2 : index
    %c0_7 = arith.constant 0 : index
    %c0_8 = arith.constant 0 : index
    %8 = vector.load %arg0[%c2, %c0_7, %c0_8] : memref<4x50x3200xbf16, #tpu.memory_space<vmem>>, vector<1x50x3200xbf16>
    %9 = vector.shape_cast %8 : vector<1x50x3200xbf16> to vector<50x3200xbf16>
    %cst_9 = arith.constant dense<0.000000e+00> : vector<50x128xf32>
    %10 = tpu.matmul %9, %0, %cst_9 {dimension_numbers = #tpu.dot_dimension_numbers<[1], [0], [0], [1], [0, 0, 1, 1], [], []>} : vector<50x3200xbf16>, vector<3200x128xbf16>, vector<50x128xf32> -> vector<50x128xf32>
    %11 = arith.maximumf %7, %10 : vector<50x128xf32>
    %c3 = arith.constant 3 : index
    %c0_10 = arith.constant 0 : index
    %c0_11 = arith.constant 0 : index
    %12 = vector.load %arg0[%c3, %c0_10, %c0_11] : memref<4x50x3200xbf16, #tpu.memory_space<vmem>>, vector<1x50x3200xbf16>
    %13 = vector.shape_cast %12 : vector<1x50x3200xbf16> to vector<50x3200xbf16>
    %cst_12 = arith.constant dense<0.000000e+00> : vector<50x128xf32>
    %14 = tpu.matmul %13, %0, %cst_12 {dimension_numbers = #tpu.dot_dimension_numbers<[1], [0], [0], [1], [0, 0, 1, 1], [], []>} : vector<50x3200xbf16>, vector<3200x128xbf16>, vector<50x128xf32> -> vector<50x128xf32>
    %15 = arith.maximumf %11, %14 : vector<50x128xf32>
    %c0_13 = arith.constant 0 : index
    %c0_14 = arith.constant 0 : index
    %16 = vector.load %arg2[%c0_13, %c0_14] : memref<1x128xf32, #tpu.memory_space<vmem>>, vector<1x128xf32>
    %17 = vector.broadcast %16 : vector<1x128xf32> to vector<50x128xf32>
    %18 = arith.addf %15, %17 : vector<50x128xf32>
    %cst_15 = arith.constant 0.000000e+00 : f32
    %19 = vector.broadcast %cst_15 : f32 to vector<50x128xf32>
    %20 = arith.maximumf %18, %19 : vector<50x128xf32>
    %21 = arith.truncf %20 : vector<50x128xf32> to vector<50x128xbf16>
    %c0_16 = arith.constant 0 : index
    %c0_17 = arith.constant 0 : index
    %22 = vector.load %arg10[%c0_16, %c0_17] : memref<50x128xbf16, #tpu.memory_space<vmem>>, vector<50x128xbf16>
    tpu.vector_store %arg10[%c0_16, %c0_17], %21 {strides = array<i32>} : memref<50x128xbf16, #tpu.memory_space<vmem>>, vector<50x128xbf16>,
    %cst_18 = arith.constant 0.000000e+00 : f32
    %23 = vector.broadcast %cst_18 : f32 to vector<2x128xf32>
    %c0_19 = arith.constant 0 : index
    %c0_20 = arith.constant 0 : index
    %24 = vector.load %arg10[%c0_19, %c0_20] : memref<50x128xbf16, #tpu.memory_space<vmem>>, vector<2x128xbf16>
    %c0_21 = arith.constant 0 : index
    %c0_22 = arith.constant 0 : index
    %25 = vector.load %arg3[%c0_21, %c0_22] : memref<3200x128xbf16, #tpu.memory_space<vmem>>, vector<128x128xbf16>
    %cst_23 = arith.constant dense<0.000000e+00> : vector<2x128xf32>
    %26 = tpu.matmul %24, %25, %cst_23 {dimension_numbers = #tpu.dot_dimension_numbers<[1], [0], [0], [1], [0, 0, 1, 1], [], []>} : vector<2x128xbf16>, vector<128x128xbf16>, vector<2x128xf32> -> vector<2x128xf32>
    %27 = arith.addf %23, %26 : vector<2x128xf32>
    %c2_24 = arith.constant 2 : index
    %c0_25 = arith.constant 0 : index
    %28 = vector.load %arg10[%c2_24, %c0_25] : memref<50x128xbf16, #tpu.memory_space<vmem>>, vector<2x128xbf16>
    %c128 = arith.constant 128 : index
    %c0_26 = arith.constant 0 : index
    %29 = vector.load %arg3[%c128, %c0_26] : memref<3200x128xbf16, #tpu.memory_space<vmem>>, vector<128x128xbf16>
    %cst_27 = arith.constant dense<0.000000e+00> : vector<2x128xf32>
    %30 = tpu.matmul %28, %29, %cst_27 {dimension_numbers = #tpu.dot_dimension_numbers<[1], [0], [0], [1], [0, 0, 1, 1], [], []>} : vector<2x128xbf16>, vector<128x128xbf16>, vector<2x128xf32> -> vector<2x128xf32>
    %31 = arith.addf %27, %30 : vector<2x128xf32>
    %c4 = arith.constant 4 : index
    %c0_28 = arith.constant 0 : index
    %32 = vector.load %arg10[%c4, %c0_28] : memref<50x128xbf16, #tpu.memory_space<vmem>>, vector<2x128xbf16>
    %c256 = arith.constant 256 : index
    %c0_29 = arith.constant 0 : index
    %33 = vector.load %arg3[%c256, %c0_29] : memref<3200x128xbf16, #tpu.memory_space<vmem>>, vector<128x128xbf16>
    %cst_30 = arith.constant dense<0.000000e+00> : vector<2x128xf32>
    %34 = tpu.matmul %32, %33, %cst_30 {dimension_numbers = #tpu.dot_dimension_numbers<[1], [0], [0], [1], [0, 0, 1, 1], [], []>} : vector<2x128xbf16>, vector<128x128xbf16>, vector<2x128xf32> -> vector<2x128xf32>
    %35 = arith.addf %31, %34 : vector<2x128xf32>
    %c6 = arith.constant 6 : index
    %c0_31 = arith.constant 0 : index
    %36 = vector.load %arg10[%c6, %c0_31] : memref<50x128xbf16, #tpu.memory_space<vmem>>, vector<2x128xbf16>
    %c384 = arith.constant 384 : index
    %c0_32 = arith.constant 0 : index
    %37 = vector.load %arg3[%c384, %c0_32] : memref<3200x128xbf16, #tpu.memory_space<vmem>>, vector<128x128xbf16>
    %cst_33 = arith.constant dense<0.000000e+00> : vector<2x128xf32>
    %38 = tpu.matmul %36, %37, %cst_33 {dimension_numbers = #tpu.dot_dimension_numbers<[1], [0], [0], [1], [0, 0, 1, 1], [], []>} : vector<2x128xbf16>, vector<128x128xbf16>, vector<2x128xf32> -> vector<2x128xf32>
    %39 = arith.addf %35, %38 : vector<2x128xf32>
    %c8 = arith.constant 8 : index
    %c0_34 = arith.constant 0 : index
    %40 = vector.load %arg10[%c8, %c0_34] : memref<50x128xbf16, #tpu.memory_space<vmem>>, vector<2x128xbf16>
    %c512 = arith.constant 512 : index
    %c0_35 = arith.constant 0 : index
    %41 = vector.load %arg3[%c512, %c0_35] : memref<3200x128xbf16, #tpu.memory_space<vmem>>, vector<128x128xbf16>
    %cst_36 = arith.constant dense<0.000000e+00> : vector<2x128xf32>
    %42 = tpu.matmul %40, %41, %cst_36 {dimension_numbers = #tpu.dot_dimension_numbers<[1], [0], [0], [1], [0, 0, 1, 1], [], []>} : vector<2x128xbf16>, vector<128x128xbf16>, vector<2x128xf32> -> vector<2x128xf32>
    %43 = arith.addf %39, %42 : vector<2x128xf32>
    %c10 = arith.constant 10 : index
    %c0_37 = arith.constant 0 : index
    %44 = vector.load %arg10[%c10, %c0_37] : memref<50x128xbf16, #tpu.memory_space<vmem>>, vector<2x128xbf16>
    %c640 = arith.constant 640 : index
    %c0_38 = arith.constant 0 : index
    %45 = vector.load %arg3[%c640, %c0_38] : memref<3200x128xbf16, #tpu.memory_space<vmem>>, vector<128x128xbf16>
    %cst_39 = arith.constant dense<0.000000e+00> : vector<2x128xf32>
    %46 = tpu.matmul %44, %45, %cst_39 {dimension_numbers = #tpu.dot_dimension_numbers<[1], [0], [0], [1], [0, 0, 1, 1], [], []>} : vector<2x128xbf16>, vector<128x128xbf16>, vector<2x128xf32> -> vector<2x128xf32>
    %47 = arith.addf %43, %46 : vector<2x128xf32>
    %c12 = arith.constant 12 : index
    %c0_40 = arith.constant 0 : index
    %48 = vector.load %arg10[%c12, %c0_40] : memref<50x128xbf16, #tpu.memory_space<vmem>>, vector<2x128xbf16>
    %c768 = arith.constant 768 : index
    %c0_41 = arith.constant 0 : index
    %49 = vector.load %arg3[%c768, %c0_41] : memref<3200x128xbf16, #tpu.memory_space<vmem>>, vector<128x128xbf16>
    %cst_42 = arith.constant dense<0.000000e+00> : vector<2x128xf32>
    %50 = tpu.matmul %48, %49, %cst_42 {dimension_numbers = #tpu.dot_dimension_numbers<[1], [0], [0], [1], [0, 0, 1, 1], [], []>} : vector<2x128xbf16>, vector<128x128xbf16>, vector<2x128xf32> -> vector<2x128xf32>
    %51 = arith.addf %47, %50 : vector<2x128xf32>
    %c14 = arith.constant 14 : index
    %c0_43 = arith.constant 0 : index
    %52 = vector.load %arg10[%c14, %c0_43] : memref<50x128xbf16, #tpu.memory_space<vmem>>, vector<2x128xbf16>
    %c896 = arith.constant 896 : index
    %c0_44 = arith.constant 0 : index
    %53 = vector.load %arg3[%c896, %c0_44] : memref<3200x128xbf16, #tpu.memory_space<vmem>>, vector<128x128xbf16>
    %cst_45 = arith.constant dense<0.000000e+00> : vector<2x128xf32>
    %54 = tpu.matmul %52, %53, %cst_45 {dimension_numbers = #tpu.dot_dimension_numbers<[1], [0], [0], [1], [0, 0, 1, 1], [], []>} : vector<2x128xbf16>, vector<128x128xbf16>, vector<2x128xf32> -> vector<2x128xf32>
    %55 = arith.addf %51, %54 : vector<2x128xf32>
    %c16 = arith.constant 16 : index
    %c0_46 = arith.constant 0 : index
    %56 = vector.load %arg10[%c16, %c0_46] : memref<50x128xbf16, #tpu.memory_space<vmem>>, vector<2x128xbf16>
    %c1024 = arith.constant 1024 : index
    %c0_47 = arith.constant 0 : index
    %57 = vector.load %arg3[%c1024, %c0_47] : memref<3200x128xbf16, #tpu.memory_space<vmem>>, vector<128x128xbf16>
    %cst_48 = arith.constant dense<0.000000e+00> : vector<2x128xf32>
    %58 = tpu.matmul %56, %57, %cst_48 {dimension_numbers = #tpu.dot_dimension_numbers<[1], [0], [0], [1], [0, 0, 1, 1], [], []>} : vector<2x128xbf16>, vector<128x128xbf16>, vector<2x128xf32> -> vector<2x128xf32>
    %59 = arith.addf %55, %58 : vector<2x128xf32>
    %c18 = arith.constant 18 : index
    %c0_49 = arith.constant 0 : index
    %60 = vector.load %arg10[%c18, %c0_49] : memref<50x128xbf16, #tpu.memory_space<vmem>>, vector<2x128xbf16>
    %c1152 = arith.constant 1152 : index
    %c0_50 = arith.constant 0 : index
    %61 = vector.load %arg3[%c1152, %c0_50] : memref<3200x128xbf16, #tpu.memory_space<vmem>>, vector<128x128xbf16>
    %cst_51 = arith.constant dense<0.000000e+00> : vector<2x128xf32>
    %62 = tpu.matmul %60, %61, %cst_51 {dimension_numbers = #tpu.dot_dimension_numbers<[1], [0], [0], [1], [0, 0, 1, 1], [], []>} : vector<2x128xbf16>, vector<128x128xbf16>, vector<2x128xf32> -> vector<2x128xf32>
    %63 = arith.addf %59, %62 : vector<2x128xf32>
    %c20 = arith.constant 20 : index
    %c0_52 = arith.constant 0 : index
    %64 = vector.load %arg10[%c20, %c0_52] : memref<50x128xbf16, #tpu.memory_space<vmem>>, vector<2x128xbf16>
    %c1280 = arith.constant 1280 : index
    %c0_53 = arith.constant 0 : index
    %65 = vector.load %arg3[%c1280, %c0_53] : memref<3200x128xbf16, #tpu.memory_space<vmem>>, vector<128x128xbf16>
    %cst_54 = arith.constant dense<0.000000e+00> : vector<2x128xf32>
    %66 = tpu.matmul %64, %65, %cst_54 {dimension_numbers = #tpu.dot_dimension_numbers<[1], [0], [0], [1], [0, 0, 1, 1], [], []>} : vector<2x128xbf16>, vector<128x128xbf16>, vector<2x128xf32> -> vector<2x128xf32>
    %67 = arith.addf %63, %66 : vector<2x128xf32>
    %c22 = arith.constant 22 : index
    %c0_55 = arith.constant 0 : index
    %68 = vector.load %arg10[%c22, %c0_55] : memref<50x128xbf16, #tpu.memory_space<vmem>>, vector<2x128xbf16>
    %c1408 = arith.constant 1408 : index
    %c0_56 = arith.constant 0 : index
    %69 = vector.load %arg3[%c1408, %c0_56] : memref<3200x128xbf16, #tpu.memory_space<vmem>>, vector<128x128xbf16>
    %cst_57 = arith.constant dense<0.000000e+00> : vector<2x128xf32>
    %70 = tpu.matmul %68, %69, %cst_57 {dimension_numbers = #tpu.dot_dimension_numbers<[1], [0], [0], [1], [0, 0, 1, 1], [], []>} : vector<2x128xbf16>, vector<128x128xbf16>, vector<2x128xf32> -> vector<2x128xf32>
    %71 = arith.addf %67, %70 : vector<2x128xf32>
    %c24 = arith.constant 24 : index
    %c0_58 = arith.constant 0 : index
    %72 = vector.load %arg10[%c24, %c0_58] : memref<50x128xbf16, #tpu.memory_space<vmem>>, vector<2x128xbf16>
    %c1536 = arith.constant 1536 : index
    %c0_59 = arith.constant 0 : index
    %73 = vector.load %arg3[%c1536, %c0_59] : memref<3200x128xbf16, #tpu.memory_space<vmem>>, vector<128x128xbf16>
    %cst_60 = arith.constant dense<0.000000e+00> : vector<2x128xf32>
    %74 = tpu.matmul %72, %73, %cst_60 {dimension_numbers = #tpu.dot_dimension_numbers<[1], [0], [0], [1], [0, 0, 1, 1], [], []>} : vector<2x128xbf16>, vector<128x128xbf16>, vector<2x128xf32> -> vector<2x128xf32>
    %75 = arith.addf %71, %74 : vector<2x128xf32>
    %c26 = arith.constant 26 : index
    %c0_61 = arith.constant 0 : index
    %76 = vector.load %arg10[%c26, %c0_61] : memref<50x128xbf16, #tpu.memory_space<vmem>>, vector<2x128xbf16>
    %c1664 = arith.constant 1664 : index
    %c0_62 = arith.constant 0 : index
    %77 = vector.load %arg3[%c1664, %c0_62] : memref<3200x128xbf16, #tpu.memory_space<vmem>>, vector<128x128xbf16>
    %cst_63 = arith.constant dense<0.000000e+00> : vector<2x128xf32>
    %78 = tpu.matmul %76, %77, %cst_63 {dimension_numbers = #tpu.dot_dimension_numbers<[1], [0], [0], [1], [0, 0, 1, 1], [], []>} : vector<2x128xbf16>, vector<128x128xbf16>, vector<2x128xf32> -> vector<2x128xf32>
    %79 = arith.addf %75, %78 : vector<2x128xf32>
    %c28 = arith.constant 28 : index
    %c0_64 = arith.constant 0 : index
    %80 = vector.load %arg10[%c28, %c0_64] : memref<50x128xbf16, #tpu.memory_space<vmem>>, vector<2x128xbf16>
    %c1792 = arith.constant 1792 : index
    %c0_65 = arith.constant 0 : index
    %81 = vector.load %arg3[%c1792, %c0_65] : memref<3200x128xbf16, #tpu.memory_space<vmem>>, vector<128x128xbf16>
    %cst_66 = arith.constant dense<0.000000e+00> : vector<2x128xf32>
    %82 = tpu.matmul %80, %81, %cst_66 {dimension_numbers = #tpu.dot_dimension_numbers<[1], [0], [0], [1], [0, 0, 1, 1], [], []>} : vector<2x128xbf16>, vector<128x128xbf16>, vector<2x128xf32> -> vector<2x128xf32>
    %83 = arith.addf %79, %82 : vector<2x128xf32>
    %c30 = arith.constant 30 : index
    %c0_67 = arith.constant 0 : index
    %84 = vector.load %arg10[%c30, %c0_67] : memref<50x128xbf16, #tpu.memory_space<vmem>>, vector<2x128xbf16>
    %c1920 = arith.constant 1920 : index
    %c0_68 = arith.constant 0 : index
    %85 = vector.load %arg3[%c1920, %c0_68] : memref<3200x128xbf16, #tpu.memory_space<vmem>>, vector<128x128xbf16>
    %cst_69 = arith.constant dense<0.000000e+00> : vector<2x128xf32>
    %86 = tpu.matmul %84, %85, %cst_69 {dimension_numbers = #tpu.dot_dimension_numbers<[1], [0], [0], [1], [0, 0, 1, 1], [], []>} : vector<2x128xbf16>, vector<128x128xbf16>, vector<2x128xf32> -> vector<2x128xf32>
    %87 = arith.addf %83, %86 : vector<2x128xf32>
    %c32 = arith.constant 32 : index
    %c0_70 = arith.constant 0 : index
    %88 = vector.load %arg10[%c32, %c0_70] : memref<50x128xbf16, #tpu.memory_space<vmem>>, vector<2x128xbf16>
    %c2048 = arith.constant 2048 : index
    %c0_71 = arith.constant 0 : index
    %89 = vector.load %arg3[%c2048, %c0_71] : memref<3200x128xbf16, #tpu.memory_space<vmem>>, vector<128x128xbf16>
    %cst_72 = arith.constant dense<0.000000e+00> : vector<2x128xf32>
    %90 = tpu.matmul %88, %89, %cst_72 {dimension_numbers = #tpu.dot_dimension_numbers<[1], [0], [0], [1], [0, 0, 1, 1], [], []>} : vector<2x128xbf16>, vector<128x128xbf16>, vector<2x128xf32> -> vector<2x128xf32>
    %91 = arith.addf %87, %90 : vector<2x128xf32>
    %c34 = arith.constant 34 : index
    %c0_73 = arith.constant 0 : index
    %92 = vector.load %arg10[%c34, %c0_73] : memref<50x128xbf16, #tpu.memory_space<vmem>>, vector<2x128xbf16>
    %c2176 = arith.constant 2176 : index
    %c0_74 = arith.constant 0 : index
    %93 = vector.load %arg3[%c2176, %c0_74] : memref<3200x128xbf16, #tpu.memory_space<vmem>>, vector<128x128xbf16>
    %cst_75 = arith.constant dense<0.000000e+00> : vector<2x128xf32>
    %94 = tpu.matmul %92, %93, %cst_75 {dimension_numbers = #tpu.dot_dimension_numbers<[1], [0], [0], [1], [0, 0, 1, 1], [], []>} : vector<2x128xbf16>, vector<128x128xbf16>, vector<2x128xf32> -> vector<2x128xf32>
    %95 = arith.addf %91, %94 : vector<2x128xf32>
    %c36 = arith.constant 36 : index
    %c0_76 = arith.constant 0 : index
    %96 = vector.load %arg10[%c36, %c0_76] : memref<50x128xbf16, #tpu.memory_space<vmem>>, vector<2x128xbf16>
    %c2304 = arith.constant 2304 : index
    %c0_77 = arith.constant 0 : index
    %97 = vector.load %arg3[%c2304, %c0_77] : memref<3200x128xbf16, #tpu.memory_space<vmem>>, vector<128x128xbf16>
    %cst_78 = arith.constant dense<0.000000e+00> : vector<2x128xf32>
    %98 = tpu.matmul %96, %97, %cst_78 {dimension_numbers = #tpu.dot_dimension_numbers<[1], [0], [0], [1], [0, 0, 1, 1], [], []>} : vector<2x128xbf16>, vector<128x128xbf16>, vector<2x128xf32> -> vector<2x128xf32>
    %99 = arith.addf %95, %98 : vector<2x128xf32>
    %c38 = arith.constant 38 : index
    %c0_79 = arith.constant 0 : index
    %100 = vector.load %arg10[%c38, %c0_79] : memref<50x128xbf16, #tpu.memory_space<vmem>>, vector<2x128xbf16>
    %c2432 = arith.constant 2432 : index
    %c0_80 = arith.constant 0 : index
    %101 = vector.load %arg3[%c2432, %c0_80] : memref<3200x128xbf16, #tpu.memory_space<vmem>>, vector<128x128xbf16>
    %cst_81 = arith.constant dense<0.000000e+00> : vector<2x128xf32>
    %102 = tpu.matmul %100, %101, %cst_81 {dimension_numbers = #tpu.dot_dimension_numbers<[1], [0], [0], [1], [0, 0, 1, 1], [], []>} : vector<2x128xbf16>, vector<128x128xbf16>, vector<2x128xf32> -> vector<2x128xf32>
    %103 = arith.addf %99, %102 : vector<2x128xf32>
    %c40 = arith.constant 40 : index
    %c0_82 = arith.constant 0 : index
    %104 = vector.load %arg10[%c40, %c0_82] : memref<50x128xbf16, #tpu.memory_space<vmem>>, vector<2x128xbf16>
    %c2560 = arith.constant 2560 : index
    %c0_83 = arith.constant 0 : index
    %105 = vector.load %arg3[%c2560, %c0_83] : memref<3200x128xbf16, #tpu.memory_space<vmem>>, vector<128x128xbf16>
    %cst_84 = arith.constant dense<0.000000e+00> : vector<2x128xf32>
    %106 = tpu.matmul %104, %105, %cst_84 {dimension_numbers = #tpu.dot_dimension_numbers<[1], [0], [0], [1], [0, 0, 1, 1], [], []>} : vector<2x128xbf16>, vector<128x128xbf16>, vector<2x128xf32> -> vector<2x128xf32>
    %107 = arith.addf %103, %106 : vector<2x128xf32>
    %c42 = arith.constant 42 : index
    %c0_85 = arith.constant 0 : index
    %108 = vector.load %arg10[%c42, %c0_85] : memref<50x128xbf16, #tpu.memory_space<vmem>>, vector<2x128xbf16>
    %c2688 = arith.constant 2688 : index
    %c0_86 = arith.constant 0 : index
    %109 = vector.load %arg3[%c2688, %c0_86] : memref<3200x128xbf16, #tpu.memory_space<vmem>>, vector<128x128xbf16>
    %cst_87 = arith.constant dense<0.000000e+00> : vector<2x128xf32>
    %110 = tpu.matmul %108, %109, %cst_87 {dimension_numbers = #tpu.dot_dimension_numbers<[1], [0], [0], [1], [0, 0, 1, 1], [], []>} : vector<2x128xbf16>, vector<128x128xbf16>, vector<2x128xf32> -> vector<2x128xf32>
    %111 = arith.addf %107, %110 : vector<2x128xf32>
    %c44 = arith.constant 44 : index
    %c0_88 = arith.constant 0 : index
    %112 = vector.load %arg10[%c44, %c0_88] : memref<50x128xbf16, #tpu.memory_space<vmem>>, vector<2x128xbf16>
    %c2816 = arith.constant 2816 : index
    %c0_89 = arith.constant 0 : index
    %113 = vector.load %arg3[%c2816, %c0_89] : memref<3200x128xbf16, #tpu.memory_space<vmem>>, vector<128x128xbf16>
    %cst_90 = arith.constant dense<0.000000e+00> : vector<2x128xf32>
    %114 = tpu.matmul %112, %113, %cst_90 {dimension_numbers = #tpu.dot_dimension_numbers<[1], [0], [0], [1], [0, 0, 1, 1], [], []>} : vector<2x128xbf16>, vector<128x128xbf16>, vector<2x128xf32> -> vector<2x128xf32>
    %115 = arith.addf %111, %114 : vector<2x128xf32>
    %c46 = arith.constant 46 : index
    %c0_91 = arith.constant 0 : index
    %116 = vector.load %arg10[%c46, %c0_91] : memref<50x128xbf16, #tpu.memory_space<vmem>>, vector<2x128xbf16>
    %c2944 = arith.constant 2944 : index
    %c0_92 = arith.constant 0 : index
    %117 = vector.load %arg3[%c2944, %c0_92] : memref<3200x128xbf16, #tpu.memory_space<vmem>>, vector<128x128xbf16>
    %cst_93 = arith.constant dense<0.000000e+00> : vector<2x128xf32>
    %118 = tpu.matmul %116, %117, %cst_93 {dimension_numbers = #tpu.dot_dimension_numbers<[1], [0], [0], [1], [0, 0, 1, 1], [], []>} : vector<2x128xbf16>, vector<128x128xbf16>, vector<2x128xf32> -> vector<2x128xf32>
    %119 = arith.addf %115, %118 : vector<2x128xf32>
    %c48 = arith.constant 48 : index
    %c0_94 = arith.constant 0 : index
    %120 = vector.load %arg10[%c48, %c0_94] : memref<50x128xbf16, #tpu.memory_space<vmem>>, vector<2x128xbf16>
    %c3072 = arith.constant 3072 : index
    %c0_95 = arith.constant 0 : index
    %121 = vector.load %arg3[%c3072, %c0_95] : memref<3200x128xbf16, #tpu.memory_space<vmem>>, vector<128x128xbf16>
    %cst_96 = arith.constant dense<0.000000e+00> : vector<2x128xf32>
    %122 = tpu.matmul %120, %121, %cst_96 {dimension_numbers = #tpu.dot_dimension_numbers<[1], [0], [0], [1], [0, 0, 1, 1], [], []>} : vector<2x128xbf16>, vector<128x128xbf16>, vector<2x128xf32> -> vector<2x128xf32>
    %123 = arith.addf %119, %122 : vector<2x128xf32>
    %c0_97 = arith.constant 0 : index
    %c0_98 = arith.constant 0 : index
    %124 = vector.load %arg4[%c0_97, %c0_98] : memref<1x128xf32, #tpu.memory_space<vmem>>, vector<1x128xf32>
    %125 = vector.broadcast %124 : vector<1x128xf32> to vector<2x128xf32>
    %126 = arith.addf %123, %125 : vector<2x128xf32>
    %cst_99 = arith.constant 0.000000e+00 : f32
    %127 = vector.broadcast %cst_99 : f32 to vector<2x128xf32>
    %128 = arith.maximumf %126, %127 : vector<2x128xf32>
    %129 = arith.truncf %128 : vector<2x128xf32> to vector<2x128xbf16>
    %c0_100 = arith.constant 0 : index
    %c0_101 = arith.constant 0 : index
    %130 = vector.load %arg5[%c0_100, %c0_101] : memref<128x128xbf16, #tpu.memory_space<vmem>>, vector<128x128xbf16>
    %cst_102 = arith.constant dense<0.000000e+00> : vector<2x128xf32>
    %131 = tpu.matmul %129, %130, %cst_102 {dimension_numbers = #tpu.dot_dimension_numbers<[1], [0], [0], [1], [0, 0, 1, 1], [], []>} : vector<2x128xbf16>, vector<128x128xbf16>, vector<2x128xf32> -> vector<2x128xf32>
    %c0_103 = arith.constant 0 : index
    %c0_104 = arith.constant 0 : index
    %132 = vector.load %arg6[%c0_103, %c0_104] : memref<1x128xf32, #tpu.memory_space<vmem>>, vector<1x128xf32>
    %133 = vector.broadcast %132 : vector<1x128xf32> to vector<2x128xf32>
    %134 = arith.addf %131, %133 : vector<2x128xf32>
    %cst_105 = arith.constant 0.000000e+00 : f32
    %135 = vector.broadcast %cst_105 : f32 to vector<2x128xf32>
    %136 = arith.maximumf %134, %135 : vector<2x128xf32>
    %137 = arith.truncf %136 : vector<2x128xf32> to vector<2x128xbf16>
    %c0_106 = arith.constant 0 : index
    %c0_107 = arith.constant 0 : index
    %138 = vector.load %arg7[%c0_106, %c0_107] : memref<128x128xbf16, #tpu.memory_space<vmem>>, vector<128x128xbf16>
    %cst_108 = arith.constant dense<0.000000e+00> : vector<2x128xf32>
    %139 = tpu.matmul %137, %138, %cst_108 {dimension_numbers = #tpu.dot_dimension_numbers<[1], [0], [0], [1], [0, 0, 1, 1], [], []>} : vector<2x128xbf16>, vector<128x128xbf16>, vector<2x128xf32> -> vector<2x128xf32>
    %c0_109 = arith.constant 0 : index
    %c0_110 = arith.constant 0 : index
    %140 = vector.load %arg8[%c0_109, %c0_110] : memref<1x128xf32, #tpu.memory_space<vmem>>, vector<1x128xf32>
    %141 = vector.broadcast %140 : vector<1x128xf32> to vector<2x128xf32>
    %142 = arith.addf %139, %141 : vector<2x128xf32>
    %c0_111 = arith.constant 0 : index
    %c0_112 = arith.constant 0 : index
    %143 = vector.load %arg9[%c0_111, %c0_112] : memref<2x128xf32, #tpu.memory_space<vmem>>, vector<2x128xf32>
    tpu.vector_store %arg9[%c0_111, %c0_112], %142 {strides = array<i32>} : memref<2x128xf32, #tpu.memory_space<vmem>>, vector<2x128xf32>,
    return
  }
}

</mosaic_0001>

<llo_original>
// kernel: lenet_forward.2
$region0: #{lenet_forward.2}
  #allocation0 [shape = 'u32[]', space=smem, size = 0x4, offset = 0x4, fixed_abs, tag = 'smem constant byte address 0x4 - core index']
  #allocation1 [shape = 'u32[144,128]{1,0:T(1,128)}', space=vmem, size = 0x12000, scoped, tag = 'internal scratch']
  %s0 = inlined_call_operand.vmem [shape: bf16[4,392,128], index: 0, kind: input, shape index: {}]
  %s1 = inlined_call_operand.vmem [shape: bf16[128,128], index: 1, kind: input, shape index: {}]
  %s2 = inlined_call_operand.vmem [shape: f32[1,128], index: 2, kind: input, shape index: {}]
  %s3 = inlined_call_operand.vmem [shape: bf16[392,128], index: 3, kind: output, shape index: {}]
  %s4 = sld [smem:[#allocation0]]
  $region22: #{lenet_forward.2} parent=0
    _
  %s6 = ssub.s32 1, %s4
  %s7 = scalar_select 0, %s6, %s4
  // Predicated region
  $region2: #{lenet_forward.2} parent=0 // pred_check
    _
  $region3: #{lenet_forward.2} parent=0 // pred_check_branch
    %9 = sbr.rel (0) target = $region5
  $region4: #{lenet_forward.2} parent=0 // pred_region
    _
  $region5: #{lenet_forward.2} parent=0 // pred_fallthru
    _
  // Predicated region
  $region6: #{lenet_forward.2} parent=0 // pred_check
    _
  $region7: #{lenet_forward.2} parent=0 // pred_check_branch
    %11 = sbr.rel (0) target = $region9
  $region8: #{lenet_forward.2} parent=0 // pred_region
    _
  $region9: #{lenet_forward.2} parent=0 // pred_fallthru
    _
  // Predicated region
  $region10: #{lenet_forward.2} parent=0 // pred_check
    _
  $region11: #{lenet_forward.2} parent=0 // pred_check_branch
    %13 = sbr.rel (0) target = $region13
  $region12: #{lenet_forward.2} parent=0 // pred_region
    _
  $region13: #{lenet_forward.2} parent=0 // pred_fallthru
    _
  %v15 = vld [vmem:[%s1] sm:$0xf]
  %v16 = vld [vmem:[%s1 + $0x4] sm:$0xf]
  %v17 = vld [vmem:[%s1 + $0x8] sm:$0xf]
  %v18 = vld [vmem:[%s1 + $0xc] sm:$0xf]
  %v19 = vld [vmem:[%s1 + $0x10] sm:$0xf]
  %v20 = vld [vmem:[%s1 + $0x14] sm:$0xf]
  %v21 = vld [vmem:[%s1 + $0x18] sm:$0xf]
  %v22 = vld [vmem:[%s1 + $0x1c] sm:$0xf]
  %v23 = vld [vmem:[%s1 + $0x20] sm:$0xf]
  %v24 = vld [vmem:[%s1 + $0x24] sm:$0xf]
  %v25 = vld [vmem:[%s1 + $0x28] sm:$0xf]
  %v26 = vld [vmem:[%s1 + $0x2c] sm:$0xf]
  %v27 = vld [vmem:[%s1 + $0x30] sm:$0xf]
  %v28 = vld [vmem:[%s1 + $0x34] sm:$0xf]
  %v29 = vld [vmem:[%s1 + $0x38] sm:$0xf]
  %v30 = vld [vmem:[%s1 + $0x3c] sm:$0xf]
  %v31 = vld [vmem:[%s0] sm:$0xf]
  %v32 = vld [vmem:[%s0 + $0x4] sm:$0xf]
  %v33 = vld [vmem:[%s0 + $0x8] sm:$0xf]
  %v34 = vld [vmem:[%s0 + $0xc] sm:$0xf]
  %v35 = vld [vmem:[%s0 + $0x10] sm:$0xf]
  %v36 = vld [vmem:[%s0 + $0x14] sm:$0xf]
  %v37 = vld [vmem:[%s0 + $0x18] sm:$0xf]
  %v38 = vld [vmem:[%s0 + $0x1c] sm:$0xf]
  %v39 = vld [vmem:[%s0 + $0x20] sm:$0xf]
  %v40 = vld [vmem:[%s0 + $0x24] sm:$0xf]
  %v41 = vld [vmem:[%s0 + $0x28] sm:$0xf]
  %v42 = vld [vmem:[%s0 + $0x2c] sm:$0xf]
  %v43 = vld [vmem:[%s0 + $0x30] sm:$0xf]
  %v44 = vld [vmem:[%s0 + $0x34] sm:$0xf]
  %v45 = vld [vmem:[%s0 + $0x38] sm:$0xf]
  %v46 = vld [vmem:[%s0 + $0x3c] sm:$0xf]
  %v47 = vld [vmem:[%s0 + $0x40] sm:$0xf]
  %v48 = vld [vmem:[%s0 + $0x44] sm:$0xf]
  %v49 = vld [vmem:[%s0 + $0x48] sm:$0xf]
  %v50 = vld [vmem:[%s0 + $0x4c] sm:$0xf]
  %v51 = vld [vmem:[%s0 + $0x50] sm:$0xf]
  %v52 = vld [vmem:[%s0 + $0x54] sm:$0xf]
  %v53 = vld [vmem:[%s0 + $0x58] sm:$0xf]
  %v54 = vld [vmem:[%s0 + $0x5c] sm:$0xf]
  %v55 = vld [vmem:[%s0 + $0x60] sm:$0xf]
  %v56 = vld [vmem:[%s0 + $0x64] sm:$0xf]
  %v57 = vld [vmem:[%s0 + $0x68] sm:$0xf]
  %v58 = vld [vmem:[%s0 + $0x6c] sm:$0xf]
  %v59 = vld [vmem:[%s0 + $0x70] sm:$0xf]
  %v60 = vld [vmem:[%s0 + $0x74] sm:$0xf]
  %v61 = vld [vmem:[%s0 + $0x78] sm:$0xf]
  %v62 = vld [vmem:[%s0 + $0x7c] sm:$0xf]
  %v63 = vld [vmem:[%s0 + $0x80] sm:$0xf]
  %v64 = vld [vmem:[%s0 + $0x84] sm:$0xf]
  %v65 = vld [vmem:[%s0 + $0x88] sm:$0xf]
  %v66 = vld [vmem:[%s0 + $0x8c] sm:$0xf]
  %v67 = vld [vmem:[%s0 + $0x90] sm:$0xf]
  %v68 = vld [vmem:[%s0 + $0x94] sm:$0xf]
  %v69 = vld [vmem:[%s0 + $0x98] sm:$0xf]
  %v70 = vld [vmem:[%s0 + $0x9c] sm:$0xf]
  %v71 = vld [vmem:[%s0 + $0xa0] sm:$0xf]
  %v72 = vld [vmem:[%s0 + $0xa4] sm:$0xf]
  %v73 = vld [vmem:[%s0 + $0xa8] sm:$0xf]
  %v74 = vld [vmem:[%s0 + $0xac] sm:$0xf]
  %v75 = vld [vmem:[%s0 + $0xb0] sm:$0xf]
  %v76 = vld [vmem:[%s0 + $0xb4] sm:$0xf]
  %v77 = vld [vmem:[%s0 + $0xb8] sm:$0xf]
  %v78 = vld [vmem:[%s0 + $0xbc] sm:$0xf]
  %v79 = vld [vmem:[%s0 + $0xc0] sm:$0xf]
  %v129 = vunpack.c.l.b16 %v31
  %v130 = vunpack.c.l.b16 %v32
  %v131 = vunpack.c.l.b16 %v33
  %v132 = vunpack.c.l.b16 %v34
  %v133 = vunpack.c.l.b16 %v35
  %v134 = vunpack.c.l.b16 %v36
  %v135 = vunpack.c.l.b16 %v37
  %v136 = vunpack.c.l.b16 %v38
  %v137 = vunpack.c.l.b16 %v39
  %v138 = vunpack.c.l.b16 %v40
  %v139 = vunpack.c.l.b16 %v41
  %v140 = vunpack.c.l.b16 %v42
  %v141 = vunpack.c.l.b16 %v43
  %v142 = vunpack.c.l.b16 %v44
  %v143 = vunpack.c.l.b16 %v45
  %v144 = vunpack.c.l.b16 %v46
  %v145 = vunpack.c.l.b16 %v47
  %v146 = vunpack.c.l.b16 %v48
  %v147 = vunpack.c.l.b16 %v49
  %v148 = vunpack.c.l.b16 %v50
  %v149 = vunpack.c.l.b16 %v51
  %v150 = vunpack.c.l.b16 %v52
  %v151 = vunpack.c.l.b16 %v53
  %v152 = vunpack.c.l.b16 %v54
  %v153 = vunpack.c.l.b16 %v55
  %v154 = vunpack.c.l.b16 %v56
  %v155 = vunpack.c.l.b16 %v57
  %v156 = vunpack.c.l.b16 %v58
  %v157 = vunpack.c.l.b16 %v59
  %v158 = vunpack.c.l.b16 %v60
  %v159 = vunpack.c.l.b16 %v61
  %v160 = vunpack.c.l.b16 %v62
  %v161 = vunpack.c.l.b16 %v63
  %v162 = vunpack.c.l.b16 %v64
  %v163 = vunpack.c.l.b16 %v65
  %v164 = vunpack.c.l.b16 %v66
  %v165 = vunpack.c.l.b16 %v67
  %v166 = vunpack.c.l.b16 %v68
  %v167 = vunpack.c.l.b16 %v69
  %v168 = vunpack.c.l.b16 %v70
  %v169 = vunpack.c.l.b16 %v71
  %v170 = vunpack.c.l.b16 %v72
  %v171 = vunpack.c.l.b16 %v73
  %v172 = vunpack.c.l.b16 %v74
  %v173 = vunpack.c.l.b16 %v75
  %v174 = vunpack.c.l.b16 %v76
  %v175 = vunpack.c.l.b16 %v77
  %v176 = vunpack.c.l.b16 %v78
  %v177 = vunpack.c.l.b16 %v79
  %v178 = vpack.c.b16 %v130, %v129
  %v179 = vpack.c.b16 %v132, %v131
  %v180 = vpack.c.b16 %v134, %v133
  %v181 = vpack.c.b16 %v136, %v135
  %v182 = vpack.c.b16 %v138, %v137
  %v183 = vpack.c.b16 %v140, %v139
  %v184 = vpack.c.b16 %v142, %v141
  %v185 = vpack.c.b16 %v144, %v143
  %v186 = vpack.c.b16 %v146, %v145
  %v187 = vpack.c.b16 %v148, %v147
  %v188 = vpack.c.b16 %v150, %v149
  %v189 = vpack.c.b16 %v152, %v151
  %v190 = vpack.c.b16 %v154, %v153
  %v191 = vpack.c.b16 %v156, %v155
  %v192 = vpack.c.b16 %v158, %v157
  %v193 = vpack.c.b16 %v160, %v159
  %v194 = vpack.c.b16 %v162, %v161
  %v195 = vpack.c.b16 %v164, %v163
  %v196 = vpack.c.b16 %v166, %v165
  %v197 = vpack.c.b16 %v168, %v167
  %v198 = vpack.c.b16 %v170, %v169
  %v199 = vpack.c.b16 %v172, %v171
  %v200 = vpack.c.b16 %v174, %v173
  %v201 = vpack.c.b16 %v176, %v175
  %v202 = vpack.c.b16 %v177, %v177
  %v244 = vunpack.c.l.b16 %v15
  %v245 = vunpack.c.l.b16 %v16
  %v246 = vunpack.c.l.b16 %v17
  %v247 = vunpack.c.l.b16 %v18
  %v248 = vunpack.c.l.b16 %v19
  %v249 = vunpack.c.l.b16 %v20
  %v250 = vunpack.c.l.b16 %v21
  %v251 = vunpack.c.l.b16 %v22
  %v252 = vunpack.c.l.b16 %v23
  %v253 = vunpack.c.l.b16 %v24
  %v254 = vunpack.c.l.b16 %v25
  %v255 = vunpack.c.l.b16 %v26
  %v256 = vunpack.c.l.b16 %v27
  %v257 = vunpack.c.l.b16 %v28
  %v258 = vunpack.c.l.b16 %v29
  %v259 = vunpack.c.l.b16 %v30
  %v260 = vpack.c.b16 %v245, %v244
  %v261 = vpack.c.b16 %v247, %v246
  %v262 = vpack.c.b16 %v249, %v248
  %v263 = vpack.c.b16 %v251, %v250
  %v264 = vpack.c.b16 %v253, %v252
  %v265 = vpack.c.b16 %v255, %v254
  %v266 = vpack.c.b16 %v257, %v256
  %v267 = vpack.c.b16 %v259, %v258
  %276 = vmatprep.subr.bf16.mxu0 0
  %277 = vmatpush1.bf16.msra.mxu0 %v260
  %278 = vmatprep.subr.bf16.mxu0 0
  %279 = vmatpush1.bf16.msra.mxu0 %v261
  %280 = vmatprep.subr.bf16.mxu0 0
  %281 = vmatpush1.bf16.msra.mxu0 %v262
  %282 = vmatprep.subr.bf16.mxu0 0
  %283 = vmatpush1.bf16.msra.mxu0 %v263
  %284 = vmatprep.subr.bf16.mxu0 0
  %285 = vmatpush1.bf16.msra.mxu0 %v264
  %286 = vmatprep.subr.bf16.mxu0 0
  %287 = vmatpush1.bf16.msra.mxu0 %v265
  %288 = vmatprep.subr.bf16.mxu0 0
  %289 = vmatpush1.bf16.msra.mxu0 %v266
  %290 = vmatprep.subr.bf16.mxu0 0
  %291 = vmatpush1.bf16.msra.mxu0 %v267
  %292 = vmatprep.subr.bf16.mxu0 0
  %293 = vmatpush1.bf16.msra.mxu0 0
  %294 = vmatprep.subr.bf16.mxu0 0
  %295 = vmatpush1.bf16.msra.mxu0 0
  %296 = vmatprep.subr.bf16.mxu0 0
  %297 = vmatpush1.bf16.msra.mxu0 0
  %298 = vmatprep.subr.bf16.mxu0 0
  %299 = vmatpush1.bf16.msra.mxu0 0
  %300 = vmatprep.subr.bf16.mxu0 0
  %301 = vmatpush1.bf16.msra.mxu0 0
  %302 = vmatprep.subr.bf16.mxu0 0
  %303 = vmatpush1.bf16.msra.mxu0 0
  %304 = vmatprep.subr.bf16.mxu0 0
  %305 = vmatpush1.bf16.msra.mxu0 0
  %306 = vmatprep.subr.bf16.mxu0 0
  %307 = vmatpush1.bf16.msra.mxu0 0
  %308 = vmatprep.mubr.bf16.mxu0 0
  %309 = vmatmul.mubr.bf16.gmra.mrb[0].mxu0 %v178
  %v310 = vpop.f32.mrb[0].mxu0
  %v311 = vadd.f32 0.0, %v310
  %v312 = vpop.f32.mrb[0].mxu0
  %v313 = vpop.f32.mrb[0].mxu0
  %v314 = vadd.f32 0.0, %v313
  %v315 = vpop.f32.mrb[0].mxu0
  %316 = vmatprep.mubr.bf16.mxu0 0
  %317 = vmatmul.mubr.bf16.gmra.mrb[0].mxu0 %v179
  %v318 = vpop.f32.mrb[0].mxu0
  %v319 = vadd.f32 0.0, %v318
  %v320 = vpop.f32.mrb[0].mxu0
  %v321 = vpop.f32.mrb[0].mxu0
  %v322 = vadd.f32 0.0, %v321
  %v323 = vpop.f32.mrb[0].mxu0
  %324 = vmatprep.mubr.bf16.mxu0 0
  %325 = vmatmul.mubr.bf16.gmra.mrb[0].mxu0 %v180
  %v326 = vpop.f32.mrb[0].mxu0
  %v327 = vadd.f32 0.0, %v326
  %v328 = vpop.f32.mrb[0].mxu0
  %v329 = vpop.f32.mrb[0].mxu0
  %v330 = vadd.f32 0.0, %v329
  %v331 = vpop.f32.mrb[0].mxu0
  %332 = vmatprep.mubr.bf16.mxu0 0
  %333 = vmatmul.mubr.bf16.gmra.mrb[0].mxu0 %v181
  %v334 = vpop.f32.mrb[0].mxu0
  %v335 = vadd.f32 0.0, %v334
  %v336 = vpop.f32.mrb[0].mxu0
  %v337 = vpop.f32.mrb[0].mxu0
  %v338 = vadd.f32 0.0, %v337
  %v339 = vpop.f32.mrb[0].mxu0
  %340 = vmatprep.mubr.bf16.mxu0 0
  %341 = vmatmul.mubr.bf16.gmra.mrb[0].mxu0 %v182
  %v342 = vpop.f32.mrb[0].mxu0
  %v343 = vadd.f32 0.0, %v342
  %v344 = vpop.f32.mrb[0].mxu0
  %v345 = vpop.f32.mrb[0].mxu0
  %v346 = vadd.f32 0.0, %v345
  %v347 = vpop.f32.mrb[0].mxu0
  %348 = vmatprep.mubr.bf16.mxu0 0
  %349 = vmatmul.mubr.bf16.gmra.mrb[0].mxu0 %v183
  %v350 = vpop.f32.mrb[0].mxu0
  %v351 = vadd.f32 0.0, %v350
  %v352 = vpop.f32.mrb[0].mxu0
  %v353 = vpop.f32.mrb[0].mxu0
  %v354 = vadd.f32 0.0, %v353
  %v355 = vpop.f32.mrb[0].mxu0
  %356 = vmatprep.mubr.bf16.mxu0 0
  %357 = vmatmul.mubr.bf16.gmra.mrb[0].mxu0 %v184
  %v358 = vpop.f32.mrb[0].mxu0
  %v359 = vadd.f32 0.0, %v358
  %v360 = vpop.f32.mrb[0].mxu0
  %v361 = vpop.f32.mrb[0].mxu0
  %v362 = vadd.f32 0.0, %v361
  %v363 = vpop.f32.mrb[0].mxu0
  %364 = vmatprep.mubr.bf16.mxu0 0
  %365 = vmatmul.mubr.bf16.gmra.mrb[0].mxu0 %v185
  %v366 = vpop.f32.mrb[0].mxu0
  %v367 = vadd.f32 0.0, %v366
  %v368 = vpop.f32.mrb[0].mxu0
  %v369 = vpop.f32.mrb[0].mxu0
  %v370 = vadd.f32 0.0, %v369
  %v371 = vpop.f32.mrb[0].mxu0
  %372 = vmatprep.mubr.bf16.mxu0 0
  %373 = vmatmul.mubr.bf16.gmra.mrb[0].mxu0 %v186
  %v374 = vpop.f32.mrb[0].mxu0
  %v375 = vadd.f32 0.0, %v374
  %v376 = vpop.f32.mrb[0].mxu0
  %v377 = vpop.f32.mrb[0].mxu0
  %v378 = vadd.f32 0.0, %v377
  %v379 = vpop.f32.mrb[0].mxu0
  %380 = vmatprep.mubr.bf16.mxu0 0
  %381 = vmatmul.mubr.bf16.gmra.mrb[0].mxu0 %v187
  %v382 = vpop.f32.mrb[0].mxu0
  %v383 = vadd.f32 0.0, %v382
  %v384 = vpop.f32.mrb[0].mxu0
  %v385 = vpop.f32.mrb[0].mxu0
  %v386 = vadd.f32 0.0, %v385
  %v387 = vpop.f32.mrb[0].mxu0
  %388 = vmatprep.mubr.bf16.mxu0 0
  %389 = vmatmul.mubr.bf16.gmra.mrb[0].mxu0 %v188
  %v390 = vpop.f32.mrb[0].mxu0
  %v391 = vadd.f32 0.0, %v390
  %v392 = vpop.f32.mrb[0].mxu0
  %v393 = vpop.f32.mrb[0].mxu0
  %v394 = vadd.f32 0.0, %v393
  %v395 = vpop.f32.mrb[0].mxu0
  %396 = vmatprep.mubr.bf16.mxu0 0
  %397 = vmatmul.mubr.bf16.gmra.mrb[0].mxu0 %v189
  %v398 = vpop.f32.mrb[0].mxu0
  %v399 = vadd.f32 0.0, %v398
  %v400 = vpop.f32.mrb[0].mxu0
  %v401 = vpop.f32.mrb[0].mxu0
  %v402 = vadd.f32 0.0, %v401
  %v403 = vpop.f32.mrb[0].mxu0
  %404 = vmatprep.mubr.bf16.mxu0 0
  %405 = vmatmul.mubr.bf16.gmra.mrb[0].mxu0 %v190
  %v406 = vpop.f32.mrb[0].mxu0
  %v407 = vadd.f32 0.0, %v406
  %v408 = vpop.f32.mrb[0].mxu0
  %v409 = vpop.f32.mrb[0].mxu0
  %v410 = vadd.f32 0.0, %v409
  %v411 = vpop.f32.mrb[0].mxu0
  %412 = vmatprep.mubr.bf16.mxu0 0
  %413 = vmatmul.mubr.bf16.gmra.mrb[0].mxu0 %v191
  %v414 = vpop.f32.mrb[0].mxu0
  %v415 = vadd.f32 0.0, %v414
  %v416 = vpop.f32.mrb[0].mxu0
  %v417 = vpop.f32.mrb[0].mxu0
  %v418 = vadd.f32 0.0, %v417
  %v419 = vpop.f32.mrb[0].mxu0
  %420 = vmatprep.mubr.bf16.mxu0 0
  %421 = vmatmul.mubr.bf16.gmra.mrb[0].mxu0 %v192
  %v422 = vpop.f32.mrb[0].mxu0
  %v423 = vadd.f32 0.0, %v422
  %v424 = vpop.f32.mrb[0].mxu0
  %v425 = vpop.f32.mrb[0].mxu0
  %v426 = vadd.f32 0.0, %v425
  %v427 = vpop.f32.mrb[0].mxu0
  %428 = vmatprep.mubr.bf16.mxu0 0
  %429 = vmatmul.mubr.bf16.gmra.mrb[0].mxu0 %v193
  %v430 = vpop.f32.mrb[0].mxu0
  %v431 = vadd.f32 0.0, %v430
  %v432 = vpop.f32.mrb[0].mxu0
  %v433 = vpop.f32.mrb[0].mxu0
  %v434 = vadd.f32 0.0, %v433
  %v435 = vpop.f32.mrb[0].mxu0
  %436 = vmatprep.mubr.bf16.mxu0 0
  %437 = vmatmul.mubr.bf16.gmra.mrb[0].mxu0 %v194
  %v438 = vpop.f32.mrb[0].mxu0
  %v439 = vadd.f32 0.0, %v438
  %v440 = vpop.f32.mrb[0].mxu0
  %v441 = vpop.f32.mrb[0].mxu0
  %v442 = vadd.f32 0.0, %v441
  %v443 = vpop.f32.mrb[0].mxu0
  %444 = vmatprep.mubr.bf16.mxu0 0
  %445 = vmatmul.mubr.bf16.gmra.mrb[0].mxu0 %v195
  %v446 = vpop.f32.mrb[0].mxu0
  %v447 = vadd.f32 0.0, %v446
  %v448 = vpop.f32.mrb[0].mxu0
  %v449 = vpop.f32.mrb[0].mxu0
  %v450 = vadd.f32 0.0, %v449
  %v451 = vpop.f32.mrb[0].mxu0
  %452 = vmatprep.mubr.bf16.mxu0 0
  %453 = vmatmul.mubr.bf16.gmra.mrb[0].mxu0 %v196
  %v454 = vpop.f32.mrb[0].mxu0
  %v455 = vadd.f32 0.0, %v454
  %v456 = vpop.f32.mrb[0].mxu0
  %v457 = vpop.f32.mrb[0].mxu0
  %v458 = vadd.f32 0.0, %v457
  %v459 = vpop.f32.mrb[0].mxu0
  %460 = vmatprep.mubr.bf16.mxu0 0
  %461 = vmatmul.mubr.bf16.gmra.mrb[0].mxu0 %v197
  %v462 = vpop.f32.mrb[0].mxu0
  %v463 = vadd.f32 0.0, %v462
  %v464 = vpop.f32.mrb[0].mxu0
  %v465 = vpop.f32.mrb[0].mxu0
  %v466 = vadd.f32 0.0, %v465
  %v467 = vpop.f32.mrb[0].mxu0
  %468 = vmatprep.mubr.bf16.mxu0 0
  %469 = vmatmul.mubr.bf16.gmra.mrb[0].mxu0 %v198
  %v470 = vpop.f32.mrb[0].mxu0
  %v471 = vadd.f32 0.0, %v470
  %v472 = vpop.f32.mrb[0].mxu0
  %v473 = vpop.f32.mrb[0].mxu0
  %v474 = vadd.f32 0.0, %v473
  %v475 = vpop.f32.mrb[0].mxu0
  %476 = vmatprep.mubr.bf16.mxu0 0
  %477 = vmatmul.mubr.bf16.gmra.mrb[0].mxu0 %v199
  %v478 = vpop.f32.mrb[0].mxu0
  %v479 = vadd.f32 0.0, %v478
  %v480 = vpop.f32.mrb[0].mxu0
  %v481 = vpop.f32.mrb[0].mxu0
  %v482 = vadd.f32 0.0, %v481
  %v483 = vpop.f32.mrb[0].mxu0
  %484 = vmatprep.mubr.bf16.mxu0 0
  %485 = vmatmul.mubr.bf16.gmra.mrb[0].mxu0 %v200
  %v486 = vpop.f32.mrb[0].mxu0
  %v487 = vadd.f32 0.0, %v486
  %v488 = vpop.f32.mrb[0].mxu0
  %v489 = vpop.f32.mrb[0].mxu0
  %v490 = vadd.f32 0.0, %v489
  %v491 = vpop.f32.mrb[0].mxu0
  %492 = vmatprep.mubr.bf16.mxu0 0
  %493 = vmatmul.mubr.bf16.gmra.mrb[0].mxu0 %v201
  %v494 = vpop.f32.mrb[0].mxu0
  %v495 = vadd.f32 0.0, %v494
  %v496 = vpop.f32.mrb[0].mxu0
  %v497 = vpop.f32.mrb[0].mxu0
  %v498 = vadd.f32 0.0, %v497
  %v499 = vpop.f32.mrb[0].mxu0
  %500 = vmatprep.mubr.bf16.mxu0 0
  %501 = vmatmul.mubr.bf16.gmra.mrb[0].mxu0 %v202
  %v502 = vpop.f32.mrb[0].mxu0
  %v503 = vadd.f32 0.0, %v502
  %v504 = vpop.f32.mrb[0].mxu0
  %v505 = vpop.f32.mrb[0].mxu0
  %v506 = vpop.f32.mrb[0].mxu0
  %507 = vdwg.mxu0
  %s508 = scalar_lea.vmem %s0, 196
  %v509 = vld [vmem:[%s508] sm:$0xf]
  %v510 = vld [vmem:[%s508 + $0x4] sm:$0xf]
  %v511 = vld [vmem:[%s508 + $0x8] sm:$0xf]
  %v512 = vld [vmem:[%s508 + $0xc] sm:$0xf]
  %v513 = vld [vmem:[%s508 + $0x10] sm:$0xf]
  %v514 = vld [vmem:[%s508 + $0x14] sm:$0xf]
  %v515 = vld [vmem:[%s508 + $0x18] sm:$0xf]
  %v516 = vld [vmem:[%s508 + $0x1c] sm:$0xf]
  %v517 = vld [vmem:[%s508 + $0x20] sm:$0xf]
  %v518 = vld [vmem:[%s508 + $0x24] sm:$0xf]
  %v519 = vld [vmem:[%s508 + $0x28] sm:$0xf]
  %v520 = vld [vmem:[%s508 + $0x2c] sm:$0xf]
  %v521 = vld [vmem:[%s508 + $0x30] sm:$0xf]
  %v522 = vld [vmem:[%s508 + $0x34] sm:$0xf]
  %v523 = vld [vmem:[%s508 + $0x38] sm:$0xf]
  %v524 = vld [vmem:[%s508 + $0x3c] sm:$0xf]
  %v525 = vld [vmem:[%s508 + $0x40] sm:$0xf]
  %v526 = vld [vmem:[%s508 + $0x44] sm:$0xf]
  %v527 = vld [vmem:[%s508 + $0x48] sm:$0xf]
  %v528 = vld [vmem:[%s508 + $0x4c] sm:$0xf]
  %v529 = vld [vmem:[%s508 + $0x50] sm:$0xf]
  %v530 = vld [vmem:[%s508 + $0x54] sm:$0xf]
  %v531 = vld [vmem:[%s508 + $0x58] sm:$0xf]
  %v532 = vld [vmem:[%s508 + $0x5c] sm:$0xf]
  %v533 = vld [vmem:[%s508 + $0x60] sm:$0xf]
  %v534 = vld [vmem:[%s508 + $0x64] sm:$0xf]
  %v535 = vld [vmem:[%s508 + $0x68] sm:$0xf]
  %v536 = vld [vmem:[%s508 + $0x6c] sm:$0xf]
  %v537 = vld [vmem:[%s508 + $0x70] sm:$0xf]
  %v538 = vld [vmem:[%s508 + $0x74] sm:$0xf]
  %v539 = vld [vmem:[%s508 + $0x78] sm:$0xf]
  %v540 = vld [vmem:[%s508 + $0x7c] sm:$0xf]
  %v541 = vld [vmem:[%s508 + $0x80] sm:$0xf]
  %v542 = vld [vmem:[%s508 + $0x84] sm:$0xf]
  %v543 = vld [vmem:[%s508 + $0x88] sm:$0xf]
  %v544 = vld [vmem:[%s508 + $0x8c] sm:$0xf]
  %v545 = vld [vmem:[%s508 + $0x90] sm:$0xf]
  %v546 = vld [vmem:[%s508 + $0x94] sm:$0xf]
  %v547 = vld [vmem:[%s508 + $0x98] sm:$0xf]
  %v548 = vld [vmem:[%s508 + $0x9c] sm:$0xf]
  %v549 = vld [vmem:[%s508 + $0xa0] sm:$0xf]
  %v550 = vld [vmem:[%s508 + $0xa4] sm:$0xf]
  %v551 = vld [vmem:[%s508 + $0xa8] sm:$0xf]
  %v552 = vld [vmem:[%s508 + $0xac] sm:$0xf]
  %v553 = vld [vmem:[%s508 + $0xb0] sm:$0xf]
  %v554 = vld [vmem:[%s508 + $0xb4] sm:$0xf]
  %v555 = vld [vmem:[%s508 + $0xb8] sm:$0xf]
  %v556 = vld [vmem:[%s508 + $0xbc] sm:$0xf]
  %v557 = vld [vmem:[%s508 + $0xc0] sm:$0xf]
  %v607 = vunpack.c.l.b16 %v509
  %v608 = vunpack.c.l.b16 %v510
  %v609 = vunpack.c.l.b16 %v511
  %v610 = vunpack.c.l.b16 %v512
  %v611 = vunpack.c.l.b16 %v513
  %v612 = vunpack.c.l.b16 %v514
  %v613 = vunpack.c.l.b16 %v515
  %v614 = vunpack.c.l.b16 %v516
  %v615 = vunpack.c.l.b16 %v517
  %v616 = vunpack.c.l.b16 %v518
  %v617 = vunpack.c.l.b16 %v519
  %v618 = vunpack.c.l.b16 %v520
  %v619 = vunpack.c.l.b16 %v521
  %v620 = vunpack.c.l.b16 %v522
  %v621 = vunpack.c.l.b16 %v523
  %v622 = vunpack.c.l.b16 %v524
  %v623 = vunpack.c.l.b16 %v525
  %v624 = vunpack.c.l.b16 %v526
  %v625 = vunpack.c.l.b16 %v527
  %v626 = vunpack.c.l.b16 %v528
  %v627 = vunpack.c.l.b16 %v529
  %v628 = vunpack.c.l.b16 %v530
  %v629 = vunpack.c.l.b16 %v531
  %v630 = vunpack.c.l.b16 %v532
  %v631 = vunpack.c.l.b16 %v533
  %v632 = vunpack.c.l.b16 %v534
  %v633 = vunpack.c.l.b16 %v535
  %v634 = vunpack.c.l.b16 %v536
  %v635 = vunpack.c.l.b16 %v537
  %v636 = vunpack.c.l.b16 %v538
  %v637 = vunpack.c.l.b16 %v539
  %v638 = vunpack.c.l.b16 %v540
  %v639 = vunpack.c.l.b16 %v541
  %v640 = vunpack.c.l.b16 %v542
  %v641 = vunpack.c.l.b16 %v543
  %v642 = vunpack.c.l.b16 %v544
  %v643 = vunpack.c.l.b16 %v545
  %v644 = vunpack.c.l.b16 %v546
  %v645 = vunpack.c.l.b16 %v547
  %v646 = vunpack.c.l.b16 %v548
  %v647 = vunpack.c.l.b16 %v549
  %v648 = vunpack.c.l.b16 %v550
  %v649 = vunpack.c.l.b16 %v551
  %v650 = vunpack.c.l.b16 %v552
  %v651 = vunpack.c.l.b16 %v553
  %v652 = vunpack.c.l.b16 %v554
  %v653 = vunpack.c.l.b16 %v555
  %v654 = vunpack.c.l.b16 %v556
  %v655 = vunpack.c.l.b16 %v557
  %v656 = vpack.c.b16 %v608, %v607
  %v657 = vpack.c.b16 %v610, %v609
  %v658 = vpack.c.b16 %v612, %v611
  %v659 = vpack.c.b16 %v614, %v613
  %v660 = vpack.c.b16 %v616, %v615
  %v661 = vpack.c.b16 %v618, %v617
  %v662 = vpack.c.b16 %v620, %v619
  %v663 = vpack.c.b16 %v622, %v621
  %v664 = vpack.c.b16 %v624, %v623
  %v665 = vpack.c.b16 %v626, %v625
  %v666 = vpack.c.b16 %v628, %v627
  %v667 = vpack.c.b16 %v630, %v629
  %v668 = vpack.c.b16 %v632, %v631
  %v669 = vpack.c.b16 %v634, %v633
  %v670 = vpack.c.b16 %v636, %v635
  %v671 = vpack.c.b16 %v638, %v637
  %v672 = vpack.c.b16 %v640, %v639
  %v673 = vpack.c.b16 %v642, %v641
  %v674 = vpack.c.b16 %v644, %v643
  %v675 = vpack.c.b16 %v646, %v645
  %v676 = vpack.c.b16 %v648, %v647
  %v677 = vpack.c.b16 %v650, %v649
  %v678 = vpack.c.b16 %v652, %v651
  %v679 = vpack.c.b16 %v654, %v653
  %v680 = vpack.c.b16 %v655, %v655
  %706 = vmatprep.subr.bf16.mxu0 0
  %707 = vmatpush1.bf16.msra.mxu0 %v260
  %708 = vmatprep.subr.bf16.mxu0 0
  %709 = vmatpush1.bf16.msra.mxu0 %v261
  %710 = vmatprep.subr.bf16.mxu0 0
  %711 = vmatpush1.bf16.msra.mxu0 %v262
  %712 = vmatprep.subr.bf16.mxu0 0
  %713 = vmatpush1.bf16.msra.mxu0 %v263
  %714 = vmatprep.subr.bf16.mxu0 0
  %715 = vmatpush1.bf16.msra.mxu0 %v264
  %716 = vmatprep.subr.bf16.mxu0 0
  %717 = vmatpush1.bf16.msra.mxu0 %v265
  %718 = vmatprep.subr.bf16.mxu0 0
  %719 = vmatpush1.bf16.msra.mxu0 %v266
  %720 = vmatprep.subr.bf16.mxu0 0
  %721 = vmatpush1.bf16.msra.mxu0 %v267
  %722 = vmatprep.subr.bf16.mxu0 0
  %723 = vmatpush1.bf16.msra.mxu0 0
  %724 = vmatprep.subr.bf16.mxu0 0
  %725 = vmatpush1.bf16.msra.mxu0 0
  %726 = vmatprep.subr.bf16.mxu0 0
  %727 = vmatpush1.bf16.msra.mxu0 0
  %728 = vmatprep.subr.bf16.mxu0 0
  %729 = vmatpush1.bf16.msra.mxu0 0
  %730 = vmatprep.subr.bf16.mxu0 0
  %731 = vmatpush1.bf16.msra.mxu0 0
  %732 = vmatprep.subr.bf16.mxu0 0
  %733 = vmatpush1.bf16.msra.mxu0 0
  %734 = vmatprep.subr.bf16.mxu0 0
  %735 = vmatpush1.bf16.msra.mxu0 0
  %736 = vmatprep.subr.bf16.mxu0 0
  %737 = vmatpush1.bf16.msra.mxu0 0
  %738 = vmatprep.mubr.bf16.mxu0 0
  %739 = vmatmul.mubr.bf16.gmra.mrb[0].mxu0 %v656
  %v740 = vpop.f32.mrb[0].mxu0
  %v741 = vadd.f32 0.0, %v740
  %v742 = vpop.f32.mrb[0].mxu0
  %v743 = vpop.f32.mrb[0].mxu0
  %v744 = vadd.f32 0.0, %v743
  %v745 = vpop.f32.mrb[0].mxu0
  %746 = vmatprep.mubr.bf16.mxu0 0
  %747 = vmatmul.mubr.bf16.gmra.mrb[0].mxu0 %v657
  %v748 = vpop.f32.mrb[0].mxu0
  %v749 = vadd.f32 0.0, %v748
  %v750 = vpop.f32.mrb[0].mxu0
  %v751 = vpop.f32.mrb[0].mxu0
  %v752 = vadd.f32 0.0, %v751
  %v753 = vpop.f32.mrb[0].mxu0
  %754 = vmatprep.mubr.bf16.mxu0 0
  %755 = vmatmul.mubr.bf16.gmra.mrb[0].mxu0 %v658
  %v756 = vpop.f32.mrb[0].mxu0
  %v757 = vadd.f32 0.0, %v756
  %v758 = vpop.f32.mrb[0].mxu0
  %v759 = vpop.f32.mrb[0].mxu0
  %v760 = vadd.f32 0.0, %v759
  %v761 = vpop.f32.mrb[0].mxu0
  %762 = vmatprep.mubr.bf16.mxu0 0
  %763 = vmatmul.mubr.bf16.gmra.mrb[0].mxu0 %v659
  %v764 = vpop.f32.mrb[0].mxu0
  %v765 = vadd.f32 0.0, %v764
  %v766 = vpop.f32.mrb[0].mxu0
  %v767 = vpop.f32.mrb[0].mxu0
  %v768 = vadd.f32 0.0, %v767
  %v769 = vpop.f32.mrb[0].mxu0
  %770 = vmatprep.mubr.bf16.mxu0 0
  %771 = vmatmul.mubr.bf16.gmra.mrb[0].mxu0 %v660
  %v772 = vpop.f32.mrb[0].mxu0
  %v773 = vadd.f32 0.0, %v772
  %v774 = vpop.f32.mrb[0].mxu0
  %v775 = vpop.f32.mrb[0].mxu0
  %v776 = vadd.f32 0.0, %v775
  %v777 = vpop.f32.mrb[0].mxu0
  %778 = vmatprep.mubr.bf16.mxu0 0
  %779 = vmatmul.mubr.bf16.gmra.mrb[0].mxu0 %v661
  %v780 = vpop.f32.mrb[0].mxu0
  %v781 = vadd.f32 0.0, %v780
  %v782 = vpop.f32.mrb[0].mxu0
  %v783 = vpop.f32.mrb[0].mxu0
  %v784 = vadd.f32 0.0, %v783
  %v785 = vpop.f32.mrb[0].mxu0
  %786 = vmatprep.mubr.bf16.mxu0 0
  %787 = vmatmul.mubr.bf16.gmra.mrb[0].mxu0 %v662
  %v788 = vpop.f32.mrb[0].mxu0
  %v789 = vadd.f32 0.0, %v788
  %v790 = vpop.f32.mrb[0].mxu0
  %v791 = vpop.f32.mrb[0].mxu0
  %v792 = vadd.f32 0.0, %v791
  %v793 = vpop.f32.mrb[0].mxu0
  %794 = vmatprep.mubr.bf16.mxu0 0
  %795 = vmatmul.mubr.bf16.gmra.mrb[0].mxu0 %v663
  %v796 = vpop.f32.mrb[0].mxu0
  %v797 = vadd.f32 0.0, %v796
  %v798 = vpop.f32.mrb[0].mxu0
  %v799 = vpop.f32.mrb[0].mxu0
  %v800 = vadd.f32 0.0, %v799
  %v801 = vpop.f32.mrb[0].mxu0
  %802 = vmatprep.mubr.bf16.mxu0 0
  %803 = vmatmul.mubr.bf16.gmra.mrb[0].mxu0 %v664
  %v804 = vpop.f32.mrb[0].mxu0
  %v805 = vadd.f32 0.0, %v804
  %v806 = vpop.f32.mrb[0].mxu0
  %v807 = vpop.f32.mrb[0].mxu0
  %v808 = vadd.f32 0.0, %v807
  %v809 = vpop.f32.mrb[0].mxu0
  %810 = vmatprep.mubr.bf16.mxu0 0
  %811 = vmatmul.mubr.bf16.gmra.mrb[0].mxu0 %v665
  %v812 = vpop.f32.mrb[0].mxu0
  %v813 = vadd.f32 0.0, %v812
  %v814 = vpop.f32.mrb[0].mxu0
  %v815 = vpop.f32.mrb[0].mxu0
  %v816 = vadd.f32 0.0, %v815
  %v817 = vpop.f32.mrb[0].mxu0
  %818 = vmatprep.mubr.bf16.mxu0 0
  %819 = vmatmul.mubr.bf16.gmra.mrb[0].mxu0 %v666
  %v820 = vpop.f32.mrb[0].mxu0
  %v821 = vadd.f32 0.0, %v820
  %v822 = vpop.f32.mrb[0].mxu0
  %v823 = vpop.f32.mrb[0].mxu0
  %v824 = vadd.f32 0.0, %v823
  %v825 = vpop.f32.mrb[0].mxu0
  %826 = vmatprep.mubr.bf16.mxu0 0
  %827 = vmatmul.mubr.bf16.gmra.mrb[0].mxu0 %v667
  %v828 = vpop.f32.mrb[0].mxu0
  %v829 = vadd.f32 0.0, %v828
  %v830 = vpop.f32.mrb[0].mxu0
  %v831 = vpop.f32.mrb[0].mxu0
  %v832 = vadd.f32 0.0, %v831
  %v833 = vpop.f32.mrb[0].mxu0
  %834 = vmatprep.mubr.bf16.mxu0 0
  %835 = vmatmul.mubr.bf16.gmra.mrb[0].mxu0 %v668
  %v836 = vpop.f32.mrb[0].mxu0
  %v837 = vadd.f32 0.0, %v836
  %v838 = vpop.f32.mrb[0].mxu0
  %v839 = vpop.f32.mrb[0].mxu0
  %v840 = vadd.f32 0.0, %v839
  %v841 = vpop.f32.mrb[0].mxu0
  %842 = vmatprep.mubr.bf16.mxu0 0
  %843 = vmatmul.mubr.bf16.gmra.mrb[0].mxu0 %v669
  %v844 = vpop.f32.mrb[0].mxu0
  %v845 = vadd.f32 0.0, %v844
  %v846 = vpop.f32.mrb[0].mxu0
  %v847 = vpop.f32.mrb[0].mxu0
  %v848 = vadd.f32 0.0, %v847
  %v849 = vpop.f32.mrb[0].mxu0
  %850 = vmatprep.mubr.bf16.mxu0 0
  %851 = vmatmul.mubr.bf16.gmra.mrb[0].mxu0 %v670
  %v852 = vpop.f32.mrb[0].mxu0
  %v853 = vadd.f32 0.0, %v852
  %v854 = vpop.f32.mrb[0].mxu0
  %v855 = vpop.f32.mrb[0].mxu0
  %v856 = vadd.f32 0.0, %v855
  %v857 = vpop.f32.mrb[0].mxu0
  %858 = vmatprep.mubr.bf16.mxu0 0
  %859 = vmatmul.mubr.bf16.gmra.mrb[0].mxu0 %v671
  %v860 = vpop.f32.mrb[0].mxu0
  %v861 = vadd.f32 0.0, %v860
  %v862 = vpop.f32.mrb[0].mxu0
  %v863 = vpop.f32.mrb[0].mxu0
  %v864 = vadd.f32 0.0, %v863
  %v865 = vpop.f32.mrb[0].mxu0
  %866 = vmatprep.mubr.bf16.mxu0 0
  %867 = vmatmul.mubr.bf16.gmra.mrb[0].mxu0 %v672
  %v868 = vpop.f32.mrb[0].mxu0
  %v869 = vadd.f32 0.0, %v868
  %v870 = vpop.f32.mrb[0].mxu0
  %v871 = vpop.f32.mrb[0].mxu0
  %v872 = vadd.f32 0.0, %v871
  %v873 = vpop.f32.mrb[0].mxu0
  %874 = vmatprep.mubr.bf16.mxu0 0
  %875 = vmatmul.mubr.bf16.gmra.mrb[0].mxu0 %v673
  %v876 = vpop.f32.mrb[0].mxu0
  %v877 = vadd.f32 0.0, %v876
  %v878 = vpop.f32.mrb[0].mxu0
  %v879 = vpop.f32.mrb[0].mxu0
  %v880 = vadd.f32 0.0, %v879
  %v881 = vpop.f32.mrb[0].mxu0
  %882 = vmatprep.mubr.bf16.mxu0 0
  %883 = vmatmul.mubr.bf16.gmra.mrb[0].mxu0 %v674
  %v884 = vpop.f32.mrb[0].mxu0
  %v885 = vadd.f32 0.0, %v884
  %v886 = vpop.f32.mrb[0].mxu0
  %v887 = vpop.f32.mrb[0].mxu0
  %v888 = vadd.f32 0.0, %v887
  %v889 = vpop.f32.mrb[0].mxu0
  %890 = vmatprep.mubr.bf16.mxu0 0
  %891 = vmatmul.mubr.bf16.gmra.mrb[0].mxu0 %v675
  %v892 = vpop.f32.mrb[0].mxu0
  %v893 = vadd.f32 0.0, %v892
  %v894 = vpop.f32.mrb[0].mxu0
  %v895 = vpop.f32.mrb[0].mxu0
  %v896 = vadd.f32 0.0, %v895
  %v897 = vpop.f32.mrb[0].mxu0
  %898 = vmatprep.mubr.bf16.mxu0 0
  %899 = vmatmul.mubr.bf16.gmra.mrb[0].mxu0 %v676
  %v900 = vpop.f32.mrb[0].mxu0
  %v901 = vadd.f32 0.0, %v900
  %v902 = vpop.f32.mrb[0].mxu0
  %v903 = vpop.f32.mrb[0].mxu0
  %v904 = vadd.f32 0.0, %v903
  %v905 = vpop.f32.mrb[0].mxu0
  %906 = vmatprep.mubr.bf16.mxu0 0
  %907 = vmatmul.mubr.bf16.gmra.mrb[0].mxu0 %v677
  %v908 = vpop.f32.mrb[0].mxu0
  %v909 = vadd.f32 0.0, %v908
  %v910 = vpop.f32.mrb[0].mxu0
  %v911 = vpop.f32.mrb[0].mxu0
  %v912 = vadd.f32 0.0, %v911
  %v913 = vpop.f32.mrb[0].mxu0
  %914 = vmatprep.mubr.bf16.mxu0 0
  %915 = vmatmul.mubr.bf16.gmra.mrb[0].mxu0 %v678
  %v916 = vpop.f32.mrb[0].mxu0
  %v917 = vadd.f32 0.0, %v916
  %v918 = vpop.f32.mrb[0].mxu0
  %v919 = vpop.f32.mrb[0].mxu0
  %v920 = vadd.f32 0.0, %v919
  %v921 = vpop.f32.mrb[0].mxu0
  %922 = vmatprep.mubr.bf16.mxu0 0
  %923 = vmatmul.mubr.bf16.gmra.mrb[0].mxu0 %v679
  %v924 = vpop.f32.mrb[0].mxu0
  %v925 = vadd.f32 0.0, %v924
  %v926 = vpop.f32.mrb[0].mxu0
  %v927 = vpop.f32.mrb[0].mxu0
  %v928 = vadd.f32 0.0, %v927
  %v929 = vpop.f32.mrb[0].mxu0
  %930 = vmatprep.mubr.bf16.mxu0 0
  %931 = vmatmul.mubr.bf16.gmra.mrb[0].mxu0 %v680
  %v932 = vpop.f32.mrb[0].mxu0
  %v933 = vadd.f32 0.0, %v932
  %v934 = vpop.f32.mrb[0].mxu0
  %v935 = vpop.f32.mrb[0].mxu0
  %v936 = vpop.f32.mrb[0].mxu0
  %937 = vdwg.mxu0
  %v938 = vmax.f32 %v311, %v741
  %v939 = vmax.f32 %v314, %v744
  %v940 = vmax.f32 %v319, %v749
  %v941 = vmax.f32 %v322, %v752
  %v942 = vmax.f32 %v327, %v757
  %v943 = vmax.f32 %v330, %v760
  %v944 = vmax.f32 %v335, %v765
  %v945 = vmax.f32 %v338, %v768
  %v946 = vmax.f32 %v343, %v773
  %v947 = vmax.f32 %v346, %v776
  %v948 = vmax.f32 %v351, %v781
  %v949 = vmax.f32 %v354, %v784
  %v950 = vmax.f32 %v359, %v789
  %v951 = vmax.f32 %v362, %v792
  %v952 = vmax.f32 %v367, %v797
  %v953 = vmax.f32 %v370, %v800
  %v954 = vmax.f32 %v375, %v805
  %v955 = vmax.f32 %v378, %v808
  %v956 = vmax.f32 %v383, %v813
  %v957 = vmax.f32 %v386, %v816
  %v958 = vmax.f32 %v391, %v821
  %v959 = vmax.f32 %v394, %v824
  %v960 = vmax.f32 %v399, %v829
  %v961 = vmax.f32 %v402, %v832
  %v962 = vmax.f32 %v407, %v837
  %v963 = vmax.f32 %v410, %v840
  %v964 = vmax.f32 %v415, %v845
  %v965 = vmax.f32 %v418, %v848
  %v966 = vmax.f32 %v423, %v853
  %v967 = vmax.f32 %v426, %v856
  %v968 = vmax.f32 %v431, %v861
  %v969 = vmax.f32 %v434, %v864
  %v970 = vmax.f32 %v439, %v869
  %v971 = vmax.f32 %v442, %v872
  %v972 = vmax.f32 %v447, %v877
  %v973 = vmax.f32 %v450, %v880
  %v974 = vmax.f32 %v455, %v885
  %v975 = vmax.f32 %v458, %v888
  %v976 = vmax.f32 %v463, %v893
  %v977 = vmax.f32 %v466, %v896
  %v978 = vmax.f32 %v471, %v901
  %v979 = vmax.f32 %v474, %v904
  %v980 = vmax.f32 %v479, %v909
  %v981 = vmax.f32 %v482, %v912
  %v982 = vmax.f32 %v487, %v917
  %v983 = vmax.f32 %v490, %v920
  %v984 = vmax.f32 %v495, %v925
  %v985 = vmax.f32 %v498, %v928
  %v986 = vmax.f32 %v503, %v933
  %s987 = scalar_lea.vmem %s0, 392
  %v988 = vld [vmem:[%s987] sm:$0xf]
  %v989 = vld [vmem:[%s987 + $0x4] sm:$0xf]
  %v990 = vld [vmem:[%s987 + $0x8] sm:$0xf]
  %v991 = vld [vmem:[%s987 + $0xc] sm:$0xf]
  %v992 = vld [vmem:[%s987 + $0x10] sm:$0xf]
  %v993 = vld [vmem:[%s987 + $0x14] sm:$0xf]
  %v994 = vld [vmem:[%s987 + $0x18] sm:$0xf]
  %v995 = vld [vmem:[%s987 + $0x1c] sm:$0xf]
  %v996 = vld [vmem:[%s987 + $0x20] sm:$0xf]
  %v997 = vld [vmem:[%s987 + $0x24] sm:$0xf]
  %v998 = vld [vmem:[%s987 + $0x28] sm:$0xf]
  %v999 = vld [vmem:[%s987 + $0x2c] sm:$0xf]
  %v1000 = vld [vmem:[%s987 + $0x30] sm:$0xf]
  %v1001 = vld [vmem:[%s987 + $0x34] sm:$0xf]
  %v1002 = vld [vmem:[%s987 + $0x38] sm:$0xf]
  %v1003 = vld [vmem:[%s987 + $0x3c] sm:$0xf]
  %v1004 = vld [vmem:[%s987 + $0x40] sm:$0xf]
  %v1005 = vld [vmem:[%s987 + $0x44] sm:$0xf]
  %v1006 = vld [vmem:[%s987 + $0x48] sm:$0xf]
  %v1007 = vld [vmem:[%s987 + $0x4c] sm:$0xf]
  %v1008 = vld [vmem:[%s987 + $0x50] sm:$0xf]
  %v1009 = vld [vmem:[%s987 + $0x54] sm:$0xf]
  %v1010 = vld [vmem:[%s987 + $0x58] sm:$0xf]
  %v1011 = vld [vmem:[%s987 + $0x5c] sm:$0xf]
  %v1012 = vld [vmem:[%s987 + $0x60] sm:$0xf]
  %v1013 = vld [vmem:[%s987 + $0x64] sm:$0xf]
  %v1014 = vld [vmem:[%s987 + $0x68] sm:$0xf]
  %v1015 = vld [vmem:[%s987 + $0x6c] sm:$0xf]
  %v1016 = vld [vmem:[%s987 + $0x70] sm:$0xf]
  %v1017 = vld [vmem:[%s987 + $0x74] sm:$0xf]
  %v1018 = vld [vmem:[%s987 + $0x78] sm:$0xf]
  %v1019 = vld [vmem:[%s987 + $0x7c] sm:$0xf]
  %v1020 = vld [vmem:[%s987 + $0x80] sm:$0xf]
  %v1021 = vld [vmem:[%s987 + $0x84] sm:$0xf]
  %v1022 = vld [vmem:[%s987 + $0x88] sm:$0xf]
  %v1023 = vld [vmem:[%s987 + $0x8c] sm:$0xf]
  %v1024 = vld [vmem:[%s987 + $0x90] sm:$0xf]
  %v1025 = vld [vmem:[%s987 + $0x94] sm:$0xf]
  %v1026 = vld [vmem:[%s987 + $0x98] sm:$0xf]
  %v1027 = vld [vmem:[%s987 + $0x9c] sm:$0xf]
  %v1028 = vld [vmem:[%s987 + $0xa0] sm:$0xf]
  %v1029 = vld [vmem:[%s987 + $0xa4] sm:$0xf]
  %v1030 = vld [vmem:[%s987 + $0xa8] sm:$0xf]
  %v1031 = vld [vmem:[%s987 + $0xac] sm:$0xf]
  %v1032 = vld [vmem:[%s987 + $0xb0] sm:$0xf]
  %v1033 = vld [vmem:[%s987 + $0xb4] sm:$0xf]
  %v1034 = vld [vmem:[%s987 + $0xb8] sm:$0xf]
  %v1035 = vld [vmem:[%s987 + $0xbc] sm:$0xf]
  %v1036 = vld [vmem:[%s987 + $0xc0] sm:$0xf]
  %v1086 = vunpack.c.l.b16 %v988
  %v1087 = vunpack.c.l.b16 %v989
  %v1088 = vunpack.c.l.b16 %v990
  %v1089 = vunpack.c.l.b16 %v991
  %v1090 = vunpack.c.l.b16 %v992
  %v1091 = vunpack.c.l.b16 %v993
  %v1092 = vunpack.c.l.b16 %v994
  %v1093 = vunpack.c.l.b16 %v995
  %v1094 = vunpack.c.l.b16 %v996
  %v1095 = vunpack.c.l.b16 %v997
  %v1096 = vunpack.c.l.b16 %v998
  %v1097 = vunpack.c.l.b16 %v999
  %v1098 = vunpack.c.l.b16 %v1000
  %v1099 = vunpack.c.l.b16 %v1001
  %v1100 = vunpack.c.l.b16 %v1002
  %v1101 = vunpack.c.l.b16 %v1003
  %v1102 = vunpack.c.l.b16 %v1004
  %v1103 = vunpack.c.l.b16 %v1005
  %v1104 = vunpack.c.l.b16 %v1006
  %v1105 = vunpack.c.l.b16 %v1007
  %v1106 = vunpack.c.l.b16 %v1008
  %v1107 = vunpack.c.l.b16 %v1009
  %v1108 = vunpack.c.l.b16 %v1010
  %v1109 = vunpack.c.l.b16 %v1011
  %v1110 = vunpack.c.l.b16 %v1012
  %v1111 = vunpack.c.l.b16 %v1013
  %v1112 = vunpack.c.l.b16 %v1014
  %v1113 = vunpack.c.l.b16 %v1015
  %v1114 = vunpack.c.l.b16 %v1016
  %v1115 = vunpack.c.l.b16 %v1017
  %v1116 = vunpack.c.l.b16 %v1018
  %v1117 = vunpack.c.l.b16 %v1019
  %v1118 = vunpack.c.l.b16 %v1020
  %v1119 = vunpack.c.l.b16 %v1021
  %v1120 = vunpack.c.l.b16 %v1022
  %v1121 = vunpack.c.l.b16 %v1023
  %v1122 = vunpack.c.l.b16 %v1024
  %v1123 = vunpack.c.l.b16 %v1025
  %v1124 = vunpack.c.l.b16 %v1026
  %v1125 = vunpack.c.l.b16 %v1027
  %v1126 = vunpack.c.l.b16 %v1028
  %v1127 = vunpack.c.l.b16 %v1029
  %v1128 = vunpack.c.l.b16 %v1030
  %v1129 = vunpack.c.l.b16 %v1031
  %v1130 = vunpack.c.l.b16 %v1032
  %v1131 = vunpack.c.l.b16 %v1033
  %v1132 = vunpack.c.l.b16 %v1034
  %v1133 = vunpack.c.l.b16 %v1035
  %v1134 = vunpack.c.l.b16 %v1036
  %v1135 = vpack.c.b16 %v1087, %v1086
  %v1136 = vpack.c.b16 %v1089, %v1088
  %v1137 = vpack.c.b16 %v1091, %v1090
  %v1138 = vpack.c.b16 %v1093, %v1092
  %v1139 = vpack.c.b16 %v1095, %v1094
  %v1140 = vpack.c.b16 %v1097, %v1096
  %v1141 = vpack.c.b16 %v1099, %v1098
  %v1142 = vpack.c.b16 %v1101, %v1100
  %v1143 = vpack.c.b16 %v1103, %v1102
  %v1144 = vpack.c.b16 %v1105, %v1104
  %v1145 = vpack.c.b16 %v1107, %v1106
  %v1146 = vpack.c.b16 %v1109, %v1108
  %v1147 = vpack.c.b16 %v1111, %v1110
  %v1148 = vpack.c.b16 %v1113, %v1112
  %v1149 = vpack.c.b16 %v1115, %v1114
  %v1150 = vpack.c.b16 %v1117, %v1116
  %v1151 = vpack.c.b16 %v1119, %v1118
  %v1152 = vpack.c.b16 %v1121, %v1120
  %v1153 = vpack.c.b16 %v1123, %v1122
  %v1154 = vpack.c.b16 %v1125, %v1124
  %v1155 = vpack.c.b16 %v1127, %v1126
  %v1156 = vpack.c.b16 %v1129, %v1128
  %v1157 = vpack.c.b16 %v1131, %v1130
  %v1158 = vpack.c.b16 %v1133, %v1132
  %v1159 = vpack.c.b16 %v1134, %v1134
  %1185 = vmatprep.subr.bf16.mxu0 0
  %1186 = vmatpush1.bf16.msra.mxu0 %v260
  %1187 = vmatprep.subr.bf16.mxu0 0
  %1188 = vmatpush1.bf16.msra.mxu0 %v261
  %1189 = vmatprep.subr.bf16.mxu0 0
  %1190 = vmatpush1.bf16.msra.mxu0 %v262
  %1191 = vmatprep.subr.bf16.mxu0 0
  %1192 = vmatpush1.bf16.msra.mxu0 %v263
  %1193 = vmatprep.subr.bf16.mxu0 0
  %1194 = vmatpush1.bf16.msra.mxu0 %v264
  %1195 = vmatprep.subr.bf16.mxu0 0
  %1196 = vmatpush1.bf16.msra.mxu0 %v265
  %1197 = vmatprep.subr.bf16.mxu0 0
  %1198 = vmatpush1.bf16.msra.mxu0 %v266
  %1199 = vmatprep.subr.bf16.mxu0 0
  %1200 = vmatpush1.bf16.msra.mxu0 %v267
  %1201 = vmatprep.subr.bf16.mxu0 0
  %1202 = vmatpush1.bf16.msra.mxu0 0
  %1203 = vmatprep.subr.bf16.mxu0 0
  %1204 = vmatpush1.bf16.msra.mxu0 0
  %1205 = vmatprep.subr.bf16.mxu0 0
  %1206 = vmatpush1.bf16.msra.mxu0 0
  %1207 = vmatprep.subr.bf16.mxu0 0
  %1208 = vmatpush1.bf16.msra.mxu0 0
  %1209 = vmatprep.subr.bf16.mxu0 0
  %1210 = vmatpush1.bf16.msra.mxu0 0
  %1211 = vmatprep.subr.bf16.mxu0 0
  %1212 = vmatpush1.bf16.msra.mxu0 0
  %1213 = vmatprep.subr.bf16.mxu0 0
  %1214 = vmatpush1.bf16.msra.mxu0 0
  %1215 = vmatprep.subr.bf16.mxu0 0
  %1216 = vmatpush1.bf16.msra.mxu0 0
  %1217 = vmatprep.mubr.bf16.mxu0 0
  %1218 = vmatmul.mubr.bf16.gmra.mrb[0].mxu0 %v1135
  %v1219 = vpop.f32.mrb[0].mxu0
  %v1220 = vadd.f32 0.0, %v1219
  %v1221 = vpop.f32.mrb[0].mxu0
  %v1222 = vpop.f32.mrb[0].mxu0
  %v1223 = vadd.f32 0.0, %v1222
  %v1224 = vpop.f32.mrb[0].mxu0
  %1225 = vmatprep.mubr.bf16.mxu0 0
  %1226 = vmatmul.mubr.bf16.gmra.mrb[0].mxu0 %v1136
  %v1227 = vpop.f32.mrb[0].mxu0
  %v1228 = vadd.f32 0.0, %v1227
  %v1229 = vpop.f32.mrb[0].mxu0
  %v1230 = vpop.f32.mrb[0].mxu0
  %v1231 = vadd.f32 0.0, %v1230
  %v1232 = vpop.f32.mrb[0].mxu0
  %1233 = vmatprep.mubr.bf16.mxu0 0
  %1234 = vmatmul.mubr.bf16.gmra.mrb[0].mxu0 %v1137
  %v1235 = vpop.f32.mrb[0].mxu0
  %v1236 = vadd.f32 0.0, %v1235
  %v1237 = vpop.f32.mrb[0].mxu0
  %v1238 = vpop.f32.mrb[0].mxu0
  %v1239 = vadd.f32 0.0, %v1238
  %v1240 = vpop.f32.mrb[0].mxu0
  %1241 = vmatprep.mubr.bf16.mxu0 0
  %1242 = vmatmul.mubr.bf16.gmra.mrb[0].mxu0 %v1138
  %v1243 = vpop.f32.mrb[0].mxu0
  %v1244 = vadd.f32 0.0, %v1243
  %v1245 = vpop.f32.mrb[0].mxu0
  %v1246 = vpop.f32.mrb[0].mxu0
  %v1247 = vadd.f32 0.0, %v1246
  %v1248 = vpop.f32.mrb[0].mxu0
  %1249 = vmatprep.mubr.bf16.mxu0 0
  %1250 = vmatmul.mubr.bf16.gmra.mrb[0].mxu0 %v1139
  %v1251 = vpop.f32.mrb[0].mxu0
  %v1252 = vadd.f32 0.0, %v1251
  %v1253 = vpop.f32.mrb[0].mxu0
  %v1254 = vpop.f32.mrb[0].mxu0
  %v1255 = vadd.f32 0.0, %v1254
  %v1256 = vpop.f32.mrb[0].mxu0
  %1257 = vmatprep.mubr.bf16.mxu0 0
  %1258 = vmatmul.mubr.bf16.gmra.mrb[0].mxu0 %v1140
  %v1259 = vpop.f32.mrb[0].mxu0
  %v1260 = vadd.f32 0.0, %v1259
  %v1261 = vpop.f32.mrb[0].mxu0
  %v1262 = vpop.f32.mrb[0].mxu0
  %v1263 = vadd.f32 0.0, %v1262
  %v1264 = vpop.f32.mrb[0].mxu0
  %1265 = vmatprep.mubr.bf16.mxu0 0
  %1266 = vmatmul.mubr.bf16.gmra.mrb[0].mxu0 %v1141
  %v1267 = vpop.f32.mrb[0].mxu0
  %v1268 = vadd.f32 0.0, %v1267
  %v1269 = vpop.f32.mrb[0].mxu0
  %v1270 = vpop.f32.mrb[0].mxu0
  %v1271 = vadd.f32 0.0, %v1270
  %v1272 = vpop.f32.mrb[0].mxu0
  %1273 = vmatprep.mubr.bf16.mxu0 0
  %1274 = vmatmul.mubr.bf16.gmra.mrb[0].mxu0 %v1142
  %v1275 = vpop.f32.mrb[0].mxu0
  %v1276 = vadd.f32 0.0, %v1275
  %v1277 = vpop.f32.mrb[0].mxu0
  %v1278 = vpop.f32.mrb[0].mxu0
  %v1279 = vadd.f32 0.0, %v1278
  %v1280 = vpop.f32.mrb[0].mxu0
  %1281 = vmatprep.mubr.bf16.mxu0 0
  %1282 = vmatmul.mubr.bf16.gmra.mrb[0].mxu0 %v1143
  %v1283 = vpop.f32.mrb[0].mxu0
  %v1284 = vadd.f32 0.0, %v1283
  %v1285 = vpop.f32.mrb[0].mxu0
  %v1286 = vpop.f32.mrb[0].mxu0
  %v1287 = vadd.f32 0.0, %v1286
  %v1288 = vpop.f32.mrb[0].mxu0
  %1289 = vmatprep.mubr.bf16.mxu0 0
  %1290 = vmatmul.mubr.bf16.gmra.mrb[0].mxu0 %v1144
  %v1291 = vpop.f32.mrb[0].mxu0
  %v1292 = vadd.f32 0.0, %v1291
  %v1293 = vpop.f32.mrb[0].mxu0
  %v1294 = vpop.f32.mrb[0].mxu0
  %v1295 = vadd.f32 0.0, %v1294
  %v1296 = vpop.f32.mrb[0].mxu0
  %1297 = vmatprep.mubr.bf16.mxu0 0
  %1298 = vmatmul.mubr.bf16.gmra.mrb[0].mxu0 %v1145
  %v1299 = vpop.f32.mrb[0].mxu0
  %v1300 = vadd.f32 0.0, %v1299
  %v1301 = vpop.f32.mrb[0].mxu0
  %v1302 = vpop.f32.mrb[0].mxu0
  %v1303 = vadd.f32 0.0, %v1302
  %v1304 = vpop.f32.mrb[0].mxu0
  %1305 = vmatprep.mubr.bf16.mxu0 0
  %1306 = vmatmul.mubr.bf16.gmra.mrb[0].mxu0 %v1146
  %v1307 = vpop.f32.mrb[0].mxu0
  %v1308 = vadd.f32 0.0, %v1307
  %v1309 = vpop.f32.mrb[0].mxu0
  %v1310 = vpop.f32.mrb[0].mxu0
  %v1311 = vadd.f32 0.0, %v1310
  %v1312 = vpop.f32.mrb[0].mxu0
  %1313 = vmatprep.mubr.bf16.mxu0 0
  %1314 = vmatmul.mubr.bf16.gmra.mrb[0].mxu0 %v1147
  %v1315 = vpop.f32.mrb[0].mxu0
  %v1316 = vadd.f32 0.0, %v1315
  %v1317 = vpop.f32.mrb[0].mxu0
  %v1318 = vpop.f32.mrb[0].mxu0
  %v1319 = vadd.f32 0.0, %v1318
  %v1320 = vpop.f32.mrb[0].mxu0
  %1321 = vmatprep.mubr.bf16.mxu0 0
  %1322 = vmatmul.mubr.bf16.gmra.mrb[0].mxu0 %v1148
  %v1323 = vpop.f32.mrb[0].mxu0
  %v1324 = vadd.f32 0.0, %v1323
  %v1325 = vpop.f32.mrb[0].mxu0
  %v1326 = vpop.f32.mrb[0].mxu0
  %v1327 = vadd.f32 0.0, %v1326
  %v1328 = vpop.f32.mrb[0].mxu0
  %1329 = vmatprep.mubr.bf16.mxu0 0
  %1330 = vmatmul.mubr.bf16.gmra.mrb[0].mxu0 %v1149
  %v1331 = vpop.f32.mrb[0].mxu0
  %v1332 = vadd.f32 0.0, %v1331
  %v1333 = vpop.f32.mrb[0].mxu0
  %v1334 = vpop.f32.mrb[0].mxu0
  %v1335 = vadd.f32 0.0, %v1334
  %v1336 = vpop.f32.mrb[0].mxu0
  %1337 = vmatprep.mubr.bf16.mxu0 0
  %1338 = vmatmul.mubr.bf16.gmra.mrb[0].mxu0 %v1150
  %v1339 = vpop.f32.mrb[0].mxu0
  %v1340 = vadd.f32 0.0, %v1339
  %v1341 = vpop.f32.mrb[0].mxu0
  %v1342 = vpop.f32.mrb[0].mxu0
  %v1343 = vadd.f32 0.0, %v1342
  %v1344 = vpop.f32.mrb[0].mxu0
  %1345 = vmatprep.mubr.bf16.mxu0 0
  %1346 = vmatmul.mubr.bf16.gmra.mrb[0].mxu0 %v1151
  %v1347 = vpop.f32.mrb[0].mxu0
  %v1348 = vadd.f32 0.0, %v1347
  %v1349 = vpop.f32.mrb[0].mxu0
  %v1350 = vpop.f32.mrb[0].mxu0
  %v1351 = vadd.f32 0.0, %v1350
  %v1352 = vpop.f32.mrb[0].mxu0
  %1353 = vmatprep.mubr.bf16.mxu0 0
  %1354 = vmatmul.mubr.bf16.gmra.mrb[0].mxu0 %v1152
  %v1355 = vpop.f32.mrb[0].mxu0
  %v1356 = vadd.f32 0.0, %v1355
  %v1357 = vpop.f32.mrb[0].mxu0
  %v1358 = vpop.f32.mrb[0].mxu0
  %v1359 = vadd.f32 0.0, %v1358
  %v1360 = vpop.f32.mrb[0].mxu0
  %1361 = vmatprep.mubr.bf16.mxu0 0
  %1362 = vmatmul.mubr.bf16.gmra.mrb[0].mxu0 %v1153
  %v1363 = vpop.f32.mrb[0].mxu0
  %v1364 = vadd.f32 0.0, %v1363
  %v1365 = vpop.f32.mrb[0].mxu0
  %v1366 = vpop.f32.mrb[0].mxu0
  %v1367 = vadd.f32 0.0, %v1366
  %v1368 = vpop.f32.mrb[0].mxu0
  %1369 = vmatprep.mubr.bf16.mxu0 0
  %1370 = vmatmul.mubr.bf16.gmra.mrb[0].mxu0 %v1154
  %v1371 = vpop.f32.mrb[0].mxu0
  %v1372 = vadd.f32 0.0, %v1371
  %v1373 = vpop.f32.mrb[0].mxu0
  %v1374 = vpop.f32.mrb[0].mxu0
  %v1375 = vadd.f32 0.0, %v1374
  %v1376 = vpop.f32.mrb[0].mxu0
  %1377 = vmatprep.mubr.bf16.mxu0 0
  %1378 = vmatmul.mubr.bf16.gmra.mrb[0].mxu0 %v1155
  %v1379 = vpop.f32.mrb[0].mxu0
  %v1380 = vadd.f32 0.0, %v1379
  %v1381 = vpop.f32.mrb[0].mxu0
  %v1382 = vpop.f32.mrb[0].mxu0
  %v1383 = vadd.f32 0.0, %v1382
  %v1384 = vpop.f32.mrb[0].mxu0
  %1385 = vmatprep.mubr.bf16.mxu0 0
  %1386 = vmatmul.mubr.bf16.gmra.mrb[0].mxu0 %v1156
  %v1387 = vpop.f32.mrb[0].mxu0
  %v1388 = vadd.f32 0.0, %v1387
  %v1389 = vpop.f32.mrb[0].mxu0
  %v1390 = vpop.f32.mrb[0].mxu0
  %v1391 = vadd.f32 0.0, %v1390
  %v1392 = vpop.f32.mrb[0].mxu0
  %1393 = vmatprep.mubr.bf16.mxu0 0
  %1394 = vmatmul.mubr.bf16.gmra.mrb[0].mxu0 %v1157
  %v1395 = vpop.f32.mrb[0].mxu0
  %v1396 = vadd.f32 0.0, %v1395
  %v1397 = vpop.f32.mrb[0].mxu0
  %v1398 = vpop.f32.mrb[0].mxu0
  %v1399 = vadd.f32 0.0, %v1398
  %v1400 = vpop.f32.mrb[0].mxu0
  %1401 = vmatprep.mubr.bf16.mxu0 0
  %1402 = vmatmul.mubr.bf16.gmra.mrb[0].mxu0 %v1158
  %v1403 = vpop.f32.mrb[0].mxu0
  %v1404 = vadd.f32 0.0, %v1403
  %v1405 = vpop.f32.mrb[0].mxu0
  %v1406 = vpop.f32.mrb[0].mxu0
  %v1407 = vadd.f32 0.0, %v1406
  %v1408 = vpop.f32.mrb[0].mxu0
  %1409 = vmatprep.mubr.bf16.mxu0 0
  %1410 = vmatmul.mubr.bf16.gmra.mrb[0].mxu0 %v1159
  %v1411 = vpop.f32.mrb[0].mxu0
  %v1412 = vadd.f32 0.0, %v1411
  %v1413 = vpop.f32.mrb[0].mxu0
  %v1414 = vpop.f32.mrb[0].mxu0
  %v1415 = vpop.f32.mrb[0].mxu0
  %1416 = vdwg.mxu0
  %v1417 = vmax.f32 %v938, %v1220
  %v1418 = vmax.f32 %v939, %v1223
  %v1419 = vmax.f32 %v940, %v1228
  %v1420 = vmax.f32 %v941, %v1231
  %v1421 = vmax.f32 %v942, %v1236
  %v1422 = vmax.f32 %v943, %v1239
  %v1423 = vmax.f32 %v944, %v1244
  %v1424 = vmax.f32 %v945, %v1247
  %v1425 = vmax.f32 %v946, %v1252
  %v1426 = vmax.f32 %v947, %v1255
  %v1427 = vmax.f32 %v948, %v1260
  %v1428 = vmax.f32 %v949, %v1263
  %v1429 = vmax.f32 %v950, %v1268
  %v1430 = vmax.f32 %v951, %v1271
  %v1431 = vmax.f32 %v952, %v1276
  %v1432 = vmax.f32 %v953, %v1279
  %v1433 = vmax.f32 %v954, %v1284
  %v1434 = vmax.f32 %v955, %v1287
  %v1435 = vmax.f32 %v956, %v1292
  %v1436 = vmax.f32 %v957, %v1295
  %v1437 = vmax.f32 %v958, %v1300
  %v1438 = vmax.f32 %v959, %v1303
  %v1439 = vmax.f32 %v960, %v1308
  %v1440 = vmax.f32 %v961, %v1311
  %v1441 = vmax.f32 %v962, %v1316
  %v1442 = vmax.f32 %v963, %v1319
  %v1443 = vmax.f32 %v964, %v1324
  %v1444 = vmax.f32 %v965, %v1327
  %v1445 = vmax.f32 %v966, %v1332
  %v1446 = vmax.f32 %v967, %v1335
  %v1447 = vmax.f32 %v968, %v1340
  %v1448 = vmax.f32 %v969, %v1343
  %v1449 = vmax.f32 %v970, %v1348
  %v1450 = vmax.f32 %v971, %v1351
  %v1451 = vmax.f32 %v972, %v1356
  %v1452 = vmax.f32 %v973, %v1359
  %v1453 = vmax.f32 %v974, %v1364
  %v1454 = vmax.f32 %v975, %v1367
  %v1455 = vmax.f32 %v976, %v1372
  %v1456 = vmax.f32 %v977, %v1375
  %v1457 = vmax.f32 %v978, %v1380
  %v1458 = vmax.f32 %v979, %v1383
  %v1459 = vmax.f32 %v980, %v1388
  %v1460 = vmax.f32 %v981, %v1391
  %v1461 = vmax.f32 %v982, %v1396
  %v1462 = vmax.f32 %v983, %v1399
  %v1463 = vmax.f32 %v984, %v1404
  %v1464 = vmax.f32 %v985, %v1407
  %v1465 = vmax.f32 %v986, %v1412
  %s1466 = scalar_lea.vmem %s0, 588
  %v1467 = vld [vmem:[%s1466] sm:$0xf]
  %v1468 = vld [vmem:[%s1466 + $0x4] sm:$0xf]
  %v1469 = vld [vmem:[%s1466 + $0x8] sm:$0xf]
  %v1470 = vld [vmem:[%s1466 + $0xc] sm:$0xf]
  %v1471 = vld [vmem:[%s1466 + $0x10] sm:$0xf]
  %v1472 = vld [vmem:[%s1466 + $0x14] sm:$0xf]
  %v1473 = vld [vmem:[%s1466 + $0x18] sm:$0xf]
  %v1474 = vld [vmem:[%s1466 + $0x1c] sm:$0xf]
  %v1475 = vld [vmem:[%s1466 + $0x20] sm:$0xf]
  %v1476 = vld [vmem:[%s1466 + $0x24] sm:$0xf]
  %v1477 = vld [vmem:[%s1466 + $0x28] sm:$0xf]
  %v1478 = vld [vmem:[%s1466 + $0x2c] sm:$0xf]
  %v1479 = vld [vmem:[%s1466 + $0x30] sm:$0xf]
  %v1480 = vld [vmem:[%s1466 + $0x34] sm:$0xf]
  %v1481 = vld [vmem:[%s1466 + $0x38] sm:$0xf]
  %v1482 = vld [vmem:[%s1466 + $0x3c] sm:$0xf]
  %v1483 = vld [vmem:[%s1466 + $0x40] sm:$0xf]
  %v1484 = vld [vmem:[%s1466 + $0x44] sm:$0xf]
  %v1485 = vld [vmem:[%s1466 + $0x48] sm:$0xf]
  %v1486 = vld [vmem:[%s1466 + $0x4c] sm:$0xf]
  %v1487 = vld [vmem:[%s1466 + $0x50] sm:$0xf]
  %v1488 = vld [vmem:[%s1466 + $0x54] sm:$0xf]
  %v1489 = vld [vmem:[%s1466 + $0x58] sm:$0xf]
  %v1490 = vld [vmem:[%s1466 + $0x5c] sm:$0xf]
  %v1491 = vld [vmem:[%s1466 + $0x60] sm:$0xf]
  %v1492 = vld [vmem:[%s1466 + $0x64] sm:$0xf]
  %v1493 = vld [vmem:[%s1466 + $0x68] sm:$0xf]
  %v1494 = vld [vmem:[%s1466 + $0x6c] sm:$0xf]
  %v1495 = vld [vmem:[%s1466 + $0x70] sm:$0xf]
  %v1496 = vld [vmem:[%s1466 + $0x74] sm:$0xf]
  %v1497 = vld [vmem:[%s1466 + $0x78] sm:$0xf]
  %v1498 = vld [vmem:[%s1466 + $0x7c] sm:$0xf]
  %v1499 = vld [vmem:[%s1466 + $0x80] sm:$0xf]
  %v1500 = vld [vmem:[%s1466 + $0x84] sm:$0xf]
  %v1501 = vld [vmem:[%s1466 + $0x88] sm:$0xf]
  %v1502 = vld [vmem:[%s1466 + $0x8c] sm:$0xf]
  %v1503 = vld [vmem:[%s1466 + $0x90] sm:$0xf]
  %v1504 = vld [vmem:[%s1466 + $0x94] sm:$0xf]
  %v1505 = vld [vmem:[%s1466 + $0x98] sm:$0xf]
  %v1506 = vld [vmem:[%s1466 + $0x9c] sm:$0xf]
  %v1507 = vld [vmem:[%s1466 + $0xa0] sm:$0xf]
  %v1508 = vld [vmem:[%s1466 + $0xa4] sm:$0xf]
  %v1509 = vld [vmem:[%s1466 + $0xa8] sm:$0xf]
  %v1510 = vld [vmem:[%s1466 + $0xac] sm:$0xf]
  %v1511 = vld [vmem:[%s1466 + $0xb0] sm:$0xf]
  %v1512 = vld [vmem:[%s1466 + $0xb4] sm:$0xf]
  %v1513 = vld [vmem:[%s1466 + $0xb8] sm:$0xf]
  %v1514 = vld [vmem:[%s1466 + $0xbc] sm:$0xf]
  %v1515 = vld [vmem:[%s1466 + $0xc0] sm:$0xf]
  %v1565 = vunpack.c.l.b16 %v1467
  %v1566 = vunpack.c.l.b16 %v1468
  %v1567 = vunpack.c.l.b16 %v1469
  %v1568 = vunpack.c.l.b16 %v1470
  %v1569 = vunpack.c.l.b16 %v1471
  %v1570 = vunpack.c.l.b16 %v1472
  %v1571 = vunpack.c.l.b16 %v1473
  %v1572 = vunpack.c.l.b16 %v1474
  %v1573 = vunpack.c.l.b16 %v1475
  %v1574 = vunpack.c.l.b16 %v1476
  %v1575 = vunpack.c.l.b16 %v1477
  %v1576 = vunpack.c.l.b16 %v1478
  %v1577 = vunpack.c.l.b16 %v1479
  %v1578 = vunpack.c.l.b16 %v1480
  %v1579 = vunpack.c.l.b16 %v1481
  %v1580 = vunpack.c.l.b16 %v1482
  %v1581 = vunpack.c.l.b16 %v1483
  %v1582 = vunpack.c.l.b16 %v1484
  %v1583 = vunpack.c.l.b16 %v1485
  %v1584 = vunpack.c.l.b16 %v1486
  %v1585 = vunpack.c.l.b16 %v1487
  %v1586 = vunpack.c.l.b16 %v1488
  %v1587 = vunpack.c.l.b16 %v1489
  %v1588 = vunpack.c.l.b16 %v1490
  %v1589 = vunpack.c.l.b16 %v1491
  %v1590 = vunpack.c.l.b16 %v1492
  %v1591 = vunpack.c.l.b16 %v1493
  %v1592 = vunpack.c.l.b16 %v1494
  %v1593 = vunpack.c.l.b16 %v1495
  %v1594 = vunpack.c.l.b16 %v1496
  %v1595 = vunpack.c.l.b16 %v1497
  %v1596 = vunpack.c.l.b16 %v1498
  %v1597 = vunpack.c.l.b16 %v1499
  %v1598 = vunpack.c.l.b16 %v1500
  %v1599 = vunpack.c.l.b16 %v1501
  %v1600 = vunpack.c.l.b16 %v1502
  %v1601 = vunpack.c.l.b16 %v1503
  %v1602 = vunpack.c.l.b16 %v1504
  %v1603 = vunpack.c.l.b16 %v1505
  %v1604 = vunpack.c.l.b16 %v1506
  %v1605 = vunpack.c.l.b16 %v1507
  %v1606 = vunpack.c.l.b16 %v1508
  %v1607 = vunpack.c.l.b16 %v1509
  %v1608 = vunpack.c.l.b16 %v1510
  %v1609 = vunpack.c.l.b16 %v1511
  %v1610 = vunpack.c.l.b16 %v1512
  %v1611 = vunpack.c.l.b16 %v1513
  %v1612 = vunpack.c.l.b16 %v1514
  %v1613 = vunpack.c.l.b16 %v1515
  %v1614 = vpack.c.b16 %v1566, %v1565
  %v1615 = vpack.c.b16 %v1568, %v1567
  %v1616 = vpack.c.b16 %v1570, %v1569
  %v1617 = vpack.c.b16 %v1572, %v1571
  %v1618 = vpack.c.b16 %v1574, %v1573
  %v1619 = vpack.c.b16 %v1576, %v1575
  %v1620 = vpack.c.b16 %v1578, %v1577
  %v1621 = vpack.c.b16 %v1580, %v1579
  %v1622 = vpack.c.b16 %v1582, %v1581
  %v1623 = vpack.c.b16 %v1584, %v1583
  %v1624 = vpack.c.b16 %v1586, %v1585
  %v1625 = vpack.c.b16 %v1588, %v1587
  %v1626 = vpack.c.b16 %v1590, %v1589
  %v1627 = vpack.c.b16 %v1592, %v1591
  %v1628 = vpack.c.b16 %v1594, %v1593
  %v1629 = vpack.c.b16 %v1596, %v1595
  %v1630 = vpack.c.b16 %v1598, %v1597
  %v1631 = vpack.c.b16 %v1600, %v1599
  %v1632 = vpack.c.b16 %v1602, %v1601
  %v1633 = vpack.c.b16 %v1604, %v1603
  %v1634 = vpack.c.b16 %v1606, %v1605
  %v1635 = vpack.c.b16 %v1608, %v1607
  %v1636 = vpack.c.b16 %v1610, %v1609
  %v1637 = vpack.c.b16 %v1612, %v1611
  %v1638 = vpack.c.b16 %v1613, %v1613
  %1664 = vmatprep.subr.bf16.mxu0 0
  %1665 = vmatpush1.bf16.msra.mxu0 %v260
  %1666 = vmatprep.subr.bf16.mxu0 0
  %1667 = vmatpush1.bf16.msra.mxu0 %v261
  %1668 = vmatprep.subr.bf16.mxu0 0
  %1669 = vmatpush1.bf16.msra.mxu0 %v262
  %1670 = vmatprep.subr.bf16.mxu0 0
  %1671 = vmatpush1.bf16.msra.mxu0 %v263
  %1672 = vmatprep.subr.bf16.mxu0 0
  %1673 = vmatpush1.bf16.msra.mxu0 %v264
  %1674 = vmatprep.subr.bf16.mxu0 0
  %1675 = vmatpush1.bf16.msra.mxu0 %v265
  %1676 = vmatprep.subr.bf16.mxu0 0
  %1677 = vmatpush1.bf16.msra.mxu0 %v266
  %1678 = vmatprep.subr.bf16.mxu0 0
  %1679 = vmatpush1.bf16.msra.mxu0 %v267
  %1680 = vmatprep.subr.bf16.mxu0 0
  %1681 = vmatpush1.bf16.msra.mxu0 0
  %1682 = vmatprep.subr.bf16.mxu0 0
  %1683 = vmatpush1.bf16.msra.mxu0 0
  %1684 = vmatprep.subr.bf16.mxu0 0
  %1685 = vmatpush1.bf16.msra.mxu0 0
  %1686 = vmatprep.subr.bf16.mxu0 0
  %1687 = vmatpush1.bf16.msra.mxu0 0
  %1688 = vmatprep.subr.bf16.mxu0 0
  %1689 = vmatpush1.bf16.msra.mxu0 0
  %1690 = vmatprep.subr.bf16.mxu0 0
  %1691 = vmatpush1.bf16.msra.mxu0 0
  %1692 = vmatprep.subr.bf16.mxu0 0
  %1693 = vmatpush1.bf16.msra.mxu0 0
  %1694 = vmatprep.subr.bf16.mxu0 0
  %1695 = vmatpush1.bf16.msra.mxu0 0
  %1696 = vmatprep.mubr.bf16.mxu0 0
  %1697 = vmatmul.mubr.bf16.gmra.mrb[0].mxu0 %v1614
  %v1698 = vpop.f32.mrb[0].mxu0
  %v1699 = vadd.f32 0.0, %v1698
  %v1700 = vpop.f32.mrb[0].mxu0
  %v1701 = vpop.f32.mrb[0].mxu0
  %v1702 = vadd.f32 0.0, %v1701
  %v1703 = vpop.f32.mrb[0].mxu0
  %1704 = vmatprep.mubr.bf16.mxu0 0
  %1705 = vmatmul.mubr.bf16.gmra.mrb[0].mxu0 %v1615
  %v1706 = vpop.f32.mrb[0].mxu0
  %v1707 = vadd.f32 0.0, %v1706
  %v1708 = vpop.f32.mrb[0].mxu0
  %v1709 = vpop.f32.mrb[0].mxu0
  %v1710 = vadd.f32 0.0, %v1709
  %v1711 = vpop.f32.mrb[0].mxu0
  %1712 = vmatprep.mubr.bf16.mxu0 0
  %1713 = vmatmul.mubr.bf16.gmra.mrb[0].mxu0 %v1616
  %v1714 = vpop.f32.mrb[0].mxu0
  %v1715 = vadd.f32 0.0, %v1714
  %v1716 = vpop.f32.mrb[0].mxu0
  %v1717 = vpop.f32.mrb[0].mxu0
  %v1718 = vadd.f32 0.0, %v1717
  %v1719 = vpop.f32.mrb[0].mxu0
  %1720 = vmatprep.mubr.bf16.mxu0 0
  %1721 = vmatmul.mubr.bf16.gmra.mrb[0].mxu0 %v1617
  %v1722 = vpop.f32.mrb[0].mxu0
  %v1723 = vadd.f32 0.0, %v1722
  %v1724 = vpop.f32.mrb[0].mxu0
  %v1725 = vpop.f32.mrb[0].mxu0
  %v1726 = vadd.f32 0.0, %v1725
  %v1727 = vpop.f32.mrb[0].mxu0
  %1728 = vmatprep.mubr.bf16.mxu0 0
  %1729 = vmatmul.mubr.bf16.gmra.mrb[0].mxu0 %v1618
  %v1730 = vpop.f32.mrb[0].mxu0
  %v1731 = vadd.f32 0.0, %v1730
  %v1732 = vpop.f32.mrb[0].mxu0
  %v1733 = vpop.f32.mrb[0].mxu0
  %v1734 = vadd.f32 0.0, %v1733
  %v1735 = vpop.f32.mrb[0].mxu0
  %1736 = vmatprep.mubr.bf16.mxu0 0
  %1737 = vmatmul.mubr.bf16.gmra.mrb[0].mxu0 %v1619
  %v1738 = vpop.f32.mrb[0].mxu0
  %v1739 = vadd.f32 0.0, %v1738
  %v1740 = vpop.f32.mrb[0].mxu0
  %v1741 = vpop.f32.mrb[0].mxu0
  %v1742 = vadd.f32 0.0, %v1741
  %v1743 = vpop.f32.mrb[0].mxu0
  %1744 = vmatprep.mubr.bf16.mxu0 0
  %1745 = vmatmul.mubr.bf16.gmra.mrb[0].mxu0 %v1620
  %v1746 = vpop.f32.mrb[0].mxu0
  %v1747 = vadd.f32 0.0, %v1746
  %v1748 = vpop.f32.mrb[0].mxu0
  %v1749 = vpop.f32.mrb[0].mxu0
  %v1750 = vadd.f32 0.0, %v1749
  %v1751 = vpop.f32.mrb[0].mxu0
  %1752 = vmatprep.mubr.bf16.mxu0 0
  %1753 = vmatmul.mubr.bf16.gmra.mrb[0].mxu0 %v1621
  %v1754 = vpop.f32.mrb[0].mxu0
  %v1755 = vadd.f32 0.0, %v1754
  %v1756 = vpop.f32.mrb[0].mxu0
  %v1757 = vpop.f32.mrb[0].mxu0
  %v1758 = vadd.f32 0.0, %v1757
  %v1759 = vpop.f32.mrb[0].mxu0
  %1760 = vmatprep.mubr.bf16.mxu0 0
  %1761 = vmatmul.mubr.bf16.gmra.mrb[0].mxu0 %v1622
  %v1762 = vpop.f32.mrb[0].mxu0
  %v1763 = vadd.f32 0.0, %v1762
  %v1764 = vpop.f32.mrb[0].mxu0
  %v1765 = vpop.f32.mrb[0].mxu0
  %v1766 = vadd.f32 0.0, %v1765
  %v1767 = vpop.f32.mrb[0].mxu0
  %1768 = vmatprep.mubr.bf16.mxu0 0
  %1769 = vmatmul.mubr.bf16.gmra.mrb[0].mxu0 %v1623
  %v1770 = vpop.f32.mrb[0].mxu0
  %v1771 = vadd.f32 0.0, %v1770
  %v1772 = vpop.f32.mrb[0].mxu0
  %v1773 = vpop.f32.mrb[0].mxu0
  %v1774 = vadd.f32 0.0, %v1773
  %v1775 = vpop.f32.mrb[0].mxu0
  %1776 = vmatprep.mubr.bf16.mxu0 0
  %1777 = vmatmul.mubr.bf16.gmra.mrb[0].mxu0 %v1624
  %v1778 = vpop.f32.mrb[0].mxu0
  %v1779 = vadd.f32 0.0, %v1778
  %v1780 = vpop.f32.mrb[0].mxu0
  %v1781 = vpop.f32.mrb[0].mxu0
  %v1782 = vadd.f32 0.0, %v1781
  %v1783 = vpop.f32.mrb[0].mxu0
  %1784 = vmatprep.mubr.bf16.mxu0 0
  %1785 = vmatmul.mubr.bf16.gmra.mrb[0].mxu0 %v1625
  %v1786 = vpop.f32.mrb[0].mxu0
  %v1787 = vadd.f32 0.0, %v1786
  %v1788 = vpop.f32.mrb[0].mxu0
  %v1789 = vpop.f32.mrb[0].mxu0
  %v1790 = vadd.f32 0.0, %v1789
  %v1791 = vpop.f32.mrb[0].mxu0
  %1792 = vmatprep.mubr.bf16.mxu0 0
  %1793 = vmatmul.mubr.bf16.gmra.mrb[0].mxu0 %v1626
  %v1794 = vpop.f32.mrb[0].mxu0
  %v1795 = vadd.f32 0.0, %v1794
  %v1796 = vpop.f32.mrb[0].mxu0
  %v1797 = vpop.f32.mrb[0].mxu0
  %v1798 = vadd.f32 0.0, %v1797
  %v1799 = vpop.f32.mrb[0].mxu0
  %1800 = vmatprep.mubr.bf16.mxu0 0
  %1801 = vmatmul.mubr.bf16.gmra.mrb[0].mxu0 %v1627
  %v1802 = vpop.f32.mrb[0].mxu0
  %v1803 = vadd.f32 0.0, %v1802
  %v1804 = vpop.f32.mrb[0].mxu0
  %v1805 = vpop.f32.mrb[0].mxu0
  %v1806 = vadd.f32 0.0, %v1805
  %v1807 = vpop.f32.mrb[0].mxu0
  %1808 = vmatprep.mubr.bf16.mxu0 0
  %1809 = vmatmul.mubr.bf16.gmra.mrb[0].mxu0 %v1628
  %v1810 = vpop.f32.mrb[0].mxu0
  %v1811 = vadd.f32 0.0, %v1810
  %v1812 = vpop.f32.mrb[0].mxu0
  %v1813 = vpop.f32.mrb[0].mxu0
  %v1814 = vadd.f32 0.0, %v1813
  %v1815 = vpop.f32.mrb[0].mxu0
  %1816 = vmatprep.mubr.bf16.mxu0 0
  %1817 = vmatmul.mubr.bf16.gmra.mrb[0].mxu0 %v1629
  %v1818 = vpop.f32.mrb[0].mxu0
  %v1819 = vadd.f32 0.0, %v1818
  %v1820 = vpop.f32.mrb[0].mxu0
  %v1821 = vpop.f32.mrb[0].mxu0
  %v1822 = vadd.f32 0.0, %v1821
  %v1823 = vpop.f32.mrb[0].mxu0
  %1824 = vmatprep.mubr.bf16.mxu0 0
  %1825 = vmatmul.mubr.bf16.gmra.mrb[0].mxu0 %v1630
  %v1826 = vpop.f32.mrb[0].mxu0
  %v1827 = vadd.f32 0.0, %v1826
  %v1828 = vpop.f32.mrb[0].mxu0
  %v1829 = vpop.f32.mrb[0].mxu0
  %v1830 = vadd.f32 0.0, %v1829
  %v1831 = vpop.f32.mrb[0].mxu0
  %1832 = vmatprep.mubr.bf16.mxu0 0
  %1833 = vmatmul.mubr.bf16.gmra.mrb[0].mxu0 %v1631
  %v1834 = vpop.f32.mrb[0].mxu0
  %v1835 = vadd.f32 0.0, %v1834
  %v1836 = vpop.f32.mrb[0].mxu0
  %v1837 = vpop.f32.mrb[0].mxu0
  %v1838 = vadd.f32 0.0, %v1837
  %v1839 = vpop.f32.mrb[0].mxu0
  %1840 = vmatprep.mubr.bf16.mxu0 0
  %1841 = vmatmul.mubr.bf16.gmra.mrb[0].mxu0 %v1632
  %v1842 = vpop.f32.mrb[0].mxu0
  %v1843 = vadd.f32 0.0, %v1842
  %v1844 = vpop.f32.mrb[0].mxu0
  %v1845 = vpop.f32.mrb[0].mxu0
  %v1846 = vadd.f32 0.0, %v1845
  %v1847 = vpop.f32.mrb[0].mxu0
  %1848 = vmatprep.mubr.bf16.mxu0 0
  %1849 = vmatmul.mubr.bf16.gmra.mrb[0].mxu0 %v1633
  %v1850 = vpop.f32.mrb[0].mxu0
  %v1851 = vadd.f32 0.0, %v1850
  %v1852 = vpop.f32.mrb[0].mxu0
  %v1853 = vpop.f32.mrb[0].mxu0
  %v1854 = vadd.f32 0.0, %v1853
  %v1855 = vpop.f32.mrb[0].mxu0
  %1856 = vmatprep.mubr.bf16.mxu0 0
  %1857 = vmatmul.mubr.bf16.gmra.mrb[0].mxu0 %v1634
  %v1858 = vpop.f32.mrb[0].mxu0
  %v1859 = vadd.f32 0.0, %v1858
  %v1860 = vpop.f32.mrb[0].mxu0
  %v1861 = vpop.f32.mrb[0].mxu0
  %v1862 = vadd.f32 0.0, %v1861
  %v1863 = vpop.f32.mrb[0].mxu0
  %1864 = vmatprep.mubr.bf16.mxu0 0
  %1865 = vmatmul.mubr.bf16.gmra.mrb[0].mxu0 %v1635
  %v1866 = vpop.f32.mrb[0].mxu0
  %v1867 = vadd.f32 0.0, %v1866
  %v1868 = vpop.f32.mrb[0].mxu0
  %v1869 = vpop.f32.mrb[0].mxu0
  %v1870 = vadd.f32 0.0, %v1869
  %v1871 = vpop.f32.mrb[0].mxu0
  %1872 = vmatprep.mubr.bf16.mxu0 0
  %1873 = vmatmul.mubr.bf16.gmra.mrb[0].mxu0 %v1636
  %v1874 = vpop.f32.mrb[0].mxu0
  %v1875 = vadd.f32 0.0, %v1874
  %v1876 = vpop.f32.mrb[0].mxu0
  %v1877 = vpop.f32.mrb[0].mxu0
  %v1878 = vadd.f32 0.0, %v1877
  %v1879 = vpop.f32.mrb[0].mxu0
  %1880 = vmatprep.mubr.bf16.mxu0 0
  %1881 = vmatmul.mubr.bf16.gmra.mrb[0].mxu0 %v1637
  %v1882 = vpop.f32.mrb[0].mxu0
  %v1883 = vadd.f32 0.0, %v1882
  %v1884 = vpop.f32.mrb[0].mxu0
  %v1885 = vpop.f32.mrb[0].mxu0
  %v1886 = vadd.f32 0.0, %v1885
  %v1887 = vpop.f32.mrb[0].mxu0
  %1888 = vmatprep.mubr.bf16.mxu0 0
  %1889 = vmatmul.mubr.bf16.gmra.mrb[0].mxu0 %v1638
  %v1890 = vpop.f32.mrb[0].mxu0
  %v1891 = vadd.f32 0.0, %v1890
  %v1892 = vpop.f32.mrb[0].mxu0
  %v1893 = vpop.f32.mrb[0].mxu0
  %v1894 = vpop.f32.mrb[0].mxu0
  %1895 = vdwg.mxu0
  %v1896 = vmax.f32 %v1417, %v1699
  %v1897 = vmax.f32 %v1418, %v1702
  %v1898 = vmax.f32 %v1419, %v1707
  %v1899 = vmax.f32 %v1420, %v1710
  %v1900 = vmax.f32 %v1421, %v1715
  %v1901 = vmax.f32 %v1422, %v1718
  %v1902 = vmax.f32 %v1423, %v1723
  %v1903 = vmax.f32 %v1424, %v1726
  %v1904 = vmax.f32 %v1425, %v1731
  %v1905 = vmax.f32 %v1426, %v1734
  %v1906 = vmax.f32 %v1427, %v1739
  %v1907 = vmax.f32 %v1428, %v1742
  %v1908 = vmax.f32 %v1429, %v1747
  %v1909 = vmax.f32 %v1430, %v1750
  %v1910 = vmax.f32 %v1431, %v1755
  %v1911 = vmax.f32 %v1432, %v1758
  %v1912 = vmax.f32 %v1433, %v1763
  %v1913 = vmax.f32 %v1434, %v1766
  %v1914 = vmax.f32 %v1435, %v1771
  %v1915 = vmax.f32 %v1436, %v1774
  %v1916 = vmax.f32 %v1437, %v1779
  %v1917 = vmax.f32 %v1438, %v1782
  %v1918 = vmax.f32 %v1439, %v1787
  %v1919 = vmax.f32 %v1440, %v1790
  %v1920 = vmax.f32 %v1441, %v1795
  %v1921 = vmax.f32 %v1442, %v1798
  %v1922 = vmax.f32 %v1443, %v1803
  %v1923 = vmax.f32 %v1444, %v1806
  %v1924 = vmax.f32 %v1445, %v1811
  %v1925 = vmax.f32 %v1446, %v1814
  %v1926 = vmax.f32 %v1447, %v1819
  %v1927 = vmax.f32 %v1448, %v1822
  %v1928 = vmax.f32 %v1449, %v1827
  %v1929 = vmax.f32 %v1450, %v1830
  %v1930 = vmax.f32 %v1451, %v1835
  %v1931 = vmax.f32 %v1452, %v1838
  %v1932 = vmax.f32 %v1453, %v1843
  %v1933 = vmax.f32 %v1454, %v1846
  %v1934 = vmax.f32 %v1455, %v1851
  %v1935 = vmax.f32 %v1456, %v1854
  %v1936 = vmax.f32 %v1457, %v1859
  %v1937 = vmax.f32 %v1458, %v1862
  %v1938 = vmax.f32 %v1459, %v1867
  %v1939 = vmax.f32 %v1460, %v1870
  %v1940 = vmax.f32 %v1461, %v1875
  %v1941 = vmax.f32 %v1462, %v1878
  %v1942 = vmax.f32 %v1463, %v1883
  %v1943 = vmax.f32 %v1464, %v1886
  %v1944 = vmax.f32 %v1465, %v1891
  %v1945 = vld [vmem:[%s2] sm:$0x1]
  %v1947 = vlaneseq
  %v1948 = vshrl.u32 %v1947, 7
  %v1949 = vsub.s32 0, %v1948
  %v1950 = vrot.slane %v1945, %v1949
  %v1952 = vadd.f32 %v1896, %v1950
  %v1953 = vadd.f32 %v1897, %v1950
  %v1954 = vadd.f32 %v1898, %v1950
  %v1955 = vadd.f32 %v1899, %v1950
  %v1956 = vadd.f32 %v1900, %v1950
  %v1957 = vadd.f32 %v1901, %v1950
  %v1958 = vadd.f32 %v1902, %v1950
  %v1959 = vadd.f32 %v1903, %v1950
  %v1960 = vadd.f32 %v1904, %v1950
  %v1961 = vadd.f32 %v1905, %v1950
  %v1962 = vadd.f32 %v1906, %v1950
  %v1963 = vadd.f32 %v1907, %v1950
  %v1964 = vadd.f32 %v1908, %v1950
  %v1965 = vadd.f32 %v1909, %v1950
  %v1966 = vadd.f32 %v1910, %v1950
  %v1967 = vadd.f32 %v1911, %v1950
  %v1968 = vadd.f32 %v1912, %v1950
  %v1969 = vadd.f32 %v1913, %v1950
  %v1970 = vadd.f32 %v1914, %v1950
  %v1971 = vadd.f32 %v1915, %v1950
  %v1972 = vadd.f32 %v1916, %v1950
  %v1973 = vadd.f32 %v1917, %v1950
  %v1974 = vadd.f32 %v1918, %v1950
  %v1975 = vadd.f32 %v1919, %v1950
  %v1976 = vadd.f32 %v1920, %v1950
  %v1977 = vadd.f32 %v1921, %v1950
  %v1978 = vadd.f32 %v1922, %v1950
  %v1979 = vadd.f32 %v1923, %v1950
  %v1980 = vadd.f32 %v1924, %v1950
  %v1981 = vadd.f32 %v1925, %v1950
  %v1982 = vadd.f32 %v1926, %v1950
  %v1983 = vadd.f32 %v1927, %v1950
  %v1984 = vadd.f32 %v1928, %v1950
  %v1985 = vadd.f32 %v1929, %v1950
  %v1986 = vadd.f32 %v1930, %v1950
  %v1987 = vadd.f32 %v1931, %v1950
  %v1988 = vadd.f32 %v1932, %v1950
  %v1989 = vadd.f32 %v1933, %v1950
  %v1990 = vadd.f32 %v1934, %v1950
  %v1991 = vadd.f32 %v1935, %v1950
  %v1992 = vadd.f32 %v1936, %v1950
  %v1993 = vadd.f32 %v1937, %v1950
  %v1994 = vadd.f32 %v1938, %v1950
  %v1995 = vadd.f32 %v1939, %v1950
  %v1996 = vadd.f32 %v1940, %v1950
  %v1997 = vadd.f32 %v1941, %v1950
  %v1998 = vadd.f32 %v1942, %v1950
  %v1999 = vadd.f32 %v1943, %v1950
  %v2000 = vadd.f32 %v1944, %v1950
  %v2001 = vmax.f32 %v1952, 0.0
  %v2002 = vmax.f32 %v1953, 0.0
  %v2003 = vmax.f32 %v1954, 0.0
  %v2004 = vmax.f32 %v1955, 0.0
  %v2005 = vmax.f32 %v1956, 0.0
  %v2006 = vmax.f32 %v1957, 0.0
  %v2007 = vmax.f32 %v1958, 0.0
  %v2008 = vmax.f32 %v1959, 0.0
  %v2009 = vmax.f32 %v1960, 0.0
  %v2010 = vmax.f32 %v1961, 0.0
  %v2011 = vmax.f32 %v1962, 0.0
  %v2012 = vmax.f32 %v1963, 0.0
  %v2013 = vmax.f32 %v1964, 0.0
  %v2014 = vmax.f32 %v1965, 0.0
  %v2015 = vmax.f32 %v1966, 0.0
  %v2016 = vmax.f32 %v1967, 0.0
  %v2017 = vmax.f32 %v1968, 0.0
  %v2018 = vmax.f32 %v1969, 0.0
  %v2019 = vmax.f32 %v1970, 0.0
  %v2020 = vmax.f32 %v1971, 0.0
  %v2021 = vmax.f32 %v1972, 0.0
  %v2022 = vmax.f32 %v1973, 0.0
  %v2023 = vmax.f32 %v1974, 0.0
  %v2024 = vmax.f32 %v1975, 0.0
  %v2025 = vmax.f32 %v1976, 0.0
  %v2026 = vmax.f32 %v1977, 0.0
  %v2027 = vmax.f32 %v1978, 0.0
  %v2028 = vmax.f32 %v1979, 0.0
  %v2029 = vmax.f32 %v1980, 0.0
  %v2030 = vmax.f32 %v1981, 0.0
  %v2031 = vmax.f32 %v1982, 0.0
  %v2032 = vmax.f32 %v1983, 0.0
  %v2033 = vmax.f32 %v1984, 0.0
  %v2034 = vmax.f32 %v1985, 0.0
  %v2035 = vmax.f32 %v1986, 0.0
  %v2036 = vmax.f32 %v1987, 0.0
  %v2037 = vmax.f32 %v1988, 0.0
  %v2038 = vmax.f32 %v1989, 0.0
  %v2039 = vmax.f32 %v1990, 0.0
  %v2040 = vmax.f32 %v1991, 0.0
  %v2041 = vmax.f32 %v1992, 0.0
  %v2042 = vmax.f32 %v1993, 0.0
  %v2043 = vmax.f32 %v1994, 0.0
  %v2044 = vmax.f32 %v1995, 0.0
  %v2045 = vmax.f32 %v1996, 0.0
  %v2046 = vmax.f32 %v1997, 0.0
  %v2047 = vmax.f32 %v1998, 0.0
  %v2048 = vmax.f32 %v1999, 0.0
  %v2049 = vmax.f32 %v2000, 0.0
  %v2050 = vpack.c.bf16 %v2002, %v2001
  %v2051 = vpack.c.bf16 %v2004, %v2003
  %v2052 = vpack.c.bf16 %v2006, %v2005
  %v2053 = vpack.c.bf16 %v2008, %v2007
  %v2054 = vpack.c.bf16 %v2010, %v2009
  %v2055 = vpack.c.bf16 %v2012, %v2011
  %v2056 = vpack.c.bf16 %v2014, %v2013
  %v2057 = vpack.c.bf16 %v2016, %v2015
  %v2058 = vpack.c.bf16 %v2018, %v2017
  %v2059 = vpack.c.bf16 %v2020, %v2019
  %v2060 = vpack.c.bf16 %v2022, %v2021
  %v2061 = vpack.c.bf16 %v2024, %v2023
  %v2062 = vpack.c.bf16 %v2026, %v2025
  %v2063 = vpack.c.bf16 %v2028, %v2027
  %v2064 = vpack.c.bf16 %v2030, %v2029
  %v2065 = vpack.c.bf16 %v2032, %v2031
  %v2066 = vpack.c.bf16 %v2034, %v2033
  %v2067 = vpack.c.bf16 %v2036, %v2035
  %v2068 = vpack.c.bf16 %v2038, %v2037
  %v2069 = vpack.c.bf16 %v2040, %v2039
  %v2070 = vpack.c.bf16 %v2042, %v2041
  %v2071 = vpack.c.bf16 %v2044, %v2043
  %v2072 = vpack.c.bf16 %v2046, %v2045
  %v2073 = vpack.c.bf16 %v2048, %v2047
  %v2074 = vpack.c.bf16 %v2049, %v2049
  %v2100 = vunpack.c.l.b16 %v2050
  %v2101 = vunpack.c.h.b16 %v2050
  %v2102 = vunpack.c.l.b16 %v2051
  %v2103 = vunpack.c.h.b16 %v2051
  %v2104 = vunpack.c.l.b16 %v2052
  %v2105 = vunpack.c.h.b16 %v2052
  %v2106 = vunpack.c.l.b16 %v2053
  %v2107 = vunpack.c.h.b16 %v2053
  %v2108 = vunpack.c.l.b16 %v2054
  %v2109 = vunpack.c.h.b16 %v2054
  %v2110 = vunpack.c.l.b16 %v2055
  %v2111 = vunpack.c.h.b16 %v2055
  %v2112 = vunpack.c.l.b16 %v2056
  %v2113 = vunpack.c.h.b16 %v2056
  %v2114 = vunpack.c.l.b16 %v2057
  %v2115 = vunpack.c.h.b16 %v2057
  %v2116 = vunpack.c.l.b16 %v2058
  %v2117 = vunpack.c.h.b16 %v2058
  %v2118 = vunpack.c.l.b16 %v2059
  %v2119 = vunpack.c.h.b16 %v2059
  %v2120 = vunpack.c.l.b16 %v2060
  %v2121 = vunpack.c.h.b16 %v2060
  %v2122 = vunpack.c.l.b16 %v2061
  %v2123 = vunpack.c.h.b16 %v2061
  %v2124 = vunpack.c.l.b16 %v2062
  %v2125 = vunpack.c.h.b16 %v2062
  %v2126 = vunpack.c.l.b16 %v2063
  %v2127 = vunpack.c.h.b16 %v2063
  %v2128 = vunpack.c.l.b16 %v2064
  %v2129 = vunpack.c.h.b16 %v2064
  %v2130 = vunpack.c.l.b16 %v2065
  %v2131 = vunpack.c.h.b16 %v2065
  %v2132 = vunpack.c.l.b16 %v2066
  %v2133 = vunpack.c.h.b16 %v2066
  %v2134 = vunpack.c.l.b16 %v2067
  %v2135 = vunpack.c.h.b16 %v2067
  %v2136 = vunpack.c.l.b16 %v2068
  %v2137 = vunpack.c.h.b16 %v2068
  %v2138 = vunpack.c.l.b16 %v2069
  %v2139 = vunpack.c.h.b16 %v2069
  %v2140 = vunpack.c.l.b16 %v2070
  %v2141 = vunpack.c.h.b16 %v2070
  %v2142 = vunpack.c.l.b16 %v2071
  %v2143 = vunpack.c.h.b16 %v2071
  %v2144 = vunpack.c.l.b16 %v2072
  %v2145 = vunpack.c.h.b16 %v2072
  %v2146 = vunpack.c.l.b16 %v2073
  %v2147 = vunpack.c.h.b16 %v2073
  %v2148 = vunpack.c.l.b16 %v2074
  %v2149 = vpack.c.b16 %v2100, %v2100
  %v2150 = vpack.c.b16 %v2101, %v2101
  %v2151 = vpack.c.b16 %v2102, %v2102
  %v2152 = vpack.c.b16 %v2103, %v2103
  %v2153 = vpack.c.b16 %v2104, %v2104
  %v2154 = vpack.c.b16 %v2105, %v2105
  %v2155 = vpack.c.b16 %v2106, %v2106
  %v2156 = vpack.c.b16 %v2107, %v2107
  %v2157 = vpack.c.b16 %v2108, %v2108
  %v2158 = vpack.c.b16 %v2109, %v2109
  %v2159 = vpack.c.b16 %v2110, %v2110
  %v2160 = vpack.c.b16 %v2111, %v2111
  %v2161 = vpack.c.b16 %v2112, %v2112
  %v2162 = vpack.c.b16 %v2113, %v2113
  %v2163 = vpack.c.b16 %v2114, %v2114
  %v2164 = vpack.c.b16 %v2115, %v2115
  %v2165 = vpack.c.b16 %v2116, %v2116
  %v2166 = vpack.c.b16 %v2117, %v2117
  %v2167 = vpack.c.b16 %v2118, %v2118
  %v2168 = vpack.c.b16 %v2119, %v2119
  %v2169 = vpack.c.b16 %v2120, %v2120
  %v2170 = vpack.c.b16 %v2121, %v2121
  %v2171 = vpack.c.b16 %v2122, %v2122
  %v2172 = vpack.c.b16 %v2123, %v2123
  %v2173 = vpack.c.b16 %v2124, %v2124
  %v2174 = vpack.c.b16 %v2125, %v2125
  %v2175 = vpack.c.b16 %v2126, %v2126
  %v2176 = vpack.c.b16 %v2127, %v2127
  %v2177 = vpack.c.b16 %v2128, %v2128
  %v2178 = vpack.c.b16 %v2129, %v2129
  %v2179 = vpack.c.b16 %v2130, %v2130
  %v2180 = vpack.c.b16 %v2131, %v2131
  %v2181 = vpack.c.b16 %v2132, %v2132
  %v2182 = vpack.c.b16 %v2133, %v2133
  %v2183 = vpack.c.b16 %v2134, %v2134
  %v2184 = vpack.c.b16 %v2135, %v2135
  %v2185 = vpack.c.b16 %v2136, %v2136
  %v2186 = vpack.c.b16 %v2137, %v2137
  %v2187 = vpack.c.b16 %v2138, %v2138
  %v2188 = vpack.c.b16 %v2139, %v2139
  %v2189 = vpack.c.b16 %v2140, %v2140
  %v2190 = vpack.c.b16 %v2141, %v2141
  %v2191 = vpack.c.b16 %v2142, %v2142
  %v2192 = vpack.c.b16 %v2143, %v2143
  %v2193 = vpack.c.b16 %v2144, %v2144
  %v2194 = vpack.c.b16 %v2145, %v2145
  %v2195 = vpack.c.b16 %v2146, %v2146
  %v2196 = vpack.c.b16 %v2147, %v2147
  %v2197 = vpack.c.b16 %v2148, %v2148
  %2247 = vst [vmem:[%s3] sm:$0xf] %v2149
  %2248 = vst [vmem:[%s3 + $0x4] sm:$0xf] %v2150
  %2249 = vst [vmem:[%s3 + $0x8] sm:$0xf] %v2151
  %2250 = vst [vmem:[%s3 + $0xc] sm:$0xf] %v2152
  %2251 = vst [vmem:[%s3 + $0x10] sm:$0xf] %v2153
  %2252 = vst [vmem:[%s3 + $0x14] sm:$0xf] %v2154
  %2253 = vst [vmem:[%s3 + $0x18] sm:$0xf] %v2155
  %2254 = vst [vmem:[%s3 + $0x1c] sm:$0xf] %v2156
  %2255 = vst [vmem:[%s3 + $0x20] sm:$0xf] %v2157
  %2256 = vst [vmem:[%s3 + $0x24] sm:$0xf] %v2158
  %2257 = vst [vmem:[%s3 + $0x28] sm:$0xf] %v2159
  %2258 = vst [vmem:[%s3 + $0x2c] sm:$0xf] %v2160
  %2259 = vst [vmem:[%s3 + $0x30] sm:$0xf] %v2161
  %2260 = vst [vmem:[%s3 + $0x34] sm:$0xf] %v2162
  %2261 = vst [vmem:[%s3 + $0x38] sm:$0xf] %v2163
  %2262 = vst [vmem:[%s3 + $0x3c] sm:$0xf] %v2164
  %2263 = vst [vmem:[%s3 + $0x40] sm:$0xf] %v2165
  %2264 = vst [vmem:[%s3 + $0x44] sm:$0xf] %v2166
  %2265 = vst [vmem:[%s3 + $0x48] sm:$0xf] %v2167
  %2266 = vst [vmem:[%s3 + $0x4c] sm:$0xf] %v2168
  %2267 = vst [vmem:[%s3 + $0x50] sm:$0xf] %v2169
  %2268 = vst [vmem:[%s3 + $0x54] sm:$0xf] %v2170
  %2269 = vst [vmem:[%s3 + $0x58] sm:$0xf] %v2171
  %2270 = vst [vmem:[%s3 + $0x5c] sm:$0xf] %v2172
  %2271 = vst [vmem:[%s3 + $0x60] sm:$0xf] %v2173
  %2272 = vst [vmem:[%s3 + $0x64] sm:$0xf] %v2174
  %2273 = vst [vmem:[%s3 + $0x68] sm:$0xf] %v2175
  %2274 = vst [vmem:[%s3 + $0x6c] sm:$0xf] %v2176
  %2275 = vst [vmem:[%s3 + $0x70] sm:$0xf] %v2177
  %2276 = vst [vmem:[%s3 + $0x74] sm:$0xf] %v2178
  %2277 = vst [vmem:[%s3 + $0x78] sm:$0xf] %v2179
  %2278 = vst [vmem:[%s3 + $0x7c] sm:$0xf] %v2180
  %2279 = vst [vmem:[%s3 + $0x80] sm:$0xf] %v2181
  %2280 = vst [vmem:[%s3 + $0x84] sm:$0xf] %v2182
  %2281 = vst [vmem:[%s3 + $0x88] sm:$0xf] %v2183
  %2282 = vst [vmem:[%s3 + $0x8c] sm:$0xf] %v2184
  %2283 = vst [vmem:[%s3 + $0x90] sm:$0xf] %v2185
  %2284 = vst [vmem:[%s3 + $0x94] sm:$0xf] %v2186
  %2285 = vst [vmem:[%s3 + $0x98] sm:$0xf] %v2187
  %2286 = vst [vmem:[%s3 + $0x9c] sm:$0xf] %v2188
  %2287 = vst [vmem:[%s3 + $0xa0] sm:$0xf] %v2189
  %2288 = vst [vmem:[%s3 + $0xa4] sm:$0xf] %v2190
  %2289 = vst [vmem:[%s3 + $0xa8] sm:$0xf] %v2191
  %2290 = vst [vmem:[%s3 + $0xac] sm:$0xf] %v2192
  %2291 = vst [vmem:[%s3 + $0xb0] sm:$0xf] %v2193
  %2292 = vst [vmem:[%s3 + $0xb4] sm:$0xf] %v2194
  %2293 = vst [vmem:[%s3 + $0xb8] sm:$0xf] %v2195
  %2294 = vst [vmem:[%s3 + $0xbc] sm:$0xf] %v2196
  %2295 = vst [vmem:[%s3 + $0xc0] sm:$0xf] %v2197
  // Predicated region
  $region14: #{lenet_forward.2} parent=0 // pred_check
    _
  $region15: #{lenet_forward.2} parent=0 // pred_check_branch
    %2297 = sbr.rel (0) target = $region17
  $region16: #{lenet_forward.2} parent=0 // pred_region
    _
  $region17: #{lenet_forward.2} parent=0 // pred_fallthru
    _
  // Predicated region
  $region18: #{lenet_forward.2} parent=0 // pred_check
    _
  $region19: #{lenet_forward.2} parent=0 // pred_check_branch
    %2299 = sbr.rel (0) target = $region21
  $region20: #{lenet_forward.2} parent=0 // pred_region
    _
  $region21: #{lenet_forward.2} parent=0 // pred_fallthru
    _

// kernel: lenet_forward.3
$region0: #{lenet_forward.3}
  #allocation0 [shape = 'u32[]', space=smem, size = 0x4, offset = 0x4, fixed_abs, tag = 'smem constant byte address 0x4 - core index']
  #allocation1 [shape = 'u32[144,128]{1,0:T(1,128)}', space=vmem, size = 0x12000, scoped, tag = 'internal scratch']
  #allocation2 [shape = 'bf16[50,128]{1,0:T(8,128)(2,1)}', space=vmem, size = 0x3800, scoped, tag = 'scratch operand']
  %s0 = inlined_call_operand.vmem [shape: bf16[4,50,3200], index: 0, kind: input, shape index: {}]
  %s1 = inlined_call_operand.vmem [shape: bf16[3200,128], index: 1, kind: input, shape index: {}]
  %s2 = inlined_call_operand.vmem [shape: f32[1,128], index: 2, kind: input, shape index: {}]
  %s3 = inlined_call_operand.vmem [shape: bf16[3200,128], index: 3, kind: input, shape index: {}]
  %s4 = inlined_call_operand.vmem [shape: f32[1,128], index: 4, kind: input, shape index: {}]
  %s5 = inlined_call_operand.vmem [shape: bf16[128,128], index: 5, kind: input, shape index: {}]
  %s6 = inlined_call_operand.vmem [shape: f32[1,128], index: 6, kind: input, shape index: {}]
  %s7 = inlined_call_operand.vmem [shape: bf16[128,128], index: 7, kind: input, shape index: {}]
  %s8 = inlined_call_operand.vmem [shape: f32[1,128], index: 8, kind: input, shape index: {}]
  %s9 = inlined_call_operand.hbm [shape: f32[2,128], index: 9, kind: output, shape index: {}]
  %s10 = sld [smem:[#allocation0]]
  $region46: #{lenet_forward.3} parent=0
    _
  %s12 = ssub.s32 1, %s10
  %s13 = scalar_select 0, %s12, %s10
  $region1: #{lenet_forward.3} parent=0
    #allocation3 [shape = 'u8[1024]{0}', space=vmem, size = 0x400, scoped, tag = 'output window, operand 0, single buffered']
    #allocation4 [shape = 's32[1]{0}', space=sflag, size = 0x4, scoped, tag = 'scoped memory for lenet_forward.3']
    %14 = vsyncpa [#allocation4], 0
    // Predicated region
    $region2: #{lenet_forward.3} parent=1 // pred_check
      _
    $region3: #{lenet_forward.3} parent=1 // pred_check_branch
      %16 = sbr.rel (0) target = $region5
    $region4: #{lenet_forward.3} parent=1 // pred_region
      _
    $region5: #{lenet_forward.3} parent=1 // pred_fallthru
      _
    // Predicated region
    $region6: #{lenet_forward.3} parent=1 // pred_check
      _
    $region7: #{lenet_forward.3} parent=1 // pred_check_branch
      %18 = sbr.rel (0) target = $region9
    $region8: #{lenet_forward.3} parent=1 // pred_region
      _
    $region9: #{lenet_forward.3} parent=1 // pred_fallthru
      _
    // Predicated region
    $region10: #{lenet_forward.3} parent=1 // pred_check
      _
    $region11: #{lenet_forward.3} parent=1 // pred_check_branch
      %20 = sbr.rel (0) target = $region13
    $region12: #{lenet_forward.3} parent=1 // pred_region
      _
    $region13: #{lenet_forward.3} parent=1 // pred_fallthru
      _
    // Predicated region
    $region14: #{lenet_forward.3} parent=1 // pred_check
      _
    $region15: #{lenet_forward.3} parent=1 // pred_check_branch
      %22 = sbr.rel (0) target = $region17
    $region16: #{lenet_forward.3} parent=1 // pred_region
      _
    $region17: #{lenet_forward.3} parent=1 // pred_fallthru
      _
    // Predicated region
    $region18: #{lenet_forward.3} parent=1 // pred_check
      _
    $region19: #{lenet_forward.3} parent=1 // pred_check_branch
      %24 = sbr.rel (0) target = $region21
    $region20: #{lenet_forward.3} parent=1 // pred_region
      _
    $region21: #{lenet_forward.3} parent=1 // pred_fallthru
      _
    // Predicated region
    $region22: #{lenet_forward.3} parent=1 // pred_check
      _
    $region23: #{lenet_forward.3} parent=1 // pred_check_branch
      %26 = sbr.rel (0) target = $region25
    $region24: #{lenet_forward.3} parent=1 // pred_region
      _
    $region25: #{lenet_forward.3} parent=1 // pred_fallthru
      _
    // Predicated region
    $region26: #{lenet_forward.3} parent=1 // pred_check
      _
    $region27: #{lenet_forward.3} parent=1 // pred_check_branch
      %28 = sbr.rel (0) target = $region29
    $region28: #{lenet_forward.3} parent=1 // pred_region
      _
    $region29: #{lenet_forward.3} parent=1 // pred_fallthru
      _
    // Predicated region
    $region30: #{lenet_forward.3} parent=1 // pred_check
      _
    $region31: #{lenet_forward.3} parent=1 // pred_check_branch
      %30 = sbr.rel (0) target = $region33
    $region32: #{lenet_forward.3} parent=1 // pred_region
      _
    $region33: #{lenet_forward.3} parent=1 // pred_fallthru
      _
    // Predicated region
    $region34: #{lenet_forward.3} parent=1 // pred_check
      _
    $region35: #{lenet_forward.3} parent=1 // pred_check_branch
      %32 = sbr.rel (0) target = $region37
    $region36: #{lenet_forward.3} parent=1 // pred_region
      _
    $region37: #{lenet_forward.3} parent=1 // pred_fallthru
      _
    %v34 = vld [vmem:[%s1] sm:$0xf]
    %v35 = vld [vmem:[%s1 + $0x4] sm:$0xf]
    %v36 = vld [vmem:[%s1 + $0x8] sm:$0xf]
    %v37 = vld [vmem:[%s1 + $0xc] sm:$0xf]
    %v38 = vld [vmem:[%s1 + $0x10] sm:$0xf]
    %v39 = vld [vmem:[%s1 + $0x14] sm:$0xf]
    %v40 = vld [vmem:[%s1 + $0x18] sm:$0xf]
    %v41 = vld [vmem:[%s1 + $0x1c] sm:$0xf]
    %v42 = vld [vmem:[%s1 + $0x20] sm:$0xf]
    %v43 = vld [vmem:[%s1 + $0x24] sm:$0xf]
    %v44 = vld [vmem:[%s1 + $0x28] sm:$0xf]
    %v45 = vld [vmem:[%s1 + $0x2c] sm:$0xf]
    %v46 = vld [vmem:[%s1 + $0x30] sm:$0xf]
    %v47 = vld [vmem:[%s1 + $0x34] sm:$0xf]
    %v48 = vld [vmem:[%s1 + $0x38] sm:$0xf]
    %v49 = vld [vmem:[%s1 + $0x3c] sm:$0xf]
    %v50 = vld [vmem:[%s1 + $0x40] sm:$0xf]
    %v51 = vld [vmem:[%s1 + $0x44] sm:$0xf]
    %v52 = vld [vmem:[%s1 + $0x48] sm:$0xf]
    %v53 = vld [vmem:[%s1 + $0x4c] sm:$0xf]
    %v54 = vld [vmem:[%s1 + $0x50] sm:$0xf]
    %v55 = vld [vmem:[%s1 + $0x54] sm:$0xf]
    %v56 = vld [vmem:[%s1 + $0x58] sm:$0xf]
    %v57 = vld [vmem:[%s1 + $0x5c] sm:$0xf]
    %v58 = vld [vmem:[%s1 + $0x60] sm:$0xf]
    %v59 = vld [vmem:[%s1 + $0x64] sm:$0xf]
    %v60 = vld [vmem:[%s1 + $0x68] sm:$0xf]
    %v61 = vld [vmem:[%s1 + $0x6c] sm:$0xf]
    %v62 = vld [vmem:[%s1 + $0x70] sm:$0xf]
    %v63 = vld [vmem:[%s1 + $0x74] sm:$0xf]
    %v64 = vld [vmem:[%s1 + $0x78] sm:$0xf]
    %v65 = vld [vmem:[%s1 + $0x7c] sm:$0xf]
    %v66 = vld [vmem:[%s1 + $0x80] sm:$0xf]
    %v67 = vld [vmem:[%s1 + $0x84] sm:$0xf]
    %v68 = vld [vmem:[%s1 + $0x88] sm:$0xf]
    %v69 = vld [vmem:[%s1 + $0x8c] sm:$0xf]
    %v70 = vld [vmem:[%s1 + $0x90] sm:$0xf]
    %v71 = vld [vmem:[%s1 + $0x94] sm:$0xf]
    %v72 = vld [vmem:[%s1 + $0x98] sm:$0xf]
    %v73 = vld [vmem:[%s1 + $0x9c] sm:$0xf]
    %v74 = vld [vmem:[%s1 + $0xa0] sm:$0xf]
    %v75 = vld [vmem:[%s1 + $0xa4] sm:$0xf]
    %v76 = vld [vmem:[%s1 + $0xa8] sm:$0xf]
    %v77 = vld [vmem:[%s1 + $0xac] sm:$0xf]
    %v78 = vld [vmem:[%s1 + $0xb0] sm:$0xf]
    %v79 = vld [vmem:[%s1 + $0xb4] sm:$0xf]
    %v80 = vld [vmem:[%s1 + $0xb8] sm:$0xf]
    %v81 = vld [vmem:[%s1 + $0xbc] sm:$0xf]
    %v82 = vld [vmem:[%s1 + $0xc0] sm:$0xf]
    %v83 = vld [vmem:[%s1 + $0xc4] sm:$0xf]
    %v84 = vld [vmem:[%s1 + $0xc8] sm:$0xf]
    %v85 = vld [vmem:[%s1 + $0xcc] sm:$0xf]
    %v86 = vld [vmem:[%s1 + $0xd0] sm:$0xf]
    %v87 = vld [vmem:[%s1 + $0xd4] sm:$0xf]
    %v88 = vld [vmem:[%s1 + $0xd8] sm:$0xf]
    %v89 = vld [vmem:[%s1 + $0xdc] sm:$0xf]
    %v90 = vld [vmem:[%s1 + $0xe0] sm:$0xf]
    %v91 = vld [vmem:[%s1 + $0xe4] sm:$0xf]
    %v92 = vld [vmem:[%s1 + $0xe8] sm:$0xf]
    %v93 = vld [vmem:[%s1 + $0xec] sm:$0xf]
    %v94 = vld [vmem:[%s1 + $0xf0] sm:$0xf]
    %v95 = vld [vmem:[%s1 + $0xf4] sm:$0xf]
    %v96 = vld [vmem:[%s1 + $0xf8] sm:$0xf]
    %v97 = vld [vmem:[%s1 + $0xfc] sm:$0xf]
    %v98 = vld [vmem:[%s1 + $0x100] sm:$0xf]
    %v99 = vld [vmem:[%s1 + $0x104] sm:$0xf]
    %v100 = vld [vmem:[%s1 + $0x108] sm:$0xf]
    %v101 = vld [vmem:[%s1 + $0x10c] sm:$0xf]
    %v102 = vld [vmem:[%s1 + $0x110] sm:$0xf]
    %v103 = vld [vmem:[%s1 + $0x114] sm:$0xf]
    %v104 = vld [vmem:[%s1 + $0x118] sm:$0xf]
    %v105 = vld [vmem:[%s1 + $0x11c] sm:$0xf]
    %v106 = vld [vmem:[%s1 + $0x120] sm:$0xf]
    %v107 = vld [vmem:[%s1 + $0x124] sm:$0xf]
    %v108 = vld [vmem:[%s1 + $0x128] sm:$0xf]
    %v109 = vld [vmem:[%s1 + $0x12c] sm:$0xf]
    %v110 = vld [vmem:[%s1 + $0x130] sm:$0xf]
    %v111 = vld [vmem:[%s1 + $0x134] sm:$0xf]
    %v112 = vld [vmem:[%s1 + $0x138] sm:$0xf]
    %v113 = vld [vmem:[%s1 + $0x13c] sm:$0xf]
    %v114 = vld [vmem:[%s1 + $0x140] sm:$0xf]
    %v115 = vld [vmem:[%s1 + $0x144] sm:$0xf]
    %v116 = vld [vmem:[%s1 + $0x148] sm:$0xf]
    %v117 = vld [vmem:[%s1 + $0x14c] sm:$0xf]
    %v118 = vld [vmem:[%s1 + $0x150] sm:$0xf]
    %v119 = vld [vmem:[%s1 + $0x154] sm:$0xf]
    %v120 = vld [vmem:[%s1 + $0x158] sm:$0xf]
    %v121 = vld [vmem:[%s1 + $0x15c] sm:$0xf]
    %v122 = vld [vmem:[%s1 + $0x160] sm:$0xf]
    %v123 = vld [vmem:[%s1 + $0x164] sm:$0xf]
    %v124 = vld [vmem:[%s1 + $0x168] sm:$0xf]
    %v125 = vld [vmem:[%s1 + $0x16c] sm:$0xf]
    %v126 = vld [vmem:[%s1 + $0x170] sm:$0xf]
    %v127 = vld [vmem:[%s1 + $0x174] sm:$0xf]
    %v128 = vld [vmem:[%s1 + $0x178] sm:$0xf]
    %v129 = vld [vmem:[%s1 + $0x17c] sm:$0xf]
    %v130 = vld [vmem:[%s1 + $0x180] sm:$0xf]
    %v131 = vld [vmem:[%s1 + $0x184] sm:$0xf]
    %v132 = vld [vmem:[%s1 + $0x188] sm:$0xf]
    %v133 = vld [vmem:[%s1 + $0x18c] sm:$0xf]
    %v134 = vld [vmem:[%s1 + $0x190] sm:$0xf]
    %v135 = vld [vmem:[%s1 + $0x194] sm:$0xf]
    %v136 = vld [vmem:[%s1 + $0x198] sm:$0xf]
    %v137 = vld [vmem:[%s1 + $0x19c] sm:$0xf]
    %v138 = vld [vmem:[%s1 + $0x1a0] sm:$0xf]
    %v139 = vld [vmem:[%s1 + $0x1a4] sm:$0xf]
    %v140 = vld [vmem:[%s1 + $0x1a8] sm:$0xf]
    %v141 = vld [vmem:[%s1 + $0x1ac] sm:$0xf]
    %v142 = vld [vmem:[%s1 + $0x1b0] sm:$0xf]
    %v143 = vld [vmem:[%s1 + $0x1b4] sm:$0xf]
    %v144 = vld [vmem:[%s1 + $0x1b8] sm:$0xf]
    %v145 = vld [vmem:[%s1 + $0x1bc] sm:$0xf]
    %v146 = vld [vmem:[%s1 + $0x1c0] sm:$0xf]
    %v147 = vld [vmem:[%s1 + $0x1c4] sm:$0xf]
    %v148 = vld [vmem:[%s1 + $0x1c8] sm:$0xf]
    %v149 = vld [vmem:[%s1 + $0x1cc] sm:$0xf]
    %v150 = vld [vmem:[%s1 + $0x1d0] sm:$0xf]
    %v151 = vld [vmem:[%s1 + $0x1d4] sm:$0xf]
    %v152 = vld [vmem:[%s1 + $0x1d8] sm:$0xf]
    %v153 = vld [vmem:[%s1 + $0x1dc] sm:$0xf]
    %v154 = vld [vmem:[%s1 + $0x1e0] sm:$0xf]
    %v155 = vld [vmem:[%s1 + $0x1e4] sm:$0xf]
    %v156 = vld [vmem:[%s1 + $0x1e8] sm:$0xf]
    %v157 = vld [vmem:[%s1 + $0x1ec] sm:$0xf]
    %v158 = vld [vmem:[%s1 + $0x1f0] sm:$0xf]
    %v159 = vld [vmem:[%s1 + $0x1f4] sm:$0xf]
    %v160 = vld [vmem:[%s1 + $0x1f8] sm:$0xf]
    %v161 = vld [vmem:[%s1 + $0x1fc] sm:$0xf]
    %v162 = vld [vmem:[%s1 + $0x200] sm:$0xf]
    %v163 = vld [vmem:[%s1 + $0x204] sm:$0xf]
    %v164 = vld [vmem:[%s1 + $0x208] sm:$0xf]
    %v165 = vld [vmem:[%s1 + $0x20c] sm:$0xf]
    %v166 = vld [vmem:[%s1 + $0x210] sm:$0xf]
    %v167 = vld [vmem:[%s1 + $0x214] sm:$0xf]
    %v168 = vld [vmem:[%s1 + $0x218] sm:$0xf]
    %v169 = vld [vmem:[%s1 + $0x21c] sm:$0xf]
    %v170 = vld [vmem:[%s1 + $0x220] sm:$0xf]
    %v171 = vld [vmem:[%s1 + $0x224] sm:$0xf]
    %v172 = vld [vmem:[%s1 + $0x228] sm:$0xf]
    %v173 = vld [vmem:[%s1 + $0x22c] sm:$0xf]
    %v174 = vld [vmem:[%s1 + $0x230] sm:$0xf]
    %v175 = vld [vmem:[%s1 + $0x234] sm:$0xf]
    %v176 = vld [vmem:[%s1 + $0x238] sm:$0xf]
    %v177 = vld [vmem:[%s1 + $0x23c] sm:$0xf]
    %v178 = vld [vmem:[%s1 + $0x240] sm:$0xf]
    %v179 = vld [vmem:[%s1 + $0x244] sm:$0xf]
    %v180 = vld [vmem:[%s1 + $0x248] sm:$0xf]
    %v181 = vld [vmem:[%s1 + $0x24c] sm:$0xf]
    %v182 = vld [vmem:[%s1 + $0x250] sm:$0xf]
    %v183 = vld [vmem:[%s1 + $0x254] sm:$0xf]
    %v184 = vld [vmem:[%s1 + $0x258] sm:$0xf]
    %v185 = vld [vmem:[%s1 + $0x25c] sm:$0xf]
    %v186 = vld [vmem:[%s1 + $0x260] sm:$0xf]
    %v187 = vld [vmem:[%s1 + $0x264] sm:$0xf]
    %v188 = vld [vmem:[%s1 + $0x268] sm:$0xf]
    %v189 = vld [vmem:[%s1 + $0x26c] sm:$0xf]
    %v190 = vld [vmem:[%s1 + $0x270] sm:$0xf]
    %v191 = vld [vmem:[%s1 + $0x274] sm:$0xf]
    %v192 = vld [vmem:[%s1 + $0x278] sm:$0xf]
    %v193 = vld [vmem:[%s1 + $0x27c] sm:$0xf]
    %v194 = vld [vmem:[%s1 + $0x280] sm:$0xf]
    %v195 = vld [vmem:[%s1 + $0x284] sm:$0xf]
    %v196 = vld [vmem:[%s1 + $0x288] sm:$0xf]
    %v197 = vld [vmem:[%s1 + $0x28c] sm:$0xf]
    %v198 = vld [vmem:[%s1 + $0x290] sm:$0xf]
    %v199 = vld [vmem:[%s1 + $0x294] sm:$0xf]
    %v200 = vld [vmem:[%s1 + $0x298] sm:$0xf]
    %v201 = vld [vmem:[%s1 + $0x29c] sm:$0xf]
    %v202 = vld [vmem:[%s1 + $0x2a0] sm:$0xf]
    %v203 = vld [vmem:[%s1 + $0x2a4] sm:$0xf]
    %v204 = vld [vmem:[%s1 + $0x2a8] sm:$0xf]
    %v205 = vld [vmem:[%s1 + $0x2ac] sm:$0xf]
    %v206 = vld [vmem:[%s1 + $0x2b0] sm:$0xf]
    %v207 = vld [vmem:[%s1 + $0x2b4] sm:$0xf]
    %v208 = vld [vmem:[%s1 + $0x2b8] sm:$0xf]
    %v209 = vld [vmem:[%s1 + $0x2bc] sm:$0xf]
    %v210 = vld [vmem:[%s1 + $0x2c0] sm:$0xf]
    %v211 = vld [vmem:[%s1 + $0x2c4] sm:$0xf]
    %v212 = vld [vmem:[%s1 + $0x2c8] sm:$0xf]
    %v213 = vld [vmem:[%s1 + $0x2cc] sm:$0xf]
    %v214 = vld [vmem:[%s1 + $0x2d0] sm:$0xf]
    %v215 = vld [vmem:[%s1 + $0x2d4] sm:$0xf]
    %v216 = vld [vmem:[%s1 + $0x2d8] sm:$0xf]
    %v217 = vld [vmem:[%s1 + $0x2dc] sm:$0xf]
    %v218 = vld [vmem:[%s1 + $0x2e0] sm:$0xf]
    %v219 = vld [vmem:[%s1 + $0x2e4] sm:$0xf]
    %v220 = vld [vmem:[%s1 + $0x2e8] sm:$0xf]
    %v221 = vld [vmem:[%s1 + $0x2ec] sm:$0xf]
    %v222 = vld [vmem:[%s1 + $0x2f0] sm:$0xf]
    %v223 = vld [vmem:[%s1 + $0x2f4] sm:$0xf]
    %v224 = vld [vmem:[%s1 + $0x2f8] sm:$0xf]
    %v225 = vld [vmem:[%s1 + $0x2fc] sm:$0xf]
    %v226 = vld [vmem:[%s1 + $0x300] sm:$0xf]
    %v227 = vld [vmem:[%s1 + $0x304] sm:$0xf]
    %v228 = vld [vmem:[%s1 + $0x308] sm:$0xf]
    %v229 = vld [vmem:[%s1 + $0x30c] sm:$0xf]
    %v230 = vld [vmem:[%s1 + $0x310] sm:$0xf]
    %v231 = vld [vmem:[%s1 + $0x314] sm:$0xf]
    %v232 = vld [vmem:[%s1 + $0x318] sm:$0xf]
    %v233 = vld [vmem:[%s1 + $0x31c] sm:$0xf]
    %v234 = vld [vmem:[%s1 + $0x320] sm:$0xf]
    %v235 = vld [vmem:[%s1 + $0x324] sm:$0xf]
    %v236 = vld [vmem:[%s1 + $0x328] sm:$0xf]
    %v237 = vld [vmem:[%s1 + $0x32c] sm:$0xf]
    %v238 = vld [vmem:[%s1 + $0x330] sm:$0xf]
    %v239 = vld [vmem:[%s1 + $0x334] sm:$0xf]
    %v240 = vld [vmem:[%s1 + $0x338] sm:$0xf]
    %v241 = vld [vmem:[%s1 + $0x33c] sm:$0xf]
    %v242 = vld [vmem:[%s1 + $0x340] sm:$0xf]
    %v243 = vld [vmem:[%s1 + $0x344] sm:$0xf]
    %v244 = vld [vmem:[%s1 + $0x348] sm:$0xf]
    %v245 = vld [vmem:[%s1 + $0x34c] sm:$0xf]
    %v246 = vld [vmem:[%s1 + $0x350] sm:$0xf]
    %v247 = vld [vmem:[%s1 + $0x354] sm:$0xf]
    %v248 = vld [vmem:[%s1 + $0x358] sm:$0xf]
    %v249 = vld [vmem:[%s1 + $0x35c] sm:$0xf]
    %v250 = vld [vmem:[%s1 + $0x360] sm:$0xf]
    %v251 = vld [vmem:[%s1 + $0x364] sm:$0xf]
    %v252 = vld [vmem:[%s1 + $0x368] sm:$0xf]
    %v253 = vld [vmem:[%s1 + $0x36c] sm:$0xf]
    %v254 = vld [vmem:[%s1 + $0x370] sm:$0xf]
    %v255 = vld [vmem:[%s1 + $0x374] sm:$0xf]
    %v256 = vld [vmem:[%s1 + $0x378] sm:$0xf]
    %v257 = vld [vmem:[%s1 + $0x37c] sm:$0xf]
    %v258 = vld [vmem:[%s1 + $0x380] sm:$0xf]
    %v259 = vld [vmem:[%s1 + $0x384] sm:$0xf]
    %v260 = vld [vmem:[%s1 + $0x388] sm:$0xf]
    %v261 = vld [vmem:[%s1 + $0x38c] sm:$0xf]
    %v262 = vld [vmem:[%s1 + $0x390] sm:$0xf]
    %v263 = vld [vmem:[%s1 + $0x394] sm:$0xf]
    %v264 = vld [vmem:[%s1 + $0x398] sm:$0xf]
    %v265 = vld [vmem:[%s1 + $0x39c] sm:$0xf]
    %v266 = vld [vmem:[%s1 + $0x3a0] sm:$0xf]
    %v267 = vld [vmem:[%s1 + $0x3a4] sm:$0xf]
    %v268 = vld [vmem:[%s1 + $0x3a8] sm:$0xf]
    %v269 = vld [vmem:[%s1 + $0x3ac] sm:$0xf]
    %v270 = vld [vmem:[%s1 + $0x3b0] sm:$0xf]
    %v271 = vld [vmem:[%s1 + $0x3b4] sm:$0xf]
    %v272 = vld [vmem:[%s1 + $0x3b8] sm:$0xf]
    %v273 = vld [vmem:[%s1 + $0x3bc] sm:$0xf]
    %v274 = vld [vmem:[%s1 + $0x3c0] sm:$0xf]
    %v275 = vld [vmem:[%s1 + $0x3c4] sm:$0xf]
    %v276 = vld [vmem:[%s1 + $0x3c8] sm:$0xf]
    %v277 = vld [vmem:[%s1 + $0x3cc] sm:$0xf]
    %v278 = vld [vmem:[%s1 + $0x3d0] sm:$0xf]
    %v279 = vld [vmem:[%s1 + $0x3d4] sm:$0xf]
    %v280 = vld [vmem:[%s1 + $0x3d8] sm:$0xf]
    %v281 = vld [vmem:[%s1 + $0x3dc] sm:$0xf]
    %v282 = vld [vmem:[%s1 + $0x3e0] sm:$0xf]
    %v283 = vld [vmem:[%s1 + $0x3e4] sm:$0xf]
    %v284 = vld [vmem:[%s1 + $0x3e8] sm:$0xf]
    %v285 = vld [vmem:[%s1 + $0x3ec] sm:$0xf]
    %v286 = vld [vmem:[%s1 + $0x3f0] sm:$0xf]
    %v287 = vld [vmem:[%s1 + $0x3f4] sm:$0xf]
    %v288 = vld [vmem:[%s1 + $0x3f8] sm:$0xf]
    %v289 = vld [vmem:[%s1 + $0x3fc] sm:$0xf]
    %v290 = vld [vmem:[%s1 + $0x400] sm:$0xf]
    %v291 = vld [vmem:[%s1 + $0x404] sm:$0xf]
    %v292 = vld [vmem:[%s1 + $0x408] sm:$0xf]
    %v293 = vld [vmem:[%s1 + $0x40c] sm:$0xf]
    %v294 = vld [vmem:[%s1 + $0x410] sm:$0xf]
    %v295 = vld [vmem:[%s1 + $0x414] sm:$0xf]
    %v296 = vld [vmem:[%s1 + $0x418] sm:$0xf]
    %v297 = vld [vmem:[%s1 + $0x41c] sm:$0xf]
    %v298 = vld [vmem:[%s1 + $0x420] sm:$0xf]
    %v299 = vld [vmem:[%s1 + $0x424] sm:$0xf]
    %v300 = vld [vmem:[%s1 + $0x428] sm:$0xf]
    %v301 = vld [vmem:[%s1 + $0x42c] sm:$0xf]
    %v302 = vld [vmem:[%s1 + $0x430] sm:$0xf]
    %v303 = vld [vmem:[%s1 + $0x434] sm:$0xf]
    %v304 = vld [vmem:[%s1 + $0x438] sm:$0xf]
    %v305 = vld [vmem:[%s1 + $0x43c] sm:$0xf]
    %v306 = vld [vmem:[%s1 + $0x440] sm:$0xf]
    %v307 = vld [vmem:[%s1 + $0x444] sm:$0xf]
    %v308 = vld [vmem:[%s1 + $0x448] sm:$0xf]
    %v309 = vld [vmem:[%s1 + $0x44c] sm:$0xf]
    %v310 = vld [vmem:[%s1 + $0x450] sm:$0xf]
    %v311 = vld [vmem:[%s1 + $0x454] sm:$0xf]
    %v312 = vld [vmem:[%s1 + $0x458] sm:$0xf]
    %v313 = vld [vmem:[%s1 + $0x45c] sm:$0xf]
    %v314 = vld [vmem:[%s1 + $0x460] sm:$0xf]
    %v315 = vld [vmem:[%s1 + $0x464] sm:$0xf]
    %v316 = vld [vmem:[%s1 + $0x468] sm:$0xf]
    %v317 = vld [vmem:[%s1 + $0x46c] sm:$0xf]
    %v318 = vld [vmem:[%s1 + $0x470] sm:$0xf]
    %v319 = vld [vmem:[%s1 + $0x474] sm:$0xf]
    %v320 = vld [vmem:[%s1 + $0x478] sm:$0xf]
    %v321 = vld [vmem:[%s1 + $0x47c] sm:$0xf]
    %v322 = vld [vmem:[%s1 + $0x480] sm:$0xf]
    %v323 = vld [vmem:[%s1 + $0x484] sm:$0xf]
    %v324 = vld [vmem:[%s1 + $0x488] sm:$0xf]
    %v325 = vld [vmem:[%s1 + $0x48c] sm:$0xf]
    %v326 = vld [vmem:[%s1 + $0x490] sm:$0xf]
    %v327 = vld [vmem:[%s1 + $0x494] sm:$0xf]
    %v328 = vld [vmem:[%s1 + $0x498] sm:$0xf]
    %v329 = vld [vmem:[%s1 + $0x49c] sm:$0xf]
    %v330 = vld [vmem:[%s1 + $0x4a0] sm:$0xf]
    %v331 = vld [vmem:[%s1 + $0x4a4] sm:$0xf]
    %v332 = vld [vmem:[%s1 + $0x4a8] sm:$0xf]
    %v333 = vld [vmem:[%s1 + $0x4ac] sm:$0xf]
    %v334 = vld [vmem:[%s1 + $0x4b0] sm:$0xf]
    %v335 = vld [vmem:[%s1 + $0x4b4] sm:$0xf]
    %v336 = vld [vmem:[%s1 + $0x4b8] sm:$0xf]
    %v337 = vld [vmem:[%s1 + $0x4bc] sm:$0xf]
    %v338 = vld [vmem:[%s1 + $0x4c0] sm:$0xf]
    %v339 = vld [vmem:[%s1 + $0x4c4] sm:$0xf]
    %v340 = vld [vmem:[%s1 + $0x4c8] sm:$0xf]
    %v341 = vld [vmem:[%s1 + $0x4cc] sm:$0xf]
    %v342 = vld [vmem:[%s1 + $0x4d0] sm:$0xf]
    %v343 = vld [vmem:[%s1 + $0x4d4] sm:$0xf]
    %v344 = vld [vmem:[%s1 + $0x4d8] sm:$0xf]
    %v345 = vld [vmem:[%s1 + $0x4dc] sm:$0xf]
    %v346 = vld [vmem:[%s1 + $0x4e0] sm:$0xf]
    %v347 = vld [vmem:[%s1 + $0x4e4] sm:$0xf]
    %v348 = vld [vmem:[%s1 + $0x4e8] sm:$0xf]
    %v349 = vld [vmem:[%s1 + $0x4ec] sm:$0xf]
    %v350 = vld [vmem:[%s1 + $0x4f0] sm:$0xf]
    %v351 = vld [vmem:[%s1 + $0x4f4] sm:$0xf]
    %v352 = vld [vmem:[%s1 + $0x4f8] sm:$0xf]
    %v353 = vld [vmem:[%s1 + $0x4fc] sm:$0xf]
    %v354 = vld [vmem:[%s1 + $0x500] sm:$0xf]
    %v355 = vld [vmem:[%s1 + $0x504] sm:$0xf]
    %v356 = vld [vmem:[%s1 + $0x508] sm:$0xf]
    %v357 = vld [vmem:[%s1 + $0x50c] sm:$0xf]
    %v358 = vld [vmem:[%s1 + $0x510] sm:$0xf]
    %v359 = vld [vmem:[%s1 + $0x514] sm:$0xf]
    %v360 = vld [vmem:[%s1 + $0x518] sm:$0xf]
    %v361 = vld [vmem:[%s1 + $0x51c] sm:$0xf]
    %v362 = vld [vmem:[%s1 + $0x520] sm:$0xf]
    %v363 = vld [vmem:[%s1 + $0x524] sm:$0xf]
    %v364 = vld [vmem:[%s1 + $0x528] sm:$0xf]
    %v365 = vld [vmem:[%s1 + $0x52c] sm:$0xf]
    %v366 = vld [vmem:[%s1 + $0x530] sm:$0xf]
    %v367 = vld [vmem:[%s1 + $0x534] sm:$0xf]
    %v368 = vld [vmem:[%s1 + $0x538] sm:$0xf]
    %v369 = vld [vmem:[%s1 + $0x53c] sm:$0xf]
    %v370 = vld [vmem:[%s1 + $0x540] sm:$0xf]
    %v371 = vld [vmem:[%s1 + $0x544] sm:$0xf]
    %v372 = vld [vmem:[%s1 + $0x548] sm:$0xf]
    %v373 = vld [vmem:[%s1 + $0x54c] sm:$0xf]
    %v374 = vld [vmem:[%s1 + $0x550] sm:$0xf]
    %v375 = vld [vmem:[%s1 + $0x554] sm:$0xf]
    %v376 = vld [vmem:[%s1 + $0x558] sm:$0xf]
    %v377 = vld [vmem:[%s1 + $0x55c] sm:$0xf]
    %v378 = vld [vmem:[%s1 + $0x560] sm:$0xf]
    %v379 = vld [vmem:[%s1 + $0x564] sm:$0xf]
    %v380 = vld [vmem:[%s1 + $0x568] sm:$0xf]
    %v381 = vld [vmem:[%s1 + $0x56c] sm:$0xf]
    %v382 = vld [vmem:[%s1 + $0x570] sm:$0xf]
    %v383 = vld [vmem:[%s1 + $0x574] sm:$0xf]
    %v384 = vld [vmem:[%s1 + $0x578] sm:$0xf]
    %v385 = vld [vmem:[%s1 + $0x57c] sm:$0xf]
    %v386 = vld [vmem:[%s1 + $0x580] sm:$0xf]
    %v387 = vld [vmem:[%s1 + $0x584] sm:$0xf]
    %v388 = vld [vmem:[%s1 + $0x588] sm:$0xf]
    %v389 = vld [vmem:[%s1 + $0x58c] sm:$0xf]
    %v390 = vld [vmem:[%s1 + $0x590] sm:$0xf]
    %v391 = vld [vmem:[%s1 + $0x594] sm:$0xf]
    %v392 = vld [vmem:[%s1 + $0x598] sm:$0xf]
    %v393 = vld [vmem:[%s1 + $0x59c] sm:$0xf]
    %v394 = vld [vmem:[%s1 + $0x5a0] sm:$0xf]
    %v395 = vld [vmem:[%s1 + $0x5a4] sm:$0xf]
    %v396 = vld [vmem:[%s1 + $0x5a8] sm:$0xf]
    %v397 = vld [vmem:[%s1 + $0x5ac] sm:$0xf]
    %v398 = vld [vmem:[%s1 + $0x5b0] sm:$0xf]
    %v399 = vld [vmem:[%s1 + $0x5b4] sm:$0xf]
    %v400 = vld [vmem:[%s1 + $0x5b8] sm:$0xf]
    %v401 = vld [vmem:[%s1 + $0x5bc] sm:$0xf]
    %v402 = vld [vmem:[%s1 + $0x5c0] sm:$0xf]
    %v403 = vld [vmem:[%s1 + $0x5c4] sm:$0xf]
    %v404 = vld [vmem:[%s1 + $0x5c8] sm:$0xf]
    %v405 = vld [vmem:[%s1 + $0x5cc] sm:$0xf]
    %v406 = vld [vmem:[%s1 + $0x5d0] sm:$0xf]
    %v407 = vld [vmem:[%s1 + $0x5d4] sm:$0xf]
    %v408 = vld [vmem:[%s1 + $0x5d8] sm:$0xf]
    %v409 = vld [vmem:[%s1 + $0x5dc] sm:$0xf]
    %v410 = vld [vmem:[%s1 + $0x5e0] sm:$0xf]
    %v411 = vld [vmem:[%s1 + $0x5e4] sm:$0xf]
    %v412 = vld [vmem:[%s1 + $0x5e8] sm:$0xf]
    %v413 = vld [vmem:[%s1 + $0x5ec] sm:$0xf]
    %v414 = vld [vmem:[%s1 + $0x5f0] sm:$0xf]
    %v415 = vld [vmem:[%s1 + $0x5f4] sm:$0xf]
    %v416 = vld [vmem:[%s1 + $0x5f8] sm:$0xf]
    %v417 = vld [vmem:[%s1 + $0x5fc] sm:$0xf]
    %v418 = vld [vmem:[%s1 + $0x600] sm:$0xf]
    %v419 = vld [vmem:[%s1 + $0x604] sm:$0xf]
    %v420 = vld [vmem:[%s1 + $0x608] sm:$0xf]
    %v421 = vld [vmem:[%s1 + $0x60c] sm:$0xf]
    %v422 = vld [vmem:[%s1 + $0x610] sm:$0xf]
    %v423 = vld [vmem:[%s1 + $0x614] sm:$0xf]
    %v424 = vld [vmem:[%s1 + $0x618] sm:$0xf]
    %v425 = vld [vmem:[%s1 + $0x61c] sm:$0xf]
    %v426 = vld [vmem:[%s1 + $0x620] sm:$0xf]
    %v427 = vld [vmem:[%s1 + $0x624] sm:$0xf]
    %v428 = vld [vmem:[%s1 + $0x628] sm:$0xf]
    %v429 = vld [vmem:[%s1 + $0x62c] sm:$0xf]
    %v430 = vld [vmem:[%s1 + $0x630] sm:$0xf]
    %v431 = vld [vmem:[%s1 + $0x634] sm:$0xf]
    %v432 = vld [vmem:[%s1 + $0x638] sm:$0xf]
    %v433 = vld [vmem:[%s1 + $0x63c] sm:$0xf]
    %v434 = vld [vmem:[%s0] sm:$0xff]
    %v435 = vld [vmem:[%s0 + $0x8] sm:$0xff]
    %v436 = vld [vmem:[%s0 + $0x10] sm:$0xff]
    %v437 = vld [vmem:[%s0 + $0x18] sm:$0xff]
    %v438 = vld [vmem:[%s0 + $0x20] sm:$0xff]
    %v439 = vld [vmem:[%s0 + $0x28] sm:$0xff]
    %v440 = vld [vmem:[%s0 + $0x30] sm:$0xff]
    %v441 = vld [vmem:[%s0 + $0x38] sm:$0xff]
    %v442 = vld [vmem:[%s0 + $0x40] sm:$0xff]
    %v443 = vld [vmem:[%s0 + $0x48] sm:$0xff]
    %v444 = vld [vmem:[%s0 + $0x50] sm:$0xff]
    %v445 = vld [vmem:[%s0 + $0x58] sm:$0xff]
    %v446 = vld [vmem:[%s0 + $0x60] sm:$0xf]
    %v447 = vld [vmem:[%s0 + $0x64] sm:$0xff]
    %v448 = vld [vmem:[%s0 + $0x6c] sm:$0xff]
    %v449 = vld [vmem:[%s0 + $0x74] sm:$0xff]
    %v450 = vld [vmem:[%s0 + $0x7c] sm:$0xff]
    %v451 = vld [vmem:[%s0 + $0x84] sm:$0xff]
    %v452 = vld [vmem:[%s0 + $0x8c] sm:$0xff]
    %v453 = vld [vmem:[%s0 + $0x94] sm:$0xff]
    %v454 = vld [vmem:[%s0 + $0x9c] sm:$0xff]
    %v455 = vld [vmem:[%s0 + $0xa4] sm:$0xff]
    %v456 = vld [vmem:[%s0 + $0xac] sm:$0xff]
    %v457 = vld [vmem:[%s0 + $0xb4] sm:$0xff]
    %v458 = vld [vmem:[%s0 + $0xbc] sm:$0xff]
    %v459 = vld [vmem:[%s0 + $0xc4] sm:$0xf]
    %v460 = vld [vmem:[%s0 + $0xc8] sm:$0xff]
    %v461 = vld [vmem:[%s0 + $0xd0] sm:$0xff]
    %v462 = vld [vmem:[%s0 + $0xd8] sm:$0xff]
    %v463 = vld [vmem:[%s0 + $0xe0] sm:$0xff]
    %v464 = vld [vmem:[%s0 + $0xe8] sm:$0xff]
    %v465 = vld [vmem:[%s0 + $0xf0] sm:$0xff]
    %v466 = vld [vmem:[%s0 + $0xf8] sm:$0xff]
    %v467 = vld [vmem:[%s0 + $0x100] sm:$0xff]
    %v468 = vld [vmem:[%s0 + $0x108] sm:$0xff]
    %v469 = vld [vmem:[%s0 + $0x110] sm:$0xff]
    %v470 = vld [vmem:[%s0 + $0x118] sm:$0xff]
    %v471 = vld [vmem:[%s0 + $0x120] sm:$0xff]
    %v472 = vld [vmem:[%s0 + $0x128] sm:$0xf]
    %v473 = vld [vmem:[%s0 + $0x12c] sm:$0xff]
    %v474 = vld [vmem:[%s0 + $0x134] sm:$0xff]
    %v475 = vld [vmem:[%s0 + $0x13c] sm:$0xff]
    %v476 = vld [vmem:[%s0 + $0x144] sm:$0xff]
    %v477 = vld [vmem:[%s0 + $0x14c] sm:$0xff]
    %v478 = vld [vmem:[%s0 + $0x154] sm:$0xff]
    %v479 = vld [vmem:[%s0 + $0x15c] sm:$0xff]
    %v480 = vld [vmem:[%s0 + $0x164] sm:$0xff]
    %v481 = vld [vmem:[%s0 + $0x16c] sm:$0xff]
    %v482 = vld [vmem:[%s0 + $0x174] sm:$0xff]
    %v483 = vld [vmem:[%s0 + $0x17c] sm:$0xff]
    %v484 = vld [vmem:[%s0 + $0x184] sm:$0xff]
    %v485 = vld [vmem:[%s0 + $0x18c] sm:$0xf]
    %v486 = vld [vmem:[%s0 + $0x190] sm:$0xff]
    %v487 = vld [vmem:[%s0 + $0x198] sm:$0xff]
    %v488 = vld [vmem:[%s0 + $0x1a0] sm:$0xff]
    %v489 = vld [vmem:[%s0 + $0x1a8] sm:$0xff]
    %v490 = vld [vmem:[%s0 + $0x1b0] sm:$0xff]
    %v491 = vld [vmem:[%s0 + $0x1b8] sm:$0xff]
    %v492 = vld [vmem:[%s0 + $0x1c0] sm:$0xff]
    %v493 = vld [vmem:[%s0 + $0x1c8] sm:$0xff]
    %v494 = vld [vmem:[%s0 + $0x1d0] sm:$0xff]
    %v495 = vld [vmem:[%s0 + $0x1d8] sm:$0xff]
    %v496 = vld [vmem:[%s0 + $0x1e0] sm:$0xff]
    %v497 = vld [vmem:[%s0 + $0x1e8] sm:$0xff]
    %v498 = vld [vmem:[%s0 + $0x1f0] sm:$0xf]
    %v499 = vld [vmem:[%s0 + $0x1f4] sm:$0xff]
    %v500 = vld [vmem:[%s0 + $0x1fc] sm:$0xff]
    %v501 = vld [vmem:[%s0 + $0x204] sm:$0xff]
    %v502 = vld [vmem:[%s0 + $0x20c] sm:$0xff]
    %v503 = vld [vmem:[%s0 + $0x214] sm:$0xff]
    %v504 = vld [vmem:[%s0 + $0x21c] sm:$0xff]
    %v505 = vld [vmem:[%s0 + $0x224] sm:$0xff]
    %v506 = vld [vmem:[%s0 + $0x22c] sm:$0xff]
    %v507 = vld [vmem:[%s0 + $0x234] sm:$0xff]
    %v508 = vld [vmem:[%s0 + $0x23c] sm:$0xff]
    %v509 = vld [vmem:[%s0 + $0x244] sm:$0xff]
    %v510 = vld [vmem:[%s0 + $0x24c] sm:$0xff]
    %v511 = vld [vmem:[%s0 + $0x254] sm:$0xf]
    %v512 = vld [vmem:[%s0 + $0x258] sm:$0x11]
    %v513 = vld [vmem:[%s0 + $0x260] sm:$0x11]
    %v514 = vld [vmem:[%s0 + $0x268] sm:$0x11]
    %v515 = vld [vmem:[%s0 + $0x270] sm:$0x11]
    %v516 = vld [vmem:[%s0 + $0x278] sm:$0x11]
    %v517 = vld [vmem:[%s0 + $0x280] sm:$0x11]
    %v518 = vld [vmem:[%s0 + $0x288] sm:$0x11]
    %v519 = vld [vmem:[%s0 + $0x290] sm:$0x11]
    %v520 = vld [vmem:[%s0 + $0x298] sm:$0x11]
    %v521 = vld [vmem:[%s0 + $0x2a0] sm:$0x11]
    %v522 = vld [vmem:[%s0 + $0x2a8] sm:$0x11]
    %v523 = vld [vmem:[%s0 + $0x2b0] sm:$0x11]
    %v524 = vld [vmem:[%s0 + $0x2b8] sm:$0x1]
    %v616 = vunpack.c.l.b16 %v434
    %v617 = vunpack.c.h.b16 %v434
    %v618 = vunpack.c.l.b16 %v435
    %v619 = vunpack.c.h.b16 %v435
    %v620 = vunpack.c.l.b16 %v436
    %v621 = vunpack.c.h.b16 %v436
    %v622 = vunpack.c.l.b16 %v437
    %v623 = vunpack.c.h.b16 %v437
    %v624 = vunpack.c.l.b16 %v438
    %v625 = vunpack.c.h.b16 %v438
    %v626 = vunpack.c.l.b16 %v439
    %v627 = vunpack.c.h.b16 %v439
    %v628 = vunpack.c.l.b16 %v440
    %v629 = vunpack.c.h.b16 %v440
    %v630 = vunpack.c.l.b16 %v441
    %v631 = vunpack.c.h.b16 %v441
    %v632 = vunpack.c.l.b16 %v442
    %v633 = vunpack.c.h.b16 %v442
    %v634 = vunpack.c.l.b16 %v443
    %v635 = vunpack.c.h.b16 %v443
    %v636 = vunpack.c.l.b16 %v444
    %v637 = vunpack.c.h.b16 %v444
    %v638 = vunpack.c.l.b16 %v445
    %v639 = vunpack.c.h.b16 %v445
    %v640 = vunpack.c.l.b16 %v446
    %v641 = vunpack.c.l.b16 %v447
    %v642 = vunpack.c.h.b16 %v447
    %v643 = vunpack.c.l.b16 %v448
    %v644 = vunpack.c.h.b16 %v448
    %v645 = vunpack.c.l.b16 %v449
    %v646 = vunpack.c.h.b16 %v449
    %v647 = vunpack.c.l.b16 %v450
    %v648 = vunpack.c.h.b16 %v450
    %v649 = vunpack.c.l.b16 %v451
    %v650 = vunpack.c.h.b16 %v451
    %v651 = vunpack.c.l.b16 %v452
    %v652 = vunpack.c.h.b16 %v452
    %v653 = vunpack.c.l.b16 %v453
    %v654 = vunpack.c.h.b16 %v453
    %v655 = vunpack.c.l.b16 %v454
    %v656 = vunpack.c.h.b16 %v454
    %v657 = vunpack.c.l.b16 %v455
    %v658 = vunpack.c.h.b16 %v455
    %v659 = vunpack.c.l.b16 %v456
    %v660 = vunpack.c.h.b16 %v456
    %v661 = vunpack.c.l.b16 %v457
    %v662 = vunpack.c.h.b16 %v457
    %v663 = vunpack.c.l.b16 %v458
    %v664 = vunpack.c.h.b16 %v458
    %v665 = vunpack.c.l.b16 %v459
    %v666 = vunpack.c.l.b16 %v460
    %v667 = vunpack.c.h.b16 %v460
    %v668 = vunpack.c.l.b16 %v461
    %v669 = vunpack.c.h.b16 %v461
    %v670 = vunpack.c.l.b16 %v462
    %v671 = vunpack.c.h.b16 %v462
    %v672 = vunpack.c.l.b16 %v463
    %v673 = vunpack.c.h.b16 %v463
    %v674 = vunpack.c.l.b16 %v464
    %v675 = vunpack.c.h.b16 %v464
    %v676 = vunpack.c.l.b16 %v465
    %v677 = vunpack.c.h.b16 %v465
    %v678 = vunpack.c.l.b16 %v466
    %v679 = vunpack.c.h.b16 %v466
    %v680 = vunpack.c.l.b16 %v467
    %v681 = vunpack.c.h.b16 %v467
    %v682 = vunpack.c.l.b16 %v468
    %v683 = vunpack.c.h.b16 %v468
    %v684 = vunpack.c.l.b16 %v469
    %v685 = vunpack.c.h.b16 %v469
    %v686 = vunpack.c.l.b16 %v470
    %v687 = vunpack.c.h.b16 %v470
    %v688 = vunpack.c.l.b16 %v471
    %v689 = vunpack.c.h.b16 %v471
    %v690 = vunpack.c.l.b16 %v472
    %v691 = vunpack.c.l.b16 %v473
    %v692 = vunpack.c.h.b16 %v473
    %v693 = vunpack.c.l.b16 %v474
    %v694 = vunpack.c.h.b16 %v474
    %v695 = vunpack.c.l.b16 %v475
    %v696 = vunpack.c.h.b16 %v475
    %v697 = vunpack.c.l.b16 %v476
    %v698 = vunpack.c.h.b16 %v476
    %v699 = vunpack.c.l.b16 %v477
    %v700 = vunpack.c.h.b16 %v477
    %v701 = vunpack.c.l.b16 %v478
    %v702 = vunpack.c.h.b16 %v478
    %v703 = vunpack.c.l.b16 %v479
    %v704 = vunpack.c.h.b16 %v479
    %v705 = vunpack.c.l.b16 %v480
    %v706 = vunpack.c.h.b16 %v480
    %v707 = vunpack.c.l.b16 %v481
    %v708 = vunpack.c.h.b16 %v481
    %v709 = vunpack.c.l.b16 %v482
    %v710 = vunpack.c.h.b16 %v482
    %v711 = vunpack.c.l.b16 %v483
    %v712 = vunpack.c.h.b16 %v483
    %v713 = vunpack.c.l.b16 %v484
    %v714 = vunpack.c.h.b16 %v484
    %v715 = vunpack.c.l.b16 %v485
    %v716 = vunpack.c.l.b16 %v486
    %v717 = vunpack.c.h.b16 %v486
    %v718 = vunpack.c.l.b16 %v487
    %v719 = vunpack.c.h.b16 %v487
    %v720 = vunpack.c.l.b16 %v488
    %v721 = vunpack.c.h.b16 %v488
    %v722 = vunpack.c.l.b16 %v489
    %v723 = vunpack.c.h.b16 %v489
    %v724 = vunpack.c.l.b16 %v490
    %v725 = vunpack.c.h.b16 %v490
    %v726 = vunpack.c.l.b16 %v491
    %v727 = vunpack.c.h.b16 %v491
    %v728 = vunpack.c.l.b16 %v492
    %v729 = vunpack.c.h.b16 %v492
    %v730 = vunpack.c.l.b16 %v493
    %v731 = vunpack.c.h.b16 %v493
    %v732 = vunpack.c.l.b16 %v494
    %v733 = vunpack.c.h.b16 %v494
    %v734 = vunpack.c.l.b16 %v495
    %v735 = vunpack.c.h.b16 %v495
    %v736 = vunpack.c.l.b16 %v496
    %v737 = vunpack.c.h.b16 %v496
    %v738 = vunpack.c.l.b16 %v497
    %v739 = vunpack.c.h.b16 %v497
    %v740 = vunpack.c.l.b16 %v498
    %v741 = vunpack.c.l.b16 %v499
    %v742 = vunpack.c.h.b16 %v499
    %v743 = vunpack.c.l.b16 %v500
    %v744 = vunpack.c.h.b16 %v500
    %v745 = vunpack.c.l.b16 %v501
    %v746 = vunpack.c.h.b16 %v501
    %v747 = vunpack.c.l.b16 %v502
    %v748 = vunpack.c.h.b16 %v502
    %v749 = vunpack.c.l.b16 %v503
    %v750 = vunpack.c.h.b16 %v503
    %v751 = vunpack.c.l.b16 %v504
    %v752 = vunpack.c.h.b16 %v504
    %v753 = vunpack.c.l.b16 %v505
    %v754 = vunpack.c.h.b16 %v505
    %v755 = vunpack.c.l.b16 %v506
    %v756 = vunpack.c.h.b16 %v506
    %v757 = vunpack.c.l.b16 %v507
    %v758 = vunpack.c.h.b16 %v507
    %v759 = vunpack.c.l.b16 %v508
    %v760 = vunpack.c.h.b16 %v508
    %v761 = vunpack.c.l.b16 %v509
    %v762 = vunpack.c.h.b16 %v509
    %v763 = vunpack.c.l.b16 %v510
    %v764 = vunpack.c.h.b16 %v510
    %v765 = vunpack.c.l.b16 %v511
    %v766 = vunpack.c.l.b16 %v512
    %v767 = vunpack.c.h.b16 %v512
    %v768 = vunpack.c.l.b16 %v513
    %v769 = vunpack.c.h.b16 %v513
    %v770 = vunpack.c.l.b16 %v514
    %v771 = vunpack.c.h.b16 %v514
    %v772 = vunpack.c.l.b16 %v515
    %v773 = vunpack.c.h.b16 %v515
    %v774 = vunpack.c.l.b16 %v516
    %v775 = vunpack.c.h.b16 %v516
    %v776 = vunpack.c.l.b16 %v517
    %v777 = vunpack.c.h.b16 %v517
    %v778 = vunpack.c.l.b16 %v518
    %v779 = vunpack.c.h.b16 %v518
    %v780 = vunpack.c.l.b16 %v519
    %v781 = vunpack.c.h.b16 %v519
    %v782 = vunpack.c.l.b16 %v520
    %v783 = vunpack.c.h.b16 %v520
    %v784 = vunpack.c.l.b16 %v521
    %v785 = vunpack.c.h.b16 %v521
    %v786 = vunpack.c.l.b16 %v522
    %v787 = vunpack.c.h.b16 %v522
    %v788 = vunpack.c.l.b16 %v523
    %v789 = vunpack.c.h.b16 %v523
    %v790 = vunpack.c.l.b16 %v524
    %v791 = vpack.c.b16 %v641, %v616
    %v792 = vpack.c.b16 %v642, %v617
    %v793 = vpack.c.b16 %v643, %v618
    %v794 = vpack.c.b16 %v644, %v619
    %v795 = vpack.c.b16 %v645, %v620
    %v796 = vpack.c.b16 %v646, %v621
    %v797 = vpack.c.b16 %v647, %v622
    %v798 = vpack.c.b16 %v648, %v623
    %v799 = vpack.c.b16 %v649, %v624
    %v800 = vpack.c.b16 %v650, %v625
    %v801 = vpack.c.b16 %v651, %v626
    %v802 = vpack.c.b16 %v652, %v627
    %v803 = vpack.c.b16 %v653, %v628
    %v804 = vpack.c.b16 %v654, %v629
    %v805 = vpack.c.b16 %v655, %v630
    %v806 = vpack.c.b16 %v656, %v631
    %v807 = vpack.c.b16 %v657, %v632
    %v808 = vpack.c.b16 %v658, %v633
    %v809 = vpack.c.b16 %v659, %v634
    %v810 = vpack.c.b16 %v660, %v635
    %v811 = vpack.c.b16 %v661, %v636
    %v812 = vpack.c.b16 %v662, %v637
    %v813 = vpack.c.b16 %v663, %v638
    %v814 = vpack.c.b16 %v664, %v639
    %v815 = vpack.c.b16 %v665, %v640
    %v816 = vpack.c.b16 %v691, %v666
    %v817 = vpack.c.b16 %v692, %v667
    %v818 = vpack.c.b16 %v693, %v668
    %v819 = vpack.c.b16 %v694, %v669
    %v820 = vpack.c.b16 %v695, %v670
    %v821 = vpack.c.b16 %v696, %v671
    %v822 = vpack.c.b16 %v697, %v672
    %v823 = vpack.c.b16 %v698, %v673
    %v824 = vpack.c.b16 %v699, %v674
    %v825 = vpack.c.b16 %v700, %v675
    %v826 = vpack.c.b16 %v701, %v676
    %v827 = vpack.c.b16 %v702, %v677
    %v828 = vpack.c.b16 %v703, %v678
    %v829 = vpack.c.b16 %v704, %v679
    %v830 = vpack.c.b16 %v705, %v680
    %v831 = vpack.c.b16 %v706, %v681
    %v832 = vpack.c.b16 %v707, %v682
    %v833 = vpack.c.b16 %v708, %v683
    %v834 = vpack.c.b16 %v709, %v684
    %v835 = vpack.c.b16 %v710, %v685
    %v836 = vpack.c.b16 %v711, %v686
    %v837 = vpack.c.b16 %v712, %v687
    %v838 = vpack.c.b16 %v713, %v688
    %v839 = vpack.c.b16 %v714, %v689
    %v840 = vpack.c.b16 %v715, %v690
    %v841 = vpack.c.b16 %v741, %v716
    %v842 = vpack.c.b16 %v742, %v717
    %v843 = vpack.c.b16 %v743, %v718
    %v844 = vpack.c.b16 %v744, %v719
    %v845 = vpack.c.b16 %v745, %v720
    %v846 = vpack.c.b16 %v746, %v721
    %v847 = vpack.c.b16 %v747, %v722
    %v848 = vpack.c.b16 %v748, %v723
    %v849 = vpack.c.b16 %v749, %v724
    %v850 = vpack.c.b16 %v750, %v725
    %v851 = vpack.c.b16 %v751, %v726
    %v852 = vpack.c.b16 %v752, %v727
    %v853 = vpack.c.b16 %v753, %v728
    %v854 = vpack.c.b16 %v754, %v729
    %v855 = vpack.c.b16 %v755, %v730
    %v856 = vpack.c.b16 %v756, %v731
    %v857 = vpack.c.b16 %v757, %v732
    %v858 = vpack.c.b16 %v758, %v733
    %v859 = vpack.c.b16 %v759, %v734
    %v860 = vpack.c.b16 %v760, %v735
    %v861 = vpack.c.b16 %v761, %v736
    %v862 = vpack.c.b16 %v762, %v737
    %v863 = vpack.c.b16 %v763, %v738
    %v864 = vpack.c.b16 %v764, %v739
    %v865 = vpack.c.b16 %v765, %v740
    %v866 = vpack.c.b16 %v766, %v766
    %v867 = vpack.c.b16 %v767, %v767
    %v868 = vpack.c.b16 %v768, %v768
    %v869 = vpack.c.b16 %v769, %v769
    %v870 = vpack.c.b16 %v770, %v770
    %v871 = vpack.c.b16 %v771, %v771
    %v872 = vpack.c.b16 %v772, %v772
    %v873 = vpack.c.b16 %v773, %v773
    %v874 = vpack.c.b16 %v774, %v774
    %v875 = vpack.c.b16 %v775, %v775
    %v876 = vpack.c.b16 %v776, %v776
    %v877 = vpack.c.b16 %v777, %v777
    %v878 = vpack.c.b16 %v778, %v778
    %v879 = vpack.c.b16 %v779, %v779
    %v880 = vpack.c.b16 %v780, %v780
    %v881 = vpack.c.b16 %v781, %v781
    %v882 = vpack.c.b16 %v782, %v782
    %v883 = vpack.c.b16 %v783, %v783
    %v884 = vpack.c.b16 %v784, %v784
    %v885 = vpack.c.b16 %v785, %v785
    %v886 = vpack.c.b16 %v786, %v786
    %v887 = vpack.c.b16 %v787, %v787
    %v888 = vpack.c.b16 %v788, %v788
    %v889 = vpack.c.b16 %v789, %v789
    %v890 = vpack.c.b16 %v790, %v790
    %v1391 = vunpack.c.l.b16 %v34
    %v1392 = vunpack.c.l.b16 %v35
    %v1393 = vunpack.c.l.b16 %v36
    %v1394 = vunpack.c.l.b16 %v37
    %v1395 = vunpack.c.l.b16 %v38
    %v1396 = vunpack.c.l.b16 %v39
    %v1397 = vunpack.c.l.b16 %v40
    %v1398 = vunpack.c.l.b16 %v41
    %v1399 = vunpack.c.l.b16 %v42
    %v1400 = vunpack.c.l.b16 %v43
    %v1401 = vunpack.c.l.b16 %v44
    %v1402 = vunpack.c.l.b16 %v45
    %v1403 = vunpack.c.l.b16 %v46
    %v1404 = vunpack.c.l.b16 %v47
    %v1405 = vunpack.c.l.b16 %v48
    %v1406 = vunpack.c.l.b16 %v49
    %v1407 = vunpack.c.l.b16 %v50
    %v1408 = vunpack.c.l.b16 %v51
    %v1409 = vunpack.c.l.b16 %v52
    %v1410 = vunpack.c.l.b16 %v53
    %v1411 = vunpack.c.l.b16 %v54
    %v1412 = vunpack.c.l.b16 %v55
    %v1413 = vunpack.c.l.b16 %v56
    %v1414 = vunpack.c.l.b16 %v57
    %v1415 = vunpack.c.l.b16 %v58
    %v1416 = vunpack.c.l.b16 %v59
    %v1417 = vunpack.c.l.b16 %v60
    %v1418 = vunpack.c.l.b16 %v61
    %v1419 = vunpack.c.l.b16 %v62
    %v1420 = vunpack.c.l.b16 %v63
    %v1421 = vunpack.c.l.b16 %v64
    %v1422 = vunpack.c.l.b16 %v65
    %v1423 = vunpack.c.l.b16 %v66
    %v1424 = vunpack.c.l.b16 %v67
    %v1425 = vunpack.c.l.b16 %v68
    %v1426 = vunpack.c.l.b16 %v69
    %v1427 = vunpack.c.l.b16 %v70
    %v1428 = vunpack.c.l.b16 %v71
    %v1429 = vunpack.c.l.b16 %v72
    %v1430 = vunpack.c.l.b16 %v73
    %v1431 = vunpack.c.l.b16 %v74
    %v1432 = vunpack.c.l.b16 %v75
    %v1433 = vunpack.c.l.b16 %v76
    %v1434 = vunpack.c.l.b16 %v77
    %v1435 = vunpack.c.l.b16 %v78
    %v1436 = vunpack.c.l.b16 %v79
    %v1437 = vunpack.c.l.b16 %v80
    %v1438 = vunpack.c.l.b16 %v81
    %v1439 = vunpack.c.l.b16 %v82
    %v1440 = vunpack.c.l.b16 %v83
    %v1441 = vunpack.c.l.b16 %v84
    %v1442 = vunpack.c.l.b16 %v85
    %v1443 = vunpack.c.l.b16 %v86
    %v1444 = vunpack.c.l.b16 %v87
    %v1445 = vunpack.c.l.b16 %v88
    %v1446 = vunpack.c.l.b16 %v89
    %v1447 = vunpack.c.l.b16 %v90
    %v1448 = vunpack.c.l.b16 %v91
    %v1449 = vunpack.c.l.b16 %v92
    %v1450 = vunpack.c.l.b16 %v93
    %v1451 = vunpack.c.l.b16 %v94
    %v1452 = vunpack.c.l.b16 %v95
    %v1453 = vunpack.c.l.b16 %v96
    %v1454 = vunpack.c.l.b16 %v97
    %v1455 = vunpack.c.l.b16 %v98
    %v1456 = vunpack.c.l.b16 %v99
    %v1457 = vunpack.c.l.b16 %v100
    %v1458 = vunpack.c.l.b16 %v101
    %v1459 = vunpack.c.l.b16 %v102
    %v1460 = vunpack.c.l.b16 %v103
    %v1461 = vunpack.c.l.b16 %v104
    %v1462 = vunpack.c.l.b16 %v105
    %v1463 = vunpack.c.l.b16 %v106
    %v1464 = vunpack.c.l.b16 %v107
    %v1465 = vunpack.c.l.b16 %v108
    %v1466 = vunpack.c.l.b16 %v109
    %v1467 = vunpack.c.l.b16 %v110
    %v1468 = vunpack.c.l.b16 %v111
    %v1469 = vunpack.c.l.b16 %v112
    %v1470 = vunpack.c.l.b16 %v113
    %v1471 = vunpack.c.l.b16 %v114
    %v1472 = vunpack.c.l.b16 %v115
    %v1473 = vunpack.c.l.b16 %v116
    %v1474 = vunpack.c.l.b16 %v117
    %v1475 = vunpack.c.l.b16 %v118
    %v1476 = vunpack.c.l.b16 %v119
    %v1477 = vunpack.c.l.b16 %v120
    %v1478 = vunpack.c.l.b16 %v121
    %v1479 = vunpack.c.l.b16 %v122
    %v1480 = vunpack.c.l.b16 %v123
    %v1481 = vunpack.c.l.b16 %v124
    %v1482 = vunpack.c.l.b16 %v125
    %v1483 = vunpack.c.l.b16 %v126
    %v1484 = vunpack.c.l.b16 %v127
    %v1485 = vunpack.c.l.b16 %v128
    %v1486 = vunpack.c.l.b16 %v129
    %v1487 = vunpack.c.l.b16 %v130
    %v1488 = vunpack.c.l.b16 %v131
    %v1489 = vunpack.c.l.b16 %v132
    %v1490 = vunpack.c.l.b16 %v133
    %v1491 = vunpack.c.l.b16 %v134
    %v1492 = vunpack.c.l.b16 %v135
    %v1493 = vunpack.c.l.b16 %v136
    %v1494 = vunpack.c.l.b16 %v137
    %v1495 = vunpack.c.l.b16 %v138
    %v1496 = vunpack.c.l.b16 %v139
    %v1497 = vunpack.c.l.b16 %v140
    %v1498 = vunpack.c.l.b16 %v141
    %v1499 = vunpack.c.l.b16 %v142
    %v1500 = vunpack.c.l.b16 %v143
    %v1501 = vunpack.c.l.b16 %v144
    %v1502 = vunpack.c.l.b16 %v145
    %v1503 = vunpack.c.l.b16 %v146
    %v1504 = vunpack.c.l.b16 %v147
    %v1505 = vunpack.c.l.b16 %v148
    %v1506 = vunpack.c.l.b16 %v149
    %v1507 = vunpack.c.l.b16 %v150
    %v1508 = vunpack.c.l.b16 %v151
    %v1509 = vunpack.c.l.b16 %v152
    %v1510 = vunpack.c.l.b16 %v153
    %v1511 = vunpack.c.l.b16 %v154
    %v1512 = vunpack.c.l.b16 %v155
    %v1513 = vunpack.c.l.b16 %v156
    %v1514 = vunpack.c.l.b16 %v157
    %v1515 = vunpack.c.l.b16 %v158
    %v1516 = vunpack.c.l.b16 %v159
    %v1517 = vunpack.c.l.b16 %v160
    %v1518 = vunpack.c.l.b16 %v161
    %v1519 = vunpack.c.l.b16 %v162
    %v1520 = vunpack.c.l.b16 %v163
    %v1521 = vunpack.c.l.b16 %v164
    %v1522 = vunpack.c.l.b16 %v165
    %v1523 = vunpack.c.l.b16 %v166
    %v1524 = vunpack.c.l.b16 %v167
    %v1525 = vunpack.c.l.b16 %v168
    %v1526 = vunpack.c.l.b16 %v169
    %v1527 = vunpack.c.l.b16 %v170
    %v1528 = vunpack.c.l.b16 %v171
    %v1529 = vunpack.c.l.b16 %v172
    %v1530 = vunpack.c.l.b16 %v173
    %v1531 = vunpack.c.l.b16 %v174
    %v1532 = vunpack.c.l.b16 %v175
    %v1533 = vunpack.c.l.b16 %v176
    %v1534 = vunpack.c.l.b16 %v177
    %v1535 = vunpack.c.l.b16 %v178
    %v1536 = vunpack.c.l.b16 %v179
    %v1537 = vunpack.c.l.b16 %v180
    %v1538 = vunpack.c.l.b16 %v181
    %v1539 = vunpack.c.l.b16 %v182
    %v1540 = vunpack.c.l.b16 %v183
    %v1541 = vunpack.c.l.b16 %v184
    %v1542 = vunpack.c.l.b16 %v185
    %v1543 = vunpack.c.l.b16 %v186
    %v1544 = vunpack.c.l.b16 %v187
    %v1545 = vunpack.c.l.b16 %v188
    %v1546 = vunpack.c.l.b16 %v189
    %v1547 = vunpack.c.l.b16 %v190
    %v1548 = vunpack.c.l.b16 %v191
    %v1549 = vunpack.c.l.b16 %v192
    %v1550 = vunpack.c.l.b16 %v193
    %v1551 = vunpack.c.l.b16 %v194
    %v1552 = vunpack.c.l.b16 %v195
    %v1553 = vunpack.c.l.b16 %v196
    %v1554 = vunpack.c.l.b16 %v197
    %v1555 = vunpack.c.l.b16 %v198
    %v1556 = vunpack.c.l.b16 %v199
    %v1557 = vunpack.c.l.b16 %v200
    %v1558 = vunpack.c.l.b16 %v201
    %v1559 = vunpack.c.l.b16 %v202
    %v1560 = vunpack.c.l.b16 %v203
    %v1561 = vunpack.c.l.b16 %v204
    %v1562 = vunpack.c.l.b16 %v205
    %v1563 = vunpack.c.l.b16 %v206
    %v1564 = vunpack.c.l.b16 %v207
    %v1565 = vunpack.c.l.b16 %v208
    %v1566 = vunpack.c.l.b16 %v209
    %v1567 = vunpack.c.l.b16 %v210
    %v1568 = vunpack.c.l.b16 %v211
    %v1569 = vunpack.c.l.b16 %v212
    %v1570 = vunpack.c.l.b16 %v213
    %v1571 = vunpack.c.l.b16 %v214
    %v1572 = vunpack.c.l.b16 %v215
    %v1573 = vunpack.c.l.b16 %v216
    %v1574 = vunpack.c.l.b16 %v217
    %v1575 = vunpack.c.l.b16 %v218
    %v1576 = vunpack.c.l.b16 %v219
    %v1577 = vunpack.c.l.b16 %v220
    %v1578 = vunpack.c.l.b16 %v221
    %v1579 = vunpack.c.l.b16 %v222
    %v1580 = vunpack.c.l.b16 %v223
    %v1581 = vunpack.c.l.b16 %v224
    %v1582 = vunpack.c.l.b16 %v225
    %v1583 = vunpack.c.l.b16 %v226
    %v1584 = vunpack.c.l.b16 %v227
    %v1585 = vunpack.c.l.b16 %v228
    %v1586 = vunpack.c.l.b16 %v229
    %v1587 = vunpack.c.l.b16 %v230
    %v1588 = vunpack.c.l.b16 %v231
    %v1589 = vunpack.c.l.b16 %v232
    %v1590 = vunpack.c.l.b16 %v233
    %v1591 = vunpack.c.l.b16 %v234
    %v1592 = vunpack.c.l.b16 %v235
    %v1593 = vunpack.c.l.b16 %v236
    %v1594 = vunpack.c.l.b16 %v237
    %v1595 = vunpack.c.l.b16 %v238
    %v1596 = vunpack.c.l.b16 %v239
    %v1597 = vunpack.c.l.b16 %v240
    %v1598 = vunpack.c.l.b16 %v241
    %v1599 = vunpack.c.l.b16 %v242
    %v1600 = vunpack.c.l.b16 %v243
    %v1601 = vunpack.c.l.b16 %v244
    %v1602 = vunpack.c.l.b16 %v245
    %v1603 = vunpack.c.l.b16 %v246
    %v1604 = vunpack.c.l.b16 %v247
    %v1605 = vunpack.c.l.b16 %v248
    %v1606 = vunpack.c.l.b16 %v249
    %v1607 = vunpack.c.l.b16 %v250
    %v1608 = vunpack.c.l.b16 %v251
    %v1609 = vunpack.c.l.b16 %v252
    %v1610 = vunpack.c.l.b16 %v253
    %v1611 = vunpack.c.l.b16 %v254
    %v1612 = vunpack.c.l.b16 %v255
    %v1613 = vunpack.c.l.b16 %v256
    %v1614 = vunpack.c.l.b16 %v257
    %v1615 = vunpack.c.l.b16 %v258
    %v1616 = vunpack.c.l.b16 %v259
    %v1617 = vunpack.c.l.b16 %v260
    %v1618 = vunpack.c.l.b16 %v261
    %v1619 = vunpack.c.l.b16 %v262
    %v1620 = vunpack.c.l.b16 %v263
    %v1621 = vunpack.c.l.b16 %v264
    %v1622 = vunpack.c.l.b16 %v265
    %v1623 = vunpack.c.l.b16 %v266
    %v1624 = vunpack.c.l.b16 %v267
    %v1625 = vunpack.c.l.b16 %v268
    %v1626 = vunpack.c.l.b16 %v269
    %v1627 = vunpack.c.l.b16 %v270
    %v1628 = vunpack.c.l.b16 %v271
    %v1629 = vunpack.c.l.b16 %v272
    %v1630 = vunpack.c.l.b16 %v273
    %v1631 = vunpack.c.l.b16 %v274
    %v1632 = vunpack.c.l.b16 %v275
    %v1633 = vunpack.c.l.b16 %v276
    %v1634 = vunpack.c.l.b16 %v277
    %v1635 = vunpack.c.l.b16 %v278
    %v1636 = vunpack.c.l.b16 %v279
    %v1637 = vunpack.c.l.b16 %v280
    %v1638 = vunpack.c.l.b16 %v281
    %v1639 = vunpack.c.l.b16 %v282
    %v1640 = vunpack.c.l.b16 %v283
    %v1641 = vunpack.c.l.b16 %v284
    %v1642 = vunpack.c.l.b16 %v285
    %v1643 = vunpack.c.l.b16 %v286
    %v1644 = vunpack.c.l.b16 %v287
    %v1645 = vunpack.c.l.b16 %v288
    %v1646 = vunpack.c.l.b16 %v289
    %v1647 = vunpack.c.l.b16 %v290
    %v1648 = vunpack.c.l.b16 %v291
    %v1649 = vunpack.c.l.b16 %v292
    %v1650 = vunpack.c.l.b16 %v293
    %v1651 = vunpack.c.l.b16 %v294
    %v1652 = vunpack.c.l.b16 %v295
    %v1653 = vunpack.c.l.b16 %v296
    %v1654 = vunpack.c.l.b16 %v297
    %v1655 = vunpack.c.l.b16 %v298
    %v1656 = vunpack.c.l.b16 %v299
    %v1657 = vunpack.c.l.b16 %v300
    %v1658 = vunpack.c.l.b16 %v301
    %v1659 = vunpack.c.l.b16 %v302
    %v1660 = vunpack.c.l.b16 %v303
    %v1661 = vunpack.c.l.b16 %v304
    %v1662 = vunpack.c.l.b16 %v305
    %v1663 = vunpack.c.l.b16 %v306
    %v1664 = vunpack.c.l.b16 %v307
    %v1665 = vunpack.c.l.b16 %v308
    %v1666 = vunpack.c.l.b16 %v309
    %v1667 = vunpack.c.l.b16 %v310
    %v1668 = vunpack.c.l.b16 %v311
    %v1669 = vunpack.c.l.b16 %v312
    %v1670 = vunpack.c.l.b16 %v313
    %v1671 = vunpack.c.l.b16 %v314
    %v1672 = vunpack.c.l.b16 %v315
    %v1673 = vunpack.c.l.b16 %v316
    %v1674 = vunpack.c.l.b16 %v317
    %v1675 = vunpack.c.l.b16 %v318
    %v1676 = vunpack.c.l.b16 %v319
    %v1677 = vunpack.c.l.b16 %v320
    %v1678 = vunpack.c.l.b16 %v321
    %v1679 = vunpack.c.l.b16 %v322
    %v1680 = vunpack.c.l.b16 %v323
    %v1681 = vunpack.c.l.b16 %v324
    %v1682 = vunpack.c.l.b16 %v325
    %v1683 = vunpack.c.l.b16 %v326
    %v1684 = vunpack.c.l.b16 %v327
    %v1685 = vunpack.c.l.b16 %v328
    %v1686 = vunpack.c.l.b16 %v329
    %v1687 = vunpack.c.l.b16 %v330
    %v1688 = vunpack.c.l.b16 %v331
    %v1689 = vunpack.c.l.b16 %v332
    %v1690 = vunpack.c.l.b16 %v333
    %v1691 = vunpack.c.l.b16 %v334
    %v1692 = vunpack.c.l.b16 %v335
    %v1693 = vunpack.c.l.b16 %v336
    %v1694 = vunpack.c.l.b16 %v337
    %v1695 = vunpack.c.l.b16 %v338
    %v1696 = vunpack.c.l.b16 %v339
    %v1697 = vunpack.c.l.b16 %v340
    %v1698 = vunpack.c.l.b16 %v341
    %v1699 = vunpack.c.l.b16 %v342
    %v1700 = vunpack.c.l.b16 %v343
    %v1701 = vunpack.c.l.b16 %v344
    %v1702 = vunpack.c.l.b16 %v345
    %v1703 = vunpack.c.l.b16 %v346
    %v1704 = vunpack.c.l.b16 %v347
    %v1705 = vunpack.c.l.b16 %v348
    %v1706 = vunpack.c.l.b16 %v349
    %v1707 = vunpack.c.l.b16 %v350
    %v1708 = vunpack.c.l.b16 %v351
    %v1709 = vunpack.c.l.b16 %v352
    %v1710 = vunpack.c.l.b16 %v353
    %v1711 = vunpack.c.l.b16 %v354
    %v1712 = vunpack.c.l.b16 %v355
    %v1713 = vunpack.c.l.b16 %v356
    %v1714 = vunpack.c.l.b16 %v357
    %v1715 = vunpack.c.l.b16 %v358
    %v1716 = vunpack.c.l.b16 %v359
    %v1717 = vunpack.c.l.b16 %v360
    %v1718 = vunpack.c.l.b16 %v361
    %v1719 = vunpack.c.l.b16 %v362
    %v1720 = vunpack.c.l.b16 %v363
    %v1721 = vunpack.c.l.b16 %v364
    %v1722 = vunpack.c.l.b16 %v365
    %v1723 = vunpack.c.l.b16 %v366
    %v1724 = vunpack.c.l.b16 %v367
    %v1725 = vunpack.c.l.b16 %v368
    %v1726 = vunpack.c.l.b16 %v369
    %v1727 = vunpack.c.l.b16 %v370
    %v1728 = vunpack.c.l.b16 %v371
    %v1729 = vunpack.c.l.b16 %v372
    %v1730 = vunpack.c.l.b16 %v373
    %v1731 = vunpack.c.l.b16 %v374
    %v1732 = vunpack.c.l.b16 %v375
    %v1733 = vunpack.c.l.b16 %v376
    %v1734 = vunpack.c.l.b16 %v377
    %v1735 = vunpack.c.l.b16 %v378
    %v1736 = vunpack.c.l.b16 %v379
    %v1737 = vunpack.c.l.b16 %v380
    %v1738 = vunpack.c.l.b16 %v381
    %v1739 = vunpack.c.l.b16 %v382
    %v1740 = vunpack.c.l.b16 %v383
    %v1741 = vunpack.c.l.b16 %v384
    %v1742 = vunpack.c.l.b16 %v385
    %v1743 = vunpack.c.l.b16 %v386
    %v1744 = vunpack.c.l.b16 %v387
    %v1745 = vunpack.c.l.b16 %v388
    %v1746 = vunpack.c.l.b16 %v389
    %v1747 = vunpack.c.l.b16 %v390
    %v1748 = vunpack.c.l.b16 %v391
    %v1749 = vunpack.c.l.b16 %v392
    %v1750 = vunpack.c.l.b16 %v393
    %v1751 = vunpack.c.l.b16 %v394
    %v1752 = vunpack.c.l.b16 %v395
    %v1753 = vunpack.c.l.b16 %v396
    %v1754 = vunpack.c.l.b16 %v397
    %v1755 = vunpack.c.l.b16 %v398
    %v1756 = vunpack.c.l.b16 %v399
    %v1757 = vunpack.c.l.b16 %v400
    %v1758 = vunpack.c.l.b16 %v401
    %v1759 = vunpack.c.l.b16 %v402
    %v1760 = vunpack.c.l.b16 %v403
    %v1761 = vunpack.c.l.b16 %v404
    %v1762 = vunpack.c.l.b16 %v405
    %v1763 = vunpack.c.l.b16 %v406
    %v1764 = vunpack.c.l.b16 %v407
    %v1765 = vunpack.c.l.b16 %v408
    %v1766 = vunpack.c.l.b16 %v409
    %v1767 = vunpack.c.l.b16 %v410
    %v1768 = vunpack.c.l.b16 %v411
    %v1769 = vunpack.c.l.b16 %v412
    %v1770 = vunpack.c.l.b16 %v413
    %v1771 = vunpack.c.l.b16 %v414
    %v1772 = vunpack.c.l.b16 %v415
    %v1773 = vunpack.c.l.b16 %v416
    %v1774 = vunpack.c.l.b16 %v417
    %v1775 = vunpack.c.l.b16 %v418
    %v1776 = vunpack.c.l.b16 %v419
    %v1777 = vunpack.c.l.b16 %v420
    %v1778 = vunpack.c.l.b16 %v421
    %v1779 = vunpack.c.l.b16 %v422
    %v1780 = vunpack.c.l.b16 %v423
    %v1781 = vunpack.c.l.b16 %v424
    %v1782 = vunpack.c.l.b16 %v425
    %v1783 = vunpack.c.l.b16 %v426
    %v1784 = vunpack.c.l.b16 %v427
    %v1785 = vunpack.c.l.b16 %v428
    %v1786 = vunpack.c.l.b16 %v429
    %v1787 = vunpack.c.l.b16 %v430
    %v1788 = vunpack.c.l.b16 %v431
    %v1789 = vunpack.c.l.b16 %v432
    %v1790 = vunpack.c.l.b16 %v433
    %v1791 = vpack.c.b16 %v1392, %v1391
    %v1792 = vpack.c.b16 %v1394, %v1393
    %v1793 = vpack.c.b16 %v1396, %v1395
    %v1794 = vpack.c.b16 %v1398, %v1397
    %v1795 = vpack.c.b16 %v1400, %v1399
    %v1796 = vpack.c.b16 %v1402, %v1401
    %v1797 = vpack.c.b16 %v1404, %v1403
    %v1798 = vpack.c.b16 %v1406, %v1405
    %v1799 = vpack.c.b16 %v1408, %v1407
    %v1800 = vpack.c.b16 %v1410, %v1409
    %v1801 = vpack.c.b16 %v1412, %v1411
    %v1802 = vpack.c.b16 %v1414, %v1413
    %v1803 = vpack.c.b16 %v1416, %v1415
    %v1804 = vpack.c.b16 %v1418, %v1417
    %v1805 = vpack.c.b16 %v1420, %v1419
    %v1806 = vpack.c.b16 %v1422, %v1421
    %v1807 = vpack.c.b16 %v1424, %v1423
    %v1808 = vpack.c.b16 %v1426, %v1425
    %v1809 = vpack.c.b16 %v1428, %v1427
    %v1810 = vpack.c.b16 %v1430, %v1429
    %v1811 = vpack.c.b16 %v1432, %v1431
    %v1812 = vpack.c.b16 %v1434, %v1433
    %v1813 = vpack.c.b16 %v1436, %v1435
    %v1814 = vpack.c.b16 %v1438, %v1437
    %v1815 = vpack.c.b16 %v1440, %v1439
    %v1816 = vpack.c.b16 %v1442, %v1441
    %v1817 = vpack.c.b16 %v1444, %v1443
    %v1818 = vpack.c.b16 %v1446, %v1445
    %v1819 = vpack.c.b16 %v1448, %v1447
    %v1820 = vpack.c.b16 %v1450, %v1449
    %v1821 = vpack.c.b16 %v1452, %v1451
    %v1822 = vpack.c.b16 %v1454, %v1453
    %v1823 = vpack.c.b16 %v1456, %v1455
    %v1824 = vpack.c.b16 %v1458, %v1457
    %v1825 = vpack.c.b16 %v1460, %v1459
    %v1826 = vpack.c.b16 %v1462, %v1461
    %v1827 = vpack.c.b16 %v1464, %v1463
    %v1828 = vpack.c.b16 %v1466, %v1465
    %v1829 = vpack.c.b16 %v1468, %v1467
    %v1830 = vpack.c.b16 %v1470, %v1469
    %v1831 = vpack.c.b16 %v1472, %v1471
    %v1832 = vpack.c.b16 %v1474, %v1473
    %v1833 = vpack.c.b16 %v1476, %v1475
    %v1834 = vpack.c.b16 %v1478, %v1477
    %v1835 = vpack.c.b16 %v1480, %v1479
    %v1836 = vpack.c.b16 %v1482, %v1481
    %v1837 = vpack.c.b16 %v1484, %v1483
    %v1838 = vpack.c.b16 %v1486, %v1485
    %v1839 = vpack.c.b16 %v1488, %v1487
    %v1840 = vpack.c.b16 %v1490, %v1489
    %v1841 = vpack.c.b16 %v1492, %v1491
    %v1842 = vpack.c.b16 %v1494, %v1493
    %v1843 = vpack.c.b16 %v1496, %v1495
    %v1844 = vpack.c.b16 %v1498, %v1497
    %v1845 = vpack.c.b16 %v1500, %v1499
    %v1846 = vpack.c.b16 %v1502, %v1501
    %v1847 = vpack.c.b16 %v1504, %v1503
    %v1848 = vpack.c.b16 %v1506, %v1505
    %v1849 = vpack.c.b16 %v1508, %v1507
    %v1850 = vpack.c.b16 %v1510, %v1509
    %v1851 = vpack.c.b16 %v1512, %v1511
    %v1852 = vpack.c.b16 %v1514, %v1513
    %v1853 = vpack.c.b16 %v1516, %v1515
    %v1854 = vpack.c.b16 %v1518, %v1517
    %v1855 = vpack.c.b16 %v1520, %v1519
    %v1856 = vpack.c.b16 %v1522, %v1521
    %v1857 = vpack.c.b16 %v1524, %v1523
    %v1858 = vpack.c.b16 %v1526, %v1525
    %v1859 = vpack.c.b16 %v1528, %v1527
    %v1860 = vpack.c.b16 %v1530, %v1529
    %v1861 = vpack.c.b16 %v1532, %v1531
    %v1862 = vpack.c.b16 %v1534, %v1533
    %v1863 = vpack.c.b16 %v1536, %v1535
    %v1864 = vpack.c.b16 %v1538, %v1537
    %v1865 = vpack.c.b16 %v1540, %v1539
    %v1866 = vpack.c.b16 %v1542, %v1541
    %v1867 = vpack.c.b16 %v1544, %v1543
    %v1868 = vpack.c.b16 %v1546, %v1545
    %v1869 = vpack.c.b16 %v1548, %v1547
    %v1870 = vpack.c.b16 %v1550, %v1549
    %v1871 = vpack.c.b16 %v1552, %v1551
    %v1872 = vpack.c.b16 %v1554, %v1553
    %v1873 = vpack.c.b16 %v1556, %v1555
    %v1874 = vpack.c.b16 %v1558, %v1557
    %v1875 = vpack.c.b16 %v1560, %v1559
    %v1876 = vpack.c.b16 %v1562, %v1561
    %v1877 = vpack.c.b16 %v1564, %v1563
    %v1878 = vpack.c.b16 %v1566, %v1565
    %v1879 = vpack.c.b16 %v1568, %v1567
    %v1880 = vpack.c.b16 %v1570, %v1569
    %v1881 = vpack.c.b16 %v1572, %v1571
    %v1882 = vpack.c.b16 %v1574, %v1573
    %v1883 = vpack.c.b16 %v1576, %v1575
    %v1884 = vpack.c.b16 %v1578, %v1577
    %v1885 = vpack.c.b16 %v1580, %v1579
    %v1886 = vpack.c.b16 %v1582, %v1581
    %v1887 = vpack.c.b16 %v1584, %v1583
    %v1888 = vpack.c.b16 %v1586, %v1585
    %v1889 = vpack.c.b16 %v1588, %v1587
    %v1890 = vpack.c.b16 %v1590, %v1589
    %v1891 = vpack.c.b16 %v1592, %v1591
    %v1892 = vpack.c.b16 %v1594, %v1593
    %v1893 = vpack.c.b16 %v1596, %v1595
    %v1894 = vpack.c.b16 %v1598, %v1597
    %v1895 = vpack.c.b16 %v1600, %v1599
    %v1896 = vpack.c.b16 %v1602, %v1601
    %v1897 = vpack.c.b16 %v1604, %v1603
    %v1898 = vpack.c.b16 %v1606, %v1605
    %v1899 = vpack.c.b16 %v1608, %v1607
    %v1900 = vpack.c.b16 %v1610, %v1609
    %v1901 = vpack.c.b16 %v1612, %v1611
    %v1902 = vpack.c.b16 %v1614, %v1613
    %v1903 = vpack.c.b16 %v1616, %v1615
    %v1904 = vpack.c.b16 %v1618, %v1617
    %v1905 = vpack.c.b16 %v1620, %v1619
    %v1906 = vpack.c.b16 %v1622, %v1621
    %v1907 = vpack.c.b16 %v1624, %v1623
    %v1908 = vpack.c.b16 %v1626, %v1625
    %v1909 = vpack.c.b16 %v1628, %v1627
    %v1910 = vpack.c.b16 %v1630, %v1629
    %v1911 = vpack.c.b16 %v1632, %v1631
    %v1912 = vpack.c.b16 %v1634, %v1633
    %v1913 = vpack.c.b16 %v1636, %v1635
    %v1914 = vpack.c.b16 %v1638, %v1637
    %v1915 = vpack.c.b16 %v1640, %v1639
    %v1916 = vpack.c.b16 %v1642, %v1641
    %v1917 = vpack.c.b16 %v1644, %v1643
    %v1918 = vpack.c.b16 %v1646, %v1645
    %v1919 = vpack.c.b16 %v1648, %v1647
    %v1920 = vpack.c.b16 %v1650, %v1649
    %v1921 = vpack.c.b16 %v1652, %v1651
    %v1922 = vpack.c.b16 %v1654, %v1653
    %v1923 = vpack.c.b16 %v1656, %v1655
    %v1924 = vpack.c.b16 %v1658, %v1657
    %v1925 = vpack.c.b16 %v1660, %v1659
    %v1926 = vpack.c.b16 %v1662, %v1661
    %v1927 = vpack.c.b16 %v1664, %v1663
    %v1928 = vpack.c.b16 %v1666, %v1665
    %v1929 = vpack.c.b16 %v1668, %v1667
    %v1930 = vpack.c.b16 %v1670, %v1669
    %v1931 = vpack.c.b16 %v1672, %v1671
    %v1932 = vpack.c.b16 %v1674, %v1673
    %v1933 = vpack.c.b16 %v1676, %v1675
    %v1934 = vpack.c.b16 %v1678, %v1677
    %v1935 = vpack.c.b16 %v1680, %v1679
    %v1936 = vpack.c.b16 %v1682, %v1681
    %v1937 = vpack.c.b16 %v1684, %v1683
    %v1938 = vpack.c.b16 %v1686, %v1685
    %v1939 = vpack.c.b16 %v1688, %v1687
    %v1940 = vpack.c.b16 %v1690, %v1689
    %v1941 = vpack.c.b16 %v1692, %v1691
    %v1942 = vpack.c.b16 %v1694, %v1693
    %v1943 = vpack.c.b16 %v1696, %v1695
    %v1944 = vpack.c.b16 %v1698, %v1697
    %v1945 = vpack.c.b16 %v1700, %v1699
    %v1946 = vpack.c.b16 %v1702, %v1701
    %v1947 = vpack.c.b16 %v1704, %v1703
    %v1948 = vpack.c.b16 %v1706, %v1705
    %v1949 = vpack.c.b16 %v1708, %v1707
    %v1950 = vpack.c.b16 %v1710, %v1709
    %v1951 = vpack.c.b16 %v1712, %v1711
    %v1952 = vpack.c.b16 %v1714, %v1713
    %v1953 = vpack.c.b16 %v1716, %v1715
    %v1954 = vpack.c.b16 %v1718, %v1717
    %v1955 = vpack.c.b16 %v1720, %v1719
    %v1956 = vpack.c.b16 %v1722, %v1721
    %v1957 = vpack.c.b16 %v1724, %v1723
    %v1958 = vpack.c.b16 %v1726, %v1725
    %v1959 = vpack.c.b16 %v1728, %v1727
    %v1960 = vpack.c.b16 %v1730, %v1729
    %v1961 = vpack.c.b16 %v1732, %v1731
    %v1962 = vpack.c.b16 %v1734, %v1733
    %v1963 = vpack.c.b16 %v1736, %v1735
    %v1964 = vpack.c.b16 %v1738, %v1737
    %v1965 = vpack.c.b16 %v1740, %v1739
    %v1966 = vpack.c.b16 %v1742, %v1741
    %v1967 = vpack.c.b16 %v1744, %v1743
    %v1968 = vpack.c.b16 %v1746, %v1745
    %v1969 = vpack.c.b16 %v1748, %v1747
    %v1970 = vpack.c.b16 %v1750, %v1749
    %v1971 = vpack.c.b16 %v1752, %v1751
    %v1972 = vpack.c.b16 %v1754, %v1753
    %v1973 = vpack.c.b16 %v1756, %v1755
    %v1974 = vpack.c.b16 %v1758, %v1757
    %v1975 = vpack.c.b16 %v1760, %v1759
    %v1976 = vpack.c.b16 %v1762, %v1761
    %v1977 = vpack.c.b16 %v1764, %v1763
    %v1978 = vpack.c.b16 %v1766, %v1765
    %v1979 = vpack.c.b16 %v1768, %v1767
    %v1980 = vpack.c.b16 %v1770, %v1769
    %v1981 = vpack.c.b16 %v1772, %v1771
    %v1982 = vpack.c.b16 %v1774, %v1773
    %v1983 = vpack.c.b16 %v1776, %v1775
    %v1984 = vpack.c.b16 %v1778, %v1777
    %v1985 = vpack.c.b16 %v1780, %v1779
    %v1986 = vpack.c.b16 %v1782, %v1781
    %v1987 = vpack.c.b16 %v1784, %v1783
    %v1988 = vpack.c.b16 %v1786, %v1785
    %v1989 = vpack.c.b16 %v1788, %v1787
    %v1990 = vpack.c.b16 %v1790, %v1789
    %2191 = vmatprep.subr.bf16.mxu0 0
    %2192 = vmatpush1.bf16.msra.mxu0 %v1791
    %2193 = vmatprep.subr.bf16.mxu0 0
    %2194 = vmatpush1.bf16.msra.mxu0 %v1792
    %2195 = vmatprep.subr.bf16.mxu0 0
    %2196 = vmatpush1.bf16.msra.mxu0 %v1793
    %2197 = vmatprep.subr.bf16.mxu0 0
    %2198 = vmatpush1.bf16.msra.mxu0 %v1794
    %2199 = vmatprep.subr.bf16.mxu0 0
    %2200 = vmatpush1.bf16.msra.mxu0 %v1795
    %2201 = vmatprep.subr.bf16.mxu0 0
    %2202 = vmatpush1.bf16.msra.mxu0 %v1796
    %2203 = vmatprep.subr.bf16.mxu0 0
    %2204 = vmatpush1.bf16.msra.mxu0 %v1797
    %2205 = vmatprep.subr.bf16.mxu0 0
    %2206 = vmatpush1.bf16.msra.mxu0 %v1798
    %2207 = vmatprep.subr.bf16.mxu0 0
    %2208 = vmatpush1.bf16.msra.mxu0 %v1799
    %2209 = vmatprep.subr.bf16.mxu0 0
    %2210 = vmatpush1.bf16.msra.mxu0 %v1800
    %2211 = vmatprep.subr.bf16.mxu0 0
    %2212 = vmatpush1.bf16.msra.mxu0 %v1801
    %2213 = vmatprep.subr.bf16.mxu0 0
    %2214 = vmatpush1.bf16.msra.mxu0 %v1802
    %2215 = vmatprep.subr.bf16.mxu0 0
    %2216 = vmatpush1.bf16.msra.mxu0 %v1803
    %2217 = vmatprep.subr.bf16.mxu0 0
    %2218 = vmatpush1.bf16.msra.mxu0 %v1804
    %2219 = vmatprep.subr.bf16.mxu0 0
    %2220 = vmatpush1.bf16.msra.mxu0 %v1805
    %2221 = vmatprep.subr.bf16.mxu0 0
    %2222 = vmatpush1.bf16.msra.mxu0 %v1806
    %2223 = vmatprep.mubr.bf16.mxu0 %v792
    %2224 = vmatmul.mubr.bf16.gmra.mrb[0].mxu0 %v791
    %v2225 = vpop.f32.mrb[0].mxu0
    %v2226 = vadd.f32 0.0, %v2225
    %v2227 = vpop.f32.mrb[0].mxu0
    %v2228 = vpop.f32.mrb[0].mxu0
    %v2229 = vadd.f32 0.0, %v2228
    %v2230 = vpop.f32.mrb[0].mxu0
    %2231 = vmatprep.mubr.bf16.mxu0 %v817
    %2232 = vmatmul.mubr.bf16.gmra.mrb[0].mxu0 %v816
    %v2233 = vpop.f32.mrb[0].mxu0
    %v2234 = vadd.f32 0.0, %v2233
    %v2235 = vpop.f32.mrb[0].mxu0
    %v2236 = vpop.f32.mrb[0].mxu0
    %v2237 = vadd.f32 0.0, %v2236
    %v2238 = vpop.f32.mrb[0].mxu0
    %2239 = vmatprep.mubr.bf16.mxu0 %v842
    %2240 = vmatmul.mubr.bf16.gmra.mrb[0].mxu0 %v841
    %v2241 = vpop.f32.mrb[0].mxu0
    %v2242 = vadd.f32 0.0, %v2241
    %v2243 = vpop.f32.mrb[0].mxu0
    %v2244 = vpop.f32.mrb[0].mxu0
    %v2245 = vadd.f32 0.0, %v2244
    %v2246 = vpop.f32.mrb[0].mxu0
    %2247 = vmatprep.mubr.bf16.mxu0 %v867
    %2248 = vmatmul.mubr.bf16.gmra.mrb[0].mxu0 %v866
    %v2249 = vpop.f32.mrb[0].mxu0
    %v2250 = vadd.f32 0.0, %v2249
    %v2251 = vpop.f32.mrb[0].mxu0
    %v2252 = vpop.f32.mrb[0].mxu0
    %v2253 = vpop.f32.mrb[0].mxu0
    %2254 = vdwg.mxu0
    %2255 = vmatprep.subr.bf16.mxu0 0
    %2256 = vmatpush1.bf16.msra.mxu0 %v1807
    %2257 = vmatprep.subr.bf16.mxu0 0
    %2258 = vmatpush1.bf16.msra.mxu0 %v1808
    %2259 = vmatprep.subr.bf16.mxu0 0
    %2260 = vmatpush1.bf16.msra.mxu0 %v1809
    %2261 = vmatprep.subr.bf16.mxu0 0
    %2262 = vmatpush1.bf16.msra.mxu0 %v1810
    %2263 = vmatprep.subr.bf16.mxu0 0
    %2264 = vmatpush1.bf16.msra.mxu0 %v1811
    %2265 = vmatprep.subr.bf16.mxu0 0
    %2266 = vmatpush1.bf16.msra.mxu0 %v1812
    %2267 = vmatprep.subr.bf16.mxu0 0
    %2268 = vmatpush1.bf16.msra.mxu0 %v1813
    %2269 = vmatprep.subr.bf16.mxu0 0
    %2270 = vmatpush1.bf16.msra.mxu0 %v1814
    %2271 = vmatprep.subr.bf16.mxu0 0
    %2272 = vmatpush1.bf16.msra.mxu0 %v1815
    %2273 = vmatprep.subr.bf16.mxu0 0
    %2274 = vmatpush1.bf16.msra.mxu0 %v1816
    %2275 = vmatprep.subr.bf16.mxu0 0
    %2276 = vmatpush1.bf16.msra.mxu0 %v1817
    %2277 = vmatprep.subr.bf16.mxu0 0
    %2278 = vmatpush1.bf16.msra.mxu0 %v1818
    %2279 = vmatprep.subr.bf16.mxu0 0
    %2280 = vmatpush1.bf16.msra.mxu0 %v1819
    %2281 = vmatprep.subr.bf16.mxu0 0
    %2282 = vmatpush1.bf16.msra.mxu0 %v1820
    %2283 = vmatprep.subr.bf16.mxu0 0
    %2284 = vmatpush1.bf16.msra.mxu0 %v1821
    %2285 = vmatprep.subr.bf16.mxu0 0
    %2286 = vmatpush1.bf16.msra.mxu0 %v1822
    %2287 = vmatprep.mubr.bf16.mxu0 %v794
    %2288 = vmatmul.mubr.bf16.gmra.mrb[0].mxu0 %v793
    %v2289 = vpop.f32.mrb[0].mxu0
    %v2290 = vadd.f32 %v2226, %v2289
    %v2291 = vpop.f32.mrb[0].mxu0
    %v2292 = vpop.f32.mrb[0].mxu0
    %v2293 = vadd.f32 %v2229, %v2292
    %v2294 = vpop.f32.mrb[0].mxu0
    %2295 = vmatprep.mubr.bf16.mxu0 %v819
    %2296 = vmatmul.mubr.bf16.gmra.mrb[0].mxu0 %v818
    %v2297 = vpop.f32.mrb[0].mxu0
    %v2298 = vadd.f32 %v2234, %v2297
    %v2299 = vpop.f32.mrb[0].mxu0
    %v2300 = vpop.f32.mrb[0].mxu0
    %v2301 = vadd.f32 %v2237, %v2300
    %v2302 = vpop.f32.mrb[0].mxu0
    %2303 = vmatprep.mubr.bf16.mxu0 %v844
    %2304 = vmatmul.mubr.bf16.gmra.mrb[0].mxu0 %v843
    %v2305 = vpop.f32.mrb[0].mxu0
    %v2306 = vadd.f32 %v2242, %v2305
    %v2307 = vpop.f32.mrb[0].mxu0
    %v2308 = vpop.f32.mrb[0].mxu0
    %v2309 = vadd.f32 %v2245, %v2308
    %v2310 = vpop.f32.mrb[0].mxu0
    %2311 = vmatprep.mubr.bf16.mxu0 %v869
    %2312 = vmatmul.mubr.bf16.gmra.mrb[0].mxu0 %v868
    %v2313 = vpop.f32.mrb[0].mxu0
    %v2314 = vadd.f32 %v2250, %v2313
    %v2315 = vpop.f32.mrb[0].mxu0
    %v2316 = vpop.f32.mrb[0].mxu0
    %v2317 = vpop.f32.mrb[0].mxu0
    %2318 = vdwg.mxu0
    %2319 = vmatprep.subr.bf16.mxu0 0
    %2320 = vmatpush1.bf16.msra.mxu0 %v1823
    %2321 = vmatprep.subr.bf16.mxu0 0
    %2322 = vmatpush1.bf16.msra.mxu0 %v1824
    %2323 = vmatprep.subr.bf16.mxu0 0
    %2324 = vmatpush1.bf16.msra.mxu0 %v1825
    %2325 = vmatprep.subr.bf16.mxu0 0
    %2326 = vmatpush1.bf16.msra.mxu0 %v1826
    %2327 = vmatprep.subr.bf16.mxu0 0
    %2328 = vmatpush1.bf16.msra.mxu0 %v1827
    %2329 = vmatprep.subr.bf16.mxu0 0
    %2330 = vmatpush1.bf16.msra.mxu0 %v1828
    %2331 = vmatprep.subr.bf16.mxu0 0
    %2332 = vmatpush1.bf16.msra.mxu0 %v1829
    %2333 = vmatprep.subr.bf16.mxu0 0
    %2334 = vmatpush1.bf16.msra.mxu0 %v1830
    %2335 = vmatprep.subr.bf16.mxu0 0
    %2336 = vmatpush1.bf16.msra.mxu0 %v1831
    %2337 = vmatprep.subr.bf16.mxu0 0
    %2338 = vmatpush1.bf16.msra.mxu0 %v1832
    %2339 = vmatprep.subr.bf16.mxu0 0
    %2340 = vmatpush1.bf16.msra.mxu0 %v1833
    %2341 = vmatprep.subr.bf16.mxu0 0
    %2342 = vmatpush1.bf16.msra.mxu0 %v1834
    %2343 = vmatprep.subr.bf16.mxu0 0
    %2344 = vmatpush1.bf16.msra.mxu0 %v1835
    %2345 = vmatprep.subr.bf16.mxu0 0
    %2346 = vmatpush1.bf16.msra.mxu0 %v1836
    %2347 = vmatprep.subr.bf16.mxu0 0
    %2348 = vmatpush1.bf16.msra.mxu0 %v1837
    %2349 = vmatprep.subr.bf16.mxu0 0
    %2350 = vmatpush1.bf16.msra.mxu0 %v1838
    %2351 = vmatprep.mubr.bf16.mxu0 %v796
    %2352 = vmatmul.mubr.bf16.gmra.mrb[0].mxu0 %v795
    %v2353 = vpop.f32.mrb[0].mxu0
    %v2354 = vadd.f32 %v2290, %v2353
    %v2355 = vpop.f32.mrb[0].mxu0
    %v2356 = vpop.f32.mrb[0].mxu0
    %v2357 = vadd.f32 %v2293, %v2356
    %v2358 = vpop.f32.mrb[0].mxu0
    %2359 = vmatprep.mubr.bf16.mxu0 %v821
    %2360 = vmatmul.mubr.bf16.gmra.mrb[0].mxu0 %v820
    %v2361 = vpop.f32.mrb[0].mxu0
    %v2362 = vadd.f32 %v2298, %v2361
    %v2363 = vpop.f32.mrb[0].mxu0
    %v2364 = vpop.f32.mrb[0].mxu0
    %v2365 = vadd.f32 %v2301, %v2364
    %v2366 = vpop.f32.mrb[0].mxu0
    %2367 = vmatprep.mubr.bf16.mxu0 %v846
    %2368 = vmatmul.mubr.bf16.gmra.mrb[0].mxu0 %v845
    %v2369 = vpop.f32.mrb[0].mxu0
    %v2370 = vadd.f32 %v2306, %v2369
    %v2371 = vpop.f32.mrb[0].mxu0
    %v2372 = vpop.f32.mrb[0].mxu0
    %v2373 = vadd.f32 %v2309, %v2372
    %v2374 = vpop.f32.mrb[0].mxu0
    %2375 = vmatprep.mubr.bf16.mxu0 %v871
    %2376 = vmatmul.mubr.bf16.gmra.mrb[0].mxu0 %v870
    %v2377 = vpop.f32.mrb[0].mxu0
    %v2378 = vadd.f32 %v2314, %v2377
    %v2379 = vpop.f32.mrb[0].mxu0
    %v2380 = vpop.f32.mrb[0].mxu0
    %v2381 = vpop.f32.mrb[0].mxu0
    %2382 = vdwg.mxu0
    %2383 = vmatprep.subr.bf16.mxu0 0
    %2384 = vmatpush1.bf16.msra.mxu0 %v1839
    %2385 = vmatprep.subr.bf16.mxu0 0
    %2386 = vmatpush1.bf16.msra.mxu0 %v1840
    %2387 = vmatprep.subr.bf16.mxu0 0
    %2388 = vmatpush1.bf16.msra.mxu0 %v1841
    %2389 = vmatprep.subr.bf16.mxu0 0
    %2390 = vmatpush1.bf16.msra.mxu0 %v1842
    %2391 = vmatprep.subr.bf16.mxu0 0
    %2392 = vmatpush1.bf16.msra.mxu0 %v1843
    %2393 = vmatprep.subr.bf16.mxu0 0
    %2394 = vmatpush1.bf16.msra.mxu0 %v1844
    %2395 = vmatprep.subr.bf16.mxu0 0
    %2396 = vmatpush1.bf16.msra.mxu0 %v1845
    %2397 = vmatprep.subr.bf16.mxu0 0
    %2398 = vmatpush1.bf16.msra.mxu0 %v1846
    %2399 = vmatprep.subr.bf16.mxu0 0
    %2400 = vmatpush1.bf16.msra.mxu0 %v1847
    %2401 = vmatprep.subr.bf16.mxu0 0
    %2402 = vmatpush1.bf16.msra.mxu0 %v1848
    %2403 = vmatprep.subr.bf16.mxu0 0
    %2404 = vmatpush1.bf16.msra.mxu0 %v1849
    %2405 = vmatprep.subr.bf16.mxu0 0
    %2406 = vmatpush1.bf16.msra.mxu0 %v1850
    %2407 = vmatprep.subr.bf16.mxu0 0
    %2408 = vmatpush1.bf16.msra.mxu0 %v1851
    %2409 = vmatprep.subr.bf16.mxu0 0
    %2410 = vmatpush1.bf16.msra.mxu0 %v1852
    %2411 = vmatprep.subr.bf16.mxu0 0
    %2412 = vmatpush1.bf16.msra.mxu0 %v1853
    %2413 = vmatprep.subr.bf16.mxu0 0
    %2414 = vmatpush1.bf16.msra.mxu0 %v1854
    %2415 = vmatprep.mubr.bf16.mxu0 %v798
    %2416 = vmatmul.mubr.bf16.gmra.mrb[0].mxu0 %v797
    %v2417 = vpop.f32.mrb[0].mxu0
    %v2418 = vadd.f32 %v2354, %v2417
    %v2419 = vpop.f32.mrb[0].mxu0
    %v2420 = vpop.f32.mrb[0].mxu0
    %v2421 = vadd.f32 %v2357, %v2420
    %v2422 = vpop.f32.mrb[0].mxu0
    %2423 = vmatprep.mubr.bf16.mxu0 %v823
    %2424 = vmatmul.mubr.bf16.gmra.mrb[0].mxu0 %v822
    %v2425 = vpop.f32.mrb[0].mxu0
    %v2426 = vadd.f32 %v2362, %v2425
    %v2427 = vpop.f32.mrb[0].mxu0
    %v2428 = vpop.f32.mrb[0].mxu0
    %v2429 = vadd.f32 %v2365, %v2428
    %v2430 = vpop.f32.mrb[0].mxu0
    %2431 = vmatprep.mubr.bf16.mxu0 %v848
    %2432 = vmatmul.mubr.bf16.gmra.mrb[0].mxu0 %v847
    %v2433 = vpop.f32.mrb[0].mxu0
    %v2434 = vadd.f32 %v2370, %v2433
    %v2435 = vpop.f32.mrb[0].mxu0
    %v2436 = vpop.f32.mrb[0].mxu0
    %v2437 = vadd.f32 %v2373, %v2436
    %v2438 = vpop.f32.mrb[0].mxu0
    %2439 = vmatprep.mubr.bf16.mxu0 %v873
    %2440 = vmatmul.mubr.bf16.gmra.mrb[0].mxu0 %v872
    %v2441 = vpop.f32.mrb[0].mxu0
    %v2442 = vadd.f32 %v2378, %v2441
    %v2443 = vpop.f32.mrb[0].mxu0
    %v2444 = vpop.f32.mrb[0].mxu0
    %v2445 = vpop.f32.mrb[0].mxu0
    %2446 = vdwg.mxu0
    %2447 = vmatprep.subr.bf16.mxu0 0
    %2448 = vmatpush1.bf16.msra.mxu0 %v1855
    %2449 = vmatprep.subr.bf16.mxu0 0
    %2450 = vmatpush1.bf16.msra.mxu0 %v1856
    %2451 = vmatprep.subr.bf16.mxu0 0
    %2452 = vmatpush1.bf16.msra.mxu0 %v1857
    %2453 = vmatprep.subr.bf16.mxu0 0
    %2454 = vmatpush1.bf16.msra.mxu0 %v1858
    %2455 = vmatprep.subr.bf16.mxu0 0
    %2456 = vmatpush1.bf16.msra.mxu0 %v1859
    %2457 = vmatprep.subr.bf16.mxu0 0
    %2458 = vmatpush1.bf16.msra.mxu0 %v1860
    %2459 = vmatprep.subr.bf16.mxu0 0
    %2460 = vmatpush1.bf16.msra.mxu0 %v1861
    %2461 = vmatprep.subr.bf16.mxu0 0
    %2462 = vmatpush1.bf16.msra.mxu0 %v1862
    %2463 = vmatprep.subr.bf16.mxu0 0
    %2464 = vmatpush1.bf16.msra.mxu0 %v1863
    %2465 = vmatprep.subr.bf16.mxu0 0
    %2466 = vmatpush1.bf16.msra.mxu0 %v1864
    %2467 = vmatprep.subr.bf16.mxu0 0
    %2468 = vmatpush1.bf16.msra.mxu0 %v1865
    %2469 = vmatprep.subr.bf16.mxu0 0
    %2470 = vmatpush1.bf16.msra.mxu0 %v1866
    %2471 = vmatprep.subr.bf16.mxu0 0
    %2472 = vmatpush1.bf16.msra.mxu0 %v1867
    %2473 = vmatprep.subr.bf16.mxu0 0
    %2474 = vmatpush1.bf16.msra.mxu0 %v1868
    %2475 = vmatprep.subr.bf16.mxu0 0
    %2476 = vmatpush1.bf16.msra.mxu0 %v1869
    %2477 = vmatprep.subr.bf16.mxu0 0
    %2478 = vmatpush1.bf16.msra.mxu0 %v1870
    %2479 = vmatprep.mubr.bf16.mxu0 %v800
    %2480 = vmatmul.mubr.bf16.gmra.mrb[0].mxu0 %v799
    %v2481 = vpop.f32.mrb[0].mxu0
    %v2482 = vadd.f32 %v2418, %v2481
    %v2483 = vpop.f32.mrb[0].mxu0
    %v2484 = vpop.f32.mrb[0].mxu0
    %v2485 = vadd.f32 %v2421, %v2484
    %v2486 = vpop.f32.mrb[0].mxu0
    %2487 = vmatprep.mubr.bf16.mxu0 %v825
    %2488 = vmatmul.mubr.bf16.gmra.mrb[0].mxu0 %v824
    %v2489 = vpop.f32.mrb[0].mxu0
    %v2490 = vadd.f32 %v2426, %v2489
    %v2491 = vpop.f32.mrb[0].mxu0
    %v2492 = vpop.f32.mrb[0].mxu0
    %v2493 = vadd.f32 %v2429, %v2492
    %v2494 = vpop.f32.mrb[0].mxu0
    %2495 = vmatprep.mubr.bf16.mxu0 %v850
    %2496 = vmatmul.mubr.bf16.gmra.mrb[0].mxu0 %v849
    %v2497 = vpop.f32.mrb[0].mxu0
    %v2498 = vadd.f32 %v2434, %v2497
    %v2499 = vpop.f32.mrb[0].mxu0
    %v2500 = vpop.f32.mrb[0].mxu0
    %v2501 = vadd.f32 %v2437, %v2500
    %v2502 = vpop.f32.mrb[0].mxu0
    %2503 = vmatprep.mubr.bf16.mxu0 %v875
    %2504 = vmatmul.mubr.bf16.gmra.mrb[0].mxu0 %v874
    %v2505 = vpop.f32.mrb[0].mxu0
    %v2506 = vadd.f32 %v2442, %v2505
    %v2507 = vpop.f32.mrb[0].mxu0
    %v2508 = vpop.f32.mrb[0].mxu0
    %v2509 = vpop.f32.mrb[0].mxu0
    %2510 = vdwg.mxu0
    %2511 = vmatprep.subr.bf16.mxu0 0
    %2512 = vmatpush1.bf16.msra.mxu0 %v1871
    %2513 = vmatprep.subr.bf16.mxu0 0
    %2514 = vmatpush1.bf16.msra.mxu0 %v1872
    %2515 = vmatprep.subr.bf16.mxu0 0
    %2516 = vmatpush1.bf16.msra.mxu0 %v1873
    %2517 = vmatprep.subr.bf16.mxu0 0
    %2518 = vmatpush1.bf16.msra.mxu0 %v1874
    %2519 = vmatprep.subr.bf16.mxu0 0
    %2520 = vmatpush1.bf16.msra.mxu0 %v1875
    %2521 = vmatprep.subr.bf16.mxu0 0
    %2522 = vmatpush1.bf16.msra.mxu0 %v1876
    %2523 = vmatprep.subr.bf16.mxu0 0
    %2524 = vmatpush1.bf16.msra.mxu0 %v1877
    %2525 = vmatprep.subr.bf16.mxu0 0
    %2526 = vmatpush1.bf16.msra.mxu0 %v1878
    %2527 = vmatprep.subr.bf16.mxu0 0
    %2528 = vmatpush1.bf16.msra.mxu0 %v1879
    %2529 = vmatprep.subr.bf16.mxu0 0
    %2530 = vmatpush1.bf16.msra.mxu0 %v1880
    %2531 = vmatprep.subr.bf16.mxu0 0
    %2532 = vmatpush1.bf16.msra.mxu0 %v1881
    %2533 = vmatprep.subr.bf16.mxu0 0
    %2534 = vmatpush1.bf16.msra.mxu0 %v1882
    %2535 = vmatprep.subr.bf16.mxu0 0
    %2536 = vmatpush1.bf16.msra.mxu0 %v1883
    %2537 = vmatprep.subr.bf16.mxu0 0
    %2538 = vmatpush1.bf16.msra.mxu0 %v1884
    %2539 = vmatprep.subr.bf16.mxu0 0
    %2540 = vmatpush1.bf16.msra.mxu0 %v1885
    %2541 = vmatprep.subr.bf16.mxu0 0
    %2542 = vmatpush1.bf16.msra.mxu0 %v1886
    %2543 = vmatprep.mubr.bf16.mxu0 %v802
    %2544 = vmatmul.mubr.bf16.gmra.mrb[0].mxu0 %v801
    %v2545 = vpop.f32.mrb[0].mxu0
    %v2546 = vadd.f32 %v2482, %v2545
    %v2547 = vpop.f32.mrb[0].mxu0
    %v2548 = vpop.f32.mrb[0].mxu0
    %v2549 = vadd.f32 %v2485, %v2548
    %v2550 = vpop.f32.mrb[0].mxu0
    %2551 = vmatprep.mubr.bf16.mxu0 %v827
    %2552 = vmatmul.mubr.bf16.gmra.mrb[0].mxu0 %v826
    %v2553 = vpop.f32.mrb[0].mxu0
    %v2554 = vadd.f32 %v2490, %v2553
    %v2555 = vpop.f32.mrb[0].mxu0
    %v2556 = vpop.f32.mrb[0].mxu0
    %v2557 = vadd.f32 %v2493, %v2556
    %v2558 = vpop.f32.mrb[0].mxu0
    %2559 = vmatprep.mubr.bf16.mxu0 %v852
    %2560 = vmatmul.mubr.bf16.gmra.mrb[0].mxu0 %v851
    %v2561 = vpop.f32.mrb[0].mxu0
    %v2562 = vadd.f32 %v2498, %v2561
    %v2563 = vpop.f32.mrb[0].mxu0
    %v2564 = vpop.f32.mrb[0].mxu0
    %v2565 = vadd.f32 %v2501, %v2564
    %v2566 = vpop.f32.mrb[0].mxu0
    %2567 = vmatprep.mubr.bf16.mxu0 %v877
    %2568 = vmatmul.mubr.bf16.gmra.mrb[0].mxu0 %v876
    %v2569 = vpop.f32.mrb[0].mxu0
    %v2570 = vadd.f32 %v2506, %v2569
    %v2571 = vpop.f32.mrb[0].mxu0
    %v2572 = vpop.f32.mrb[0].mxu0
    %v2573 = vpop.f32.mrb[0].mxu0
    %2574 = vdwg.mxu0
    %2575 = vmatprep.subr.bf16.mxu0 0
    %2576 = vmatpush1.bf16.msra.mxu0 %v1887
    %2577 = vmatprep.subr.bf16.mxu0 0
    %2578 = vmatpush1.bf16.msra.mxu0 %v1888
    %2579 = vmatprep.subr.bf16.mxu0 0
    %2580 = vmatpush1.bf16.msra.mxu0 %v1889
    %2581 = vmatprep.subr.bf16.mxu0 0
    %2582 = vmatpush1.bf16.msra.mxu0 %v1890
    %2583 = vmatprep.subr.bf16.mxu0 0
    %2584 = vmatpush1.bf16.msra.mxu0 %v1891
    %2585 = vmatprep.subr.bf16.mxu0 0
    %2586 = vmatpush1.bf16.msra.mxu0 %v1892
    %2587 = vmatprep.subr.bf16.mxu0 0
    %2588 = vmatpush1.bf16.msra.mxu0 %v1893
    %2589 = vmatprep.subr.bf16.mxu0 0
    %2590 = vmatpush1.bf16.msra.mxu0 %v1894
    %2591 = vmatprep.subr.bf16.mxu0 0
    %2592 = vmatpush1.bf16.msra.mxu0 %v1895
    %2593 = vmatprep.subr.bf16.mxu0 0
    %2594 = vmatpush1.bf16.msra.mxu0 %v1896
    %2595 = vmatprep.subr.bf16.mxu0 0
    %2596 = vmatpush1.bf16.msra.mxu0 %v1897
    %2597 = vmatprep.subr.bf16.mxu0 0
    %2598 = vmatpush1.bf16.msra.mxu0 %v1898
    %2599 = vmatprep.subr.bf16.mxu0 0
    %2600 = vmatpush1.bf16.msra.mxu0 %v1899
    %2601 = vmatprep.subr.bf16.mxu0 0
    %2602 = vmatpush1.bf16.msra.mxu0 %v1900
    %2603 = vmatprep.subr.bf16.mxu0 0
    %2604 = vmatpush1.bf16.msra.mxu0 %v1901
    %2605 = vmatprep.subr.bf16.mxu0 0
    %2606 = vmatpush1.bf16.msra.mxu0 %v1902
    %2607 = vmatprep.mubr.bf16.mxu0 %v804
    %2608 = vmatmul.mubr.bf16.gmra.mrb[0].mxu0 %v803
    %v2609 = vpop.f32.mrb[0].mxu0
    %v2610 = vadd.f32 %v2546, %v2609
    %v2611 = vpop.f32.mrb[0].mxu0
    %v2612 = vpop.f32.mrb[0].mxu0
    %v2613 = vadd.f32 %v2549, %v2612
    %v2614 = vpop.f32.mrb[0].mxu0
    %2615 = vmatprep.mubr.bf16.mxu0 %v829
    %2616 = vmatmul.mubr.bf16.gmra.mrb[0].mxu0 %v828
    %v2617 = vpop.f32.mrb[0].mxu0
    %v2618 = vadd.f32 %v2554, %v2617
    %v2619 = vpop.f32.mrb[0].mxu0
    %v2620 = vpop.f32.mrb[0].mxu0
    %v2621 = vadd.f32 %v2557, %v2620
    %v2622 = vpop.f32.mrb[0].mxu0
    %2623 = vmatprep.mubr.bf16.mxu0 %v854
    %2624 = vmatmul.mubr.bf16.gmra.mrb[0].mxu0 %v853
    %v2625 = vpop.f32.mrb[0].mxu0
    %v2626 = vadd.f32 %v2562, %v2625
    %v2627 = vpop.f32.mrb[0].mxu0
    %v2628 = vpop.f32.mrb[0].mxu0
    %v2629 = vadd.f32 %v2565, %v2628
    %v2630 = vpop.f32.mrb[0].mxu0
    %2631 = vmatprep.mubr.bf16.mxu0 %v879
    %2632 = vmatmul.mubr.bf16.gmra.mrb[0].mxu0 %v878
    %v2633 = vpop.f32.mrb[0].mxu0
    %v2634 = vadd.f32 %v2570, %v2633
    %v2635 = vpop.f32.mrb[0].mxu0
    %v2636 = vpop.f32.mrb[0].mxu0
    %v2637 = vpop.f32.mrb[0].mxu0
    %2638 = vdwg.mxu0
    %2639 = vmatprep.subr.bf16.mxu0 0
    %2640 = vmatpush1.bf16.msra.mxu0 %v1903
    %2641 = vmatprep.subr.bf16.mxu0 0
    %2642 = vmatpush1.bf16.msra.mxu0 %v1904
    %2643 = vmatprep.subr.bf16.mxu0 0
    %2644 = vmatpush1.bf16.msra.mxu0 %v1905
    %2645 = vmatprep.subr.bf16.mxu0 0
    %2646 = vmatpush1.bf16.msra.mxu0 %v1906
    %2647 = vmatprep.subr.bf16.mxu0 0
    %2648 = vmatpush1.bf16.msra.mxu0 %v1907
    %2649 = vmatprep.subr.bf16.mxu0 0
    %2650 = vmatpush1.bf16.msra.mxu0 %v1908
    %2651 = vmatprep.subr.bf16.mxu0 0
    %2652 = vmatpush1.bf16.msra.mxu0 %v1909
    %2653 = vmatprep.subr.bf16.mxu0 0
    %2654 = vmatpush1.bf16.msra.mxu0 %v1910
    %2655 = vmatprep.subr.bf16.mxu0 0
    %2656 = vmatpush1.bf16.msra.mxu0 %v1911
    %2657 = vmatprep.subr.bf16.mxu0 0
    %2658 = vmatpush1.bf16.msra.mxu0 %v1912
    %2659 = vmatprep.subr.bf16.mxu0 0
    %2660 = vmatpush1.bf16.msra.mxu0 %v1913
    %2661 = vmatprep.subr.bf16.mxu0 0
    %2662 = vmatpush1.bf16.msra.mxu0 %v1914
    %2663 = vmatprep.subr.bf16.mxu0 0
    %2664 = vmatpush1.bf16.msra.mxu0 %v1915
    %2665 = vmatprep.subr.bf16.mxu0 0
    %2666 = vmatpush1.bf16.msra.mxu0 %v1916
    %2667 = vmatprep.subr.bf16.mxu0 0
    %2668 = vmatpush1.bf16.msra.mxu0 %v1917
    %2669 = vmatprep.subr.bf16.mxu0 0
    %2670 = vmatpush1.bf16.msra.mxu0 %v1918
    %2671 = vmatprep.mubr.bf16.mxu0 %v806
    %2672 = vmatmul.mubr.bf16.gmra.mrb[0].mxu0 %v805
    %v2673 = vpop.f32.mrb[0].mxu0
    %v2674 = vadd.f32 %v2610, %v2673
    %v2675 = vpop.f32.mrb[0].mxu0
    %v2676 = vpop.f32.mrb[0].mxu0
    %v2677 = vadd.f32 %v2613, %v2676
    %v2678 = vpop.f32.mrb[0].mxu0
    %2679 = vmatprep.mubr.bf16.mxu0 %v831
    %2680 = vmatmul.mubr.bf16.gmra.mrb[0].mxu0 %v830
    %v2681 = vpop.f32.mrb[0].mxu0
    %v2682 = vadd.f32 %v2618, %v2681
    %v2683 = vpop.f32.mrb[0].mxu0
    %v2684 = vpop.f32.mrb[0].mxu0
    %v2685 = vadd.f32 %v2621, %v2684
    %v2686 = vpop.f32.mrb[0].mxu0
    %2687 = vmatprep.mubr.bf16.mxu0 %v856
    %2688 = vmatmul.mubr.bf16.gmra.mrb[0].mxu0 %v855
    %v2689 = vpop.f32.mrb[0].mxu0
    %v2690 = vadd.f32 %v2626, %v2689
    %v2691 = vpop.f32.mrb[0].mxu0
    %v2692 = vpop.f32.mrb[0].mxu0
    %v2693 = vadd.f32 %v2629, %v2692
    %v2694 = vpop.f32.mrb[0].mxu0
    %2695 = vmatprep.mubr.bf16.mxu0 %v881
    %2696 = vmatmul.mubr.bf16.gmra.mrb[0].mxu0 %v880
    %v2697 = vpop.f32.mrb[0].mxu0
    %v2698 = vadd.f32 %v2634, %v2697
    %v2699 = vpop.f32.mrb[0].mxu0
    %v2700 = vpop.f32.mrb[0].mxu0
    %v2701 = vpop.f32.mrb[0].mxu0
    %2702 = vdwg.mxu0
    %2703 = vmatprep.subr.bf16.mxu0 0
    %2704 = vmatpush1.bf16.msra.mxu0 %v1919
    %2705 = vmatprep.subr.bf16.mxu0 0
    %2706 = vmatpush1.bf16.msra.mxu0 %v1920
    %2707 = vmatprep.subr.bf16.mxu0 0
    %2708 = vmatpush1.bf16.msra.mxu0 %v1921
    %2709 = vmatprep.subr.bf16.mxu0 0
    %2710 = vmatpush1.bf16.msra.mxu0 %v1922
    %2711 = vmatprep.subr.bf16.mxu0 0
    %2712 = vmatpush1.bf16.msra.mxu0 %v1923
    %2713 = vmatprep.subr.bf16.mxu0 0
    %2714 = vmatpush1.bf16.msra.mxu0 %v1924
    %2715 = vmatprep.subr.bf16.mxu0 0
    %2716 = vmatpush1.bf16.msra.mxu0 %v1925
    %2717 = vmatprep.subr.bf16.mxu0 0
    %2718 = vmatpush1.bf16.msra.mxu0 %v1926
    %2719 = vmatprep.subr.bf16.mxu0 0
    %2720 = vmatpush1.bf16.msra.mxu0 %v1927
    %2721 = vmatprep.subr.bf16.mxu0 0
    %2722 = vmatpush1.bf16.msra.mxu0 %v1928
    %2723 = vmatprep.subr.bf16.mxu0 0
    %2724 = vmatpush1.bf16.msra.mxu0 %v1929
    %2725 = vmatprep.subr.bf16.mxu0 0
    %2726 = vmatpush1.bf16.msra.mxu0 %v1930
    %2727 = vmatprep.subr.bf16.mxu0 0
    %2728 = vmatpush1.bf16.msra.mxu0 %v1931
    %2729 = vmatprep.subr.bf16.mxu0 0
    %2730 = vmatpush1.bf16.msra.mxu0 %v1932
    %2731 = vmatprep.subr.bf16.mxu0 0
    %2732 = vmatpush1.bf16.msra.mxu0 %v1933
    %2733 = vmatprep.subr.bf16.mxu0 0
    %2734 = vmatpush1.bf16.msra.mxu0 %v1934
    %2735 = vmatprep.mubr.bf16.mxu0 %v808
    %2736 = vmatmul.mubr.bf16.gmra.mrb[0].mxu0 %v807
    %v2737 = vpop.f32.mrb[0].mxu0
    %v2738 = vadd.f32 %v2674, %v2737
    %v2739 = vpop.f32.mrb[0].mxu0
    %v2740 = vpop.f32.mrb[0].mxu0
    %v2741 = vadd.f32 %v2677, %v2740
    %v2742 = vpop.f32.mrb[0].mxu0
    %2743 = vmatprep.mubr.bf16.mxu0 %v833
    %2744 = vmatmul.mubr.bf16.gmra.mrb[0].mxu0 %v832
    %v2745 = vpop.f32.mrb[0].mxu0
    %v2746 = vadd.f32 %v2682, %v2745
    %v2747 = vpop.f32.mrb[0].mxu0
    %v2748 = vpop.f32.mrb[0].mxu0
    %v2749 = vadd.f32 %v2685, %v2748
    %v2750 = vpop.f32.mrb[0].mxu0
    %2751 = vmatprep.mubr.bf16.mxu0 %v858
    %2752 = vmatmul.mubr.bf16.gmra.mrb[0].mxu0 %v857
    %v2753 = vpop.f32.mrb[0].mxu0
    %v2754 = vadd.f32 %v2690, %v2753
    %v2755 = vpop.f32.mrb[0].mxu0
    %v2756 = vpop.f32.mrb[0].mxu0
    %v2757 = vadd.f32 %v2693, %v2756
    %v2758 = vpop.f32.mrb[0].mxu0
    %2759 = vmatprep.mubr.bf16.mxu0 %v883
    %2760 = vmatmul.mubr.bf16.gmra.mrb[0].mxu0 %v882
    %v2761 = vpop.f32.mrb[0].mxu0
    %v2762 = vadd.f32 %v2698, %v2761
    %v2763 = vpop.f32.mrb[0].mxu0
    %v2764 = vpop.f32.mrb[0].mxu0
    %v2765 = vpop.f32.mrb[0].mxu0
    %2766 = vdwg.mxu0
    %2767 = vmatprep.subr.bf16.mxu0 0
    %2768 = vmatpush1.bf16.msra.mxu0 %v1935
    %2769 = vmatprep.subr.bf16.mxu0 0
    %2770 = vmatpush1.bf16.msra.mxu0 %v1936
    %2771 = vmatprep.subr.bf16.mxu0 0
    %2772 = vmatpush1.bf16.msra.mxu0 %v1937
    %2773 = vmatprep.subr.bf16.mxu0 0
    %2774 = vmatpush1.bf16.msra.mxu0 %v1938
    %2775 = vmatprep.subr.bf16.mxu0 0
    %2776 = vmatpush1.bf16.msra.mxu0 %v1939
    %2777 = vmatprep.subr.bf16.mxu0 0
    %2778 = vmatpush1.bf16.msra.mxu0 %v1940
    %2779 = vmatprep.subr.bf16.mxu0 0
    %2780 = vmatpush1.bf16.msra.mxu0 %v1941
    %2781 = vmatprep.subr.bf16.mxu0 0
    %2782 = vmatpush1.bf16.msra.mxu0 %v1942
    %2783 = vmatprep.subr.bf16.mxu0 0
    %2784 = vmatpush1.bf16.msra.mxu0 %v1943
    %2785 = vmatprep.subr.bf16.mxu0 0
    %2786 = vmatpush1.bf16.msra.mxu0 %v1944
    %2787 = vmatprep.subr.bf16.mxu0 0
    %2788 = vmatpush1.bf16.msra.mxu0 %v1945
    %2789 = vmatprep.subr.bf16.mxu0 0
    %2790 = vmatpush1.bf16.msra.mxu0 %v1946
    %2791 = vmatprep.subr.bf16.mxu0 0
    %2792 = vmatpush1.bf16.msra.mxu0 %v1947
    %2793 = vmatprep.subr.bf16.mxu0 0
    %2794 = vmatpush1.bf16.msra.mxu0 %v1948
    %2795 = vmatprep.subr.bf16.mxu0 0
    %2796 = vmatpush1.bf16.msra.mxu0 %v1949
    %2797 = vmatprep.subr.bf16.mxu0 0
    %2798 = vmatpush1.bf16.msra.mxu0 %v1950
    %2799 = vmatprep.mubr.bf16.mxu0 %v810
    %2800 = vmatmul.mubr.bf16.gmra.mrb[0].mxu0 %v809
    %v2801 = vpop.f32.mrb[0].mxu0
    %v2802 = vadd.f32 %v2738, %v2801
    %v2803 = vpop.f32.mrb[0].mxu0
    %v2804 = vpop.f32.mrb[0].mxu0
    %v2805 = vadd.f32 %v2741, %v2804
    %v2806 = vpop.f32.mrb[0].mxu0
    %2807 = vmatprep.mubr.bf16.mxu0 %v835
    %2808 = vmatmul.mubr.bf16.gmra.mrb[0].mxu0 %v834
    %v2809 = vpop.f32.mrb[0].mxu0
    %v2810 = vadd.f32 %v2746, %v2809
    %v2811 = vpop.f32.mrb[0].mxu0
    %v2812 = vpop.f32.mrb[0].mxu0
    %v2813 = vadd.f32 %v2749, %v2812
    %v2814 = vpop.f32.mrb[0].mxu0
    %2815 = vmatprep.mubr.bf16.mxu0 %v860
    %2816 = vmatmul.mubr.bf16.gmra.mrb[0].mxu0 %v859
    %v2817 = vpop.f32.mrb[0].mxu0
    %v2818 = vadd.f32 %v2754, %v2817
    %v2819 = vpop.f32.mrb[0].mxu0
    %v2820 = vpop.f32.mrb[0].mxu0
    %v2821 = vadd.f32 %v2757, %v2820
    %v2822 = vpop.f32.mrb[0].mxu0
    %2823 = vmatprep.mubr.bf16.mxu0 %v885
    %2824 = vmatmul.mubr.bf16.gmra.mrb[0].mxu0 %v884
    %v2825 = vpop.f32.mrb[0].mxu0
    %v2826 = vadd.f32 %v2762, %v2825
    %v2827 = vpop.f32.mrb[0].mxu0
    %v2828 = vpop.f32.mrb[0].mxu0
    %v2829 = vpop.f32.mrb[0].mxu0
    %2830 = vdwg.mxu0
    %2831 = vmatprep.subr.bf16.mxu0 0
    %2832 = vmatpush1.bf16.msra.mxu0 %v1951
    %2833 = vmatprep.subr.bf16.mxu0 0
    %2834 = vmatpush1.bf16.msra.mxu0 %v1952
    %2835 = vmatprep.subr.bf16.mxu0 0
    %2836 = vmatpush1.bf16.msra.mxu0 %v1953
    %2837 = vmatprep.subr.bf16.mxu0 0
    %2838 = vmatpush1.bf16.msra.mxu0 %v1954
    %2839 = vmatprep.subr.bf16.mxu0 0
    %2840 = vmatpush1.bf16.msra.mxu0 %v1955
    %2841 = vmatprep.subr.bf16.mxu0 0
    %2842 = vmatpush1.bf16.msra.mxu0 %v1956
    %2843 = vmatprep.subr.bf16.mxu0 0
    %2844 = vmatpush1.bf16.msra.mxu0 %v1957
    %2845 = vmatprep.subr.bf16.mxu0 0
    %2846 = vmatpush1.bf16.msra.mxu0 %v1958
    %2847 = vmatprep.subr.bf16.mxu0 0
    %2848 = vmatpush1.bf16.msra.mxu0 %v1959
    %2849 = vmatprep.subr.bf16.mxu0 0
    %2850 = vmatpush1.bf16.msra.mxu0 %v1960
    %2851 = vmatprep.subr.bf16.mxu0 0
    %2852 = vmatpush1.bf16.msra.mxu0 %v1961
    %2853 = vmatprep.subr.bf16.mxu0 0
    %2854 = vmatpush1.bf16.msra.mxu0 %v1962
    %2855 = vmatprep.subr.bf16.mxu0 0
    %2856 = vmatpush1.bf16.msra.mxu0 %v1963
    %2857 = vmatprep.subr.bf16.mxu0 0
    %2858 = vmatpush1.bf16.msra.mxu0 %v1964
    %2859 = vmatprep.subr.bf16.mxu0 0
    %2860 = vmatpush1.bf16.msra.mxu0 %v1965
    %2861 = vmatprep.subr.bf16.mxu0 0
    %2862 = vmatpush1.bf16.msra.mxu0 %v1966
    %2863 = vmatprep.mubr.bf16.mxu0 %v812
    %2864 = vmatmul.mubr.bf16.gmra.mrb[0].mxu0 %v811
    %v2865 = vpop.f32.mrb[0].mxu0
    %v2866 = vadd.f32 %v2802, %v2865
    %v2867 = vpop.f32.mrb[0].mxu0
    %v2868 = vpop.f32.mrb[0].mxu0
    %v2869 = vadd.f32 %v2805, %v2868
    %v2870 = vpop.f32.mrb[0].mxu0
    %2871 = vmatprep.mubr.bf16.mxu0 %v837
    %2872 = vmatmul.mubr.bf16.gmra.mrb[0].mxu0 %v836
    %v2873 = vpop.f32.mrb[0].mxu0
    %v2874 = vadd.f32 %v2810, %v2873
    %v2875 = vpop.f32.mrb[0].mxu0
    %v2876 = vpop.f32.mrb[0].mxu0
    %v2877 = vadd.f32 %v2813, %v2876
    %v2878 = vpop.f32.mrb[0].mxu0
    %2879 = vmatprep.mubr.bf16.mxu0 %v862
    %2880 = vmatmul.mubr.bf16.gmra.mrb[0].mxu0 %v861
    %v2881 = vpop.f32.mrb[0].mxu0
    %v2882 = vadd.f32 %v2818, %v2881
    %v2883 = vpop.f32.mrb[0].mxu0
    %v2884 = vpop.f32.mrb[0].mxu0
    %v2885 = vadd.f32 %v2821, %v2884
    %v2886 = vpop.f32.mrb[0].mxu0
    %2887 = vmatprep.mubr.bf16.mxu0 %v887
    %2888 = vmatmul.mubr.bf16.gmra.mrb[0].mxu0 %v886
    %v2889 = vpop.f32.mrb[0].mxu0
    %v2890 = vadd.f32 %v2826, %v2889
    %v2891 = vpop.f32.mrb[0].mxu0
    %v2892 = vpop.f32.mrb[0].mxu0
    %v2893 = vpop.f32.mrb[0].mxu0
    %2894 = vdwg.mxu0
    %2895 = vmatprep.subr.bf16.mxu0 0
    %2896 = vmatpush1.bf16.msra.mxu0 %v1967
    %2897 = vmatprep.subr.bf16.mxu0 0
    %2898 = vmatpush1.bf16.msra.mxu0 %v1968
    %2899 = vmatprep.subr.bf16.mxu0 0
    %2900 = vmatpush1.bf16.msra.mxu0 %v1969
    %2901 = vmatprep.subr.bf16.mxu0 0
    %2902 = vmatpush1.bf16.msra.mxu0 %v1970
    %2903 = vmatprep.subr.bf16.mxu0 0
    %2904 = vmatpush1.bf16.msra.mxu0 %v1971
    %2905 = vmatprep.subr.bf16.mxu0 0
    %2906 = vmatpush1.bf16.msra.mxu0 %v1972
    %2907 = vmatprep.subr.bf16.mxu0 0
    %2908 = vmatpush1.bf16.msra.mxu0 %v1973
    %2909 = vmatprep.subr.bf16.mxu0 0
    %2910 = vmatpush1.bf16.msra.mxu0 %v1974
    %2911 = vmatprep.subr.bf16.mxu0 0
    %2912 = vmatpush1.bf16.msra.mxu0 %v1975
    %2913 = vmatprep.subr.bf16.mxu0 0
    %2914 = vmatpush1.bf16.msra.mxu0 %v1976
    %2915 = vmatprep.subr.bf16.mxu0 0
    %2916 = vmatpush1.bf16.msra.mxu0 %v1977
    %2917 = vmatprep.subr.bf16.mxu0 0
    %2918 = vmatpush1.bf16.msra.mxu0 %v1978
    %2919 = vmatprep.subr.bf16.mxu0 0
    %2920 = vmatpush1.bf16.msra.mxu0 %v1979
    %2921 = vmatprep.subr.bf16.mxu0 0
    %2922 = vmatpush1.bf16.msra.mxu0 %v1980
    %2923 = vmatprep.subr.bf16.mxu0 0
    %2924 = vmatpush1.bf16.msra.mxu0 %v1981
    %2925 = vmatprep.subr.bf16.mxu0 0
    %2926 = vmatpush1.bf16.msra.mxu0 %v1982
    %2927 = vmatprep.mubr.bf16.mxu0 %v814
    %2928 = vmatmul.mubr.bf16.gmra.mrb[0].mxu0 %v813
    %v2929 = vpop.f32.mrb[0].mxu0
    %v2930 = vadd.f32 %v2866, %v2929
    %v2931 = vpop.f32.mrb[0].mxu0
    %v2932 = vpop.f32.mrb[0].mxu0
    %v2933 = vadd.f32 %v2869, %v2932
    %v2934 = vpop.f32.mrb[0].mxu0
    %2935 = vmatprep.mubr.bf16.mxu0 %v839
    %2936 = vmatmul.mubr.bf16.gmra.mrb[0].mxu0 %v838
    %v2937 = vpop.f32.mrb[0].mxu0
    %v2938 = vadd.f32 %v2874, %v2937
    %v2939 = vpop.f32.mrb[0].mxu0
    %v2940 = vpop.f32.mrb[0].mxu0
    %v2941 = vadd.f32 %v2877, %v2940
    %v2942 = vpop.f32.mrb[0].mxu0
    %2943 = vmatprep.mubr.bf16.mxu0 %v864
    %2944 = vmatmul.mubr.bf16.gmra.mrb[0].mxu0 %v863
    %v2945 = vpop.f32.mrb[0].mxu0
    %v2946 = vadd.f32 %v2882, %v2945
    %v2947 = vpop.f32.mrb[0].mxu0
    %v2948 = vpop.f32.mrb[0].mxu0
    %v2949 = vadd.f32 %v2885, %v2948
    %v2950 = vpop.f32.mrb[0].mxu0
    %2951 = vmatprep.mubr.bf16.mxu0 %v889
    %2952 = vmatmul.mubr.bf16.gmra.mrb[0].mxu0 %v888
    %v2953 = vpop.f32.mrb[0].mxu0
    %v2954 = vadd.f32 %v2890, %v2953
    %v2955 = vpop.f32.mrb[0].mxu0
    %v2956 = vpop.f32.mrb[0].mxu0
    %v2957 = vpop.f32.mrb[0].mxu0
    %2958 = vdwg.mxu0
    %2959 = vmatprep.subr.bf16.mxu0 0
    %2960 = vmatpush1.bf16.msra.mxu0 %v1983
    %2961 = vmatprep.subr.bf16.mxu0 0
    %2962 = vmatpush1.bf16.msra.mxu0 %v1984
    %2963 = vmatprep.subr.bf16.mxu0 0
    %2964 = vmatpush1.bf16.msra.mxu0 %v1985
    %2965 = vmatprep.subr.bf16.mxu0 0
    %2966 = vmatpush1.bf16.msra.mxu0 %v1986
    %2967 = vmatprep.subr.bf16.mxu0 0
    %2968 = vmatpush1.bf16.msra.mxu0 %v1987
    %2969 = vmatprep.subr.bf16.mxu0 0
    %2970 = vmatpush1.bf16.msra.mxu0 %v1988
    %2971 = vmatprep.subr.bf16.mxu0 0
    %2972 = vmatpush1.bf16.msra.mxu0 %v1989
    %2973 = vmatprep.subr.bf16.mxu0 0
    %2974 = vmatpush1.bf16.msra.mxu0 %v1990
    %2975 = vmatprep.subr.bf16.mxu0 0
    %2976 = vmatpush1.bf16.msra.mxu0 0
    %2977 = vmatprep.subr.bf16.mxu0 0
    %2978 = vmatpush1.bf16.msra.mxu0 0
    %2979 = vmatprep.subr.bf16.mxu0 0
    %2980 = vmatpush1.bf16.msra.mxu0 0
    %2981 = vmatprep.subr.bf16.mxu0 0
    %2982 = vmatpush1.bf16.msra.mxu0 0
    %2983 = vmatprep.subr.bf16.mxu0 0
    %2984 = vmatpush1.bf16.msra.mxu0 0
    %2985 = vmatprep.subr.bf16.mxu0 0
    %2986 = vmatpush1.bf16.msra.mxu0 0
    %2987 = vmatprep.subr.bf16.mxu0 0
    %2988 = vmatpush1.bf16.msra.mxu0 0
    %2989 = vmatprep.subr.bf16.mxu0 0
    %2990 = vmatpush1.bf16.msra.mxu0 0
    %2991 = vmatprep.mubr.bf16.mxu0 0
    %2992 = vmatmul.mubr.bf16.gmra.mrb[0].mxu0 %v815
    %v2993 = vpop.f32.mrb[0].mxu0
    %v2994 = vadd.f32 %v2930, %v2993
    %v2995 = vpop.f32.mrb[0].mxu0
    %v2996 = vpop.f32.mrb[0].mxu0
    %v2997 = vadd.f32 %v2933, %v2996
    %v2998 = vpop.f32.mrb[0].mxu0
    %2999 = vmatprep.mubr.bf16.mxu0 0
    %3000 = vmatmul.mubr.bf16.gmra.mrb[0].mxu0 %v840
    %v3001 = vpop.f32.mrb[0].mxu0
    %v3002 = vadd.f32 %v2938, %v3001
    %v3003 = vpop.f32.mrb[0].mxu0
    %v3004 = vpop.f32.mrb[0].mxu0
    %v3005 = vadd.f32 %v2941, %v3004
    %v3006 = vpop.f32.mrb[0].mxu0
    %3007 = vmatprep.mubr.bf16.mxu0 0
    %3008 = vmatmul.mubr.bf16.gmra.mrb[0].mxu0 %v865
    %v3009 = vpop.f32.mrb[0].mxu0
    %v3010 = vadd.f32 %v2946, %v3009
    %v3011 = vpop.f32.mrb[0].mxu0
    %v3012 = vpop.f32.mrb[0].mxu0
    %v3013 = vadd.f32 %v2949, %v3012
    %v3014 = vpop.f32.mrb[0].mxu0
    %3015 = vmatprep.mubr.bf16.mxu0 0
    %3016 = vmatmul.mubr.bf16.gmra.mrb[0].mxu0 %v890
    %v3017 = vpop.f32.mrb[0].mxu0
    %v3018 = vadd.f32 %v2954, %v3017
    %v3019 = vpop.f32.mrb[0].mxu0
    %v3020 = vpop.f32.mrb[0].mxu0
    %v3021 = vpop.f32.mrb[0].mxu0
    %3022 = vdwg.mxu0
    %s3023 = scalar_lea.vmem %s0, 700
    %v3024 = vld [vmem:[%s3023] sm:$0xff]
    %v3025 = vld [vmem:[%s3023 + $0x8] sm:$0xff]
    %v3026 = vld [vmem:[%s3023 + $0x10] sm:$0xff]
    %v3027 = vld [vmem:[%s3023 + $0x18] sm:$0xff]
    %v3028 = vld [vmem:[%s3023 + $0x20] sm:$0xff]
    %v3029 = vld [vmem:[%s3023 + $0x28] sm:$0xff]
    %v3030 = vld [vmem:[%s3023 + $0x30] sm:$0xff]
    %v3031 = vld [vmem:[%s3023 + $0x38] sm:$0xff]
    %v3032 = vld [vmem:[%s3023 + $0x40] sm:$0xff]
    %v3033 = vld [vmem:[%s3023 + $0x48] sm:$0xff]
    %v3034 = vld [vmem:[%s3023 + $0x50] sm:$0xff]
    %v3035 = vld [vmem:[%s3023 + $0x58] sm:$0xff]
    %v3036 = vld [vmem:[%s3023 + $0x60] sm:$0xf]
    %v3037 = vld [vmem:[%s3023 + $0x64] sm:$0xff]
    %v3038 = vld [vmem:[%s3023 + $0x6c] sm:$0xff]
    %v3039 = vld [vmem:[%s3023 + $0x74] sm:$0xff]
    %v3040 = vld [vmem:[%s3023 + $0x7c] sm:$0xff]
    %v3041 = vld [vmem:[%s3023 + $0x84] sm:$0xff]
    %v3042 = vld [vmem:[%s3023 + $0x8c] sm:$0xff]
    %v3043 = vld [vmem:[%s3023 + $0x94] sm:$0xff]
    %v3044 = vld [vmem:[%s3023 + $0x9c] sm:$0xff]
    %v3045 = vld [vmem:[%s3023 + $0xa4] sm:$0xff]
    %v3046 = vld [vmem:[%s3023 + $0xac] sm:$0xff]
    %v3047 = vld [vmem:[%s3023 + $0xb4] sm:$0xff]
    %v3048 = vld [vmem:[%s3023 + $0xbc] sm:$0xff]
    %v3049 = vld [vmem:[%s3023 + $0xc4] sm:$0xf]
    %v3050 = vld [vmem:[%s3023 + $0xc8] sm:$0xff]
    %v3051 = vld [vmem:[%s3023 + $0xd0] sm:$0xff]
    %v3052 = vld [vmem:[%s3023 + $0xd8] sm:$0xff]
    %v3053 = vld [vmem:[%s3023 + $0xe0] sm:$0xff]
    %v3054 = vld [vmem:[%s3023 + $0xe8] sm:$0xff]
    %v3055 = vld [vmem:[%s3023 + $0xf0] sm:$0xff]
    %v3056 = vld [vmem:[%s3023 + $0xf8] sm:$0xff]
    %v3057 = vld [vmem:[%s3023 + $0x100] sm:$0xff]
    %v3058 = vld [vmem:[%s3023 + $0x108] sm:$0xff]
    %v3059 = vld [vmem:[%s3023 + $0x110] sm:$0xff]
    %v3060 = vld [vmem:[%s3023 + $0x118] sm:$0xff]
    %v3061 = vld [vmem:[%s3023 + $0x120] sm:$0xff]
    %v3062 = vld [vmem:[%s3023 + $0x128] sm:$0xf]
    %v3063 = vld [vmem:[%s3023 + $0x12c] sm:$0xff]
    %v3064 = vld [vmem:[%s3023 + $0x134] sm:$0xff]
    %v3065 = vld [vmem:[%s3023 + $0x13c] sm:$0xff]
    %v3066 = vld [vmem:[%s3023 + $0x144] sm:$0xff]
    %v3067 = vld [vmem:[%s3023 + $0x14c] sm:$0xff]
    %v3068 = vld [vmem:[%s3023 + $0x154] sm:$0xff]
    %v3069 = vld [vmem:[%s3023 + $0x15c] sm:$0xff]
    %v3070 = vld [vmem:[%s3023 + $0x164] sm:$0xff]
    %v3071 = vld [vmem:[%s3023 + $0x16c] sm:$0xff]
    %v3072 = vld [vmem:[%s3023 + $0x174] sm:$0xff]
    %v3073 = vld [vmem:[%s3023 + $0x17c] sm:$0xff]
    %v3074 = vld [vmem:[%s3023 + $0x184] sm:$0xff]
    %v3075 = vld [vmem:[%s3023 + $0x18c] sm:$0xf]
    %v3076 = vld [vmem:[%s3023 + $0x190] sm:$0xff]
    %v3077 = vld [vmem:[%s3023 + $0x198] sm:$0xff]
    %v3078 = vld [vmem:[%s3023 + $0x1a0] sm:$0xff]
    %v3079 = vld [vmem:[%s3023 + $0x1a8] sm:$0xff]
    %v3080 = vld [vmem:[%s3023 + $0x1b0] sm:$0xff]
    %v3081 = vld [vmem:[%s3023 + $0x1b8] sm:$0xff]
    %v3082 = vld [vmem:[%s3023 + $0x1c0] sm:$0xff]
    %v3083 = vld [vmem:[%s3023 + $0x1c8] sm:$0xff]
    %v3084 = vld [vmem:[%s3023 + $0x1d0] sm:$0xff]
    %v3085 = vld [vmem:[%s3023 + $0x1d8] sm:$0xff]
    %v3086 = vld [vmem:[%s3023 + $0x1e0] sm:$0xff]
    %v3087 = vld [vmem:[%s3023 + $0x1e8] sm:$0xff]
    %v3088 = vld [vmem:[%s3023 + $0x1f0] sm:$0xf]
    %v3089 = vld [vmem:[%s3023 + $0x1f4] sm:$0xff]
    %v3090 = vld [vmem:[%s3023 + $0x1fc] sm:$0xff]
    %v3091 = vld [vmem:[%s3023 + $0x204] sm:$0xff]
    %v3092 = vld [vmem:[%s3023 + $0x20c] sm:$0xff]
    %v3093 = vld [vmem:[%s3023 + $0x214] sm:$0xff]
    %v3094 = vld [vmem:[%s3023 + $0x21c] sm:$0xff]
    %v3095 = vld [vmem:[%s3023 + $0x224] sm:$0xff]
    %v3096 = vld [vmem:[%s3023 + $0x22c] sm:$0xff]
    %v3097 = vld [vmem:[%s3023 + $0x234] sm:$0xff]
    %v3098 = vld [vmem:[%s3023 + $0x23c] sm:$0xff]
    %v3099 = vld [vmem:[%s3023 + $0x244] sm:$0xff]
    %v3100 = vld [vmem:[%s3023 + $0x24c] sm:$0xff]
    %v3101 = vld [vmem:[%s3023 + $0x254] sm:$0xf]
    %v3102 = vld [vmem:[%s3023 + $0x258] sm:$0x11]
    %v3103 = vld [vmem:[%s3023 + $0x260] sm:$0x11]
    %v3104 = vld [vmem:[%s3023 + $0x268] sm:$0x11]
    %v3105 = vld [vmem:[%s3023 + $0x270] sm:$0x11]
    %v3106 = vld [vmem:[%s3023 + $0x278] sm:$0x11]
    %v3107 = vld [vmem:[%s3023 + $0x280] sm:$0x11]
    %v3108 = vld [vmem:[%s3023 + $0x288] sm:$0x11]
    %v3109 = vld [vmem:[%s3023 + $0x290] sm:$0x11]
    %v3110 = vld [vmem:[%s3023 + $0x298] sm:$0x11]
    %v3111 = vld [vmem:[%s3023 + $0x2a0] sm:$0x11]
    %v3112 = vld [vmem:[%s3023 + $0x2a8] sm:$0x11]
    %v3113 = vld [vmem:[%s3023 + $0x2b0] sm:$0x11]
    %v3114 = vld [vmem:[%s3023 + $0x2b8] sm:$0x1]
    %v3206 = vunpack.c.l.b16 %v3024
    %v3207 = vunpack.c.h.b16 %v3024
    %v3208 = vunpack.c.l.b16 %v3025
    %v3209 = vunpack.c.h.b16 %v3025
    %v3210 = vunpack.c.l.b16 %v3026
    %v3211 = vunpack.c.h.b16 %v3026
    %v3212 = vunpack.c.l.b16 %v3027
    %v3213 = vunpack.c.h.b16 %v3027
    %v3214 = vunpack.c.l.b16 %v3028
    %v3215 = vunpack.c.h.b16 %v3028
    %v3216 = vunpack.c.l.b16 %v3029
    %v3217 = vunpack.c.h.b16 %v3029
    %v3218 = vunpack.c.l.b16 %v3030
    %v3219 = vunpack.c.h.b16 %v3030
    %v3220 = vunpack.c.l.b16 %v3031
    %v3221 = vunpack.c.h.b16 %v3031
    %v3222 = vunpack.c.l.b16 %v3032
    %v3223 = vunpack.c.h.b16 %v3032
    %v3224 = vunpack.c.l.b16 %v3033
    %v3225 = vunpack.c.h.b16 %v3033
    %v3226 = vunpack.c.l.b16 %v3034
    %v3227 = vunpack.c.h.b16 %v3034
    %v3228 = vunpack.c.l.b16 %v3035
    %v3229 = vunpack.c.h.b16 %v3035
    %v3230 = vunpack.c.l.b16 %v3036
    %v3231 = vunpack.c.l.b16 %v3037
    %v3232 = vunpack.c.h.b16 %v3037
    %v3233 = vunpack.c.l.b16 %v3038
    %v3234 = vunpack.c.h.b16 %v3038
    %v3235 = vunpack.c.l.b16 %v3039
    %v3236 = vunpack.c.h.b16 %v3039
    %v3237 = vunpack.c.l.b16 %v3040
    %v3238 = vunpack.c.h.b16 %v3040
    %v3239 = vunpack.c.l.b16 %v3041
    %v3240 = vunpack.c.h.b16 %v3041
    %v3241 = vunpack.c.l.b16 %v3042
    %v3242 = vunpack.c.h.b16 %v3042
    %v3243 = vunpack.c.l.b16 %v3043
    %v3244 = vunpack.c.h.b16 %v3043
    %v3245 = vunpack.c.l.b16 %v3044
    %v3246 = vunpack.c.h.b16 %v3044
    %v3247 = vunpack.c.l.b16 %v3045
    %v3248 = vunpack.c.h.b16 %v3045
    %v3249 = vunpack.c.l.b16 %v3046
    %v3250 = vunpack.c.h.b16 %v3046
    %v3251 = vunpack.c.l.b16 %v3047
    %v3252 = vunpack.c.h.b16 %v3047
    %v3253 = vunpack.c.l.b16 %v3048
    %v3254 = vunpack.c.h.b16 %v3048
    %v3255 = vunpack.c.l.b16 %v3049
    %v3256 = vunpack.c.l.b16 %v3050
    %v3257 = vunpack.c.h.b16 %v3050
    %v3258 = vunpack.c.l.b16 %v3051
    %v3259 = vunpack.c.h.b16 %v3051
    %v3260 = vunpack.c.l.b16 %v3052
    %v3261 = vunpack.c.h.b16 %v3052
    %v3262 = vunpack.c.l.b16 %v3053
    %v3263 = vunpack.c.h.b16 %v3053
    %v3264 = vunpack.c.l.b16 %v3054
    %v3265 = vunpack.c.h.b16 %v3054
    %v3266 = vunpack.c.l.b16 %v3055
    %v3267 = vunpack.c.h.b16 %v3055
    %v3268 = vunpack.c.l.b16 %v3056
    %v3269 = vunpack.c.h.b16 %v3056
    %v3270 = vunpack.c.l.b16 %v3057
    %v3271 = vunpack.c.h.b16 %v3057
    %v3272 = vunpack.c.l.b16 %v3058
    %v3273 = vunpack.c.h.b16 %v3058
    %v3274 = vunpack.c.l.b16 %v3059
    %v3275 = vunpack.c.h.b16 %v3059
    %v3276 = vunpack.c.l.b16 %v3060
    %v3277 = vunpack.c.h.b16 %v3060
    %v3278 = vunpack.c.l.b16 %v3061
    %v3279 = vunpack.c.h.b16 %v3061
    %v3280 = vunpack.c.l.b16 %v3062
    %v3281 = vunpack.c.l.b16 %v3063
    %v3282 = vunpack.c.h.b16 %v3063
    %v3283 = vunpack.c.l.b16 %v3064
    %v3284 = vunpack.c.h.b16 %v3064
    %v3285 = vunpack.c.l.b16 %v3065
    %v3286 = vunpack.c.h.b16 %v3065
    %v3287 = vunpack.c.l.b16 %v3066
    %v3288 = vunpack.c.h.b16 %v3066
    %v3289 = vunpack.c.l.b16 %v3067
    %v3290 = vunpack.c.h.b16 %v3067
    %v3291 = vunpack.c.l.b16 %v3068
    %v3292 = vunpack.c.h.b16 %v3068
    %v3293 = vunpack.c.l.b16 %v3069
    %v3294 = vunpack.c.h.b16 %v3069
    %v3295 = vunpack.c.l.b16 %v3070
    %v3296 = vunpack.c.h.b16 %v3070
    %v3297 = vunpack.c.l.b16 %v3071
    %v3298 = vunpack.c.h.b16 %v3071
    %v3299 = vunpack.c.l.b16 %v3072
    %v3300 = vunpack.c.h.b16 %v3072
    %v3301 = vunpack.c.l.b16 %v3073
    %v3302 = vunpack.c.h.b16 %v3073
    %v3303 = vunpack.c.l.b16 %v3074
    %v3304 = vunpack.c.h.b16 %v3074
    %v3305 = vunpack.c.l.b16 %v3075
    %v3306 = vunpack.c.l.b16 %v3076
    %v3307 = vunpack.c.h.b16 %v3076
    %v3308 = vunpack.c.l.b16 %v3077
    %v3309 = vunpack.c.h.b16 %v3077
    %v3310 = vunpack.c.l.b16 %v3078
    %v3311 = vunpack.c.h.b16 %v3078
    %v3312 = vunpack.c.l.b16 %v3079
    %v3313 = vunpack.c.h.b16 %v3079
    %v3314 = vunpack.c.l.b16 %v3080
    %v3315 = vunpack.c.h.b16 %v3080
    %v3316 = vunpack.c.l.b16 %v3081
    %v3317 = vunpack.c.h.b16 %v3081
    %v3318 = vunpack.c.l.b16 %v3082
    %v3319 = vunpack.c.h.b16 %v3082
    %v3320 = vunpack.c.l.b16 %v3083
    %v3321 = vunpack.c.h.b16 %v3083
    %v3322 = vunpack.c.l.b16 %v3084
    %v3323 = vunpack.c.h.b16 %v3084
    %v3324 = vunpack.c.l.b16 %v3085
    %v3325 = vunpack.c.h.b16 %v3085
    %v3326 = vunpack.c.l.b16 %v3086
    %v3327 = vunpack.c.h.b16 %v3086
    %v3328 = vunpack.c.l.b16 %v3087
    %v3329 = vunpack.c.h.b16 %v3087
    %v3330 = vunpack.c.l.b16 %v3088
    %v3331 = vunpack.c.l.b16 %v3089
    %v3332 = vunpack.c.h.b16 %v3089
    %v3333 = vunpack.c.l.b16 %v3090
    %v3334 = vunpack.c.h.b16 %v3090
    %v3335 = vunpack.c.l.b16 %v3091
    %v3336 = vunpack.c.h.b16 %v3091
    %v3337 = vunpack.c.l.b16 %v3092
    %v3338 = vunpack.c.h.b16 %v3092
    %v3339 = vunpack.c.l.b16 %v3093
    %v3340 = vunpack.c.h.b16 %v3093
    %v3341 = vunpack.c.l.b16 %v3094
    %v3342 = vunpack.c.h.b16 %v3094
    %v3343 = vunpack.c.l.b16 %v3095
    %v3344 = vunpack.c.h.b16 %v3095
    %v3345 = vunpack.c.l.b16 %v3096
    %v3346 = vunpack.c.h.b16 %v3096
    %v3347 = vunpack.c.l.b16 %v3097
    %v3348 = vunpack.c.h.b16 %v3097
    %v3349 = vunpack.c.l.b16 %v3098
    %v3350 = vunpack.c.h.b16 %v3098
    %v3351 = vunpack.c.l.b16 %v3099
    %v3352 = vunpack.c.h.b16 %v3099
    %v3353 = vunpack.c.l.b16 %v3100
    %v3354 = vunpack.c.h.b16 %v3100
    %v3355 = vunpack.c.l.b16 %v3101
    %v3356 = vunpack.c.l.b16 %v3102
    %v3357 = vunpack.c.h.b16 %v3102
    %v3358 = vunpack.c.l.b16 %v3103
    %v3359 = vunpack.c.h.b16 %v3103
    %v3360 = vunpack.c.l.b16 %v3104
    %v3361 = vunpack.c.h.b16 %v3104
    %v3362 = vunpack.c.l.b16 %v3105
    %v3363 = vunpack.c.h.b16 %v3105
    %v3364 = vunpack.c.l.b16 %v3106
    %v3365 = vunpack.c.h.b16 %v3106
    %v3366 = vunpack.c.l.b16 %v3107
    %v3367 = vunpack.c.h.b16 %v3107
    %v3368 = vunpack.c.l.b16 %v3108
    %v3369 = vunpack.c.h.b16 %v3108
    %v3370 = vunpack.c.l.b16 %v3109
    %v3371 = vunpack.c.h.b16 %v3109
    %v3372 = vunpack.c.l.b16 %v3110
    %v3373 = vunpack.c.h.b16 %v3110
    %v3374 = vunpack.c.l.b16 %v3111
    %v3375 = vunpack.c.h.b16 %v3111
    %v3376 = vunpack.c.l.b16 %v3112
    %v3377 = vunpack.c.h.b16 %v3112
    %v3378 = vunpack.c.l.b16 %v3113
    %v3379 = vunpack.c.h.b16 %v3113
    %v3380 = vunpack.c.l.b16 %v3114
    %v3381 = vpack.c.b16 %v3231, %v3206
    %v3382 = vpack.c.b16 %v3232, %v3207
    %v3383 = vpack.c.b16 %v3233, %v3208
    %v3384 = vpack.c.b16 %v3234, %v3209
    %v3385 = vpack.c.b16 %v3235, %v3210
    %v3386 = vpack.c.b16 %v3236, %v3211
    %v3387 = vpack.c.b16 %v3237, %v3212
    %v3388 = vpack.c.b16 %v3238, %v3213
    %v3389 = vpack.c.b16 %v3239, %v3214
    %v3390 = vpack.c.b16 %v3240, %v3215
    %v3391 = vpack.c.b16 %v3241, %v3216
    %v3392 = vpack.c.b16 %v3242, %v3217
    %v3393 = vpack.c.b16 %v3243, %v3218
    %v3394 = vpack.c.b16 %v3244, %v3219
    %v3395 = vpack.c.b16 %v3245, %v3220
    %v3396 = vpack.c.b16 %v3246, %v3221
    %v3397 = vpack.c.b16 %v3247, %v3222
    %v3398 = vpack.c.b16 %v3248, %v3223
    %v3399 = vpack.c.b16 %v3249, %v3224
    %v3400 = vpack.c.b16 %v3250, %v3225
    %v3401 = vpack.c.b16 %v3251, %v3226
    %v3402 = vpack.c.b16 %v3252, %v3227
    %v3403 = vpack.c.b16 %v3253, %v3228
    %v3404 = vpack.c.b16 %v3254, %v3229
    %v3405 = vpack.c.b16 %v3255, %v3230
    %v3406 = vpack.c.b16 %v3281, %v3256
    %v3407 = vpack.c.b16 %v3282, %v3257
    %v3408 = vpack.c.b16 %v3283, %v3258
    %v3409 = vpack.c.b16 %v3284, %v3259
    %v3410 = vpack.c.b16 %v3285, %v3260
    %v3411 = vpack.c.b16 %v3286, %v3261
    %v3412 = vpack.c.b16 %v3287, %v3262
    %v3413 = vpack.c.b16 %v3288, %v3263
    %v3414 = vpack.c.b16 %v3289, %v3264
    %v3415 = vpack.c.b16 %v3290, %v3265
    %v3416 = vpack.c.b16 %v3291, %v3266
    %v3417 = vpack.c.b16 %v3292, %v3267
    %v3418 = vpack.c.b16 %v3293, %v3268
    %v3419 = vpack.c.b16 %v3294, %v3269
    %v3420 = vpack.c.b16 %v3295, %v3270
    %v3421 = vpack.c.b16 %v3296, %v3271
    %v3422 = vpack.c.b16 %v3297, %v3272
    %v3423 = vpack.c.b16 %v3298, %v3273
    %v3424 = vpack.c.b16 %v3299, %v3274
    %v3425 = vpack.c.b16 %v3300, %v3275
    %v3426 = vpack.c.b16 %v3301, %v3276
    %v3427 = vpack.c.b16 %v3302, %v3277
    %v3428 = vpack.c.b16 %v3303, %v3278
    %v3429 = vpack.c.b16 %v3304, %v3279
    %v3430 = vpack.c.b16 %v3305, %v3280
    %v3431 = vpack.c.b16 %v3331, %v3306
    %v3432 = vpack.c.b16 %v3332, %v3307
    %v3433 = vpack.c.b16 %v3333, %v3308
    %v3434 = vpack.c.b16 %v3334, %v3309
    %v3435 = vpack.c.b16 %v3335, %v3310
    %v3436 = vpack.c.b16 %v3336, %v3311
    %v3437 = vpack.c.b16 %v3337, %v3312
    %v3438 = vpack.c.b16 %v3338, %v3313
    %v3439 = vpack.c.b16 %v3339, %v3314
    %v3440 = vpack.c.b16 %v3340, %v3315
    %v3441 = vpack.c.b16 %v3341, %v3316
    %v3442 = vpack.c.b16 %v3342, %v3317
    %v3443 = vpack.c.b16 %v3343, %v3318
    %v3444 = vpack.c.b16 %v3344, %v3319
    %v3445 = vpack.c.b16 %v3345, %v3320
    %v3446 = vpack.c.b16 %v3346, %v3321
    %v3447 = vpack.c.b16 %v3347, %v3322
    %v3448 = vpack.c.b16 %v3348, %v3323
    %v3449 = vpack.c.b16 %v3349, %v3324
    %v3450 = vpack.c.b16 %v3350, %v3325
    %v3451 = vpack.c.b16 %v3351, %v3326
    %v3452 = vpack.c.b16 %v3352, %v3327
    %v3453 = vpack.c.b16 %v3353, %v3328
    %v3454 = vpack.c.b16 %v3354, %v3329
    %v3455 = vpack.c.b16 %v3355, %v3330
    %v3456 = vpack.c.b16 %v3356, %v3356
    %v3457 = vpack.c.b16 %v3357, %v3357
    %v3458 = vpack.c.b16 %v3358, %v3358
    %v3459 = vpack.c.b16 %v3359, %v3359
    %v3460 = vpack.c.b16 %v3360, %v3360
    %v3461 = vpack.c.b16 %v3361, %v3361
    %v3462 = vpack.c.b16 %v3362, %v3362
    %v3463 = vpack.c.b16 %v3363, %v3363
    %v3464 = vpack.c.b16 %v3364, %v3364
    %v3465 = vpack.c.b16 %v3365, %v3365
    %v3466 = vpack.c.b16 %v3366, %v3366
    %v3467 = vpack.c.b16 %v3367, %v3367
    %v3468 = vpack.c.b16 %v3368, %v3368
    %v3469 = vpack.c.b16 %v3369, %v3369
    %v3470 = vpack.c.b16 %v3370, %v3370
    %v3471 = vpack.c.b16 %v3371, %v3371
    %v3472 = vpack.c.b16 %v3372, %v3372
    %v3473 = vpack.c.b16 %v3373, %v3373
    %v3474 = vpack.c.b16 %v3374, %v3374
    %v3475 = vpack.c.b16 %v3375, %v3375
    %v3476 = vpack.c.b16 %v3376, %v3376
    %v3477 = vpack.c.b16 %v3377, %v3377
    %v3478 = vpack.c.b16 %v3378, %v3378
    %v3479 = vpack.c.b16 %v3379, %v3379
    %v3480 = vpack.c.b16 %v3380, %v3380
    %3581 = vmatprep.subr.bf16.mxu0 0
    %3582 = vmatpush1.bf16.msra.mxu0 %v1791
    %3583 = vmatprep.subr.bf16.mxu0 0
    %3584 = vmatpush1.bf16.msra.mxu0 %v1792
    %3585 = vmatprep.subr.bf16.mxu0 0
    %3586 = vmatpush1.bf16.msra.mxu0 %v1793
    %3587 = vmatprep.subr.bf16.mxu0 0
    %3588 = vmatpush1.bf16.msra.mxu0 %v1794
    %3589 = vmatprep.subr.bf16.mxu0 0
    %3590 = vmatpush1.bf16.msra.mxu0 %v1795
    %3591 = vmatprep.subr.bf16.mxu0 0
    %3592 = vmatpush1.bf16.msra.mxu0 %v1796
    %3593 = vmatprep.subr.bf16.mxu0 0
    %3594 = vmatpush1.bf16.msra.mxu0 %v1797
    %3595 = vmatprep.subr.bf16.mxu0 0
    %3596 = vmatpush1.bf16.msra.mxu0 %v1798
    %3597 = vmatprep.subr.bf16.mxu0 0
    %3598 = vmatpush1.bf16.msra.mxu0 %v1799
    %3599 = vmatprep.subr.bf16.mxu0 0
    %3600 = vmatpush1.bf16.msra.mxu0 %v1800
    %3601 = vmatprep.subr.bf16.mxu0 0
    %3602 = vmatpush1.bf16.msra.mxu0 %v1801
    %3603 = vmatprep.subr.bf16.mxu0 0
    %3604 = vmatpush1.bf16.msra.mxu0 %v1802
    %3605 = vmatprep.subr.bf16.mxu0 0
    %3606 = vmatpush1.bf16.msra.mxu0 %v1803
    %3607 = vmatprep.subr.bf16.mxu0 0
    %3608 = vmatpush1.bf16.msra.mxu0 %v1804
    %3609 = vmatprep.subr.bf16.mxu0 0
    %3610 = vmatpush1.bf16.msra.mxu0 %v1805
    %3611 = vmatprep.subr.bf16.mxu0 0
    %3612 = vmatpush1.bf16.msra.mxu0 %v1806
    %3613 = vmatprep.mubr.bf16.mxu0 %v3382
    %3614 = vmatmul.mubr.bf16.gmra.mrb[0].mxu0 %v3381
    %v3615 = vpop.f32.mrb[0].mxu0
    %v3616 = vadd.f32 0.0, %v3615
    %v3617 = vpop.f32.mrb[0].mxu0
    %v3618 = vpop.f32.mrb[0].mxu0
    %v3619 = vadd.f32 0.0, %v3618
    %v3620 = vpop.f32.mrb[0].mxu0
    %3621 = vmatprep.mubr.bf16.mxu0 %v3407
    %3622 = vmatmul.mubr.bf16.gmra.mrb[0].mxu0 %v3406
    %v3623 = vpop.f32.mrb[0].mxu0
    %v3624 = vadd.f32 0.0, %v3623
    %v3625 = vpop.f32.mrb[0].mxu0
    %v3626 = vpop.f32.mrb[0].mxu0
    %v3627 = vadd.f32 0.0, %v3626
    %v3628 = vpop.f32.mrb[0].mxu0
    %3629 = vmatprep.mubr.bf16.mxu0 %v3432
    %3630 = vmatmul.mubr.bf16.gmra.mrb[0].mxu0 %v3431
    %v3631 = vpop.f32.mrb[0].mxu0
    %v3632 = vadd.f32 0.0, %v3631
    %v3633 = vpop.f32.mrb[0].mxu0
    %v3634 = vpop.f32.mrb[0].mxu0
    %v3635 = vadd.f32 0.0, %v3634
    %v3636 = vpop.f32.mrb[0].mxu0
    %3637 = vmatprep.mubr.bf16.mxu0 %v3457
    %3638 = vmatmul.mubr.bf16.gmra.mrb[0].mxu0 %v3456
    %v3639 = vpop.f32.mrb[0].mxu0
    %v3640 = vadd.f32 0.0, %v3639
    %v3641 = vpop.f32.mrb[0].mxu0
    %v3642 = vpop.f32.mrb[0].mxu0
    %v3643 = vpop.f32.mrb[0].mxu0
    %3644 = vdwg.mxu0
    %3645 = vmatprep.subr.bf16.mxu0 0
    %3646 = vmatpush1.bf16.msra.mxu0 %v1807
    %3647 = vmatprep.subr.bf16.mxu0 0
    %3648 = vmatpush1.bf16.msra.mxu0 %v1808
    %3649 = vmatprep.subr.bf16.mxu0 0
    %3650 = vmatpush1.bf16.msra.mxu0 %v1809
    %3651 = vmatprep.subr.bf16.mxu0 0
    %3652 = vmatpush1.bf16.msra.mxu0 %v1810
    %3653 = vmatprep.subr.bf16.mxu0 0
    %3654 = vmatpush1.bf16.msra.mxu0 %v1811
    %3655 = vmatprep.subr.bf16.mxu0 0
    %3656 = vmatpush1.bf16.msra.mxu0 %v1812
    %3657 = vmatprep.subr.bf16.mxu0 0
    %3658 = vmatpush1.bf16.msra.mxu0 %v1813
    %3659 = vmatprep.subr.bf16.mxu0 0
    %3660 = vmatpush1.bf16.msra.mxu0 %v1814
    %3661 = vmatprep.subr.bf16.mxu0 0
    %3662 = vmatpush1.bf16.msra.mxu0 %v1815
    %3663 = vmatprep.subr.bf16.mxu0 0
    %3664 = vmatpush1.bf16.msra.mxu0 %v1816
    %3665 = vmatprep.subr.bf16.mxu0 0
    %3666 = vmatpush1.bf16.msra.mxu0 %v1817
    %3667 = vmatprep.subr.bf16.mxu0 0
    %3668 = vmatpush1.bf16.msra.mxu0 %v1818
    %3669 = vmatprep.subr.bf16.mxu0 0
    %3670 = vmatpush1.bf16.msra.mxu0 %v1819
    %3671 = vmatprep.subr.bf16.mxu0 0
    %3672 = vmatpush1.bf16.msra.mxu0 %v1820
    %3673 = vmatprep.subr.bf16.mxu0 0
    %3674 = vmatpush1.bf16.msra.mxu0 %v1821
    %3675 = vmatprep.subr.bf16.mxu0 0
    %3676 = vmatpush1.bf16.msra.mxu0 %v1822
    %3677 = vmatprep.mubr.bf16.mxu0 %v3384
    %3678 = vmatmul.mubr.bf16.gmra.mrb[0].mxu0 %v3383
    %v3679 = vpop.f32.mrb[0].mxu0
    %v3680 = vadd.f32 %v3616, %v3679
    %v3681 = vpop.f32.mrb[0].mxu0
    %v3682 = vpop.f32.mrb[0].mxu0
    %v3683 = vadd.f32 %v3619, %v3682
    %v3684 = vpop.f32.mrb[0].mxu0
    %3685 = vmatprep.mubr.bf16.mxu0 %v3409
    %3686 = vmatmul.mubr.bf16.gmra.mrb[0].mxu0 %v3408
    %v3687 = vpop.f32.mrb[0].mxu0
    %v3688 = vadd.f32 %v3624, %v3687
    %v3689 = vpop.f32.mrb[0].mxu0
    %v3690 = vpop.f32.mrb[0].mxu0
    %v3691 = vadd.f32 %v3627, %v3690
    %v3692 = vpop.f32.mrb[0].mxu0
    %3693 = vmatprep.mubr.bf16.mxu0 %v3434
    %3694 = vmatmul.mubr.bf16.gmra.mrb[0].mxu0 %v3433
    %v3695 = vpop.f32.mrb[0].mxu0
    %v3696 = vadd.f32 %v3632, %v3695
    %v3697 = vpop.f32.mrb[0].mxu0
    %v3698 = vpop.f32.mrb[0].mxu0
    %v3699 = vadd.f32 %v3635, %v3698
    %v3700 = vpop.f32.mrb[0].mxu0
    %3701 = vmatprep.mubr.bf16.mxu0 %v3459
    %3702 = vmatmul.mubr.bf16.gmra.mrb[0].mxu0 %v3458
    %v3703 = vpop.f32.mrb[0].mxu0
    %v3704 = vadd.f32 %v3640, %v3703
    %v3705 = vpop.f32.mrb[0].mxu0
    %v3706 = vpop.f32.mrb[0].mxu0
    %v3707 = vpop.f32.mrb[0].mxu0
    %3708 = vdwg.mxu0
    %3709 = vmatprep.subr.bf16.mxu0 0
    %3710 = vmatpush1.bf16.msra.mxu0 %v1823
    %3711 = vmatprep.subr.bf16.mxu0 0
    %3712 = vmatpush1.bf16.msra.mxu0 %v1824
    %3713 = vmatprep.subr.bf16.mxu0 0
    %3714 = vmatpush1.bf16.msra.mxu0 %v1825
    %3715 = vmatprep.subr.bf16.mxu0 0
    %3716 = vmatpush1.bf16.msra.mxu0 %v1826
    %3717 = vmatprep.subr.bf16.mxu0 0
    %3718 = vmatpush1.bf16.msra.mxu0 %v1827
    %3719 = vmatprep.subr.bf16.mxu0 0
    %3720 = vmatpush1.bf16.msra.mxu0 %v1828
    %3721 = vmatprep.subr.bf16.mxu0 0
    %3722 = vmatpush1.bf16.msra.mxu0 %v1829
    %3723 = vmatprep.subr.bf16.mxu0 0
    %3724 = vmatpush1.bf16.msra.mxu0 %v1830
    %3725 = vmatprep.subr.bf16.mxu0 0
    %3726 = vmatpush1.bf16.msra.mxu0 %v1831
    %3727 = vmatprep.subr.bf16.mxu0 0
    %3728 = vmatpush1.bf16.msra.mxu0 %v1832
    %3729 = vmatprep.subr.bf16.mxu0 0
    %3730 = vmatpush1.bf16.msra.mxu0 %v1833
    %3731 = vmatprep.subr.bf16.mxu0 0
    %3732 = vmatpush1.bf16.msra.mxu0 %v1834
    %3733 = vmatprep.subr.bf16.mxu0 0
    %3734 = vmatpush1.bf16.msra.mxu0 %v1835
    %3735 = vmatprep.subr.bf16.mxu0 0
    %3736 = vmatpush1.bf16.msra.mxu0 %v1836
    %3737 = vmatprep.subr.bf16.mxu0 0
    %3738 = vmatpush1.bf16.msra.mxu0 %v1837
    %3739 = vmatprep.subr.bf16.mxu0 0
    %3740 = vmatpush1.bf16.msra.mxu0 %v1838
    %3741 = vmatprep.mubr.bf16.mxu0 %v3386
    %3742 = vmatmul.mubr.bf16.gmra.mrb[0].mxu0 %v3385
    %v3743 = vpop.f32.mrb[0].mxu0
    %v3744 = vadd.f32 %v3680, %v3743
    %v3745 = vpop.f32.mrb[0].mxu0
    %v3746 = vpop.f32.mrb[0].mxu0
    %v3747 = vadd.f32 %v3683, %v3746
    %v3748 = vpop.f32.mrb[0].mxu0
    %3749 = vmatprep.mubr.bf16.mxu0 %v3411
    %3750 = vmatmul.mubr.bf16.gmra.mrb[0].mxu0 %v3410
    %v3751 = vpop.f32.mrb[0].mxu0
    %v3752 = vadd.f32 %v3688, %v3751
    %v3753 = vpop.f32.mrb[0].mxu0
    %v3754 = vpop.f32.mrb[0].mxu0
    %v3755 = vadd.f32 %v3691, %v3754
    %v3756 = vpop.f32.mrb[0].mxu0
    %3757 = vmatprep.mubr.bf16.mxu0 %v3436
    %3758 = vmatmul.mubr.bf16.gmra.mrb[0].mxu0 %v3435
    %v3759 = vpop.f32.mrb[0].mxu0
    %v3760 = vadd.f32 %v3696, %v3759
    %v3761 = vpop.f32.mrb[0].mxu0
    %v3762 = vpop.f32.mrb[0].mxu0
    %v3763 = vadd.f32 %v3699, %v3762
    %v3764 = vpop.f32.mrb[0].mxu0
    %3765 = vmatprep.mubr.bf16.mxu0 %v3461
    %3766 = vmatmul.mubr.bf16.gmra.mrb[0].mxu0 %v3460
    %v3767 = vpop.f32.mrb[0].mxu0
    %v3768 = vadd.f32 %v3704, %v3767
    %v3769 = vpop.f32.mrb[0].mxu0
    %v3770 = vpop.f32.mrb[0].mxu0
    %v3771 = vpop.f32.mrb[0].mxu0
    %3772 = vdwg.mxu0
    %3773 = vmatprep.subr.bf16.mxu0 0
    %3774 = vmatpush1.bf16.msra.mxu0 %v1839
    %3775 = vmatprep.subr.bf16.mxu0 0
    %3776 = vmatpush1.bf16.msra.mxu0 %v1840
    %3777 = vmatprep.subr.bf16.mxu0 0
    %3778 = vmatpush1.bf16.msra.mxu0 %v1841
    %3779 = vmatprep.subr.bf16.mxu0 0
    %3780 = vmatpush1.bf16.msra.mxu0 %v1842
    %3781 = vmatprep.subr.bf16.mxu0 0
    %3782 = vmatpush1.bf16.msra.mxu0 %v1843
    %3783 = vmatprep.subr.bf16.mxu0 0
    %3784 = vmatpush1.bf16.msra.mxu0 %v1844
    %3785 = vmatprep.subr.bf16.mxu0 0
    %3786 = vmatpush1.bf16.msra.mxu0 %v1845
    %3787 = vmatprep.subr.bf16.mxu0 0
    %3788 = vmatpush1.bf16.msra.mxu0 %v1846
    %3789 = vmatprep.subr.bf16.mxu0 0
    %3790 = vmatpush1.bf16.msra.mxu0 %v1847
    %3791 = vmatprep.subr.bf16.mxu0 0
    %3792 = vmatpush1.bf16.msra.mxu0 %v1848
    %3793 = vmatprep.subr.bf16.mxu0 0
    %3794 = vmatpush1.bf16.msra.mxu0 %v1849
    %3795 = vmatprep.subr.bf16.mxu0 0
    %3796 = vmatpush1.bf16.msra.mxu0 %v1850
    %3797 = vmatprep.subr.bf16.mxu0 0
    %3798 = vmatpush1.bf16.msra.mxu0 %v1851
    %3799 = vmatprep.subr.bf16.mxu0 0
    %3800 = vmatpush1.bf16.msra.mxu0 %v1852
    %3801 = vmatprep.subr.bf16.mxu0 0
    %3802 = vmatpush1.bf16.msra.mxu0 %v1853
    %3803 = vmatprep.subr.bf16.mxu0 0
    %3804 = vmatpush1.bf16.msra.mxu0 %v1854
    %3805 = vmatprep.mubr.bf16.mxu0 %v3388
    %3806 = vmatmul.mubr.bf16.gmra.mrb[0].mxu0 %v3387
    %v3807 = vpop.f32.mrb[0].mxu0
    %v3808 = vadd.f32 %v3744, %v3807
    %v3809 = vpop.f32.mrb[0].mxu0
    %v3810 = vpop.f32.mrb[0].mxu0
    %v3811 = vadd.f32 %v3747, %v3810
    %v3812 = vpop.f32.mrb[0].mxu0
    %3813 = vmatprep.mubr.bf16.mxu0 %v3413
    %3814 = vmatmul.mubr.bf16.gmra.mrb[0].mxu0 %v3412
    %v3815 = vpop.f32.mrb[0].mxu0
    %v3816 = vadd.f32 %v3752, %v3815
    %v3817 = vpop.f32.mrb[0].mxu0
    %v3818 = vpop.f32.mrb[0].mxu0
    %v3819 = vadd.f32 %v3755, %v3818
    %v3820 = vpop.f32.mrb[0].mxu0
    %3821 = vmatprep.mubr.bf16.mxu0 %v3438
    %3822 = vmatmul.mubr.bf16.gmra.mrb[0].mxu0 %v3437
    %v3823 = vpop.f32.mrb[0].mxu0
    %v3824 = vadd.f32 %v3760, %v3823
    %v3825 = vpop.f32.mrb[0].mxu0
    %v3826 = vpop.f32.mrb[0].mxu0
    %v3827 = vadd.f32 %v3763, %v3826
    %v3828 = vpop.f32.mrb[0].mxu0
    %3829 = vmatprep.mubr.bf16.mxu0 %v3463
    %3830 = vmatmul.mubr.bf16.gmra.mrb[0].mxu0 %v3462
    %v3831 = vpop.f32.mrb[0].mxu0
    %v3832 = vadd.f32 %v3768, %v3831
    %v3833 = vpop.f32.mrb[0].mxu0
    %v3834 = vpop.f32.mrb[0].mxu0
    %v3835 = vpop.f32.mrb[0].mxu0
    %3836 = vdwg.mxu0
    %3837 = vmatprep.subr.bf16.mxu0 0
    %3838 = vmatpush1.bf16.msra.mxu0 %v1855
    %3839 = vmatprep.subr.bf16.mxu0 0
    %3840 = vmatpush1.bf16.msra.mxu0 %v1856
    %3841 = vmatprep.subr.bf16.mxu0 0
    %3842 = vmatpush1.bf16.msra.mxu0 %v1857
    %3843 = vmatprep.subr.bf16.mxu0 0
    %3844 = vmatpush1.bf16.msra.mxu0 %v1858
    %3845 = vmatprep.subr.bf16.mxu0 0
    %3846 = vmatpush1.bf16.msra.mxu0 %v1859
    %3847 = vmatprep.subr.bf16.mxu0 0
    %3848 = vmatpush1.bf16.msra.mxu0 %v1860
    %3849 = vmatprep.subr.bf16.mxu0 0
    %3850 = vmatpush1.bf16.msra.mxu0 %v1861
    %3851 = vmatprep.subr.bf16.mxu0 0
    %3852 = vmatpush1.bf16.msra.mxu0 %v1862
    %3853 = vmatprep.subr.bf16.mxu0 0
    %3854 = vmatpush1.bf16.msra.mxu0 %v1863
    %3855 = vmatprep.subr.bf16.mxu0 0
    %3856 = vmatpush1.bf16.msra.mxu0 %v1864
    %3857 = vmatprep.subr.bf16.mxu0 0
    %3858 = vmatpush1.bf16.msra.mxu0 %v1865
    %3859 = vmatprep.subr.bf16.mxu0 0
    %3860 = vmatpush1.bf16.msra.mxu0 %v1866
    %3861 = vmatprep.subr.bf16.mxu0 0
    %3862 = vmatpush1.bf16.msra.mxu0 %v1867
    %3863 = vmatprep.subr.bf16.mxu0 0
    %3864 = vmatpush1.bf16.msra.mxu0 %v1868
    %3865 = vmatprep.subr.bf16.mxu0 0
    %3866 = vmatpush1.bf16.msra.mxu0 %v1869
    %3867 = vmatprep.subr.bf16.mxu0 0
    %3868 = vmatpush1.bf16.msra.mxu0 %v1870
    %3869 = vmatprep.mubr.bf16.mxu0 %v3390
    %3870 = vmatmul.mubr.bf16.gmra.mrb[0].mxu0 %v3389
    %v3871 = vpop.f32.mrb[0].mxu0
    %v3872 = vadd.f32 %v3808, %v3871
    %v3873 = vpop.f32.mrb[0].mxu0
    %v3874 = vpop.f32.mrb[0].mxu0
    %v3875 = vadd.f32 %v3811, %v3874
    %v3876 = vpop.f32.mrb[0].mxu0
    %3877 = vmatprep.mubr.bf16.mxu0 %v3415
    %3878 = vmatmul.mubr.bf16.gmra.mrb[0].mxu0 %v3414
    %v3879 = vpop.f32.mrb[0].mxu0
    %v3880 = vadd.f32 %v3816, %v3879
    %v3881 = vpop.f32.mrb[0].mxu0
    %v3882 = vpop.f32.mrb[0].mxu0
    %v3883 = vadd.f32 %v3819, %v3882
    %v3884 = vpop.f32.mrb[0].mxu0
    %3885 = vmatprep.mubr.bf16.mxu0 %v3440
    %3886 = vmatmul.mubr.bf16.gmra.mrb[0].mxu0 %v3439
    %v3887 = vpop.f32.mrb[0].mxu0
    %v3888 = vadd.f32 %v3824, %v3887
    %v3889 = vpop.f32.mrb[0].mxu0
    %v3890 = vpop.f32.mrb[0].mxu0
    %v3891 = vadd.f32 %v3827, %v3890
    %v3892 = vpop.f32.mrb[0].mxu0
    %3893 = vmatprep.mubr.bf16.mxu0 %v3465
    %3894 = vmatmul.mubr.bf16.gmra.mrb[0].mxu0 %v3464
    %v3895 = vpop.f32.mrb[0].mxu0
    %v3896 = vadd.f32 %v3832, %v3895
    %v3897 = vpop.f32.mrb[0].mxu0
    %v3898 = vpop.f32.mrb[0].mxu0
    %v3899 = vpop.f32.mrb[0].mxu0
    %3900 = vdwg.mxu0
    %3901 = vmatprep.subr.bf16.mxu0 0
    %3902 = vmatpush1.bf16.msra.mxu0 %v1871
    %3903 = vmatprep.subr.bf16.mxu0 0
    %3904 = vmatpush1.bf16.msra.mxu0 %v1872
    %3905 = vmatprep.subr.bf16.mxu0 0
    %3906 = vmatpush1.bf16.msra.mxu0 %v1873
    %3907 = vmatprep.subr.bf16.mxu0 0
    %3908 = vmatpush1.bf16.msra.mxu0 %v1874
    %3909 = vmatprep.subr.bf16.mxu0 0
    %3910 = vmatpush1.bf16.msra.mxu0 %v1875
    %3911 = vmatprep.subr.bf16.mxu0 0
    %3912 = vmatpush1.bf16.msra.mxu0 %v1876
    %3913 = vmatprep.subr.bf16.mxu0 0
    %3914 = vmatpush1.bf16.msra.mxu0 %v1877
    %3915 = vmatprep.subr.bf16.mxu0 0
    %3916 = vmatpush1.bf16.msra.mxu0 %v1878
    %3917 = vmatprep.subr.bf16.mxu0 0
    %3918 = vmatpush1.bf16.msra.mxu0 %v1879
    %3919 = vmatprep.subr.bf16.mxu0 0
    %3920 = vmatpush1.bf16.msra.mxu0 %v1880
    %3921 = vmatprep.subr.bf16.mxu0 0
    %3922 = vmatpush1.bf16.msra.mxu0 %v1881
    %3923 = vmatprep.subr.bf16.mxu0 0
    %3924 = vmatpush1.bf16.msra.mxu0 %v1882
    %3925 = vmatprep.subr.bf16.mxu0 0
    %3926 = vmatpush1.bf16.msra.mxu0 %v1883
    %3927 = vmatprep.subr.bf16.mxu0 0
    %3928 = vmatpush1.bf16.msra.mxu0 %v1884
    %3929 = vmatprep.subr.bf16.mxu0 0
    %3930 = vmatpush1.bf16.msra.mxu0 %v1885
    %3931 = vmatprep.subr.bf16.mxu0 0
    %3932 = vmatpush1.bf16.msra.mxu0 %v1886
    %3933 = vmatprep.mubr.bf16.mxu0 %v3392
    %3934 = vmatmul.mubr.bf16.gmra.mrb[0].mxu0 %v3391
    %v3935 = vpop.f32.mrb[0].mxu0
    %v3936 = vadd.f32 %v3872, %v3935
    %v3937 = vpop.f32.mrb[0].mxu0
    %v3938 = vpop.f32.mrb[0].mxu0
    %v3939 = vadd.f32 %v3875, %v3938
    %v3940 = vpop.f32.mrb[0].mxu0
    %3941 = vmatprep.mubr.bf16.mxu0 %v3417
    %3942 = vmatmul.mubr.bf16.gmra.mrb[0].mxu0 %v3416
    %v3943 = vpop.f32.mrb[0].mxu0
    %v3944 = vadd.f32 %v3880, %v3943
    %v3945 = vpop.f32.mrb[0].mxu0
    %v3946 = vpop.f32.mrb[0].mxu0
    %v3947 = vadd.f32 %v3883, %v3946
    %v3948 = vpop.f32.mrb[0].mxu0
    %3949 = vmatprep.mubr.bf16.mxu0 %v3442
    %3950 = vmatmul.mubr.bf16.gmra.mrb[0].mxu0 %v3441
    %v3951 = vpop.f32.mrb[0].mxu0
    %v3952 = vadd.f32 %v3888, %v3951
    %v3953 = vpop.f32.mrb[0].mxu0
    %v3954 = vpop.f32.mrb[0].mxu0
    %v3955 = vadd.f32 %v3891, %v3954
    %v3956 = vpop.f32.mrb[0].mxu0
    %3957 = vmatprep.mubr.bf16.mxu0 %v3467
    %3958 = vmatmul.mubr.bf16.gmra.mrb[0].mxu0 %v3466
    %v3959 = vpop.f32.mrb[0].mxu0
    %v3960 = vadd.f32 %v3896, %v3959
    %v3961 = vpop.f32.mrb[0].mxu0
    %v3962 = vpop.f32.mrb[0].mxu0
    %v3963 = vpop.f32.mrb[0].mxu0
    %3964 = vdwg.mxu0
    %3965 = vmatprep.subr.bf16.mxu0 0
    %3966 = vmatpush1.bf16.msra.mxu0 %v1887
    %3967 = vmatprep.subr.bf16.mxu0 0
    %3968 = vmatpush1.bf16.msra.mxu0 %v1888
    %3969 = vmatprep.subr.bf16.mxu0 0
    %3970 = vmatpush1.bf16.msra.mxu0 %v1889
    %3971 = vmatprep.subr.bf16.mxu0 0
    %3972 = vmatpush1.bf16.msra.mxu0 %v1890
    %3973 = vmatprep.subr.bf16.mxu0 0
    %3974 = vmatpush1.bf16.msra.mxu0 %v1891
    %3975 = vmatprep.subr.bf16.mxu0 0
    %3976 = vmatpush1.bf16.msra.mxu0 %v1892
    %3977 = vmatprep.subr.bf16.mxu0 0
    %3978 = vmatpush1.bf16.msra.mxu0 %v1893
    %3979 = vmatprep.subr.bf16.mxu0 0
    %3980 = vmatpush1.bf16.msra.mxu0 %v1894
    %3981 = vmatprep.subr.bf16.mxu0 0
    %3982 = vmatpush1.bf16.msra.mxu0 %v1895
    %3983 = vmatprep.subr.bf16.mxu0 0
    %3984 = vmatpush1.bf16.msra.mxu0 %v1896
    %3985 = vmatprep.subr.bf16.mxu0 0
    %3986 = vmatpush1.bf16.msra.mxu0 %v1897
    %3987 = vmatprep.subr.bf16.mxu0 0
    %3988 = vmatpush1.bf16.msra.mxu0 %v1898
    %3989 = vmatprep.subr.bf16.mxu0 0
    %3990 = vmatpush1.bf16.msra.mxu0 %v1899
    %3991 = vmatprep.subr.bf16.mxu0 0
    %3992 = vmatpush1.bf16.msra.mxu0 %v1900
    %3993 = vmatprep.subr.bf16.mxu0 0
    %3994 = vmatpush1.bf16.msra.mxu0 %v1901
    %3995 = vmatprep.subr.bf16.mxu0 0
    %3996 = vmatpush1.bf16.msra.mxu0 %v1902
    %3997 = vmatprep.mubr.bf16.mxu0 %v3394
    %3998 = vmatmul.mubr.bf16.gmra.mrb[0].mxu0 %v3393
    %v3999 = vpop.f32.mrb[0].mxu0
    %v4000 = vadd.f32 %v3936, %v3999
    %v4001 = vpop.f32.mrb[0].mxu0
    %v4002 = vpop.f32.mrb[0].mxu0
    %v4003 = vadd.f32 %v3939, %v4002
    %v4004 = vpop.f32.mrb[0].mxu0
    %4005 = vmatprep.mubr.bf16.mxu0 %v3419
    %4006 = vmatmul.mubr.bf16.gmra.mrb[0].mxu0 %v3418
    %v4007 = vpop.f32.mrb[0].mxu0
    %v4008 = vadd.f32 %v3944, %v4007
    %v4009 = vpop.f32.mrb[0].mxu0
    %v4010 = vpop.f32.mrb[0].mxu0
    %v4011 = vadd.f32 %v3947, %v4010
    %v4012 = vpop.f32.mrb[0].mxu0
    %4013 = vmatprep.mubr.bf16.mxu0 %v3444
    %4014 = vmatmul.mubr.bf16.gmra.mrb[0].mxu0 %v3443
    %v4015 = vpop.f32.mrb[0].mxu0
    %v4016 = vadd.f32 %v3952, %v4015
    %v4017 = vpop.f32.mrb[0].mxu0
    %v4018 = vpop.f32.mrb[0].mxu0
    %v4019 = vadd.f32 %v3955, %v4018
    %v4020 = vpop.f32.mrb[0].mxu0
    %4021 = vmatprep.mubr.bf16.mxu0 %v3469
    %4022 = vmatmul.mubr.bf16.gmra.mrb[0].mxu0 %v3468
    %v4023 = vpop.f32.mrb[0].mxu0
    %v4024 = vadd.f32 %v3960, %v4023
    %v4025 = vpop.f32.mrb[0].mxu0
    %v4026 = vpop.f32.mrb[0].mxu0
    %v4027 = vpop.f32.mrb[0].mxu0
    %4028 = vdwg.mxu0
    %4029 = vmatprep.subr.bf16.mxu0 0
    %4030 = vmatpush1.bf16.msra.mxu0 %v1903
    %4031 = vmatprep.subr.bf16.mxu0 0
    %4032 = vmatpush1.bf16.msra.mxu0 %v1904
    %4033 = vmatprep.subr.bf16.mxu0 0
    %4034 = vmatpush1.bf16.msra.mxu0 %v1905
    %4035 = vmatprep.subr.bf16.mxu0 0
    %4036 = vmatpush1.bf16.msra.mxu0 %v1906
    %4037 = vmatprep.subr.bf16.mxu0 0
    %4038 = vmatpush1.bf16.msra.mxu0 %v1907
    %4039 = vmatprep.subr.bf16.mxu0 0
    %4040 = vmatpush1.bf16.msra.mxu0 %v1908
    %4041 = vmatprep.subr.bf16.mxu0 0
    %4042 = vmatpush1.bf16.msra.mxu0 %v1909
    %4043 = vmatprep.subr.bf16.mxu0 0
    %4044 = vmatpush1.bf16.msra.mxu0 %v1910
    %4045 = vmatprep.subr.bf16.mxu0 0
    %4046 = vmatpush1.bf16.msra.mxu0 %v1911
    %4047 = vmatprep.subr.bf16.mxu0 0
    %4048 = vmatpush1.bf16.msra.mxu0 %v1912
    %4049 = vmatprep.subr.bf16.mxu0 0
    %4050 = vmatpush1.bf16.msra.mxu0 %v1913
    %4051 = vmatprep.subr.bf16.mxu0 0
    %4052 = vmatpush1.bf16.msra.mxu0 %v1914
    %4053 = vmatprep.subr.bf16.mxu0 0
    %4054 = vmatpush1.bf16.msra.mxu0 %v1915
    %4055 = vmatprep.subr.bf16.mxu0 0
    %4056 = vmatpush1.bf16.msra.mxu0 %v1916
    %4057 = vmatprep.subr.bf16.mxu0 0
    %4058 = vmatpush1.bf16.msra.mxu0 %v1917
    %4059 = vmatprep.subr.bf16.mxu0 0
    %4060 = vmatpush1.bf16.msra.mxu0 %v1918
    %4061 = vmatprep.mubr.bf16.mxu0 %v3396
    %4062 = vmatmul.mubr.bf16.gmra.mrb[0].mxu0 %v3395
    %v4063 = vpop.f32.mrb[0].mxu0
    %v4064 = vadd.f32 %v4000, %v4063
    %v4065 = vpop.f32.mrb[0].mxu0
    %v4066 = vpop.f32.mrb[0].mxu0
    %v4067 = vadd.f32 %v4003, %v4066
    %v4068 = vpop.f32.mrb[0].mxu0
    %4069 = vmatprep.mubr.bf16.mxu0 %v3421
    %4070 = vmatmul.mubr.bf16.gmra.mrb[0].mxu0 %v3420
    %v4071 = vpop.f32.mrb[0].mxu0
    %v4072 = vadd.f32 %v4008, %v4071
    %v4073 = vpop.f32.mrb[0].mxu0
    %v4074 = vpop.f32.mrb[0].mxu0
    %v4075 = vadd.f32 %v4011, %v4074
    %v4076 = vpop.f32.mrb[0].mxu0
    %4077 = vmatprep.mubr.bf16.mxu0 %v3446
    %4078 = vmatmul.mubr.bf16.gmra.mrb[0].mxu0 %v3445
    %v4079 = vpop.f32.mrb[0].mxu0
    %v4080 = vadd.f32 %v4016, %v4079
    %v4081 = vpop.f32.mrb[0].mxu0
    %v4082 = vpop.f32.mrb[0].mxu0
    %v4083 = vadd.f32 %v4019, %v4082
    %v4084 = vpop.f32.mrb[0].mxu0
    %4085 = vmatprep.mubr.bf16.mxu0 %v3471
    %4086 = vmatmul.mubr.bf16.gmra.mrb[0].mxu0 %v3470
    %v4087 = vpop.f32.mrb[0].mxu0
    %v4088 = vadd.f32 %v4024, %v4087
    %v4089 = vpop.f32.mrb[0].mxu0
    %v4090 = vpop.f32.mrb[0].mxu0
    %v4091 = vpop.f32.mrb[0].mxu0
    %4092 = vdwg.mxu0
    %4093 = vmatprep.subr.bf16.mxu0 0
    %4094 = vmatpush1.bf16.msra.mxu0 %v1919
    %4095 = vmatprep.subr.bf16.mxu0 0
    %4096 = vmatpush1.bf16.msra.mxu0 %v1920
    %4097 = vmatprep.subr.bf16.mxu0 0
    %4098 = vmatpush1.bf16.msra.mxu0 %v1921
    %4099 = vmatprep.subr.bf16.mxu0 0
    %4100 = vmatpush1.bf16.msra.mxu0 %v1922
    %4101 = vmatprep.subr.bf16.mxu0 0
    %4102 = vmatpush1.bf16.msra.mxu0 %v1923
    %4103 = vmatprep.subr.bf16.mxu0 0
    %4104 = vmatpush1.bf16.msra.mxu0 %v1924
    %4105 = vmatprep.subr.bf16.mxu0 0
    %4106 = vmatpush1.bf16.msra.mxu0 %v1925
    %4107 = vmatprep.subr.bf16.mxu0 0
    %4108 = vmatpush1.bf16.msra.mxu0 %v1926
    %4109 = vmatprep.subr.bf16.mxu0 0
    %4110 = vmatpush1.bf16.msra.mxu0 %v1927
    %4111 = vmatprep.subr.bf16.mxu0 0
    %4112 = vmatpush1.bf16.msra.mxu0 %v1928
    %4113 = vmatprep.subr.bf16.mxu0 0
    %4114 = vmatpush1.bf16.msra.mxu0 %v1929
    %4115 = vmatprep.subr.bf16.mxu0 0
    %4116 = vmatpush1.bf16.msra.mxu0 %v1930
    %4117 = vmatprep.subr.bf16.mxu0 0
    %4118 = vmatpush1.bf16.msra.mxu0 %v1931
    %4119 = vmatprep.subr.bf16.mxu0 0
    %4120 = vmatpush1.bf16.msra.mxu0 %v1932
    %4121 = vmatprep.subr.bf16.mxu0 0
    %4122 = vmatpush1.bf16.msra.mxu0 %v1933
    %4123 = vmatprep.subr.bf16.mxu0 0
    %4124 = vmatpush1.bf16.msra.mxu0 %v1934
    %4125 = vmatprep.mubr.bf16.mxu0 %v3398
    %4126 = vmatmul.mubr.bf16.gmra.mrb[0].mxu0 %v3397
    %v4127 = vpop.f32.mrb[0].mxu0
    %v4128 = vadd.f32 %v4064, %v4127
    %v4129 = vpop.f32.mrb[0].mxu0
    %v4130 = vpop.f32.mrb[0].mxu0
    %v4131 = vadd.f32 %v4067, %v4130
    %v4132 = vpop.f32.mrb[0].mxu0
    %4133 = vmatprep.mubr.bf16.mxu0 %v3423
    %4134 = vmatmul.mubr.bf16.gmra.mrb[0].mxu0 %v3422
    %v4135 = vpop.f32.mrb[0].mxu0
    %v4136 = vadd.f32 %v4072, %v4135
    %v4137 = vpop.f32.mrb[0].mxu0
    %v4138 = vpop.f32.mrb[0].mxu0
    %v4139 = vadd.f32 %v4075, %v4138
    %v4140 = vpop.f32.mrb[0].mxu0
    %4141 = vmatprep.mubr.bf16.mxu0 %v3448
    %4142 = vmatmul.mubr.bf16.gmra.mrb[0].mxu0 %v3447
    %v4143 = vpop.f32.mrb[0].mxu0
    %v4144 = vadd.f32 %v4080, %v4143
    %v4145 = vpop.f32.mrb[0].mxu0
    %v4146 = vpop.f32.mrb[0].mxu0
    %v4147 = vadd.f32 %v4083, %v4146
    %v4148 = vpop.f32.mrb[0].mxu0
    %4149 = vmatprep.mubr.bf16.mxu0 %v3473
    %4150 = vmatmul.mubr.bf16.gmra.mrb[0].mxu0 %v3472
    %v4151 = vpop.f32.mrb[0].mxu0
    %v4152 = vadd.f32 %v4088, %v4151
    %v4153 = vpop.f32.mrb[0].mxu0
    %v4154 = vpop.f32.mrb[0].mxu0
    %v4155 = vpop.f32.mrb[0].mxu0
    %4156 = vdwg.mxu0
    %4157 = vmatprep.subr.bf16.mxu0 0
    %4158 = vmatpush1.bf16.msra.mxu0 %v1935
    %4159 = vmatprep.subr.bf16.mxu0 0
    %4160 = vmatpush1.bf16.msra.mxu0 %v1936
    %4161 = vmatprep.subr.bf16.mxu0 0
    %4162 = vmatpush1.bf16.msra.mxu0 %v1937
    %4163 = vmatprep.subr.bf16.mxu0 0
    %4164 = vmatpush1.bf16.msra.mxu0 %v1938
    %4165 = vmatprep.subr.bf16.mxu0 0
    %4166 = vmatpush1.bf16.msra.mxu0 %v1939
    %4167 = vmatprep.subr.bf16.mxu0 0
    %4168 = vmatpush1.bf16.msra.mxu0 %v1940
    %4169 = vmatprep.subr.bf16.mxu0 0
    %4170 = vmatpush1.bf16.msra.mxu0 %v1941
    %4171 = vmatprep.subr.bf16.mxu0 0
    %4172 = vmatpush1.bf16.msra.mxu0 %v1942
    %4173 = vmatprep.subr.bf16.mxu0 0
    %4174 = vmatpush1.bf16.msra.mxu0 %v1943
    %4175 = vmatprep.subr.bf16.mxu0 0
    %4176 = vmatpush1.bf16.msra.mxu0 %v1944
    %4177 = vmatprep.subr.bf16.mxu0 0
    %4178 = vmatpush1.bf16.msra.mxu0 %v1945
    %4179 = vmatprep.subr.bf16.mxu0 0
    %4180 = vmatpush1.bf16.msra.mxu0 %v1946
    %4181 = vmatprep.subr.bf16.mxu0 0
    %4182 = vmatpush1.bf16.msra.mxu0 %v1947
    %4183 = vmatprep.subr.bf16.mxu0 0
    %4184 = vmatpush1.bf16.msra.mxu0 %v1948
    %4185 = vmatprep.subr.bf16.mxu0 0
    %4186 = vmatpush1.bf16.msra.mxu0 %v1949
    %4187 = vmatprep.subr.bf16.mxu0 0
    %4188 = vmatpush1.bf16.msra.mxu0 %v1950
    %4189 = vmatprep.mubr.bf16.mxu0 %v3400
    %4190 = vmatmul.mubr.bf16.gmra.mrb[0].mxu0 %v3399
    %v4191 = vpop.f32.mrb[0].mxu0
    %v4192 = vadd.f32 %v4128, %v4191
    %v4193 = vpop.f32.mrb[0].mxu0
    %v4194 = vpop.f32.mrb[0].mxu0
    %v4195 = vadd.f32 %v4131, %v4194
    %v4196 = vpop.f32.mrb[0].mxu0
    %4197 = vmatprep.mubr.bf16.mxu0 %v3425
    %4198 = vmatmul.mubr.bf16.gmra.mrb[0].mxu0 %v3424
    %v4199 = vpop.f32.mrb[0].mxu0
    %v4200 = vadd.f32 %v4136, %v4199
    %v4201 = vpop.f32.mrb[0].mxu0
    %v4202 = vpop.f32.mrb[0].mxu0
    %v4203 = vadd.f32 %v4139, %v4202
    %v4204 = vpop.f32.mrb[0].mxu0
    %4205 = vmatprep.mubr.bf16.mxu0 %v3450
    %4206 = vmatmul.mubr.bf16.gmra.mrb[0].mxu0 %v3449
    %v4207 = vpop.f32.mrb[0].mxu0
    %v4208 = vadd.f32 %v4144, %v4207
    %v4209 = vpop.f32.mrb[0].mxu0
    %v4210 = vpop.f32.mrb[0].mxu0
    %v4211 = vadd.f32 %v4147, %v4210
    %v4212 = vpop.f32.mrb[0].mxu0
    %4213 = vmatprep.mubr.bf16.mxu0 %v3475
    %4214 = vmatmul.mubr.bf16.gmra.mrb[0].mxu0 %v3474
    %v4215 = vpop.f32.mrb[0].mxu0
    %v4216 = vadd.f32 %v4152, %v4215
    %v4217 = vpop.f32.mrb[0].mxu0
    %v4218 = vpop.f32.mrb[0].mxu0
    %v4219 = vpop.f32.mrb[0].mxu0
    %4220 = vdwg.mxu0
    %4221 = vmatprep.subr.bf16.mxu0 0
    %4222 = vmatpush1.bf16.msra.mxu0 %v1951
    %4223 = vmatprep.subr.bf16.mxu0 0
    %4224 = vmatpush1.bf16.msra.mxu0 %v1952
    %4225 = vmatprep.subr.bf16.mxu0 0
    %4226 = vmatpush1.bf16.msra.mxu0 %v1953
    %4227 = vmatprep.subr.bf16.mxu0 0
    %4228 = vmatpush1.bf16.msra.mxu0 %v1954
    %4229 = vmatprep.subr.bf16.mxu0 0
    %4230 = vmatpush1.bf16.msra.mxu0 %v1955
    %4231 = vmatprep.subr.bf16.mxu0 0
    %4232 = vmatpush1.bf16.msra.mxu0 %v1956
    %4233 = vmatprep.subr.bf16.mxu0 0
    %4234 = vmatpush1.bf16.msra.mxu0 %v1957
    %4235 = vmatprep.subr.bf16.mxu0 0
    %4236 = vmatpush1.bf16.msra.mxu0 %v1958
    %4237 = vmatprep.subr.bf16.mxu0 0
    %4238 = vmatpush1.bf16.msra.mxu0 %v1959
    %4239 = vmatprep.subr.bf16.mxu0 0
    %4240 = vmatpush1.bf16.msra.mxu0 %v1960
    %4241 = vmatprep.subr.bf16.mxu0 0
    %4242 = vmatpush1.bf16.msra.mxu0 %v1961
    %4243 = vmatprep.subr.bf16.mxu0 0
    %4244 = vmatpush1.bf16.msra.mxu0 %v1962
    %4245 = vmatprep.subr.bf16.mxu0 0
    %4246 = vmatpush1.bf16.msra.mxu0 %v1963
    %4247 = vmatprep.subr.bf16.mxu0 0
    %4248 = vmatpush1.bf16.msra.mxu0 %v1964
    %4249 = vmatprep.subr.bf16.mxu0 0
    %4250 = vmatpush1.bf16.msra.mxu0 %v1965
    %4251 = vmatprep.subr.bf16.mxu0 0
    %4252 = vmatpush1.bf16.msra.mxu0 %v1966
    %4253 = vmatprep.mubr.bf16.mxu0 %v3402
    %4254 = vmatmul.mubr.bf16.gmra.mrb[0].mxu0 %v3401
    %v4255 = vpop.f32.mrb[0].mxu0
    %v4256 = vadd.f32 %v4192, %v4255
    %v4257 = vpop.f32.mrb[0].mxu0
    %v4258 = vpop.f32.mrb[0].mxu0
    %v4259 = vadd.f32 %v4195, %v4258
    %v4260 = vpop.f32.mrb[0].mxu0
    %4261 = vmatprep.mubr.bf16.mxu0 %v3427
    %4262 = vmatmul.mubr.bf16.gmra.mrb[0].mxu0 %v3426
    %v4263 = vpop.f32.mrb[0].mxu0
    %v4264 = vadd.f32 %v4200, %v4263
    %v4265 = vpop.f32.mrb[0].mxu0
    %v4266 = vpop.f32.mrb[0].mxu0
    %v4267 = vadd.f32 %v4203, %v4266
    %v4268 = vpop.f32.mrb[0].mxu0
    %4269 = vmatprep.mubr.bf16.mxu0 %v3452
    %4270 = vmatmul.mubr.bf16.gmra.mrb[0].mxu0 %v3451
    %v4271 = vpop.f32.mrb[0].mxu0
    %v4272 = vadd.f32 %v4208, %v4271
    %v4273 = vpop.f32.mrb[0].mxu0
    %v4274 = vpop.f32.mrb[0].mxu0
    %v4275 = vadd.f32 %v4211, %v4274
    %v4276 = vpop.f32.mrb[0].mxu0
    %4277 = vmatprep.mubr.bf16.mxu0 %v3477
    %4278 = vmatmul.mubr.bf16.gmra.mrb[0].mxu0 %v3476
    %v4279 = vpop.f32.mrb[0].mxu0
    %v4280 = vadd.f32 %v4216, %v4279
    %v4281 = vpop.f32.mrb[0].mxu0
    %v4282 = vpop.f32.mrb[0].mxu0
    %v4283 = vpop.f32.mrb[0].mxu0
    %4284 = vdwg.mxu0
    %4285 = vmatprep.subr.bf16.mxu0 0
    %4286 = vmatpush1.bf16.msra.mxu0 %v1967
    %4287 = vmatprep.subr.bf16.mxu0 0
    %4288 = vmatpush1.bf16.msra.mxu0 %v1968
    %4289 = vmatprep.subr.bf16.mxu0 0
    %4290 = vmatpush1.bf16.msra.mxu0 %v1969
    %4291 = vmatprep.subr.bf16.mxu0 0
    %4292 = vmatpush1.bf16.msra.mxu0 %v1970
    %4293 = vmatprep.subr.bf16.mxu0 0
    %4294 = vmatpush1.bf16.msra.mxu0 %v1971
    %4295 = vmatprep.subr.bf16.mxu0 0
    %4296 = vmatpush1.bf16.msra.mxu0 %v1972
    %4297 = vmatprep.subr.bf16.mxu0 0
    %4298 = vmatpush1.bf16.msra.mxu0 %v1973
    %4299 = vmatprep.subr.bf16.mxu0 0
    %4300 = vmatpush1.bf16.msra.mxu0 %v1974
    %4301 = vmatprep.subr.bf16.mxu0 0
    %4302 = vmatpush1.bf16.msra.mxu0 %v1975
    %4303 = vmatprep.subr.bf16.mxu0 0
    %4304 = vmatpush1.bf16.msra.mxu0 %v1976
    %4305 = vmatprep.subr.bf16.mxu0 0
    %4306 = vmatpush1.bf16.msra.mxu0 %v1977
    %4307 = vmatprep.subr.bf16.mxu0 0
    %4308 = vmatpush1.bf16.msra.mxu0 %v1978
    %4309 = vmatprep.subr.bf16.mxu0 0
    %4310 = vmatpush1.bf16.msra.mxu0 %v1979
    %4311 = vmatprep.subr.bf16.mxu0 0
    %4312 = vmatpush1.bf16.msra.mxu0 %v1980
    %4313 = vmatprep.subr.bf16.mxu0 0
    %4314 = vmatpush1.bf16.msra.mxu0 %v1981
    %4315 = vmatprep.subr.bf16.mxu0 0
    %4316 = vmatpush1.bf16.msra.mxu0 %v1982
    %4317 = vmatprep.mubr.bf16.mxu0 %v3404
    %4318 = vmatmul.mubr.bf16.gmra.mrb[0].mxu0 %v3403
    %v4319 = vpop.f32.mrb[0].mxu0
    %v4320 = vadd.f32 %v4256, %v4319
    %v4321 = vpop.f32.mrb[0].mxu0
    %v4322 = vpop.f32.mrb[0].mxu0
    %v4323 = vadd.f32 %v4259, %v4322
    %v4324 = vpop.f32.mrb[0].mxu0
    %4325 = vmatprep.mubr.bf16.mxu0 %v3429
    %4326 = vmatmul.mubr.bf16.gmra.mrb[0].mxu0 %v3428
    %v4327 = vpop.f32.mrb[0].mxu0
    %v4328 = vadd.f32 %v4264, %v4327
    %v4329 = vpop.f32.mrb[0].mxu0
    %v4330 = vpop.f32.mrb[0].mxu0
    %v4331 = vadd.f32 %v4267, %v4330
    %v4332 = vpop.f32.mrb[0].mxu0
    %4333 = vmatprep.mubr.bf16.mxu0 %v3454
    %4334 = vmatmul.mubr.bf16.gmra.mrb[0].mxu0 %v3453
    %v4335 = vpop.f32.mrb[0].mxu0
    %v4336 = vadd.f32 %v4272, %v4335
    %v4337 = vpop.f32.mrb[0].mxu0
    %v4338 = vpop.f32.mrb[0].mxu0
    %v4339 = vadd.f32 %v4275, %v4338
    %v4340 = vpop.f32.mrb[0].mxu0
    %4341 = vmatprep.mubr.bf16.mxu0 %v3479
    %4342 = vmatmul.mubr.bf16.gmra.mrb[0].mxu0 %v3478
    %v4343 = vpop.f32.mrb[0].mxu0
    %v4344 = vadd.f32 %v4280, %v4343
    %v4345 = vpop.f32.mrb[0].mxu0
    %v4346 = vpop.f32.mrb[0].mxu0
    %v4347 = vpop.f32.mrb[0].mxu0
    %4348 = vdwg.mxu0
    %4349 = vmatprep.subr.bf16.mxu0 0
    %4350 = vmatpush1.bf16.msra.mxu0 %v1983
    %4351 = vmatprep.subr.bf16.mxu0 0
    %4352 = vmatpush1.bf16.msra.mxu0 %v1984
    %4353 = vmatprep.subr.bf16.mxu0 0
    %4354 = vmatpush1.bf16.msra.mxu0 %v1985
    %4355 = vmatprep.subr.bf16.mxu0 0
    %4356 = vmatpush1.bf16.msra.mxu0 %v1986
    %4357 = vmatprep.subr.bf16.mxu0 0
    %4358 = vmatpush1.bf16.msra.mxu0 %v1987
    %4359 = vmatprep.subr.bf16.mxu0 0
    %4360 = vmatpush1.bf16.msra.mxu0 %v1988
    %4361 = vmatprep.subr.bf16.mxu0 0
    %4362 = vmatpush1.bf16.msra.mxu0 %v1989
    %4363 = vmatprep.subr.bf16.mxu0 0
    %4364 = vmatpush1.bf16.msra.mxu0 %v1990
    %4365 = vmatprep.subr.bf16.mxu0 0
    %4366 = vmatpush1.bf16.msra.mxu0 0
    %4367 = vmatprep.subr.bf16.mxu0 0
    %4368 = vmatpush1.bf16.msra.mxu0 0
    %4369 = vmatprep.subr.bf16.mxu0 0
    %4370 = vmatpush1.bf16.msra.mxu0 0
    %4371 = vmatprep.subr.bf16.mxu0 0
    %4372 = vmatpush1.bf16.msra.mxu0 0
    %4373 = vmatprep.subr.bf16.mxu0 0
    %4374 = vmatpush1.bf16.msra.mxu0 0
    %4375 = vmatprep.subr.bf16.mxu0 0
    %4376 = vmatpush1.bf16.msra.mxu0 0
    %4377 = vmatprep.subr.bf16.mxu0 0
    %4378 = vmatpush1.bf16.msra.mxu0 0
    %4379 = vmatprep.subr.bf16.mxu0 0
    %4380 = vmatpush1.bf16.msra.mxu0 0
    %4381 = vmatprep.mubr.bf16.mxu0 0
    %4382 = vmatmul.mubr.bf16.gmra.mrb[0].mxu0 %v3405
    %v4383 = vpop.f32.mrb[0].mxu0
    %v4384 = vadd.f32 %v4320, %v4383
    %v4385 = vpop.f32.mrb[0].mxu0
    %v4386 = vpop.f32.mrb[0].mxu0
    %v4387 = vadd.f32 %v4323, %v4386
    %v4388 = vpop.f32.mrb[0].mxu0
    %4389 = vmatprep.mubr.bf16.mxu0 0
    %4390 = vmatmul.mubr.bf16.gmra.mrb[0].mxu0 %v3430
    %v4391 = vpop.f32.mrb[0].mxu0
    %v4392 = vadd.f32 %v4328, %v4391
    %v4393 = vpop.f32.mrb[0].mxu0
    %v4394 = vpop.f32.mrb[0].mxu0
    %v4395 = vadd.f32 %v4331, %v4394
    %v4396 = vpop.f32.mrb[0].mxu0
    %4397 = vmatprep.mubr.bf16.mxu0 0
    %4398 = vmatmul.mubr.bf16.gmra.mrb[0].mxu0 %v3455
    %v4399 = vpop.f32.mrb[0].mxu0
    %v4400 = vadd.f32 %v4336, %v4399
    %v4401 = vpop.f32.mrb[0].mxu0
    %v4402 = vpop.f32.mrb[0].mxu0
    %v4403 = vadd.f32 %v4339, %v4402
    %v4404 = vpop.f32.mrb[0].mxu0
    %4405 = vmatprep.mubr.bf16.mxu0 0
    %4406 = vmatmul.mubr.bf16.gmra.mrb[0].mxu0 %v3480
    %v4407 = vpop.f32.mrb[0].mxu0
    %v4408 = vadd.f32 %v4344, %v4407
    %v4409 = vpop.f32.mrb[0].mxu0
    %v4410 = vpop.f32.mrb[0].mxu0
    %v4411 = vpop.f32.mrb[0].mxu0
    %4412 = vdwg.mxu0
    %v4413 = vmax.f32 %v2994, %v4384
    %v4414 = vmax.f32 %v2997, %v4387
    %v4415 = vmax.f32 %v3002, %v4392
    %v4416 = vmax.f32 %v3005, %v4395
    %v4417 = vmax.f32 %v3010, %v4400
    %v4418 = vmax.f32 %v3013, %v4403
    %v4419 = vmax.f32 %v3018, %v4408
    %s4420 = scalar_lea.vmem %s0, 1400
    %v4421 = vld [vmem:[%s4420] sm:$0xff]
    %v4422 = vld [vmem:[%s4420 + $0x8] sm:$0xff]
    %v4423 = vld [vmem:[%s4420 + $0x10] sm:$0xff]
    %v4424 = vld [vmem:[%s4420 + $0x18] sm:$0xff]
    %v4425 = vld [vmem:[%s4420 + $0x20] sm:$0xff]
    %v4426 = vld [vmem:[%s4420 + $0x28] sm:$0xff]
    %v4427 = vld [vmem:[%s4420 + $0x30] sm:$0xff]
    %v4428 = vld [vmem:[%s4420 + $0x38] sm:$0xff]
    %v4429 = vld [vmem:[%s4420 + $0x40] sm:$0xff]
    %v4430 = vld [vmem:[%s4420 + $0x48] sm:$0xff]
    %v4431 = vld [vmem:[%s4420 + $0x50] sm:$0xff]
    %v4432 = vld [vmem:[%s4420 + $0x58] sm:$0xff]
    %v4433 = vld [vmem:[%s4420 + $0x60] sm:$0xf]
    %v4434 = vld [vmem:[%s4420 + $0x64] sm:$0xff]
    %v4435 = vld [vmem:[%s4420 + $0x6c] sm:$0xff]
    %v4436 = vld [vmem:[%s4420 + $0x74] sm:$0xff]
    %v4437 = vld [vmem:[%s4420 + $0x7c] sm:$0xff]
    %v4438 = vld [vmem:[%s4420 + $0x84] sm:$0xff]
    %v4439 = vld [vmem:[%s4420 + $0x8c] sm:$0xff]
    %v4440 = vld [vmem:[%s4420 + $0x94] sm:$0xff]
    %v4441 = vld [vmem:[%s4420 + $0x9c] sm:$0xff]
    %v4442 = vld [vmem:[%s4420 + $0xa4] sm:$0xff]
    %v4443 = vld [vmem:[%s4420 + $0xac] sm:$0xff]
    %v4444 = vld [vmem:[%s4420 + $0xb4] sm:$0xff]
    %v4445 = vld [vmem:[%s4420 + $0xbc] sm:$0xff]
    %v4446 = vld [vmem:[%s4420 + $0xc4] sm:$0xf]
    %v4447 = vld [vmem:[%s4420 + $0xc8] sm:$0xff]
    %v4448 = vld [vmem:[%s4420 + $0xd0] sm:$0xff]
    %v4449 = vld [vmem:[%s4420 + $0xd8] sm:$0xff]
    %v4450 = vld [vmem:[%s4420 + $0xe0] sm:$0xff]
    %v4451 = vld [vmem:[%s4420 + $0xe8] sm:$0xff]
    %v4452 = vld [vmem:[%s4420 + $0xf0] sm:$0xff]
    %v4453 = vld [vmem:[%s4420 + $0xf8] sm:$0xff]
    %v4454 = vld [vmem:[%s4420 + $0x100] sm:$0xff]
    %v4455 = vld [vmem:[%s4420 + $0x108] sm:$0xff]
    %v4456 = vld [vmem:[%s4420 + $0x110] sm:$0xff]
    %v4457 = vld [vmem:[%s4420 + $0x118] sm:$0xff]
    %v4458 = vld [vmem:[%s4420 + $0x120] sm:$0xff]
    %v4459 = vld [vmem:[%s4420 + $0x128] sm:$0xf]
    %v4460 = vld [vmem:[%s4420 + $0x12c] sm:$0xff]
    %v4461 = vld [vmem:[%s4420 + $0x134] sm:$0xff]
    %v4462 = vld [vmem:[%s4420 + $0x13c] sm:$0xff]
    %v4463 = vld [vmem:[%s4420 + $0x144] sm:$0xff]
    %v4464 = vld [vmem:[%s4420 + $0x14c] sm:$0xff]
    %v4465 = vld [vmem:[%s4420 + $0x154] sm:$0xff]
    %v4466 = vld [vmem:[%s4420 + $0x15c] sm:$0xff]
    %v4467 = vld [vmem:[%s4420 + $0x164] sm:$0xff]
    %v4468 = vld [vmem:[%s4420 + $0x16c] sm:$0xff]
    %v4469 = vld [vmem:[%s4420 + $0x174] sm:$0xff]
    %v4470 = vld [vmem:[%s4420 + $0x17c] sm:$0xff]
    %v4471 = vld [vmem:[%s4420 + $0x184] sm:$0xff]
    %v4472 = vld [vmem:[%s4420 + $0x18c] sm:$0xf]
    %v4473 = vld [vmem:[%s4420 + $0x190] sm:$0xff]
    %v4474 = vld [vmem:[%s4420 + $0x198] sm:$0xff]
    %v4475 = vld [vmem:[%s4420 + $0x1a0] sm:$0xff]
    %v4476 = vld [vmem:[%s4420 + $0x1a8] sm:$0xff]
    %v4477 = vld [vmem:[%s4420 + $0x1b0] sm:$0xff]
    %v4478 = vld [vmem:[%s4420 + $0x1b8] sm:$0xff]
    %v4479 = vld [vmem:[%s4420 + $0x1c0] sm:$0xff]
    %v4480 = vld [vmem:[%s4420 + $0x1c8] sm:$0xff]
    %v4481 = vld [vmem:[%s4420 + $0x1d0] sm:$0xff]
    %v4482 = vld [vmem:[%s4420 + $0x1d8] sm:$0xff]
    %v4483 = vld [vmem:[%s4420 + $0x1e0] sm:$0xff]
    %v4484 = vld [vmem:[%s4420 + $0x1e8] sm:$0xff]
    %v4485 = vld [vmem:[%s4420 + $0x1f0] sm:$0xf]
    %v4486 = vld [vmem:[%s4420 + $0x1f4] sm:$0xff]
    %v4487 = vld [vmem:[%s4420 + $0x1fc] sm:$0xff]
    %v4488 = vld [vmem:[%s4420 + $0x204] sm:$0xff]
    %v4489 = vld [vmem:[%s4420 + $0x20c] sm:$0xff]
    %v4490 = vld [vmem:[%s4420 + $0x214] sm:$0xff]
    %v4491 = vld [vmem:[%s4420 + $0x21c] sm:$0xff]
    %v4492 = vld [vmem:[%s4420 + $0x224] sm:$0xff]
    %v4493 = vld [vmem:[%s4420 + $0x22c] sm:$0xff]
    %v4494 = vld [vmem:[%s4420 + $0x234] sm:$0xff]
    %v4495 = vld [vmem:[%s4420 + $0x23c] sm:$0xff]
    %v4496 = vld [vmem:[%s4420 + $0x244] sm:$0xff]
    %v4497 = vld [vmem:[%s4420 + $0x24c] sm:$0xff]
    %v4498 = vld [vmem:[%s4420 + $0x254] sm:$0xf]
    %v4499 = vld [vmem:[%s4420 + $0x258] sm:$0x11]
    %v4500 = vld [vmem:[%s4420 + $0x260] sm:$0x11]
    %v4501 = vld [vmem:[%s4420 + $0x268] sm:$0x11]
    %v4502 = vld [vmem:[%s4420 + $0x270] sm:$0x11]
    %v4503 = vld [vmem:[%s4420 + $0x278] sm:$0x11]
    %v4504 = vld [vmem:[%s4420 + $0x280] sm:$0x11]
    %v4505 = vld [vmem:[%s4420 + $0x288] sm:$0x11]
    %v4506 = vld [vmem:[%s4420 + $0x290] sm:$0x11]
    %v4507 = vld [vmem:[%s4420 + $0x298] sm:$0x11]
    %v4508 = vld [vmem:[%s4420 + $0x2a0] sm:$0x11]
    %v4509 = vld [vmem:[%s4420 + $0x2a8] sm:$0x11]
    %v4510 = vld [vmem:[%s4420 + $0x2b0] sm:$0x11]
    %v4511 = vld [vmem:[%s4420 + $0x2b8] sm:$0x1]
    %v4603 = vunpack.c.l.b16 %v4421
    %v4604 = vunpack.c.h.b16 %v4421
    %v4605 = vunpack.c.l.b16 %v4422
    %v4606 = vunpack.c.h.b16 %v4422
    %v4607 = vunpack.c.l.b16 %v4423
    %v4608 = vunpack.c.h.b16 %v4423
    %v4609 = vunpack.c.l.b16 %v4424
    %v4610 = vunpack.c.h.b16 %v4424
    %v4611 = vunpack.c.l.b16 %v4425
    %v4612 = vunpack.c.h.b16 %v4425
    %v4613 = vunpack.c.l.b16 %v4426
    %v4614 = vunpack.c.h.b16 %v4426
    %v4615 = vunpack.c.l.b16 %v4427
    %v4616 = vunpack.c.h.b16 %v4427
    %v4617 = vunpack.c.l.b16 %v4428
    %v4618 = vunpack.c.h.b16 %v4428
    %v4619 = vunpack.c.l.b16 %v4429
    %v4620 = vunpack.c.h.b16 %v4429
    %v4621 = vunpack.c.l.b16 %v4430
    %v4622 = vunpack.c.h.b16 %v4430
    %v4623 = vunpack.c.l.b16 %v4431
    %v4624 = vunpack.c.h.b16 %v4431
    %v4625 = vunpack.c.l.b16 %v4432
    %v4626 = vunpack.c.h.b16 %v4432
    %v4627 = vunpack.c.l.b16 %v4433
    %v4628 = vunpack.c.l.b16 %v4434
    %v4629 = vunpack.c.h.b16 %v4434
    %v4630 = vunpack.c.l.b16 %v4435
    %v4631 = vunpack.c.h.b16 %v4435
    %v4632 = vunpack.c.l.b16 %v4436
    %v4633 = vunpack.c.h.b16 %v4436
    %v4634 = vunpack.c.l.b16 %v4437
    %v4635 = vunpack.c.h.b16 %v4437
    %v4636 = vunpack.c.l.b16 %v4438
    %v4637 = vunpack.c.h.b16 %v4438
    %v4638 = vunpack.c.l.b16 %v4439
    %v4639 = vunpack.c.h.b16 %v4439
    %v4640 = vunpack.c.l.b16 %v4440
    %v4641 = vunpack.c.h.b16 %v4440
    %v4642 = vunpack.c.l.b16 %v4441
    %v4643 = vunpack.c.h.b16 %v4441
    %v4644 = vunpack.c.l.b16 %v4442
    %v4645 = vunpack.c.h.b16 %v4442
    %v4646 = vunpack.c.l.b16 %v4443
    %v4647 = vunpack.c.h.b16 %v4443
    %v4648 = vunpack.c.l.b16 %v4444
    %v4649 = vunpack.c.h.b16 %v4444
    %v4650 = vunpack.c.l.b16 %v4445
    %v4651 = vunpack.c.h.b16 %v4445
    %v4652 = vunpack.c.l.b16 %v4446
    %v4653 = vunpack.c.l.b16 %v4447
    %v4654 = vunpack.c.h.b16 %v4447
    %v4655 = vunpack.c.l.b16 %v4448
    %v4656 = vunpack.c.h.b16 %v4448
    %v4657 = vunpack.c.l.b16 %v4449
    %v4658 = vunpack.c.h.b16 %v4449
    %v4659 = vunpack.c.l.b16 %v4450
    %v4660 = vunpack.c.h.b16 %v4450
    %v4661 = vunpack.c.l.b16 %v4451
    %v4662 = vunpack.c.h.b16 %v4451
    %v4663 = vunpack.c.l.b16 %v4452
    %v4664 = vunpack.c.h.b16 %v4452
    %v4665 = vunpack.c.l.b16 %v4453
    %v4666 = vunpack.c.h.b16 %v4453
    %v4667 = vunpack.c.l.b16 %v4454
    %v4668 = vunpack.c.h.b16 %v4454
    %v4669 = vunpack.c.l.b16 %v4455
    %v4670 = vunpack.c.h.b16 %v4455
    %v4671 = vunpack.c.l.b16 %v4456
    %v4672 = vunpack.c.h.b16 %v4456
    %v4673 = vunpack.c.l.b16 %v4457
    %v4674 = vunpack.c.h.b16 %v4457
    %v4675 = vunpack.c.l.b16 %v4458
    %v4676 = vunpack.c.h.b16 %v4458
    %v4677 = vunpack.c.l.b16 %v4459
    %v4678 = vunpack.c.l.b16 %v4460
    %v4679 = vunpack.c.h.b16 %v4460
    %v4680 = vunpack.c.l.b16 %v4461
    %v4681 = vunpack.c.h.b16 %v4461
    %v4682 = vunpack.c.l.b16 %v4462
    %v4683 = vunpack.c.h.b16 %v4462
    %v4684 = vunpack.c.l.b16 %v4463
    %v4685 = vunpack.c.h.b16 %v4463
    %v4686 = vunpack.c.l.b16 %v4464
    %v4687 = vunpack.c.h.b16 %v4464
    %v4688 = vunpack.c.l.b16 %v4465
    %v4689 = vunpack.c.h.b16 %v4465
    %v4690 = vunpack.c.l.b16 %v4466
    %v4691 = vunpack.c.h.b16 %v4466
    %v4692 = vunpack.c.l.b16 %v4467
    %v4693 = vunpack.c.h.b16 %v4467
    %v4694 = vunpack.c.l.b16 %v4468
    %v4695 = vunpack.c.h.b16 %v4468
    %v4696 = vunpack.c.l.b16 %v4469
    %v4697 = vunpack.c.h.b16 %v4469
    %v4698 = vunpack.c.l.b16 %v4470
    %v4699 = vunpack.c.h.b16 %v4470
    %v4700 = vunpack.c.l.b16 %v4471
    %v4701 = vunpack.c.h.b16 %v4471
    %v4702 = vunpack.c.l.b16 %v4472
    %v4703 = vunpack.c.l.b16 %v4473
    %v4704 = vunpack.c.h.b16 %v4473
    %v4705 = vunpack.c.l.b16 %v4474
    %v4706 = vunpack.c.h.b16 %v4474
    %v4707 = vunpack.c.l.b16 %v4475
    %v4708 = vunpack.c.h.b16 %v4475
    %v4709 = vunpack.c.l.b16 %v4476
    %v4710 = vunpack.c.h.b16 %v4476
    %v4711 = vunpack.c.l.b16 %v4477
    %v4712 = vunpack.c.h.b16 %v4477
    %v4713 = vunpack.c.l.b16 %v4478
    %v4714 = vunpack.c.h.b16 %v4478
    %v4715 = vunpack.c.l.b16 %v4479
    %v4716 = vunpack.c.h.b16 %v4479
    %v4717 = vunpack.c.l.b16 %v4480
    %v4718 = vunpack.c.h.b16 %v4480
    %v4719 = vunpack.c.l.b16 %v4481
    %v4720 = vunpack.c.h.b16 %v4481
    %v4721 = vunpack.c.l.b16 %v4482
    %v4722 = vunpack.c.h.b16 %v4482
    %v4723 = vunpack.c.l.b16 %v4483
    %v4724 = vunpack.c.h.b16 %v4483
    %v4725 = vunpack.c.l.b16 %v4484
    %v4726 = vunpack.c.h.b16 %v4484
    %v4727 = vunpack.c.l.b16 %v4485
    %v4728 = vunpack.c.l.b16 %v4486
    %v4729 = vunpack.c.h.b16 %v4486
    %v4730 = vunpack.c.l.b16 %v4487
    %v4731 = vunpack.c.h.b16 %v4487
    %v4732 = vunpack.c.l.b16 %v4488
    %v4733 = vunpack.c.h.b16 %v4488
    %v4734 = vunpack.c.l.b16 %v4489
    %v4735 = vunpack.c.h.b16 %v4489
    %v4736 = vunpack.c.l.b16 %v4490
    %v4737 = vunpack.c.h.b16 %v4490
    %v4738 = vunpack.c.l.b16 %v4491
    %v4739 = vunpack.c.h.b16 %v4491
    %v4740 = vunpack.c.l.b16 %v4492
    %v4741 = vunpack.c.h.b16 %v4492
    %v4742 = vunpack.c.l.b16 %v4493
    %v4743 = vunpack.c.h.b16 %v4493
    %v4744 = vunpack.c.l.b16 %v4494
    %v4745 = vunpack.c.h.b16 %v4494
    %v4746 = vunpack.c.l.b16 %v4495
    %v4747 = vunpack.c.h.b16 %v4495
    %v4748 = vunpack.c.l.b16 %v4496
    %v4749 = vunpack.c.h.b16 %v4496
    %v4750 = vunpack.c.l.b16 %v4497
    %v4751 = vunpack.c.h.b16 %v4497
    %v4752 = vunpack.c.l.b16 %v4498
    %v4753 = vunpack.c.l.b16 %v4499
    %v4754 = vunpack.c.h.b16 %v4499
    %v4755 = vunpack.c.l.b16 %v4500
    %v4756 = vunpack.c.h.b16 %v4500
    %v4757 = vunpack.c.l.b16 %v4501
    %v4758 = vunpack.c.h.b16 %v4501
    %v4759 = vunpack.c.l.b16 %v4502
    %v4760 = vunpack.c.h.b16 %v4502
    %v4761 = vunpack.c.l.b16 %v4503
    %v4762 = vunpack.c.h.b16 %v4503
    %v4763 = vunpack.c.l.b16 %v4504
    %v4764 = vunpack.c.h.b16 %v4504
    %v4765 = vunpack.c.l.b16 %v4505
    %v4766 = vunpack.c.h.b16 %v4505
    %v4767 = vunpack.c.l.b16 %v4506
    %v4768 = vunpack.c.h.b16 %v4506
    %v4769 = vunpack.c.l.b16 %v4507
    %v4770 = vunpack.c.h.b16 %v4507
    %v4771 = vunpack.c.l.b16 %v4508
    %v4772 = vunpack.c.h.b16 %v4508
    %v4773 = vunpack.c.l.b16 %v4509
    %v4774 = vunpack.c.h.b16 %v4509
    %v4775 = vunpack.c.l.b16 %v4510
    %v4776 = vunpack.c.h.b16 %v4510
    %v4777 = vunpack.c.l.b16 %v4511
    %v4778 = vpack.c.b16 %v4628, %v4603
    %v4779 = vpack.c.b16 %v4629, %v4604
    %v4780 = vpack.c.b16 %v4630, %v4605
    %v4781 = vpack.c.b16 %v4631, %v4606
    %v4782 = vpack.c.b16 %v4632, %v4607
    %v4783 = vpack.c.b16 %v4633, %v4608
    %v4784 = vpack.c.b16 %v4634, %v4609
    %v4785 = vpack.c.b16 %v4635, %v4610
    %v4786 = vpack.c.b16 %v4636, %v4611
    %v4787 = vpack.c.b16 %v4637, %v4612
    %v4788 = vpack.c.b16 %v4638, %v4613
    %v4789 = vpack.c.b16 %v4639, %v4614
    %v4790 = vpack.c.b16 %v4640, %v4615
    %v4791 = vpack.c.b16 %v4641, %v4616
    %v4792 = vpack.c.b16 %v4642, %v4617
    %v4793 = vpack.c.b16 %v4643, %v4618
    %v4794 = vpack.c.b16 %v4644, %v4619
    %v4795 = vpack.c.b16 %v4645, %v4620
    %v4796 = vpack.c.b16 %v4646, %v4621
    %v4797 = vpack.c.b16 %v4647, %v4622
    %v4798 = vpack.c.b16 %v4648, %v4623
    %v4799 = vpack.c.b16 %v4649, %v4624
    %v4800 = vpack.c.b16 %v4650, %v4625
    %v4801 = vpack.c.b16 %v4651, %v4626
    %v4802 = vpack.c.b16 %v4652, %v4627
    %v4803 = vpack.c.b16 %v4678, %v4653
    %v4804 = vpack.c.b16 %v4679, %v4654
    %v4805 = vpack.c.b16 %v4680, %v4655
    %v4806 = vpack.c.b16 %v4681, %v4656
    %v4807 = vpack.c.b16 %v4682, %v4657
    %v4808 = vpack.c.b16 %v4683, %v4658
    %v4809 = vpack.c.b16 %v4684, %v4659
    %v4810 = vpack.c.b16 %v4685, %v4660
    %v4811 = vpack.c.b16 %v4686, %v4661
    %v4812 = vpack.c.b16 %v4687, %v4662
    %v4813 = vpack.c.b16 %v4688, %v4663
    %v4814 = vpack.c.b16 %v4689, %v4664
    %v4815 = vpack.c.b16 %v4690, %v4665
    %v4816 = vpack.c.b16 %v4691, %v4666
    %v4817 = vpack.c.b16 %v4692, %v4667
    %v4818 = vpack.c.b16 %v4693, %v4668
    %v4819 = vpack.c.b16 %v4694, %v4669
    %v4820 = vpack.c.b16 %v4695, %v4670
    %v4821 = vpack.c.b16 %v4696, %v4671
    %v4822 = vpack.c.b16 %v4697, %v4672
    %v4823 = vpack.c.b16 %v4698, %v4673
    %v4824 = vpack.c.b16 %v4699, %v4674
    %v4825 = vpack.c.b16 %v4700, %v4675
    %v4826 = vpack.c.b16 %v4701, %v4676
    %v4827 = vpack.c.b16 %v4702, %v4677
    %v4828 = vpack.c.b16 %v4728, %v4703
    %v4829 = vpack.c.b16 %v4729, %v4704
    %v4830 = vpack.c.b16 %v4730, %v4705
    %v4831 = vpack.c.b16 %v4731, %v4706
    %v4832 = vpack.c.b16 %v4732, %v4707
    %v4833 = vpack.c.b16 %v4733, %v4708
    %v4834 = vpack.c.b16 %v4734, %v4709
    %v4835 = vpack.c.b16 %v4735, %v4710
    %v4836 = vpack.c.b16 %v4736, %v4711
    %v4837 = vpack.c.b16 %v4737, %v4712
    %v4838 = vpack.c.b16 %v4738, %v4713
    %v4839 = vpack.c.b16 %v4739, %v4714
    %v4840 = vpack.c.b16 %v4740, %v4715
    %v4841 = vpack.c.b16 %v4741, %v4716
    %v4842 = vpack.c.b16 %v4742, %v4717
    %v4843 = vpack.c.b16 %v4743, %v4718
    %v4844 = vpack.c.b16 %v4744, %v4719
    %v4845 = vpack.c.b16 %v4745, %v4720
    %v4846 = vpack.c.b16 %v4746, %v4721
    %v4847 = vpack.c.b16 %v4747, %v4722
    %v4848 = vpack.c.b16 %v4748, %v4723
    %v4849 = vpack.c.b16 %v4749, %v4724
    %v4850 = vpack.c.b16 %v4750, %v4725
    %v4851 = vpack.c.b16 %v4751, %v4726
    %v4852 = vpack.c.b16 %v4752, %v4727
    %v4853 = vpack.c.b16 %v4753, %v4753
    %v4854 = vpack.c.b16 %v4754, %v4754
    %v4855 = vpack.c.b16 %v4755, %v4755
    %v4856 = vpack.c.b16 %v4756, %v4756
    %v4857 = vpack.c.b16 %v4757, %v4757
    %v4858 = vpack.c.b16 %v4758, %v4758
    %v4859 = vpack.c.b16 %v4759, %v4759
    %v4860 = vpack.c.b16 %v4760, %v4760
    %v4861 = vpack.c.b16 %v4761, %v4761
    %v4862 = vpack.c.b16 %v4762, %v4762
    %v4863 = vpack.c.b16 %v4763, %v4763
    %v4864 = vpack.c.b16 %v4764, %v4764
    %v4865 = vpack.c.b16 %v4765, %v4765
    %v4866 = vpack.c.b16 %v4766, %v4766
    %v4867 = vpack.c.b16 %v4767, %v4767
    %v4868 = vpack.c.b16 %v4768, %v4768
    %v4869 = vpack.c.b16 %v4769, %v4769
    %v4870 = vpack.c.b16 %v4770, %v4770
    %v4871 = vpack.c.b16 %v4771, %v4771
    %v4872 = vpack.c.b16 %v4772, %v4772
    %v4873 = vpack.c.b16 %v4773, %v4773
    %v4874 = vpack.c.b16 %v4774, %v4774
    %v4875 = vpack.c.b16 %v4775, %v4775
    %v4876 = vpack.c.b16 %v4776, %v4776
    %v4877 = vpack.c.b16 %v4777, %v4777
    %4978 = vmatprep.subr.bf16.mxu0 0
    %4979 = vmatpush1.bf16.msra.mxu0 %v1791
    %4980 = vmatprep.subr.bf16.mxu0 0
    %4981 = vmatpush1.bf16.msra.mxu0 %v1792
    %4982 = vmatprep.subr.bf16.mxu0 0
    %4983 = vmatpush1.bf16.msra.mxu0 %v1793
    %4984 = vmatprep.subr.bf16.mxu0 0
    %4985 = vmatpush1.bf16.msra.mxu0 %v1794
    %4986 = vmatprep.subr.bf16.mxu0 0
    %4987 = vmatpush1.bf16.msra.mxu0 %v1795
    %4988 = vmatprep.subr.bf16.mxu0 0
    %4989 = vmatpush1.bf16.msra.mxu0 %v1796
    %4990 = vmatprep.subr.bf16.mxu0 0
    %4991 = vmatpush1.bf16.msra.mxu0 %v1797
    %4992 = vmatprep.subr.bf16.mxu0 0
    %4993 = vmatpush1.bf16.msra.mxu0 %v1798
    %4994 = vmatprep.subr.bf16.mxu0 0
    %4995 = vmatpush1.bf16.msra.mxu0 %v1799
    %4996 = vmatprep.subr.bf16.mxu0 0
    %4997 = vmatpush1.bf16.msra.mxu0 %v1800
    %4998 = vmatprep.subr.bf16.mxu0 0
    %4999 = vmatpush1.bf16.msra.mxu0 %v1801
    %5000 = vmatprep.subr.bf16.mxu0 0
    %5001 = vmatpush1.bf16.msra.mxu0 %v1802
    %5002 = vmatprep.subr.bf16.mxu0 0
    %5003 = vmatpush1.bf16.msra.mxu0 %v1803
    %5004 = vmatprep.subr.bf16.mxu0 0
    %5005 = vmatpush1.bf16.msra.mxu0 %v1804
    %5006 = vmatprep.subr.bf16.mxu0 0
    %5007 = vmatpush1.bf16.msra.mxu0 %v1805
    %5008 = vmatprep.subr.bf16.mxu0 0
    %5009 = vmatpush1.bf16.msra.mxu0 %v1806
    %5010 = vmatprep.mubr.bf16.mxu0 %v4779
    %5011 = vmatmul.mubr.bf16.gmra.mrb[0].mxu0 %v4778
    %v5012 = vpop.f32.mrb[0].mxu0
    %v5013 = vadd.f32 0.0, %v5012
    %v5014 = vpop.f32.mrb[0].mxu0
    %v5015 = vpop.f32.mrb[0].mxu0
    %v5016 = vadd.f32 0.0, %v5015
    %v5017 = vpop.f32.mrb[0].mxu0
    %5018 = vmatprep.mubr.bf16.mxu0 %v4804
    %5019 = vmatmul.mubr.bf16.gmra.mrb[0].mxu0 %v4803
    %v5020 = vpop.f32.mrb[0].mxu0
    %v5021 = vadd.f32 0.0, %v5020
    %v5022 = vpop.f32.mrb[0].mxu0
    %v5023 = vpop.f32.mrb[0].mxu0
    %v5024 = vadd.f32 0.0, %v5023
    %v5025 = vpop.f32.mrb[0].mxu0
    %5026 = vmatprep.mubr.bf16.mxu0 %v4829
    %5027 = vmatmul.mubr.bf16.gmra.mrb[0].mxu0 %v4828
    %v5028 = vpop.f32.mrb[0].mxu0
    %v5029 = vadd.f32 0.0, %v5028
    %v5030 = vpop.f32.mrb[0].mxu0
    %v5031 = vpop.f32.mrb[0].mxu0
    %v5032 = vadd.f32 0.0, %v5031
    %v5033 = vpop.f32.mrb[0].mxu0
    %5034 = vmatprep.mubr.bf16.mxu0 %v4854
    %5035 = vmatmul.mubr.bf16.gmra.mrb[0].mxu0 %v4853
    %v5036 = vpop.f32.mrb[0].mxu0
    %v5037 = vadd.f32 0.0, %v5036
    %v5038 = vpop.f32.mrb[0].mxu0
    %v5039 = vpop.f32.mrb[0].mxu0
    %v5040 = vpop.f32.mrb[0].mxu0
    %5041 = vdwg.mxu0
    %5042 = vmatprep.subr.bf16.mxu0 0
    %5043 = vmatpush1.bf16.msra.mxu0 %v1807
    %5044 = vmatprep.subr.bf16.mxu0 0
    %5045 = vmatpush1.bf16.msra.mxu0 %v1808
    %5046 = vmatprep.subr.bf16.mxu0 0
    %5047 = vmatpush1.bf16.msra.mxu0 %v1809
    %5048 = vmatprep.subr.bf16.mxu0 0
    %5049 = vmatpush1.bf16.msra.mxu0 %v1810
    %5050 = vmatprep.subr.bf16.mxu0 0
    %5051 = vmatpush1.bf16.msra.mxu0 %v1811
    %5052 = vmatprep.subr.bf16.mxu0 0
    %5053 = vmatpush1.bf16.msra.mxu0 %v1812
    %5054 = vmatprep.subr.bf16.mxu0 0
    %5055 = vmatpush1.bf16.msra.mxu0 %v1813
    %5056 = vmatprep.subr.bf16.mxu0 0
    %5057 = vmatpush1.bf16.msra.mxu0 %v1814
    %5058 = vmatprep.subr.bf16.mxu0 0
    %5059 = vmatpush1.bf16.msra.mxu0 %v1815
    %5060 = vmatprep.subr.bf16.mxu0 0
    %5061 = vmatpush1.bf16.msra.mxu0 %v1816
    %5062 = vmatprep.subr.bf16.mxu0 0
    %5063 = vmatpush1.bf16.msra.mxu0 %v1817
    %5064 = vmatprep.subr.bf16.mxu0 0
    %5065 = vmatpush1.bf16.msra.mxu0 %v1818
    %5066 = vmatprep.subr.bf16.mxu0 0
    %5067 = vmatpush1.bf16.msra.mxu0 %v1819
    %5068 = vmatprep.subr.bf16.mxu0 0
    %5069 = vmatpush1.bf16.msra.mxu0 %v1820
    %5070 = vmatprep.subr.bf16.mxu0 0
    %5071 = vmatpush1.bf16.msra.mxu0 %v1821
    %5072 = vmatprep.subr.bf16.mxu0 0
    %5073 = vmatpush1.bf16.msra.mxu0 %v1822
    %5074 = vmatprep.mubr.bf16.mxu0 %v4781
    %5075 = vmatmul.mubr.bf16.gmra.mrb[0].mxu0 %v4780
    %v5076 = vpop.f32.mrb[0].mxu0
    %v5077 = vadd.f32 %v5013, %v5076
    %v5078 = vpop.f32.mrb[0].mxu0
    %v5079 = vpop.f32.mrb[0].mxu0
    %v5080 = vadd.f32 %v5016, %v5079
    %v5081 = vpop.f32.mrb[0].mxu0
    %5082 = vmatprep.mubr.bf16.mxu0 %v4806
    %5083 = vmatmul.mubr.bf16.gmra.mrb[0].mxu0 %v4805
    %v5084 = vpop.f32.mrb[0].mxu0
    %v5085 = vadd.f32 %v5021, %v5084
    %v5086 = vpop.f32.mrb[0].mxu0
    %v5087 = vpop.f32.mrb[0].mxu0
    %v5088 = vadd.f32 %v5024, %v5087
    %v5089 = vpop.f32.mrb[0].mxu0
    %5090 = vmatprep.mubr.bf16.mxu0 %v4831
    %5091 = vmatmul.mubr.bf16.gmra.mrb[0].mxu0 %v4830
    %v5092 = vpop.f32.mrb[0].mxu0
    %v5093 = vadd.f32 %v5029, %v5092
    %v5094 = vpop.f32.mrb[0].mxu0
    %v5095 = vpop.f32.mrb[0].mxu0
    %v5096 = vadd.f32 %v5032, %v5095
    %v5097 = vpop.f32.mrb[0].mxu0
    %5098 = vmatprep.mubr.bf16.mxu0 %v4856
    %5099 = vmatmul.mubr.bf16.gmra.mrb[0].mxu0 %v4855
    %v5100 = vpop.f32.mrb[0].mxu0
    %v5101 = vadd.f32 %v5037, %v5100
    %v5102 = vpop.f32.mrb[0].mxu0
    %v5103 = vpop.f32.mrb[0].mxu0
    %v5104 = vpop.f32.mrb[0].mxu0
    %5105 = vdwg.mxu0
    %5106 = vmatprep.subr.bf16.mxu0 0
    %5107 = vmatpush1.bf16.msra.mxu0 %v1823
    %5108 = vmatprep.subr.bf16.mxu0 0
    %5109 = vmatpush1.bf16.msra.mxu0 %v1824
    %5110 = vmatprep.subr.bf16.mxu0 0
    %5111 = vmatpush1.bf16.msra.mxu0 %v1825
    %5112 = vmatprep.subr.bf16.mxu0 0
    %5113 = vmatpush1.bf16.msra.mxu0 %v1826
    %5114 = vmatprep.subr.bf16.mxu0 0
    %5115 = vmatpush1.bf16.msra.mxu0 %v1827
    %5116 = vmatprep.subr.bf16.mxu0 0
    %5117 = vmatpush1.bf16.msra.mxu0 %v1828
    %5118 = vmatprep.subr.bf16.mxu0 0
    %5119 = vmatpush1.bf16.msra.mxu0 %v1829
    %5120 = vmatprep.subr.bf16.mxu0 0
    %5121 = vmatpush1.bf16.msra.mxu0 %v1830
    %5122 = vmatprep.subr.bf16.mxu0 0
    %5123 = vmatpush1.bf16.msra.mxu0 %v1831
    %5124 = vmatprep.subr.bf16.mxu0 0
    %5125 = vmatpush1.bf16.msra.mxu0 %v1832
    %5126 = vmatprep.subr.bf16.mxu0 0
    %5127 = vmatpush1.bf16.msra.mxu0 %v1833
    %5128 = vmatprep.subr.bf16.mxu0 0
    %5129 = vmatpush1.bf16.msra.mxu0 %v1834
    %5130 = vmatprep.subr.bf16.mxu0 0
    %5131 = vmatpush1.bf16.msra.mxu0 %v1835
    %5132 = vmatprep.subr.bf16.mxu0 0
    %5133 = vmatpush1.bf16.msra.mxu0 %v1836
    %5134 = vmatprep.subr.bf16.mxu0 0
    %5135 = vmatpush1.bf16.msra.mxu0 %v1837
    %5136 = vmatprep.subr.bf16.mxu0 0
    %5137 = vmatpush1.bf16.msra.mxu0 %v1838
    %5138 = vmatprep.mubr.bf16.mxu0 %v4783
    %5139 = vmatmul.mubr.bf16.gmra.mrb[0].mxu0 %v4782
    %v5140 = vpop.f32.mrb[0].mxu0
    %v5141 = vadd.f32 %v5077, %v5140
    %v5142 = vpop.f32.mrb[0].mxu0
    %v5143 = vpop.f32.mrb[0].mxu0
    %v5144 = vadd.f32 %v5080, %v5143
    %v5145 = vpop.f32.mrb[0].mxu0
    %5146 = vmatprep.mubr.bf16.mxu0 %v4808
    %5147 = vmatmul.mubr.bf16.gmra.mrb[0].mxu0 %v4807
    %v5148 = vpop.f32.mrb[0].mxu0
    %v5149 = vadd.f32 %v5085, %v5148
    %v5150 = vpop.f32.mrb[0].mxu0
    %v5151 = vpop.f32.mrb[0].mxu0
    %v5152 = vadd.f32 %v5088, %v5151
    %v5153 = vpop.f32.mrb[0].mxu0
    %5154 = vmatprep.mubr.bf16.mxu0 %v4833
    %5155 = vmatmul.mubr.bf16.gmra.mrb[0].mxu0 %v4832
    %v5156 = vpop.f32.mrb[0].mxu0
    %v5157 = vadd.f32 %v5093, %v5156
    %v5158 = vpop.f32.mrb[0].mxu0
    %v5159 = vpop.f32.mrb[0].mxu0
    %v5160 = vadd.f32 %v5096, %v5159
    %v5161 = vpop.f32.mrb[0].mxu0
    %5162 = vmatprep.mubr.bf16.mxu0 %v4858
    %5163 = vmatmul.mubr.bf16.gmra.mrb[0].mxu0 %v4857
    %v5164 = vpop.f32.mrb[0].mxu0
    %v5165 = vadd.f32 %v5101, %v5164
    %v5166 = vpop.f32.mrb[0].mxu0
    %v5167 = vpop.f32.mrb[0].mxu0
    %v5168 = vpop.f32.mrb[0].mxu0
    %5169 = vdwg.mxu0
    %5170 = vmatprep.subr.bf16.mxu0 0
    %5171 = vmatpush1.bf16.msra.mxu0 %v1839
    %5172 = vmatprep.subr.bf16.mxu0 0
    %5173 = vmatpush1.bf16.msra.mxu0 %v1840
    %5174 = vmatprep.subr.bf16.mxu0 0
    %5175 = vmatpush1.bf16.msra.mxu0 %v1841
    %5176 = vmatprep.subr.bf16.mxu0 0
    %5177 = vmatpush1.bf16.msra.mxu0 %v1842
    %5178 = vmatprep.subr.bf16.mxu0 0
    %5179 = vmatpush1.bf16.msra.mxu0 %v1843
    %5180 = vmatprep.subr.bf16.mxu0 0
    %5181 = vmatpush1.bf16.msra.mxu0 %v1844
    %5182 = vmatprep.subr.bf16.mxu0 0
    %5183 = vmatpush1.bf16.msra.mxu0 %v1845
    %5184 = vmatprep.subr.bf16.mxu0 0
    %5185 = vmatpush1.bf16.msra.mxu0 %v1846
    %5186 = vmatprep.subr.bf16.mxu0 0
    %5187 = vmatpush1.bf16.msra.mxu0 %v1847
    %5188 = vmatprep.subr.bf16.mxu0 0
    %5189 = vmatpush1.bf16.msra.mxu0 %v1848
    %5190 = vmatprep.subr.bf16.mxu0 0
    %5191 = vmatpush1.bf16.msra.mxu0 %v1849
    %5192 = vmatprep.subr.bf16.mxu0 0
    %5193 = vmatpush1.bf16.msra.mxu0 %v1850
    %5194 = vmatprep.subr.bf16.mxu0 0
    %5195 = vmatpush1.bf16.msra.mxu0 %v1851
    %5196 = vmatprep.subr.bf16.mxu0 0
    %5197 = vmatpush1.bf16.msra.mxu0 %v1852
    %5198 = vmatprep.subr.bf16.mxu0 0
    %5199 = vmatpush1.bf16.msra.mxu0 %v1853
    %5200 = vmatprep.subr.bf16.mxu0 0
    %5201 = vmatpush1.bf16.msra.mxu0 %v1854
    %5202 = vmatprep.mubr.bf16.mxu0 %v4785
    %5203 = vmatmul.mubr.bf16.gmra.mrb[0].mxu0 %v4784
    %v5204 = vpop.f32.mrb[0].mxu0
    %v5205 = vadd.f32 %v5141, %v5204
    %v5206 = vpop.f32.mrb[0].mxu0
    %v5207 = vpop.f32.mrb[0].mxu0
    %v5208 = vadd.f32 %v5144, %v5207
    %v5209 = vpop.f32.mrb[0].mxu0
    %5210 = vmatprep.mubr.bf16.mxu0 %v4810
    %5211 = vmatmul.mubr.bf16.gmra.mrb[0].mxu0 %v4809
    %v5212 = vpop.f32.mrb[0].mxu0
    %v5213 = vadd.f32 %v5149, %v5212
    %v5214 = vpop.f32.mrb[0].mxu0
    %v5215 = vpop.f32.mrb[0].mxu0
    %v5216 = vadd.f32 %v5152, %v5215
    %v5217 = vpop.f32.mrb[0].mxu0
    %5218 = vmatprep.mubr.bf16.mxu0 %v4835
    %5219 = vmatmul.mubr.bf16.gmra.mrb[0].mxu0 %v4834
    %v5220 = vpop.f32.mrb[0].mxu0
    %v5221 = vadd.f32 %v5157, %v5220
    %v5222 = vpop.f32.mrb[0].mxu0
    %v5223 = vpop.f32.mrb[0].mxu0
    %v5224 = vadd.f32 %v5160, %v5223
    %v5225 = vpop.f32.mrb[0].mxu0
    %5226 = vmatprep.mubr.bf16.mxu0 %v4860
    %5227 = vmatmul.mubr.bf16.gmra.mrb[0].mxu0 %v4859
    %v5228 = vpop.f32.mrb[0].mxu0
    %v5229 = vadd.f32 %v5165, %v5228
    %v5230 = vpop.f32.mrb[0].mxu0
    %v5231 = vpop.f32.mrb[0].mxu0
    %v5232 = vpop.f32.mrb[0].mxu0
    %5233 = vdwg.mxu0
    %5234 = vmatprep.subr.bf16.mxu0 0
    %5235 = vmatpush1.bf16.msra.mxu0 %v1855
    %5236 = vmatprep.subr.bf16.mxu0 0
    %5237 = vmatpush1.bf16.msra.mxu0 %v1856
    %5238 = vmatprep.subr.bf16.mxu0 0
    %5239 = vmatpush1.bf16.msra.mxu0 %v1857
    %5240 = vmatprep.subr.bf16.mxu0 0
    %5241 = vmatpush1.bf16.msra.mxu0 %v1858
    %5242 = vmatprep.subr.bf16.mxu0 0
    %5243 = vmatpush1.bf16.msra.mxu0 %v1859
    %5244 = vmatprep.subr.bf16.mxu0 0
    %5245 = vmatpush1.bf16.msra.mxu0 %v1860
    %5246 = vmatprep.subr.bf16.mxu0 0
    %5247 = vmatpush1.bf16.msra.mxu0 %v1861
    %5248 = vmatprep.subr.bf16.mxu0 0
    %5249 = vmatpush1.bf16.msra.mxu0 %v1862
    %5250 = vmatprep.subr.bf16.mxu0 0
    %5251 = vmatpush1.bf16.msra.mxu0 %v1863
    %5252 = vmatprep.subr.bf16.mxu0 0
    %5253 = vmatpush1.bf16.msra.mxu0 %v1864
    %5254 = vmatprep.subr.bf16.mxu0 0
    %5255 = vmatpush1.bf16.msra.mxu0 %v1865
    %5256 = vmatprep.subr.bf16.mxu0 0
    %5257 = vmatpush1.bf16.msra.mxu0 %v1866
    %5258 = vmatprep.subr.bf16.mxu0 0
    %5259 = vmatpush1.bf16.msra.mxu0 %v1867
    %5260 = vmatprep.subr.bf16.mxu0 0
    %5261 = vmatpush1.bf16.msra.mxu0 %v1868
    %5262 = vmatprep.subr.bf16.mxu0 0
    %5263 = vmatpush1.bf16.msra.mxu0 %v1869
    %5264 = vmatprep.subr.bf16.mxu0 0
    %5265 = vmatpush1.bf16.msra.mxu0 %v1870
    %5266 = vmatprep.mubr.bf16.mxu0 %v4787
    %5267 = vmatmul.mubr.bf16.gmra.mrb[0].mxu0 %v4786
    %v5268 = vpop.f32.mrb[0].mxu0
    %v5269 = vadd.f32 %v5205, %v5268
    %v5270 = vpop.f32.mrb[0].mxu0
    %v5271 = vpop.f32.mrb[0].mxu0
    %v5272 = vadd.f32 %v5208, %v5271
    %v5273 = vpop.f32.mrb[0].mxu0
    %5274 = vmatprep.mubr.bf16.mxu0 %v4812
    %5275 = vmatmul.mubr.bf16.gmra.mrb[0].mxu0 %v4811
    %v5276 = vpop.f32.mrb[0].mxu0
    %v5277 = vadd.f32 %v5213, %v5276
    %v5278 = vpop.f32.mrb[0].mxu0
    %v5279 = vpop.f32.mrb[0].mxu0
    %v5280 = vadd.f32 %v5216, %v5279
    %v5281 = vpop.f32.mrb[0].mxu0
    %5282 = vmatprep.mubr.bf16.mxu0 %v4837
    %5283 = vmatmul.mubr.bf16.gmra.mrb[0].mxu0 %v4836
    %v5284 = vpop.f32.mrb[0].mxu0
    %v5285 = vadd.f32 %v5221, %v5284
    %v5286 = vpop.f32.mrb[0].mxu0
    %v5287 = vpop.f32.mrb[0].mxu0
    %v5288 = vadd.f32 %v5224, %v5287
    %v5289 = vpop.f32.mrb[0].mxu0
    %5290 = vmatprep.mubr.bf16.mxu0 %v4862
    %5291 = vmatmul.mubr.bf16.gmra.mrb[0].mxu0 %v4861
    %v5292 = vpop.f32.mrb[0].mxu0
    %v5293 = vadd.f32 %v5229, %v5292
    %v5294 = vpop.f32.mrb[0].mxu0
    %v5295 = vpop.f32.mrb[0].mxu0
    %v5296 = vpop.f32.mrb[0].mxu0
    %5297 = vdwg.mxu0
    %5298 = vmatprep.subr.bf16.mxu0 0
    %5299 = vmatpush1.bf16.msra.mxu0 %v1871
    %5300 = vmatprep.subr.bf16.mxu0 0
    %5301 = vmatpush1.bf16.msra.mxu0 %v1872
    %5302 = vmatprep.subr.bf16.mxu0 0
    %5303 = vmatpush1.bf16.msra.mxu0 %v1873
    %5304 = vmatprep.subr.bf16.mxu0 0
    %5305 = vmatpush1.bf16.msra.mxu0 %v1874
    %5306 = vmatprep.subr.bf16.mxu0 0
    %5307 = vmatpush1.bf16.msra.mxu0 %v1875
    %5308 = vmatprep.subr.bf16.mxu0 0
    %5309 = vmatpush1.bf16.msra.mxu0 %v1876
    %5310 = vmatprep.subr.bf16.mxu0 0
    %5311 = vmatpush1.bf16.msra.mxu0 %v1877
    %5312 = vmatprep.subr.bf16.mxu0 0
    %5313 = vmatpush1.bf16.msra.mxu0 %v1878
    %5314 = vmatprep.subr.bf16.mxu0 0
    %5315 = vmatpush1.bf16.msra.mxu0 %v1879
    %5316 = vmatprep.subr.bf16.mxu0 0
    %5317 = vmatpush1.bf16.msra.mxu0 %v1880
    %5318 = vmatprep.subr.bf16.mxu0 0
    %5319 = vmatpush1.bf16.msra.mxu0 %v1881
    %5320 = vmatprep.subr.bf16.mxu0 0
    %5321 = vmatpush1.bf16.msra.mxu0 %v1882
    %5322 = vmatprep.subr.bf16.mxu0 0
    %5323 = vmatpush1.bf16.msra.mxu0 %v1883
    %5324 = vmatprep.subr.bf16.mxu0 0
    %5325 = vmatpush1.bf16.msra.mxu0 %v1884
    %5326 = vmatprep.subr.bf16.mxu0 0
    %5327 = vmatpush1.bf16.msra.mxu0 %v1885
    %5328 = vmatprep.subr.bf16.mxu0 0
    %5329 = vmatpush1.bf16.msra.mxu0 %v1886
    %5330 = vmatprep.mubr.bf16.mxu0 %v4789
    %5331 = vmatmul.mubr.bf16.gmra.mrb[0].mxu0 %v4788
    %v5332 = vpop.f32.mrb[0].mxu0
    %v5333 = vadd.f32 %v5269, %v5332
    %v5334 = vpop.f32.mrb[0].mxu0
    %v5335 = vpop.f32.mrb[0].mxu0
    %v5336 = vadd.f32 %v5272, %v5335
    %v5337 = vpop.f32.mrb[0].mxu0
    %5338 = vmatprep.mubr.bf16.mxu0 %v4814
    %5339 = vmatmul.mubr.bf16.gmra.mrb[0].mxu0 %v4813
    %v5340 = vpop.f32.mrb[0].mxu0
    %v5341 = vadd.f32 %v5277, %v5340
    %v5342 = vpop.f32.mrb[0].mxu0
    %v5343 = vpop.f32.mrb[0].mxu0
    %v5344 = vadd.f32 %v5280, %v5343
    %v5345 = vpop.f32.mrb[0].mxu0
    %5346 = vmatprep.mubr.bf16.mxu0 %v4839
    %5347 = vmatmul.mubr.bf16.gmra.mrb[0].mxu0 %v4838
    %v5348 = vpop.f32.mrb[0].mxu0
    %v5349 = vadd.f32 %v5285, %v5348
    %v5350 = vpop.f32.mrb[0].mxu0
    %v5351 = vpop.f32.mrb[0].mxu0
    %v5352 = vadd.f32 %v5288, %v5351
    %v5353 = vpop.f32.mrb[0].mxu0
    %5354 = vmatprep.mubr.bf16.mxu0 %v4864
    %5355 = vmatmul.mubr.bf16.gmra.mrb[0].mxu0 %v4863
    %v5356 = vpop.f32.mrb[0].mxu0
    %v5357 = vadd.f32 %v5293, %v5356
    %v5358 = vpop.f32.mrb[0].mxu0
    %v5359 = vpop.f32.mrb[0].mxu0
    %v5360 = vpop.f32.mrb[0].mxu0
    %5361 = vdwg.mxu0
    %5362 = vmatprep.subr.bf16.mxu0 0
    %5363 = vmatpush1.bf16.msra.mxu0 %v1887
    %5364 = vmatprep.subr.bf16.mxu0 0
    %5365 = vmatpush1.bf16.msra.mxu0 %v1888
    %5366 = vmatprep.subr.bf16.mxu0 0
    %5367 = vmatpush1.bf16.msra.mxu0 %v1889
    %5368 = vmatprep.subr.bf16.mxu0 0
    %5369 = vmatpush1.bf16.msra.mxu0 %v1890
    %5370 = vmatprep.subr.bf16.mxu0 0
    %5371 = vmatpush1.bf16.msra.mxu0 %v1891
    %5372 = vmatprep.subr.bf16.mxu0 0
    %5373 = vmatpush1.bf16.msra.mxu0 %v1892
    %5374 = vmatprep.subr.bf16.mxu0 0
    %5375 = vmatpush1.bf16.msra.mxu0 %v1893
    %5376 = vmatprep.subr.bf16.mxu0 0
    %5377 = vmatpush1.bf16.msra.mxu0 %v1894
    %5378 = vmatprep.subr.bf16.mxu0 0
    %5379 = vmatpush1.bf16.msra.mxu0 %v1895
    %5380 = vmatprep.subr.bf16.mxu0 0
    %5381 = vmatpush1.bf16.msra.mxu0 %v1896
    %5382 = vmatprep.subr.bf16.mxu0 0
    %5383 = vmatpush1.bf16.msra.mxu0 %v1897
    %5384 = vmatprep.subr.bf16.mxu0 0
    %5385 = vmatpush1.bf16.msra.mxu0 %v1898
    %5386 = vmatprep.subr.bf16.mxu0 0
    %5387 = vmatpush1.bf16.msra.mxu0 %v1899
    %5388 = vmatprep.subr.bf16.mxu0 0
    %5389 = vmatpush1.bf16.msra.mxu0 %v1900
    %5390 = vmatprep.subr.bf16.mxu0 0
    %5391 = vmatpush1.bf16.msra.mxu0 %v1901
    %5392 = vmatprep.subr.bf16.mxu0 0
    %5393 = vmatpush1.bf16.msra.mxu0 %v1902
    %5394 = vmatprep.mubr.bf16.mxu0 %v4791
    %5395 = vmatmul.mubr.bf16.gmra.mrb[0].mxu0 %v4790
    %v5396 = vpop.f32.mrb[0].mxu0
    %v5397 = vadd.f32 %v5333, %v5396
    %v5398 = vpop.f32.mrb[0].mxu0
    %v5399 = vpop.f32.mrb[0].mxu0
    %v5400 = vadd.f32 %v5336, %v5399
    %v5401 = vpop.f32.mrb[0].mxu0
    %5402 = vmatprep.mubr.bf16.mxu0 %v4816
    %5403 = vmatmul.mubr.bf16.gmra.mrb[0].mxu0 %v4815
    %v5404 = vpop.f32.mrb[0].mxu0
    %v5405 = vadd.f32 %v5341, %v5404
    %v5406 = vpop.f32.mrb[0].mxu0
    %v5407 = vpop.f32.mrb[0].mxu0
    %v5408 = vadd.f32 %v5344, %v5407
    %v5409 = vpop.f32.mrb[0].mxu0
    %5410 = vmatprep.mubr.bf16.mxu0 %v4841
    %5411 = vmatmul.mubr.bf16.gmra.mrb[0].mxu0 %v4840
    %v5412 = vpop.f32.mrb[0].mxu0
    %v5413 = vadd.f32 %v5349, %v5412
    %v5414 = vpop.f32.mrb[0].mxu0
    %v5415 = vpop.f32.mrb[0].mxu0
    %v5416 = vadd.f32 %v5352, %v5415
    %v5417 = vpop.f32.mrb[0].mxu0
    %5418 = vmatprep.mubr.bf16.mxu0 %v4866
    %5419 = vmatmul.mubr.bf16.gmra.mrb[0].mxu0 %v4865
    %v5420 = vpop.f32.mrb[0].mxu0
    %v5421 = vadd.f32 %v5357, %v5420
    %v5422 = vpop.f32.mrb[0].mxu0
    %v5423 = vpop.f32.mrb[0].mxu0
    %v5424 = vpop.f32.mrb[0].mxu0
    %5425 = vdwg.mxu0
    %5426 = vmatprep.subr.bf16.mxu0 0
    %5427 = vmatpush1.bf16.msra.mxu0 %v1903
    %5428 = vmatprep.subr.bf16.mxu0 0
    %5429 = vmatpush1.bf16.msra.mxu0 %v1904
    %5430 = vmatprep.subr.bf16.mxu0 0
    %5431 = vmatpush1.bf16.msra.mxu0 %v1905
    %5432 = vmatprep.subr.bf16.mxu0 0
    %5433 = vmatpush1.bf16.msra.mxu0 %v1906
    %5434 = vmatprep.subr.bf16.mxu0 0
    %5435 = vmatpush1.bf16.msra.mxu0 %v1907
    %5436 = vmatprep.subr.bf16.mxu0 0
    %5437 = vmatpush1.bf16.msra.mxu0 %v1908
    %5438 = vmatprep.subr.bf16.mxu0 0
    %5439 = vmatpush1.bf16.msra.mxu0 %v1909
    %5440 = vmatprep.subr.bf16.mxu0 0
    %5441 = vmatpush1.bf16.msra.mxu0 %v1910
    %5442 = vmatprep.subr.bf16.mxu0 0
    %5443 = vmatpush1.bf16.msra.mxu0 %v1911
    %5444 = vmatprep.subr.bf16.mxu0 0
    %5445 = vmatpush1.bf16.msra.mxu0 %v1912
    %5446 = vmatprep.subr.bf16.mxu0 0
    %5447 = vmatpush1.bf16.msra.mxu0 %v1913
    %5448 = vmatprep.subr.bf16.mxu0 0
    %5449 = vmatpush1.bf16.msra.mxu0 %v1914
    %5450 = vmatprep.subr.bf16.mxu0 0
    %5451 = vmatpush1.bf16.msra.mxu0 %v1915
    %5452 = vmatprep.subr.bf16.mxu0 0
    %5453 = vmatpush1.bf16.msra.mxu0 %v1916
    %5454 = vmatprep.subr.bf16.mxu0 0
    %5455 = vmatpush1.bf16.msra.mxu0 %v1917
    %5456 = vmatprep.subr.bf16.mxu0 0
    %5457 = vmatpush1.bf16.msra.mxu0 %v1918
    %5458 = vmatprep.mubr.bf16.mxu0 %v4793
    %5459 = vmatmul.mubr.bf16.gmra.mrb[0].mxu0 %v4792
    %v5460 = vpop.f32.mrb[0].mxu0
    %v5461 = vadd.f32 %v5397, %v5460
    %v5462 = vpop.f32.mrb[0].mxu0
    %v5463 = vpop.f32.mrb[0].mxu0
    %v5464 = vadd.f32 %v5400, %v5463
    %v5465 = vpop.f32.mrb[0].mxu0
    %5466 = vmatprep.mubr.bf16.mxu0 %v4818
    %5467 = vmatmul.mubr.bf16.gmra.mrb[0].mxu0 %v4817
    %v5468 = vpop.f32.mrb[0].mxu0
    %v5469 = vadd.f32 %v5405, %v5468
    %v5470 = vpop.f32.mrb[0].mxu0
    %v5471 = vpop.f32.mrb[0].mxu0
    %v5472 = vadd.f32 %v5408, %v5471
    %v5473 = vpop.f32.mrb[0].mxu0
    %5474 = vmatprep.mubr.bf16.mxu0 %v4843
    %5475 = vmatmul.mubr.bf16.gmra.mrb[0].mxu0 %v4842
    %v5476 = vpop.f32.mrb[0].mxu0
    %v5477 = vadd.f32 %v5413, %v5476
    %v5478 = vpop.f32.mrb[0].mxu0
    %v5479 = vpop.f32.mrb[0].mxu0
    %v5480 = vadd.f32 %v5416, %v5479
    %v5481 = vpop.f32.mrb[0].mxu0
    %5482 = vmatprep.mubr.bf16.mxu0 %v4868
    %5483 = vmatmul.mubr.bf16.gmra.mrb[0].mxu0 %v4867
    %v5484 = vpop.f32.mrb[0].mxu0
    %v5485 = vadd.f32 %v5421, %v5484
    %v5486 = vpop.f32.mrb[0].mxu0
    %v5487 = vpop.f32.mrb[0].mxu0
    %v5488 = vpop.f32.mrb[0].mxu0
    %5489 = vdwg.mxu0
    %5490 = vmatprep.subr.bf16.mxu0 0
    %5491 = vmatpush1.bf16.msra.mxu0 %v1919
    %5492 = vmatprep.subr.bf16.mxu0 0
    %5493 = vmatpush1.bf16.msra.mxu0 %v1920
    %5494 = vmatprep.subr.bf16.mxu0 0
    %5495 = vmatpush1.bf16.msra.mxu0 %v1921
    %5496 = vmatprep.subr.bf16.mxu0 0
    %5497 = vmatpush1.bf16.msra.mxu0 %v1922
    %5498 = vmatprep.subr.bf16.mxu0 0
    %5499 = vmatpush1.bf16.msra.mxu0 %v1923
    %5500 = vmatprep.subr.bf16.mxu0 0
    %5501 = vmatpush1.bf16.msra.mxu0 %v1924
    %5502 = vmatprep.subr.bf16.mxu0 0
    %5503 = vmatpush1.bf16.msra.mxu0 %v1925
    %5504 = vmatprep.subr.bf16.mxu0 0
    %5505 = vmatpush1.bf16.msra.mxu0 %v1926
    %5506 = vmatprep.subr.bf16.mxu0 0
    %5507 = vmatpush1.bf16.msra.mxu0 %v1927
    %5508 = vmatprep.subr.bf16.mxu0 0
    %5509 = vmatpush1.bf16.msra.mxu0 %v1928
    %5510 = vmatprep.subr.bf16.mxu0 0
    %5511 = vmatpush1.bf16.msra.mxu0 %v1929
    %5512 = vmatprep.subr.bf16.mxu0 0
    %5513 = vmatpush1.bf16.msra.mxu0 %v1930
    %5514 = vmatprep.subr.bf16.mxu0 0
    %5515 = vmatpush1.bf16.msra.mxu0 %v1931
    %5516 = vmatprep.subr.bf16.mxu0 0
    %5517 = vmatpush1.bf16.msra.mxu0 %v1932
    %5518 = vmatprep.subr.bf16.mxu0 0
    %5519 = vmatpush1.bf16.msra.mxu0 %v1933
    %5520 = vmatprep.subr.bf16.mxu0 0
    %5521 = vmatpush1.bf16.msra.mxu0 %v1934
    %5522 = vmatprep.mubr.bf16.mxu0 %v4795
    %5523 = vmatmul.mubr.bf16.gmra.mrb[0].mxu0 %v4794
    %v5524 = vpop.f32.mrb[0].mxu0
    %v5525 = vadd.f32 %v5461, %v5524
    %v5526 = vpop.f32.mrb[0].mxu0
    %v5527 = vpop.f32.mrb[0].mxu0
    %v5528 = vadd.f32 %v5464, %v5527
    %v5529 = vpop.f32.mrb[0].mxu0
    %5530 = vmatprep.mubr.bf16.mxu0 %v4820
    %5531 = vmatmul.mubr.bf16.gmra.mrb[0].mxu0 %v4819
    %v5532 = vpop.f32.mrb[0].mxu0
    %v5533 = vadd.f32 %v5469, %v5532
    %v5534 = vpop.f32.mrb[0].mxu0
    %v5535 = vpop.f32.mrb[0].mxu0
    %v5536 = vadd.f32 %v5472, %v5535
    %v5537 = vpop.f32.mrb[0].mxu0
    %5538 = vmatprep.mubr.bf16.mxu0 %v4845
    %5539 = vmatmul.mubr.bf16.gmra.mrb[0].mxu0 %v4844
    %v5540 = vpop.f32.mrb[0].mxu0
    %v5541 = vadd.f32 %v5477, %v5540
    %v5542 = vpop.f32.mrb[0].mxu0
    %v5543 = vpop.f32.mrb[0].mxu0
    %v5544 = vadd.f32 %v5480, %v5543
    %v5545 = vpop.f32.mrb[0].mxu0
    %5546 = vmatprep.mubr.bf16.mxu0 %v4870
    %5547 = vmatmul.mubr.bf16.gmra.mrb[0].mxu0 %v4869
    %v5548 = vpop.f32.mrb[0].mxu0
    %v5549 = vadd.f32 %v5485, %v5548
    %v5550 = vpop.f32.mrb[0].mxu0
    %v5551 = vpop.f32.mrb[0].mxu0
    %v5552 = vpop.f32.mrb[0].mxu0
    %5553 = vdwg.mxu0
    %5554 = vmatprep.subr.bf16.mxu0 0
    %5555 = vmatpush1.bf16.msra.mxu0 %v1935
    %5556 = vmatprep.subr.bf16.mxu0 0
    %5557 = vmatpush1.bf16.msra.mxu0 %v1936
    %5558 = vmatprep.subr.bf16.mxu0 0
    %5559 = vmatpush1.bf16.msra.mxu0 %v1937
    %5560 = vmatprep.subr.bf16.mxu0 0
    %5561 = vmatpush1.bf16.msra.mxu0 %v1938
    %5562 = vmatprep.subr.bf16.mxu0 0
    %5563 = vmatpush1.bf16.msra.mxu0 %v1939
    %5564 = vmatprep.subr.bf16.mxu0 0
    %5565 = vmatpush1.bf16.msra.mxu0 %v1940
    %5566 = vmatprep.subr.bf16.mxu0 0
    %5567 = vmatpush1.bf16.msra.mxu0 %v1941
    %5568 = vmatprep.subr.bf16.mxu0 0
    %5569 = vmatpush1.bf16.msra.mxu0 %v1942
    %5570 = vmatprep.subr.bf16.mxu0 0
    %5571 = vmatpush1.bf16.msra.mxu0 %v1943
    %5572 = vmatprep.subr.bf16.mxu0 0
    %5573 = vmatpush1.bf16.msra.mxu0 %v1944
    %5574 = vmatprep.subr.bf16.mxu0 0
    %5575 = vmatpush1.bf16.msra.mxu0 %v1945
    %5576 = vmatprep.subr.bf16.mxu0 0
    %5577 = vmatpush1.bf16.msra.mxu0 %v1946
    %5578 = vmatprep.subr.bf16.mxu0 0
    %5579 = vmatpush1.bf16.msra.mxu0 %v1947
    %5580 = vmatprep.subr.bf16.mxu0 0
    %5581 = vmatpush1.bf16.msra.mxu0 %v1948
    %5582 = vmatprep.subr.bf16.mxu0 0
    %5583 = vmatpush1.bf16.msra.mxu0 %v1949
    %5584 = vmatprep.subr.bf16.mxu0 0
    %5585 = vmatpush1.bf16.msra.mxu0 %v1950
    %5586 = vmatprep.mubr.bf16.mxu0 %v4797
    %5587 = vmatmul.mubr.bf16.gmra.mrb[0].mxu0 %v4796
    %v5588 = vpop.f32.mrb[0].mxu0
    %v5589 = vadd.f32 %v5525, %v5588
    %v5590 = vpop.f32.mrb[0].mxu0
    %v5591 = vpop.f32.mrb[0].mxu0
    %v5592 = vadd.f32 %v5528, %v5591
    %v5593 = vpop.f32.mrb[0].mxu0
    %5594 = vmatprep.mubr.bf16.mxu0 %v4822
    %5595 = vmatmul.mubr.bf16.gmra.mrb[0].mxu0 %v4821
    %v5596 = vpop.f32.mrb[0].mxu0
    %v5597 = vadd.f32 %v5533, %v5596
    %v5598 = vpop.f32.mrb[0].mxu0
    %v5599 = vpop.f32.mrb[0].mxu0
    %v5600 = vadd.f32 %v5536, %v5599
    %v5601 = vpop.f32.mrb[0].mxu0
    %5602 = vmatprep.mubr.bf16.mxu0 %v4847
    %5603 = vmatmul.mubr.bf16.gmra.mrb[0].mxu0 %v4846
    %v5604 = vpop.f32.mrb[0].mxu0
    %v5605 = vadd.f32 %v5541, %v5604
    %v5606 = vpop.f32.mrb[0].mxu0
    %v5607 = vpop.f32.mrb[0].mxu0
    %v5608 = vadd.f32 %v5544, %v5607
    %v5609 = vpop.f32.mrb[0].mxu0
    %5610 = vmatprep.mubr.bf16.mxu0 %v4872
    %5611 = vmatmul.mubr.bf16.gmra.mrb[0].mxu0 %v4871
    %v5612 = vpop.f32.mrb[0].mxu0
    %v5613 = vadd.f32 %v5549, %v5612
    %v5614 = vpop.f32.mrb[0].mxu0
    %v5615 = vpop.f32.mrb[0].mxu0
    %v5616 = vpop.f32.mrb[0].mxu0
    %5617 = vdwg.mxu0
    %5618 = vmatprep.subr.bf16.mxu0 0
    %5619 = vmatpush1.bf16.msra.mxu0 %v1951
    %5620 = vmatprep.subr.bf16.mxu0 0
    %5621 = vmatpush1.bf16.msra.mxu0 %v1952
    %5622 = vmatprep.subr.bf16.mxu0 0
    %5623 = vmatpush1.bf16.msra.mxu0 %v1953
    %5624 = vmatprep.subr.bf16.mxu0 0
    %5625 = vmatpush1.bf16.msra.mxu0 %v1954
    %5626 = vmatprep.subr.bf16.mxu0 0
    %5627 = vmatpush1.bf16.msra.mxu0 %v1955
    %5628 = vmatprep.subr.bf16.mxu0 0
    %5629 = vmatpush1.bf16.msra.mxu0 %v1956
    %5630 = vmatprep.subr.bf16.mxu0 0
    %5631 = vmatpush1.bf16.msra.mxu0 %v1957
    %5632 = vmatprep.subr.bf16.mxu0 0
    %5633 = vmatpush1.bf16.msra.mxu0 %v1958
    %5634 = vmatprep.subr.bf16.mxu0 0
    %5635 = vmatpush1.bf16.msra.mxu0 %v1959
    %5636 = vmatprep.subr.bf16.mxu0 0
    %5637 = vmatpush1.bf16.msra.mxu0 %v1960
    %5638 = vmatprep.subr.bf16.mxu0 0
    %5639 = vmatpush1.bf16.msra.mxu0 %v1961
    %5640 = vmatprep.subr.bf16.mxu0 0
    %5641 = vmatpush1.bf16.msra.mxu0 %v1962
    %5642 = vmatprep.subr.bf16.mxu0 0
    %5643 = vmatpush1.bf16.msra.mxu0 %v1963
    %5644 = vmatprep.subr.bf16.mxu0 0
    %5645 = vmatpush1.bf16.msra.mxu0 %v1964
    %5646 = vmatprep.subr.bf16.mxu0 0
    %5647 = vmatpush1.bf16.msra.mxu0 %v1965
    %5648 = vmatprep.subr.bf16.mxu0 0
    %5649 = vmatpush1.bf16.msra.mxu0 %v1966
    %5650 = vmatprep.mubr.bf16.mxu0 %v4799
    %5651 = vmatmul.mubr.bf16.gmra.mrb[0].mxu0 %v4798
    %v5652 = vpop.f32.mrb[0].mxu0
    %v5653 = vadd.f32 %v5589, %v5652
    %v5654 = vpop.f32.mrb[0].mxu0
    %v5655 = vpop.f32.mrb[0].mxu0
    %v5656 = vadd.f32 %v5592, %v5655
    %v5657 = vpop.f32.mrb[0].mxu0
    %5658 = vmatprep.mubr.bf16.mxu0 %v4824
    %5659 = vmatmul.mubr.bf16.gmra.mrb[0].mxu0 %v4823
    %v5660 = vpop.f32.mrb[0].mxu0
    %v5661 = vadd.f32 %v5597, %v5660
    %v5662 = vpop.f32.mrb[0].mxu0
    %v5663 = vpop.f32.mrb[0].mxu0
    %v5664 = vadd.f32 %v5600, %v5663
    %v5665 = vpop.f32.mrb[0].mxu0
    %5666 = vmatprep.mubr.bf16.mxu0 %v4849
    %5667 = vmatmul.mubr.bf16.gmra.mrb[0].mxu0 %v4848
    %v5668 = vpop.f32.mrb[0].mxu0
    %v5669 = vadd.f32 %v5605, %v5668
    %v5670 = vpop.f32.mrb[0].mxu0
    %v5671 = vpop.f32.mrb[0].mxu0
    %v5672 = vadd.f32 %v5608, %v5671
    %v5673 = vpop.f32.mrb[0].mxu0
    %5674 = vmatprep.mubr.bf16.mxu0 %v4874
    %5675 = vmatmul.mubr.bf16.gmra.mrb[0].mxu0 %v4873
    %v5676 = vpop.f32.mrb[0].mxu0
    %v5677 = vadd.f32 %v5613, %v5676
    %v5678 = vpop.f32.mrb[0].mxu0
    %v5679 = vpop.f32.mrb[0].mxu0
    %v5680 = vpop.f32.mrb[0].mxu0
    %5681 = vdwg.mxu0
    %5682 = vmatprep.subr.bf16.mxu0 0
    %5683 = vmatpush1.bf16.msra.mxu0 %v1967
    %5684 = vmatprep.subr.bf16.mxu0 0
    %5685 = vmatpush1.bf16.msra.mxu0 %v1968
    %5686 = vmatprep.subr.bf16.mxu0 0
    %5687 = vmatpush1.bf16.msra.mxu0 %v1969
    %5688 = vmatprep.subr.bf16.mxu0 0
    %5689 = vmatpush1.bf16.msra.mxu0 %v1970
    %5690 = vmatprep.subr.bf16.mxu0 0
    %5691 = vmatpush1.bf16.msra.mxu0 %v1971
    %5692 = vmatprep.subr.bf16.mxu0 0
    %5693 = vmatpush1.bf16.msra.mxu0 %v1972
    %5694 = vmatprep.subr.bf16.mxu0 0
    %5695 = vmatpush1.bf16.msra.mxu0 %v1973
    %5696 = vmatprep.subr.bf16.mxu0 0
    %5697 = vmatpush1.bf16.msra.mxu0 %v1974
    %5698 = vmatprep.subr.bf16.mxu0 0
    %5699 = vmatpush1.bf16.msra.mxu0 %v1975
    %5700 = vmatprep.subr.bf16.mxu0 0
    %5701 = vmatpush1.bf16.msra.mxu0 %v1976
    %5702 = vmatprep.subr.bf16.mxu0 0
    %5703 = vmatpush1.bf16.msra.mxu0 %v1977
    %5704 = vmatprep.subr.bf16.mxu0 0
    %5705 = vmatpush1.bf16.msra.mxu0 %v1978
    %5706 = vmatprep.subr.bf16.mxu0 0
    %5707 = vmatpush1.bf16.msra.mxu0 %v1979
    %5708 = vmatprep.subr.bf16.mxu0 0
    %5709 = vmatpush1.bf16.msra.mxu0 %v1980
    %5710 = vmatprep.subr.bf16.mxu0 0
    %5711 = vmatpush1.bf16.msra.mxu0 %v1981
    %5712 = vmatprep.subr.bf16.mxu0 0
    %5713 = vmatpush1.bf16.msra.mxu0 %v1982
    %5714 = vmatprep.mubr.bf16.mxu0 %v4801
    %5715 = vmatmul.mubr.bf16.gmra.mrb[0].mxu0 %v4800
    %v5716 = vpop.f32.mrb[0].mxu0
    %v5717 = vadd.f32 %v5653, %v5716
    %v5718 = vpop.f32.mrb[0].mxu0
    %v5719 = vpop.f32.mrb[0].mxu0
    %v5720 = vadd.f32 %v5656, %v5719
    %v5721 = vpop.f32.mrb[0].mxu0
    %5722 = vmatprep.mubr.bf16.mxu0 %v4826
    %5723 = vmatmul.mubr.bf16.gmra.mrb[0].mxu0 %v4825
    %v5724 = vpop.f32.mrb[0].mxu0
    %v5725 = vadd.f32 %v5661, %v5724
    %v5726 = vpop.f32.mrb[0].mxu0
    %v5727 = vpop.f32.mrb[0].mxu0
    %v5728 = vadd.f32 %v5664, %v5727
    %v5729 = vpop.f32.mrb[0].mxu0
    %5730 = vmatprep.mubr.bf16.mxu0 %v4851
    %5731 = vmatmul.mubr.bf16.gmra.mrb[0].mxu0 %v4850
    %v5732 = vpop.f32.mrb[0].mxu0
    %v5733 = vadd.f32 %v5669, %v5732
    %v5734 = vpop.f32.mrb[0].mxu0
    %v5735 = vpop.f32.mrb[0].mxu0
    %v5736 = vadd.f32 %v5672, %v5735
    %v5737 = vpop.f32.mrb[0].mxu0
    %5738 = vmatprep.mubr.bf16.mxu0 %v4876
    %5739 = vmatmul.mubr.bf16.gmra.mrb[0].mxu0 %v4875
    %v5740 = vpop.f32.mrb[0].mxu0
    %v5741 = vadd.f32 %v5677, %v5740
    %v5742 = vpop.f32.mrb[0].mxu0
    %v5743 = vpop.f32.mrb[0].mxu0
    %v5744 = vpop.f32.mrb[0].mxu0
    %5745 = vdwg.mxu0
    %5746 = vmatprep.subr.bf16.mxu0 0
    %5747 = vmatpush1.bf16.msra.mxu0 %v1983
    %5748 = vmatprep.subr.bf16.mxu0 0
    %5749 = vmatpush1.bf16.msra.mxu0 %v1984
    %5750 = vmatprep.subr.bf16.mxu0 0
    %5751 = vmatpush1.bf16.msra.mxu0 %v1985
    %5752 = vmatprep.subr.bf16.mxu0 0
    %5753 = vmatpush1.bf16.msra.mxu0 %v1986
    %5754 = vmatprep.subr.bf16.mxu0 0
    %5755 = vmatpush1.bf16.msra.mxu0 %v1987
    %5756 = vmatprep.subr.bf16.mxu0 0
    %5757 = vmatpush1.bf16.msra.mxu0 %v1988
    %5758 = vmatprep.subr.bf16.mxu0 0
    %5759 = vmatpush1.bf16.msra.mxu0 %v1989
    %5760 = vmatprep.subr.bf16.mxu0 0
    %5761 = vmatpush1.bf16.msra.mxu0 %v1990
    %5762 = vmatprep.subr.bf16.mxu0 0
    %5763 = vmatpush1.bf16.msra.mxu0 0
    %5764 = vmatprep.subr.bf16.mxu0 0
    %5765 = vmatpush1.bf16.msra.mxu0 0
    %5766 = vmatprep.subr.bf16.mxu0 0
    %5767 = vmatpush1.bf16.msra.mxu0 0
    %5768 = vmatprep.subr.bf16.mxu0 0
    %5769 = vmatpush1.bf16.msra.mxu0 0
    %5770 = vmatprep.subr.bf16.mxu0 0
    %5771 = vmatpush1.bf16.msra.mxu0 0
    %5772 = vmatprep.subr.bf16.mxu0 0
    %5773 = vmatpush1.bf16.msra.mxu0 0
    %5774 = vmatprep.subr.bf16.mxu0 0
    %5775 = vmatpush1.bf16.msra.mxu0 0
    %5776 = vmatprep.subr.bf16.mxu0 0
    %5777 = vmatpush1.bf16.msra.mxu0 0
    %5778 = vmatprep.mubr.bf16.mxu0 0
    %5779 = vmatmul.mubr.bf16.gmra.mrb[0].mxu0 %v4802
    %v5780 = vpop.f32.mrb[0].mxu0
    %v5781 = vadd.f32 %v5717, %v5780
    %v5782 = vpop.f32.mrb[0].mxu0
    %v5783 = vpop.f32.mrb[0].mxu0
    %v5784 = vadd.f32 %v5720, %v5783
    %v5785 = vpop.f32.mrb[0].mxu0
    %5786 = vmatprep.mubr.bf16.mxu0 0
    %5787 = vmatmul.mubr.bf16.gmra.mrb[0].mxu0 %v4827
    %v5788 = vpop.f32.mrb[0].mxu0
    %v5789 = vadd.f32 %v5725, %v5788
    %v5790 = vpop.f32.mrb[0].mxu0
    %v5791 = vpop.f32.mrb[0].mxu0
    %v5792 = vadd.f32 %v5728, %v5791
    %v5793 = vpop.f32.mrb[0].mxu0
    %5794 = vmatprep.mubr.bf16.mxu0 0
    %5795 = vmatmul.mubr.bf16.gmra.mrb[0].mxu0 %v4852
    %v5796 = vpop.f32.mrb[0].mxu0
    %v5797 = vadd.f32 %v5733, %v5796
    %v5798 = vpop.f32.mrb[0].mxu0
    %v5799 = vpop.f32.mrb[0].mxu0
    %v5800 = vadd.f32 %v5736, %v5799
    %v5801 = vpop.f32.mrb[0].mxu0
    %5802 = vmatprep.mubr.bf16.mxu0 0
    %5803 = vmatmul.mubr.bf16.gmra.mrb[0].mxu0 %v4877
    %v5804 = vpop.f32.mrb[0].mxu0
    %v5805 = vadd.f32 %v5741, %v5804
    %v5806 = vpop.f32.mrb[0].mxu0
    %v5807 = vpop.f32.mrb[0].mxu0
    %v5808 = vpop.f32.mrb[0].mxu0
    %5809 = vdwg.mxu0
    %v5810 = vmax.f32 %v4413, %v5781
    %v5811 = vmax.f32 %v4414, %v5784
    %v5812 = vmax.f32 %v4415, %v5789
    %v5813 = vmax.f32 %v4416, %v5792
    %v5814 = vmax.f32 %v4417, %v5797
    %v5815 = vmax.f32 %v4418, %v5800
    %v5816 = vmax.f32 %v4419, %v5805
    %s5817 = scalar_lea.vmem %s0, 2100
    %v5818 = vld [vmem:[%s5817] sm:$0xff]
    %v5819 = vld [vmem:[%s5817 + $0x8] sm:$0xff]
    %v5820 = vld [vmem:[%s5817 + $0x10] sm:$0xff]
    %v5821 = vld [vmem:[%s5817 + $0x18] sm:$0xff]
    %v5822 = vld [vmem:[%s5817 + $0x20] sm:$0xff]
    %v5823 = vld [vmem:[%s5817 + $0x28] sm:$0xff]
    %v5824 = vld [vmem:[%s5817 + $0x30] sm:$0xff]
    %v5825 = vld [vmem:[%s5817 + $0x38] sm:$0xff]
    %v5826 = vld [vmem:[%s5817 + $0x40] sm:$0xff]
    %v5827 = vld [vmem:[%s5817 + $0x48] sm:$0xff]
    %v5828 = vld [vmem:[%s5817 + $0x50] sm:$0xff]
    %v5829 = vld [vmem:[%s5817 + $0x58] sm:$0xff]
    %v5830 = vld [vmem:[%s5817 + $0x60] sm:$0xf]
    %v5831 = vld [vmem:[%s5817 + $0x64] sm:$0xff]
    %v5832 = vld [vmem:[%s5817 + $0x6c] sm:$0xff]
    %v5833 = vld [vmem:[%s5817 + $0x74] sm:$0xff]
    %v5834 = vld [vmem:[%s5817 + $0x7c] sm:$0xff]
    %v5835 = vld [vmem:[%s5817 + $0x84] sm:$0xff]
    %v5836 = vld [vmem:[%s5817 + $0x8c] sm:$0xff]
    %v5837 = vld [vmem:[%s5817 + $0x94] sm:$0xff]
    %v5838 = vld [vmem:[%s5817 + $0x9c] sm:$0xff]
    %v5839 = vld [vmem:[%s5817 + $0xa4] sm:$0xff]
    %v5840 = vld [vmem:[%s5817 + $0xac] sm:$0xff]
    %v5841 = vld [vmem:[%s5817 + $0xb4] sm:$0xff]
    %v5842 = vld [vmem:[%s5817 + $0xbc] sm:$0xff]
    %v5843 = vld [vmem:[%s5817 + $0xc4] sm:$0xf]
    %v5844 = vld [vmem:[%s5817 + $0xc8] sm:$0xff]
    %v5845 = vld [vmem:[%s5817 + $0xd0] sm:$0xff]
    %v5846 = vld [vmem:[%s5817 + $0xd8] sm:$0xff]
    %v5847 = vld [vmem:[%s5817 + $0xe0] sm:$0xff]
    %v5848 = vld [vmem:[%s5817 + $0xe8] sm:$0xff]
    %v5849 = vld [vmem:[%s5817 + $0xf0] sm:$0xff]
    %v5850 = vld [vmem:[%s5817 + $0xf8] sm:$0xff]
    %v5851 = vld [vmem:[%s5817 + $0x100] sm:$0xff]
    %v5852 = vld [vmem:[%s5817 + $0x108] sm:$0xff]
    %v5853 = vld [vmem:[%s5817 + $0x110] sm:$0xff]
    %v5854 = vld [vmem:[%s5817 + $0x118] sm:$0xff]
    %v5855 = vld [vmem:[%s5817 + $0x120] sm:$0xff]
    %v5856 = vld [vmem:[%s5817 + $0x128] sm:$0xf]
    %v5857 = vld [vmem:[%s5817 + $0x12c] sm:$0xff]
    %v5858 = vld [vmem:[%s5817 + $0x134] sm:$0xff]
    %v5859 = vld [vmem:[%s5817 + $0x13c] sm:$0xff]
    %v5860 = vld [vmem:[%s5817 + $0x144] sm:$0xff]
    %v5861 = vld [vmem:[%s5817 + $0x14c] sm:$0xff]
    %v5862 = vld [vmem:[%s5817 + $0x154] sm:$0xff]
    %v5863 = vld [vmem:[%s5817 + $0x15c] sm:$0xff]
    %v5864 = vld [vmem:[%s5817 + $0x164] sm:$0xff]
    %v5865 = vld [vmem:[%s5817 + $0x16c] sm:$0xff]
    %v5866 = vld [vmem:[%s5817 + $0x174] sm:$0xff]
    %v5867 = vld [vmem:[%s5817 + $0x17c] sm:$0xff]
    %v5868 = vld [vmem:[%s5817 + $0x184] sm:$0xff]
    %v5869 = vld [vmem:[%s5817 + $0x18c] sm:$0xf]
    %v5870 = vld [vmem:[%s5817 + $0x190] sm:$0xff]
    %v5871 = vld [vmem:[%s5817 + $0x198] sm:$0xff]
    %v5872 = vld [vmem:[%s5817 + $0x1a0] sm:$0xff]
    %v5873 = vld [vmem:[%s5817 + $0x1a8] sm:$0xff]
    %v5874 = vld [vmem:[%s5817 + $0x1b0] sm:$0xff]
    %v5875 = vld [vmem:[%s5817 + $0x1b8] sm:$0xff]
    %v5876 = vld [vmem:[%s5817 + $0x1c0] sm:$0xff]
    %v5877 = vld [vmem:[%s5817 + $0x1c8] sm:$0xff]
    %v5878 = vld [vmem:[%s5817 + $0x1d0] sm:$0xff]
    %v5879 = vld [vmem:[%s5817 + $0x1d8] sm:$0xff]
    %v5880 = vld [vmem:[%s5817 + $0x1e0] sm:$0xff]
    %v5881 = vld [vmem:[%s5817 + $0x1e8] sm:$0xff]
    %v5882 = vld [vmem:[%s5817 + $0x1f0] sm:$0xf]
    %v5883 = vld [vmem:[%s5817 + $0x1f4] sm:$0xff]
    %v5884 = vld [vmem:[%s5817 + $0x1fc] sm:$0xff]
    %v5885 = vld [vmem:[%s5817 + $0x204] sm:$0xff]
    %v5886 = vld [vmem:[%s5817 + $0x20c] sm:$0xff]
    %v5887 = vld [vmem:[%s5817 + $0x214] sm:$0xff]
    %v5888 = vld [vmem:[%s5817 + $0x21c] sm:$0xff]
    %v5889 = vld [vmem:[%s5817 + $0x224] sm:$0xff]
    %v5890 = vld [vmem:[%s5817 + $0x22c] sm:$0xff]
    %v5891 = vld [vmem:[%s5817 + $0x234] sm:$0xff]
    %v5892 = vld [vmem:[%s5817 + $0x23c] sm:$0xff]
    %v5893 = vld [vmem:[%s5817 + $0x244] sm:$0xff]
    %v5894 = vld [vmem:[%s5817 + $0x24c] sm:$0xff]
    %v5895 = vld [vmem:[%s5817 + $0x254] sm:$0xf]
    %v5896 = vld [vmem:[%s5817 + $0x258] sm:$0x11]
    %v5897 = vld [vmem:[%s5817 + $0x260] sm:$0x11]
    %v5898 = vld [vmem:[%s5817 + $0x268] sm:$0x11]
    %v5899 = vld [vmem:[%s5817 + $0x270] sm:$0x11]
    %v5900 = vld [vmem:[%s5817 + $0x278] sm:$0x11]
    %v5901 = vld [vmem:[%s5817 + $0x280] sm:$0x11]
    %v5902 = vld [vmem:[%s5817 + $0x288] sm:$0x11]
    %v5903 = vld [vmem:[%s5817 + $0x290] sm:$0x11]
    %v5904 = vld [vmem:[%s5817 + $0x298] sm:$0x11]
    %v5905 = vld [vmem:[%s5817 + $0x2a0] sm:$0x11]
    %v5906 = vld [vmem:[%s5817 + $0x2a8] sm:$0x11]
    %v5907 = vld [vmem:[%s5817 + $0x2b0] sm:$0x11]
    %v5908 = vld [vmem:[%s5817 + $0x2b8] sm:$0x1]
    %v6000 = vunpack.c.l.b16 %v5818
    %v6001 = vunpack.c.h.b16 %v5818
    %v6002 = vunpack.c.l.b16 %v5819
    %v6003 = vunpack.c.h.b16 %v5819
    %v6004 = vunpack.c.l.b16 %v5820
    %v6005 = vunpack.c.h.b16 %v5820
    %v6006 = vunpack.c.l.b16 %v5821
    %v6007 = vunpack.c.h.b16 %v5821
    %v6008 = vunpack.c.l.b16 %v5822
    %v6009 = vunpack.c.h.b16 %v5822
    %v6010 = vunpack.c.l.b16 %v5823
    %v6011 = vunpack.c.h.b16 %v5823
    %v6012 = vunpack.c.l.b16 %v5824
    %v6013 = vunpack.c.h.b16 %v5824
    %v6014 = vunpack.c.l.b16 %v5825
    %v6015 = vunpack.c.h.b16 %v5825
    %v6016 = vunpack.c.l.b16 %v5826
    %v6017 = vunpack.c.h.b16 %v5826
    %v6018 = vunpack.c.l.b16 %v5827
    %v6019 = vunpack.c.h.b16 %v5827
    %v6020 = vunpack.c.l.b16 %v5828
    %v6021 = vunpack.c.h.b16 %v5828
    %v6022 = vunpack.c.l.b16 %v5829
    %v6023 = vunpack.c.h.b16 %v5829
    %v6024 = vunpack.c.l.b16 %v5830
    %v6025 = vunpack.c.l.b16 %v5831
    %v6026 = vunpack.c.h.b16 %v5831
    %v6027 = vunpack.c.l.b16 %v5832
    %v6028 = vunpack.c.h.b16 %v5832
    %v6029 = vunpack.c.l.b16 %v5833
    %v6030 = vunpack.c.h.b16 %v5833
    %v6031 = vunpack.c.l.b16 %v5834
    %v6032 = vunpack.c.h.b16 %v5834
    %v6033 = vunpack.c.l.b16 %v5835
    %v6034 = vunpack.c.h.b16 %v5835
    %v6035 = vunpack.c.l.b16 %v5836
    %v6036 = vunpack.c.h.b16 %v5836
    %v6037 = vunpack.c.l.b16 %v5837
    %v6038 = vunpack.c.h.b16 %v5837
    %v6039 = vunpack.c.l.b16 %v5838
    %v6040 = vunpack.c.h.b16 %v5838
    %v6041 = vunpack.c.l.b16 %v5839
    %v6042 = vunpack.c.h.b16 %v5839
    %v6043 = vunpack.c.l.b16 %v5840
    %v6044 = vunpack.c.h.b16 %v5840
    %v6045 = vunpack.c.l.b16 %v5841
    %v6046 = vunpack.c.h.b16 %v5841
    %v6047 = vunpack.c.l.b16 %v5842
    %v6048 = vunpack.c.h.b16 %v5842
    %v6049 = vunpack.c.l.b16 %v5843
    %v6050 = vunpack.c.l.b16 %v5844
    %v6051 = vunpack.c.h.b16 %v5844
    %v6052 = vunpack.c.l.b16 %v5845
    %v6053 = vunpack.c.h.b16 %v5845
    %v6054 = vunpack.c.l.b16 %v5846
    %v6055 = vunpack.c.h.b16 %v5846
    %v6056 = vunpack.c.l.b16 %v5847
    %v6057 = vunpack.c.h.b16 %v5847
    %v6058 = vunpack.c.l.b16 %v5848
    %v6059 = vunpack.c.h.b16 %v5848
    %v6060 = vunpack.c.l.b16 %v5849
    %v6061 = vunpack.c.h.b16 %v5849
    %v6062 = vunpack.c.l.b16 %v5850
    %v6063 = vunpack.c.h.b16 %v5850
    %v6064 = vunpack.c.l.b16 %v5851
    %v6065 = vunpack.c.h.b16 %v5851
    %v6066 = vunpack.c.l.b16 %v5852
    %v6067 = vunpack.c.h.b16 %v5852
    %v6068 = vunpack.c.l.b16 %v5853
    %v6069 = vunpack.c.h.b16 %v5853
    %v6070 = vunpack.c.l.b16 %v5854
    %v6071 = vunpack.c.h.b16 %v5854
    %v6072 = vunpack.c.l.b16 %v5855
    %v6073 = vunpack.c.h.b16 %v5855
    %v6074 = vunpack.c.l.b16 %v5856
    %v6075 = vunpack.c.l.b16 %v5857
    %v6076 = vunpack.c.h.b16 %v5857
    %v6077 = vunpack.c.l.b16 %v5858
    %v6078 = vunpack.c.h.b16 %v5858
    %v6079 = vunpack.c.l.b16 %v5859
    %v6080 = vunpack.c.h.b16 %v5859
    %v6081 = vunpack.c.l.b16 %v5860
    %v6082 = vunpack.c.h.b16 %v5860
    %v6083 = vunpack.c.l.b16 %v5861
    %v6084 = vunpack.c.h.b16 %v5861
    %v6085 = vunpack.c.l.b16 %v5862
    %v6086 = vunpack.c.h.b16 %v5862
    %v6087 = vunpack.c.l.b16 %v5863
    %v6088 = vunpack.c.h.b16 %v5863
    %v6089 = vunpack.c.l.b16 %v5864
    %v6090 = vunpack.c.h.b16 %v5864
    %v6091 = vunpack.c.l.b16 %v5865
    %v6092 = vunpack.c.h.b16 %v5865
    %v6093 = vunpack.c.l.b16 %v5866
    %v6094 = vunpack.c.h.b16 %v5866
    %v6095 = vunpack.c.l.b16 %v5867
    %v6096 = vunpack.c.h.b16 %v5867
    %v6097 = vunpack.c.l.b16 %v5868
    %v6098 = vunpack.c.h.b16 %v5868
    %v6099 = vunpack.c.l.b16 %v5869
    %v6100 = vunpack.c.l.b16 %v5870
    %v6101 = vunpack.c.h.b16 %v5870
    %v6102 = vunpack.c.l.b16 %v5871
    %v6103 = vunpack.c.h.b16 %v5871
    %v6104 = vunpack.c.l.b16 %v5872
    %v6105 = vunpack.c.h.b16 %v5872
    %v6106 = vunpack.c.l.b16 %v5873
    %v6107 = vunpack.c.h.b16 %v5873
    %v6108 = vunpack.c.l.b16 %v5874
    %v6109 = vunpack.c.h.b16 %v5874
    %v6110 = vunpack.c.l.b16 %v5875
    %v6111 = vunpack.c.h.b16 %v5875
    %v6112 = vunpack.c.l.b16 %v5876
    %v6113 = vunpack.c.h.b16 %v5876
    %v6114 = vunpack.c.l.b16 %v5877
    %v6115 = vunpack.c.h.b16 %v5877
    %v6116 = vunpack.c.l.b16 %v5878
    %v6117 = vunpack.c.h.b16 %v5878
    %v6118 = vunpack.c.l.b16 %v5879
    %v6119 = vunpack.c.h.b16 %v5879
    %v6120 = vunpack.c.l.b16 %v5880
    %v6121 = vunpack.c.h.b16 %v5880
    %v6122 = vunpack.c.l.b16 %v5881
    %v6123 = vunpack.c.h.b16 %v5881
    %v6124 = vunpack.c.l.b16 %v5882
    %v6125 = vunpack.c.l.b16 %v5883
    %v6126 = vunpack.c.h.b16 %v5883
    %v6127 = vunpack.c.l.b16 %v5884
    %v6128 = vunpack.c.h.b16 %v5884
    %v6129 = vunpack.c.l.b16 %v5885
    %v6130 = vunpack.c.h.b16 %v5885
    %v6131 = vunpack.c.l.b16 %v5886
    %v6132 = vunpack.c.h.b16 %v5886
    %v6133 = vunpack.c.l.b16 %v5887
    %v6134 = vunpack.c.h.b16 %v5887
    %v6135 = vunpack.c.l.b16 %v5888
    %v6136 = vunpack.c.h.b16 %v5888
    %v6137 = vunpack.c.l.b16 %v5889
    %v6138 = vunpack.c.h.b16 %v5889
    %v6139 = vunpack.c.l.b16 %v5890
    %v6140 = vunpack.c.h.b16 %v5890
    %v6141 = vunpack.c.l.b16 %v5891
    %v6142 = vunpack.c.h.b16 %v5891
    %v6143 = vunpack.c.l.b16 %v5892
    %v6144 = vunpack.c.h.b16 %v5892
    %v6145 = vunpack.c.l.b16 %v5893
    %v6146 = vunpack.c.h.b16 %v5893
    %v6147 = vunpack.c.l.b16 %v5894
    %v6148 = vunpack.c.h.b16 %v5894
    %v6149 = vunpack.c.l.b16 %v5895
    %v6150 = vunpack.c.l.b16 %v5896
    %v6151 = vunpack.c.h.b16 %v5896
    %v6152 = vunpack.c.l.b16 %v5897
    %v6153 = vunpack.c.h.b16 %v5897
    %v6154 = vunpack.c.l.b16 %v5898
    %v6155 = vunpack.c.h.b16 %v5898
    %v6156 = vunpack.c.l.b16 %v5899
    %v6157 = vunpack.c.h.b16 %v5899
    %v6158 = vunpack.c.l.b16 %v5900
    %v6159 = vunpack.c.h.b16 %v5900
    %v6160 = vunpack.c.l.b16 %v5901
    %v6161 = vunpack.c.h.b16 %v5901
    %v6162 = vunpack.c.l.b16 %v5902
    %v6163 = vunpack.c.h.b16 %v5902
    %v6164 = vunpack.c.l.b16 %v5903
    %v6165 = vunpack.c.h.b16 %v5903
    %v6166 = vunpack.c.l.b16 %v5904
    %v6167 = vunpack.c.h.b16 %v5904
    %v6168 = vunpack.c.l.b16 %v5905
    %v6169 = vunpack.c.h.b16 %v5905
    %v6170 = vunpack.c.l.b16 %v5906
    %v6171 = vunpack.c.h.b16 %v5906
    %v6172 = vunpack.c.l.b16 %v5907
    %v6173 = vunpack.c.h.b16 %v5907
    %v6174 = vunpack.c.l.b16 %v5908
    %v6175 = vpack.c.b16 %v6025, %v6000
    %v6176 = vpack.c.b16 %v6026, %v6001
    %v6177 = vpack.c.b16 %v6027, %v6002
    %v6178 = vpack.c.b16 %v6028, %v6003
    %v6179 = vpack.c.b16 %v6029, %v6004
    %v6180 = vpack.c.b16 %v6030, %v6005
    %v6181 = vpack.c.b16 %v6031, %v6006
    %v6182 = vpack.c.b16 %v6032, %v6007
    %v6183 = vpack.c.b16 %v6033, %v6008
    %v6184 = vpack.c.b16 %v6034, %v6009
    %v6185 = vpack.c.b16 %v6035, %v6010
    %v6186 = vpack.c.b16 %v6036, %v6011
    %v6187 = vpack.c.b16 %v6037, %v6012
    %v6188 = vpack.c.b16 %v6038, %v6013
    %v6189 = vpack.c.b16 %v6039, %v6014
    %v6190 = vpack.c.b16 %v6040, %v6015
    %v6191 = vpack.c.b16 %v6041, %v6016
    %v6192 = vpack.c.b16 %v6042, %v6017
    %v6193 = vpack.c.b16 %v6043, %v6018
    %v6194 = vpack.c.b16 %v6044, %v6019
    %v6195 = vpack.c.b16 %v6045, %v6020
    %v6196 = vpack.c.b16 %v6046, %v6021
    %v6197 = vpack.c.b16 %v6047, %v6022
    %v6198 = vpack.c.b16 %v6048, %v6023
    %v6199 = vpack.c.b16 %v6049, %v6024
    %v6200 = vpack.c.b16 %v6075, %v6050
    %v6201 = vpack.c.b16 %v6076, %v6051
    %v6202 = vpack.c.b16 %v6077, %v6052
    %v6203 = vpack.c.b16 %v6078, %v6053
    %v6204 = vpack.c.b16 %v6079, %v6054
    %v6205 = vpack.c.b16 %v6080, %v6055
    %v6206 = vpack.c.b16 %v6081, %v6056
    %v6207 = vpack.c.b16 %v6082, %v6057
    %v6208 = vpack.c.b16 %v6083, %v6058
    %v6209 = vpack.c.b16 %v6084, %v6059
    %v6210 = vpack.c.b16 %v6085, %v6060
    %v6211 = vpack.c.b16 %v6086, %v6061
    %v6212 = vpack.c.b16 %v6087, %v6062
    %v6213 = vpack.c.b16 %v6088, %v6063
    %v6214 = vpack.c.b16 %v6089, %v6064
    %v6215 = vpack.c.b16 %v6090, %v6065
    %v6216 = vpack.c.b16 %v6091, %v6066
    %v6217 = vpack.c.b16 %v6092, %v6067
    %v6218 = vpack.c.b16 %v6093, %v6068
    %v6219 = vpack.c.b16 %v6094, %v6069
    %v6220 = vpack.c.b16 %v6095, %v6070
    %v6221 = vpack.c.b16 %v6096, %v6071
    %v6222 = vpack.c.b16 %v6097, %v6072
    %v6223 = vpack.c.b16 %v6098, %v6073
    %v6224 = vpack.c.b16 %v6099, %v6074
    %v6225 = vpack.c.b16 %v6125, %v6100
    %v6226 = vpack.c.b16 %v6126, %v6101
    %v6227 = vpack.c.b16 %v6127, %v6102
    %v6228 = vpack.c.b16 %v6128, %v6103
    %v6229 = vpack.c.b16 %v6129, %v6104
    %v6230 = vpack.c.b16 %v6130, %v6105
    %v6231 = vpack.c.b16 %v6131, %v6106
    %v6232 = vpack.c.b16 %v6132, %v6107
    %v6233 = vpack.c.b16 %v6133, %v6108
    %v6234 = vpack.c.b16 %v6134, %v6109
    %v6235 = vpack.c.b16 %v6135, %v6110
    %v6236 = vpack.c.b16 %v6136, %v6111
    %v6237 = vpack.c.b16 %v6137, %v6112
    %v6238 = vpack.c.b16 %v6138, %v6113
    %v6239 = vpack.c.b16 %v6139, %v6114
    %v6240 = vpack.c.b16 %v6140, %v6115
    %v6241 = vpack.c.b16 %v6141, %v6116
    %v6242 = vpack.c.b16 %v6142, %v6117
    %v6243 = vpack.c.b16 %v6143, %v6118
    %v6244 = vpack.c.b16 %v6144, %v6119
    %v6245 = vpack.c.b16 %v6145, %v6120
    %v6246 = vpack.c.b16 %v6146, %v6121
    %v6247 = vpack.c.b16 %v6147, %v6122
    %v6248 = vpack.c.b16 %v6148, %v6123
    %v6249 = vpack.c.b16 %v6149, %v6124
    %v6250 = vpack.c.b16 %v6150, %v6150
    %v6251 = vpack.c.b16 %v6151, %v6151
    %v6252 = vpack.c.b16 %v6152, %v6152
    %v6253 = vpack.c.b16 %v6153, %v6153
    %v6254 = vpack.c.b16 %v6154, %v6154
    %v6255 = vpack.c.b16 %v6155, %v6155
    %v6256 = vpack.c.b16 %v6156, %v6156
    %v6257 = vpack.c.b16 %v6157, %v6157
    %v6258 = vpack.c.b16 %v6158, %v6158
    %v6259 = vpack.c.b16 %v6159, %v6159
    %v6260 = vpack.c.b16 %v6160, %v6160
    %v6261 = vpack.c.b16 %v6161, %v6161
    %v6262 = vpack.c.b16 %v6162, %v6162
    %v6263 = vpack.c.b16 %v6163, %v6163
    %v6264 = vpack.c.b16 %v6164, %v6164
    %v6265 = vpack.c.b16 %v6165, %v6165
    %v6266 = vpack.c.b16 %v6166, %v6166
    %v6267 = vpack.c.b16 %v6167, %v6167
    %v6268 = vpack.c.b16 %v6168, %v6168
    %v6269 = vpack.c.b16 %v6169, %v6169
    %v6270 = vpack.c.b16 %v6170, %v6170
    %v6271 = vpack.c.b16 %v6171, %v6171
    %v6272 = vpack.c.b16 %v6172, %v6172
    %v6273 = vpack.c.b16 %v6173, %v6173
    %v6274 = vpack.c.b16 %v6174, %v6174
    %6375 = vmatprep.subr.bf16.mxu0 0
    %6376 = vmatpush1.bf16.msra.mxu0 %v1791
    %6377 = vmatprep.subr.bf16.mxu0 0
    %6378 = vmatpush1.bf16.msra.mxu0 %v1792
    %6379 = vmatprep.subr.bf16.mxu0 0
    %6380 = vmatpush1.bf16.msra.mxu0 %v1793
    %6381 = vmatprep.subr.bf16.mxu0 0
    %6382 = vmatpush1.bf16.msra.mxu0 %v1794
    %6383 = vmatprep.subr.bf16.mxu0 0
    %6384 = vmatpush1.bf16.msra.mxu0 %v1795
    %6385 = vmatprep.subr.bf16.mxu0 0
    %6386 = vmatpush1.bf16.msra.mxu0 %v1796
    %6387 = vmatprep.subr.bf16.mxu0 0
    %6388 = vmatpush1.bf16.msra.mxu0 %v1797
    %6389 = vmatprep.subr.bf16.mxu0 0
    %6390 = vmatpush1.bf16.msra.mxu0 %v1798
    %6391 = vmatprep.subr.bf16.mxu0 0
    %6392 = vmatpush1.bf16.msra.mxu0 %v1799
    %6393 = vmatprep.subr.bf16.mxu0 0
    %6394 = vmatpush1.bf16.msra.mxu0 %v1800
    %6395 = vmatprep.subr.bf16.mxu0 0
    %6396 = vmatpush1.bf16.msra.mxu0 %v1801
    %6397 = vmatprep.subr.bf16.mxu0 0
    %6398 = vmatpush1.bf16.msra.mxu0 %v1802
    %6399 = vmatprep.subr.bf16.mxu0 0
    %6400 = vmatpush1.bf16.msra.mxu0 %v1803
    %6401 = vmatprep.subr.bf16.mxu0 0
    %6402 = vmatpush1.bf16.msra.mxu0 %v1804
    %6403 = vmatprep.subr.bf16.mxu0 0
    %6404 = vmatpush1.bf16.msra.mxu0 %v1805
    %6405 = vmatprep.subr.bf16.mxu0 0
    %6406 = vmatpush1.bf16.msra.mxu0 %v1806
    %6407 = vmatprep.mubr.bf16.mxu0 %v6176
    %6408 = vmatmul.mubr.bf16.gmra.mrb[0].mxu0 %v6175
    %v6409 = vpop.f32.mrb[0].mxu0
    %v6410 = vadd.f32 0.0, %v6409
    %v6411 = vpop.f32.mrb[0].mxu0
    %v6412 = vpop.f32.mrb[0].mxu0
    %v6413 = vadd.f32 0.0, %v6412
    %v6414 = vpop.f32.mrb[0].mxu0
    %6415 = vmatprep.mubr.bf16.mxu0 %v6201
    %6416 = vmatmul.mubr.bf16.gmra.mrb[0].mxu0 %v6200
    %v6417 = vpop.f32.mrb[0].mxu0
    %v6418 = vadd.f32 0.0, %v6417
    %v6419 = vpop.f32.mrb[0].mxu0
    %v6420 = vpop.f32.mrb[0].mxu0
    %v6421 = vadd.f32 0.0, %v6420
    %v6422 = vpop.f32.mrb[0].mxu0
    %6423 = vmatprep.mubr.bf16.mxu0 %v6226
    %6424 = vmatmul.mubr.bf16.gmra.mrb[0].mxu0 %v6225
    %v6425 = vpop.f32.mrb[0].mxu0
    %v6426 = vadd.f32 0.0, %v6425
    %v6427 = vpop.f32.mrb[0].mxu0
    %v6428 = vpop.f32.mrb[0].mxu0
    %v6429 = vadd.f32 0.0, %v6428
    %v6430 = vpop.f32.mrb[0].mxu0
    %6431 = vmatprep.mubr.bf16.mxu0 %v6251
    %6432 = vmatmul.mubr.bf16.gmra.mrb[0].mxu0 %v6250
    %v6433 = vpop.f32.mrb[0].mxu0
    %v6434 = vadd.f32 0.0, %v6433
    %v6435 = vpop.f32.mrb[0].mxu0
    %v6436 = vpop.f32.mrb[0].mxu0
    %v6437 = vpop.f32.mrb[0].mxu0
    %6438 = vdwg.mxu0
    %6439 = vmatprep.subr.bf16.mxu0 0
    %6440 = vmatpush1.bf16.msra.mxu0 %v1807
    %6441 = vmatprep.subr.bf16.mxu0 0
    %6442 = vmatpush1.bf16.msra.mxu0 %v1808
    %6443 = vmatprep.subr.bf16.mxu0 0
    %6444 = vmatpush1.bf16.msra.mxu0 %v1809
    %6445 = vmatprep.subr.bf16.mxu0 0
    %6446 = vmatpush1.bf16.msra.mxu0 %v1810
    %6447 = vmatprep.subr.bf16.mxu0 0
    %6448 = vmatpush1.bf16.msra.mxu0 %v1811
    %6449 = vmatprep.subr.bf16.mxu0 0
    %6450 = vmatpush1.bf16.msra.mxu0 %v1812
    %6451 = vmatprep.subr.bf16.mxu0 0
    %6452 = vmatpush1.bf16.msra.mxu0 %v1813
    %6453 = vmatprep.subr.bf16.mxu0 0
    %6454 = vmatpush1.bf16.msra.mxu0 %v1814
    %6455 = vmatprep.subr.bf16.mxu0 0
    %6456 = vmatpush1.bf16.msra.mxu0 %v1815
    %6457 = vmatprep.subr.bf16.mxu0 0
    %6458 = vmatpush1.bf16.msra.mxu0 %v1816
    %6459 = vmatprep.subr.bf16.mxu0 0
    %6460 = vmatpush1.bf16.msra.mxu0 %v1817
    %6461 = vmatprep.subr.bf16.mxu0 0
    %6462 = vmatpush1.bf16.msra.mxu0 %v1818
    %6463 = vmatprep.subr.bf16.mxu0 0
    %6464 = vmatpush1.bf16.msra.mxu0 %v1819
    %6465 = vmatprep.subr.bf16.mxu0 0
    %6466 = vmatpush1.bf16.msra.mxu0 %v1820
    %6467 = vmatprep.subr.bf16.mxu0 0
    %6468 = vmatpush1.bf16.msra.mxu0 %v1821
    %6469 = vmatprep.subr.bf16.mxu0 0
    %6470 = vmatpush1.bf16.msra.mxu0 %v1822
    %6471 = vmatprep.mubr.bf16.mxu0 %v6178
    %6472 = vmatmul.mubr.bf16.gmra.mrb[0].mxu0 %v6177
    %v6473 = vpop.f32.mrb[0].mxu0
    %v6474 = vadd.f32 %v6410, %v6473
    %v6475 = vpop.f32.mrb[0].mxu0
    %v6476 = vpop.f32.mrb[0].mxu0
    %v6477 = vadd.f32 %v6413, %v6476
    %v6478 = vpop.f32.mrb[0].mxu0
    %6479 = vmatprep.mubr.bf16.mxu0 %v6203
    %6480 = vmatmul.mubr.bf16.gmra.mrb[0].mxu0 %v6202
    %v6481 = vpop.f32.mrb[0].mxu0
    %v6482 = vadd.f32 %v6418, %v6481
    %v6483 = vpop.f32.mrb[0].mxu0
    %v6484 = vpop.f32.mrb[0].mxu0
    %v6485 = vadd.f32 %v6421, %v6484
    %v6486 = vpop.f32.mrb[0].mxu0
    %6487 = vmatprep.mubr.bf16.mxu0 %v6228
    %6488 = vmatmul.mubr.bf16.gmra.mrb[0].mxu0 %v6227
    %v6489 = vpop.f32.mrb[0].mxu0
    %v6490 = vadd.f32 %v6426, %v6489
    %v6491 = vpop.f32.mrb[0].mxu0
    %v6492 = vpop.f32.mrb[0].mxu0
    %v6493 = vadd.f32 %v6429, %v6492
    %v6494 = vpop.f32.mrb[0].mxu0
    %6495 = vmatprep.mubr.bf16.mxu0 %v6253
    %6496 = vmatmul.mubr.bf16.gmra.mrb[0].mxu0 %v6252
    %v6497 = vpop.f32.mrb[0].mxu0
    %v6498 = vadd.f32 %v6434, %v6497
    %v6499 = vpop.f32.mrb[0].mxu0
    %v6500 = vpop.f32.mrb[0].mxu0
    %v6501 = vpop.f32.mrb[0].mxu0
    %6502 = vdwg.mxu0
    %6503 = vmatprep.subr.bf16.mxu0 0
    %6504 = vmatpush1.bf16.msra.mxu0 %v1823
    %6505 = vmatprep.subr.bf16.mxu0 0
    %6506 = vmatpush1.bf16.msra.mxu0 %v1824
    %6507 = vmatprep.subr.bf16.mxu0 0
    %6508 = vmatpush1.bf16.msra.mxu0 %v1825
    %6509 = vmatprep.subr.bf16.mxu0 0
    %6510 = vmatpush1.bf16.msra.mxu0 %v1826
    %6511 = vmatprep.subr.bf16.mxu0 0
    %6512 = vmatpush1.bf16.msra.mxu0 %v1827
    %6513 = vmatprep.subr.bf16.mxu0 0
    %6514 = vmatpush1.bf16.msra.mxu0 %v1828
    %6515 = vmatprep.subr.bf16.mxu0 0
    %6516 = vmatpush1.bf16.msra.mxu0 %v1829
    %6517 = vmatprep.subr.bf16.mxu0 0
    %6518 = vmatpush1.bf16.msra.mxu0 %v1830
    %6519 = vmatprep.subr.bf16.mxu0 0
    %6520 = vmatpush1.bf16.msra.mxu0 %v1831
    %6521 = vmatprep.subr.bf16.mxu0 0
    %6522 = vmatpush1.bf16.msra.mxu0 %v1832
    %6523 = vmatprep.subr.bf16.mxu0 0
    %6524 = vmatpush1.bf16.msra.mxu0 %v1833
    %6525 = vmatprep.subr.bf16.mxu0 0
    %6526 = vmatpush1.bf16.msra.mxu0 %v1834
    %6527 = vmatprep.subr.bf16.mxu0 0
    %6528 = vmatpush1.bf16.msra.mxu0 %v1835
    %6529 = vmatprep.subr.bf16.mxu0 0
    %6530 = vmatpush1.bf16.msra.mxu0 %v1836
    %6531 = vmatprep.subr.bf16.mxu0 0
    %6532 = vmatpush1.bf16.msra.mxu0 %v1837
    %6533 = vmatprep.subr.bf16.mxu0 0
    %6534 = vmatpush1.bf16.msra.mxu0 %v1838
    %6535 = vmatprep.mubr.bf16.mxu0 %v6180
    %6536 = vmatmul.mubr.bf16.gmra.mrb[0].mxu0 %v6179
    %v6537 = vpop.f32.mrb[0].mxu0
    %v6538 = vadd.f32 %v6474, %v6537
    %v6539 = vpop.f32.mrb[0].mxu0
    %v6540 = vpop.f32.mrb[0].mxu0
    %v6541 = vadd.f32 %v6477, %v6540
    %v6542 = vpop.f32.mrb[0].mxu0
    %6543 = vmatprep.mubr.bf16.mxu0 %v6205
    %6544 = vmatmul.mubr.bf16.gmra.mrb[0].mxu0 %v6204
    %v6545 = vpop.f32.mrb[0].mxu0
    %v6546 = vadd.f32 %v6482, %v6545
    %v6547 = vpop.f32.mrb[0].mxu0
    %v6548 = vpop.f32.mrb[0].mxu0
    %v6549 = vadd.f32 %v6485, %v6548
    %v6550 = vpop.f32.mrb[0].mxu0
    %6551 = vmatprep.mubr.bf16.mxu0 %v6230
    %6552 = vmatmul.mubr.bf16.gmra.mrb[0].mxu0 %v6229
    %v6553 = vpop.f32.mrb[0].mxu0
    %v6554 = vadd.f32 %v6490, %v6553
    %v6555 = vpop.f32.mrb[0].mxu0
    %v6556 = vpop.f32.mrb[0].mxu0
    %v6557 = vadd.f32 %v6493, %v6556
    %v6558 = vpop.f32.mrb[0].mxu0
    %6559 = vmatprep.mubr.bf16.mxu0 %v6255
    %6560 = vmatmul.mubr.bf16.gmra.mrb[0].mxu0 %v6254
    %v6561 = vpop.f32.mrb[0].mxu0
    %v6562 = vadd.f32 %v6498, %v6561
    %v6563 = vpop.f32.mrb[0].mxu0
    %v6564 = vpop.f32.mrb[0].mxu0
    %v6565 = vpop.f32.mrb[0].mxu0
    %6566 = vdwg.mxu0
    %6567 = vmatprep.subr.bf16.mxu0 0
    %6568 = vmatpush1.bf16.msra.mxu0 %v1839
    %6569 = vmatprep.subr.bf16.mxu0 0
    %6570 = vmatpush1.bf16.msra.mxu0 %v1840
    %6571 = vmatprep.subr.bf16.mxu0 0
    %6572 = vmatpush1.bf16.msra.mxu0 %v1841
    %6573 = vmatprep.subr.bf16.mxu0 0
    %6574 = vmatpush1.bf16.msra.mxu0 %v1842
    %6575 = vmatprep.subr.bf16.mxu0 0
    %6576 = vmatpush1.bf16.msra.mxu0 %v1843
    %6577 = vmatprep.subr.bf16.mxu0 0
    %6578 = vmatpush1.bf16.msra.mxu0 %v1844
    %6579 = vmatprep.subr.bf16.mxu0 0
    %6580 = vmatpush1.bf16.msra.mxu0 %v1845
    %6581 = vmatprep.subr.bf16.mxu0 0
    %6582 = vmatpush1.bf16.msra.mxu0 %v1846
    %6583 = vmatprep.subr.bf16.mxu0 0
    %6584 = vmatpush1.bf16.msra.mxu0 %v1847
    %6585 = vmatprep.subr.bf16.mxu0 0
    %6586 = vmatpush1.bf16.msra.mxu0 %v1848
    %6587 = vmatprep.subr.bf16.mxu0 0
    %6588 = vmatpush1.bf16.msra.mxu0 %v1849
    %6589 = vmatprep.subr.bf16.mxu0 0
    %6590 = vmatpush1.bf16.msra.mxu0 %v1850
    %6591 = vmatprep.subr.bf16.mxu0 0
    %6592 = vmatpush1.bf16.msra.mxu0 %v1851
    %6593 = vmatprep.subr.bf16.mxu0 0
    %6594 = vmatpush1.bf16.msra.mxu0 %v1852
    %6595 = vmatprep.subr.bf16.mxu0 0
    %6596 = vmatpush1.bf16.msra.mxu0 %v1853
    %6597 = vmatprep.subr.bf16.mxu0 0
    %6598 = vmatpush1.bf16.msra.mxu0 %v1854
    %6599 = vmatprep.mubr.bf16.mxu0 %v6182
    %6600 = vmatmul.mubr.bf16.gmra.mrb[0].mxu0 %v6181
    %v6601 = vpop.f32.mrb[0].mxu0
    %v6602 = vadd.f32 %v6538, %v6601
    %v6603 = vpop.f32.mrb[0].mxu0
    %v6604 = vpop.f32.mrb[0].mxu0
    %v6605 = vadd.f32 %v6541, %v6604
    %v6606 = vpop.f32.mrb[0].mxu0
    %6607 = vmatprep.mubr.bf16.mxu0 %v6207
    %6608 = vmatmul.mubr.bf16.gmra.mrb[0].mxu0 %v6206
    %v6609 = vpop.f32.mrb[0].mxu0
    %v6610 = vadd.f32 %v6546, %v6609
    %v6611 = vpop.f32.mrb[0].mxu0
    %v6612 = vpop.f32.mrb[0].mxu0
    %v6613 = vadd.f32 %v6549, %v6612
    %v6614 = vpop.f32.mrb[0].mxu0
    %6615 = vmatprep.mubr.bf16.mxu0 %v6232
    %6616 = vmatmul.mubr.bf16.gmra.mrb[0].mxu0 %v6231
    %v6617 = vpop.f32.mrb[0].mxu0
    %v6618 = vadd.f32 %v6554, %v6617
    %v6619 = vpop.f32.mrb[0].mxu0
    %v6620 = vpop.f32.mrb[0].mxu0
    %v6621 = vadd.f32 %v6557, %v6620
    %v6622 = vpop.f32.mrb[0].mxu0
    %6623 = vmatprep.mubr.bf16.mxu0 %v6257
    %6624 = vmatmul.mubr.bf16.gmra.mrb[0].mxu0 %v6256
    %v6625 = vpop.f32.mrb[0].mxu0
    %v6626 = vadd.f32 %v6562, %v6625
    %v6627 = vpop.f32.mrb[0].mxu0
    %v6628 = vpop.f32.mrb[0].mxu0
    %v6629 = vpop.f32.mrb[0].mxu0
    %6630 = vdwg.mxu0
    %6631 = vmatprep.subr.bf16.mxu0 0
    %6632 = vmatpush1.bf16.msra.mxu0 %v1855
    %6633 = vmatprep.subr.bf16.mxu0 0
    %6634 = vmatpush1.bf16.msra.mxu0 %v1856
    %6635 = vmatprep.subr.bf16.mxu0 0
    %6636 = vmatpush1.bf16.msra.mxu0 %v1857
    %6637 = vmatprep.subr.bf16.mxu0 0
    %6638 = vmatpush1.bf16.msra.mxu0 %v1858
    %6639 = vmatprep.subr.bf16.mxu0 0
    %6640 = vmatpush1.bf16.msra.mxu0 %v1859
    %6641 = vmatprep.subr.bf16.mxu0 0
    %6642 = vmatpush1.bf16.msra.mxu0 %v1860
    %6643 = vmatprep.subr.bf16.mxu0 0
    %6644 = vmatpush1.bf16.msra.mxu0 %v1861
    %6645 = vmatprep.subr.bf16.mxu0 0
    %6646 = vmatpush1.bf16.msra.mxu0 %v1862
    %6647 = vmatprep.subr.bf16.mxu0 0
    %6648 = vmatpush1.bf16.msra.mxu0 %v1863
    %6649 = vmatprep.subr.bf16.mxu0 0
    %6650 = vmatpush1.bf16.msra.mxu0 %v1864
    %6651 = vmatprep.subr.bf16.mxu0 0
    %6652 = vmatpush1.bf16.msra.mxu0 %v1865
    %6653 = vmatprep.subr.bf16.mxu0 0
    %6654 = vmatpush1.bf16.msra.mxu0 %v1866
    %6655 = vmatprep.subr.bf16.mxu0 0
    %6656 = vmatpush1.bf16.msra.mxu0 %v1867
    %6657 = vmatprep.subr.bf16.mxu0 0
    %6658 = vmatpush1.bf16.msra.mxu0 %v1868
    %6659 = vmatprep.subr.bf16.mxu0 0
    %6660 = vmatpush1.bf16.msra.mxu0 %v1869
    %6661 = vmatprep.subr.bf16.mxu0 0
    %6662 = vmatpush1.bf16.msra.mxu0 %v1870
    %6663 = vmatprep.mubr.bf16.mxu0 %v6184
    %6664 = vmatmul.mubr.bf16.gmra.mrb[0].mxu0 %v6183
    %v6665 = vpop.f32.mrb[0].mxu0
    %v6666 = vadd.f32 %v6602, %v6665
    %v6667 = vpop.f32.mrb[0].mxu0
    %v6668 = vpop.f32.mrb[0].mxu0
    %v6669 = vadd.f32 %v6605, %v6668
    %v6670 = vpop.f32.mrb[0].mxu0
    %6671 = vmatprep.mubr.bf16.mxu0 %v6209
    %6672 = vmatmul.mubr.bf16.gmra.mrb[0].mxu0 %v6208
    %v6673 = vpop.f32.mrb[0].mxu0
    %v6674 = vadd.f32 %v6610, %v6673
    %v6675 = vpop.f32.mrb[0].mxu0
    %v6676 = vpop.f32.mrb[0].mxu0
    %v6677 = vadd.f32 %v6613, %v6676
    %v6678 = vpop.f32.mrb[0].mxu0
    %6679 = vmatprep.mubr.bf16.mxu0 %v6234
    %6680 = vmatmul.mubr.bf16.gmra.mrb[0].mxu0 %v6233
    %v6681 = vpop.f32.mrb[0].mxu0
    %v6682 = vadd.f32 %v6618, %v6681
    %v6683 = vpop.f32.mrb[0].mxu0
    %v6684 = vpop.f32.mrb[0].mxu0
    %v6685 = vadd.f32 %v6621, %v6684
    %v6686 = vpop.f32.mrb[0].mxu0
    %6687 = vmatprep.mubr.bf16.mxu0 %v6259
    %6688 = vmatmul.mubr.bf16.gmra.mrb[0].mxu0 %v6258
    %v6689 = vpop.f32.mrb[0].mxu0
    %v6690 = vadd.f32 %v6626, %v6689
    %v6691 = vpop.f32.mrb[0].mxu0
    %v6692 = vpop.f32.mrb[0].mxu0
    %v6693 = vpop.f32.mrb[0].mxu0
    %6694 = vdwg.mxu0
    %6695 = vmatprep.subr.bf16.mxu0 0
    %6696 = vmatpush1.bf16.msra.mxu0 %v1871
    %6697 = vmatprep.subr.bf16.mxu0 0
    %6698 = vmatpush1.bf16.msra.mxu0 %v1872
    %6699 = vmatprep.subr.bf16.mxu0 0
    %6700 = vmatpush1.bf16.msra.mxu0 %v1873
    %6701 = vmatprep.subr.bf16.mxu0 0
    %6702 = vmatpush1.bf16.msra.mxu0 %v1874
    %6703 = vmatprep.subr.bf16.mxu0 0
    %6704 = vmatpush1.bf16.msra.mxu0 %v1875
    %6705 = vmatprep.subr.bf16.mxu0 0
    %6706 = vmatpush1.bf16.msra.mxu0 %v1876
    %6707 = vmatprep.subr.bf16.mxu0 0
    %6708 = vmatpush1.bf16.msra.mxu0 %v1877
    %6709 = vmatprep.subr.bf16.mxu0 0
    %6710 = vmatpush1.bf16.msra.mxu0 %v1878
    %6711 = vmatprep.subr.bf16.mxu0 0
    %6712 = vmatpush1.bf16.msra.mxu0 %v1879
    %6713 = vmatprep.subr.bf16.mxu0 0
    %6714 = vmatpush1.bf16.msra.mxu0 %v1880
    %6715 = vmatprep.subr.bf16.mxu0 0
    %6716 = vmatpush1.bf16.msra.mxu0 %v1881
    %6717 = vmatprep.subr.bf16.mxu0 0
    %6718 = vmatpush1.bf16.msra.mxu0 %v1882
    %6719 = vmatprep.subr.bf16.mxu0 0
    %6720 = vmatpush1.bf16.msra.mxu0 %v1883
    %6721 = vmatprep.subr.bf16.mxu0 0
    %6722 = vmatpush1.bf16.msra.mxu0 %v1884
    %6723 = vmatprep.subr.bf16.mxu0 0
    %6724 = vmatpush1.bf16.msra.mxu0 %v1885
    %6725 = vmatprep.subr.bf16.mxu0 0
    %6726 = vmatpush1.bf16.msra.mxu0 %v1886
    %6727 = vmatprep.mubr.bf16.mxu0 %v6186
    %6728 = vmatmul.mubr.bf16.gmra.mrb[0].mxu0 %v6185
    %v6729 = vpop.f32.mrb[0].mxu0
    %v6730 = vadd.f32 %v6666, %v6729
    %v6731 = vpop.f32.mrb[0].mxu0
    %v6732 = vpop.f32.mrb[0].mxu0
    %v6733 = vadd.f32 %v6669, %v6732
    %v6734 = vpop.f32.mrb[0].mxu0
    %6735 = vmatprep.mubr.bf16.mxu0 %v6211
    %6736 = vmatmul.mubr.bf16.gmra.mrb[0].mxu0 %v6210
    %v6737 = vpop.f32.mrb[0].mxu0
    %v6738 = vadd.f32 %v6674, %v6737
    %v6739 = vpop.f32.mrb[0].mxu0
    %v6740 = vpop.f32.mrb[0].mxu0
    %v6741 = vadd.f32 %v6677, %v6740
    %v6742 = vpop.f32.mrb[0].mxu0
    %6743 = vmatprep.mubr.bf16.mxu0 %v6236
    %6744 = vmatmul.mubr.bf16.gmra.mrb[0].mxu0 %v6235
    %v6745 = vpop.f32.mrb[0].mxu0
    %v6746 = vadd.f32 %v6682, %v6745
    %v6747 = vpop.f32.mrb[0].mxu0
    %v6748 = vpop.f32.mrb[0].mxu0
    %v6749 = vadd.f32 %v6685, %v6748
    %v6750 = vpop.f32.mrb[0].mxu0
    %6751 = vmatprep.mubr.bf16.mxu0 %v6261
    %6752 = vmatmul.mubr.bf16.gmra.mrb[0].mxu0 %v6260
    %v6753 = vpop.f32.mrb[0].mxu0
    %v6754 = vadd.f32 %v6690, %v6753
    %v6755 = vpop.f32.mrb[0].mxu0
    %v6756 = vpop.f32.mrb[0].mxu0
    %v6757 = vpop.f32.mrb[0].mxu0
    %6758 = vdwg.mxu0
    %6759 = vmatprep.subr.bf16.mxu0 0
    %6760 = vmatpush1.bf16.msra.mxu0 %v1887
    %6761 = vmatprep.subr.bf16.mxu0 0
    %6762 = vmatpush1.bf16.msra.mxu0 %v1888
    %6763 = vmatprep.subr.bf16.mxu0 0
    %6764 = vmatpush1.bf16.msra.mxu0 %v1889
    %6765 = vmatprep.subr.bf16.mxu0 0
    %6766 = vmatpush1.bf16.msra.mxu0 %v1890
    %6767 = vmatprep.subr.bf16.mxu0 0
    %6768 = vmatpush1.bf16.msra.mxu0 %v1891
    %6769 = vmatprep.subr.bf16.mxu0 0
    %6770 = vmatpush1.bf16.msra.mxu0 %v1892
    %6771 = vmatprep.subr.bf16.mxu0 0
    %6772 = vmatpush1.bf16.msra.mxu0 %v1893
    %6773 = vmatprep.subr.bf16.mxu0 0
    %6774 = vmatpush1.bf16.msra.mxu0 %v1894
    %6775 = vmatprep.subr.bf16.mxu0 0
    %6776 = vmatpush1.bf16.msra.mxu0 %v1895
    %6777 = vmatprep.subr.bf16.mxu0 0
    %6778 = vmatpush1.bf16.msra.mxu0 %v1896
    %6779 = vmatprep.subr.bf16.mxu0 0
    %6780 = vmatpush1.bf16.msra.mxu0 %v1897
    %6781 = vmatprep.subr.bf16.mxu0 0
    %6782 = vmatpush1.bf16.msra.mxu0 %v1898
    %6783 = vmatprep.subr.bf16.mxu0 0
    %6784 = vmatpush1.bf16.msra.mxu0 %v1899
    %6785 = vmatprep.subr.bf16.mxu0 0
    %6786 = vmatpush1.bf16.msra.mxu0 %v1900
    %6787 = vmatprep.subr.bf16.mxu0 0
    %6788 = vmatpush1.bf16.msra.mxu0 %v1901
    %6789 = vmatprep.subr.bf16.mxu0 0
    %6790 = vmatpush1.bf16.msra.mxu0 %v1902
    %6791 = vmatprep.mubr.bf16.mxu0 %v6188
    %6792 = vmatmul.mubr.bf16.gmra.mrb[0].mxu0 %v6187
    %v6793 = vpop.f32.mrb[0].mxu0
    %v6794 = vadd.f32 %v6730, %v6793
    %v6795 = vpop.f32.mrb[0].mxu0
    %v6796 = vpop.f32.mrb[0].mxu0
    %v6797 = vadd.f32 %v6733, %v6796
    %v6798 = vpop.f32.mrb[0].mxu0
    %6799 = vmatprep.mubr.bf16.mxu0 %v6213
    %6800 = vmatmul.mubr.bf16.gmra.mrb[0].mxu0 %v6212
    %v6801 = vpop.f32.mrb[0].mxu0
    %v6802 = vadd.f32 %v6738, %v6801
    %v6803 = vpop.f32.mrb[0].mxu0
    %v6804 = vpop.f32.mrb[0].mxu0
    %v6805 = vadd.f32 %v6741, %v6804
    %v6806 = vpop.f32.mrb[0].mxu0
    %6807 = vmatprep.mubr.bf16.mxu0 %v6238
    %6808 = vmatmul.mubr.bf16.gmra.mrb[0].mxu0 %v6237
    %v6809 = vpop.f32.mrb[0].mxu0
    %v6810 = vadd.f32 %v6746, %v6809
    %v6811 = vpop.f32.mrb[0].mxu0
    %v6812 = vpop.f32.mrb[0].mxu0
    %v6813 = vadd.f32 %v6749, %v6812
    %v6814 = vpop.f32.mrb[0].mxu0
    %6815 = vmatprep.mubr.bf16.mxu0 %v6263
    %6816 = vmatmul.mubr.bf16.gmra.mrb[0].mxu0 %v6262
    %v6817 = vpop.f32.mrb[0].mxu0
    %v6818 = vadd.f32 %v6754, %v6817
    %v6819 = vpop.f32.mrb[0].mxu0
    %v6820 = vpop.f32.mrb[0].mxu0
    %v6821 = vpop.f32.mrb[0].mxu0
    %6822 = vdwg.mxu0
    %6823 = vmatprep.subr.bf16.mxu0 0
    %6824 = vmatpush1.bf16.msra.mxu0 %v1903
    %6825 = vmatprep.subr.bf16.mxu0 0
    %6826 = vmatpush1.bf16.msra.mxu0 %v1904
    %6827 = vmatprep.subr.bf16.mxu0 0
    %6828 = vmatpush1.bf16.msra.mxu0 %v1905
    %6829 = vmatprep.subr.bf16.mxu0 0
    %6830 = vmatpush1.bf16.msra.mxu0 %v1906
    %6831 = vmatprep.subr.bf16.mxu0 0
    %6832 = vmatpush1.bf16.msra.mxu0 %v1907
    %6833 = vmatprep.subr.bf16.mxu0 0
    %6834 = vmatpush1.bf16.msra.mxu0 %v1908
    %6835 = vmatprep.subr.bf16.mxu0 0
    %6836 = vmatpush1.bf16.msra.mxu0 %v1909
    %6837 = vmatprep.subr.bf16.mxu0 0
    %6838 = vmatpush1.bf16.msra.mxu0 %v1910
    %6839 = vmatprep.subr.bf16.mxu0 0
    %6840 = vmatpush1.bf16.msra.mxu0 %v1911
    %6841 = vmatprep.subr.bf16.mxu0 0
    %6842 = vmatpush1.bf16.msra.mxu0 %v1912
    %6843 = vmatprep.subr.bf16.mxu0 0
    %6844 = vmatpush1.bf16.msra.mxu0 %v1913
    %6845 = vmatprep.subr.bf16.mxu0 0
    %6846 = vmatpush1.bf16.msra.mxu0 %v1914
    %6847 = vmatprep.subr.bf16.mxu0 0
    %6848 = vmatpush1.bf16.msra.mxu0 %v1915
    %6849 = vmatprep.subr.bf16.mxu0 0
    %6850 = vmatpush1.bf16.msra.mxu0 %v1916
    %6851 = vmatprep.subr.bf16.mxu0 0
    %6852 = vmatpush1.bf16.msra.mxu0 %v1917
    %6853 = vmatprep.subr.bf16.mxu0 0
    %6854 = vmatpush1.bf16.msra.mxu0 %v1918
    %6855 = vmatprep.mubr.bf16.mxu0 %v6190
    %6856 = vmatmul.mubr.bf16.gmra.mrb[0].mxu0 %v6189
    %v6857 = vpop.f32.mrb[0].mxu0
    %v6858 = vadd.f32 %v6794, %v6857
    %v6859 = vpop.f32.mrb[0].mxu0
    %v6860 = vpop.f32.mrb[0].mxu0
    %v6861 = vadd.f32 %v6797, %v6860
    %v6862 = vpop.f32.mrb[0].mxu0
    %6863 = vmatprep.mubr.bf16.mxu0 %v6215
    %6864 = vmatmul.mubr.bf16.gmra.mrb[0].mxu0 %v6214
    %v6865 = vpop.f32.mrb[0].mxu0
    %v6866 = vadd.f32 %v6802, %v6865
    %v6867 = vpop.f32.mrb[0].mxu0
    %v6868 = vpop.f32.mrb[0].mxu0
    %v6869 = vadd.f32 %v6805, %v6868
    %v6870 = vpop.f32.mrb[0].mxu0
    %6871 = vmatprep.mubr.bf16.mxu0 %v6240
    %6872 = vmatmul.mubr.bf16.gmra.mrb[0].mxu0 %v6239
    %v6873 = vpop.f32.mrb[0].mxu0
    %v6874 = vadd.f32 %v6810, %v6873
    %v6875 = vpop.f32.mrb[0].mxu0
    %v6876 = vpop.f32.mrb[0].mxu0
    %v6877 = vadd.f32 %v6813, %v6876
    %v6878 = vpop.f32.mrb[0].mxu0
    %6879 = vmatprep.mubr.bf16.mxu0 %v6265
    %6880 = vmatmul.mubr.bf16.gmra.mrb[0].mxu0 %v6264
    %v6881 = vpop.f32.mrb[0].mxu0
    %v6882 = vadd.f32 %v6818, %v6881
    %v6883 = vpop.f32.mrb[0].mxu0
    %v6884 = vpop.f32.mrb[0].mxu0
    %v6885 = vpop.f32.mrb[0].mxu0
    %6886 = vdwg.mxu0
    %6887 = vmatprep.subr.bf16.mxu0 0
    %6888 = vmatpush1.bf16.msra.mxu0 %v1919
    %6889 = vmatprep.subr.bf16.mxu0 0
    %6890 = vmatpush1.bf16.msra.mxu0 %v1920
    %6891 = vmatprep.subr.bf16.mxu0 0
    %6892 = vmatpush1.bf16.msra.mxu0 %v1921
    %6893 = vmatprep.subr.bf16.mxu0 0
    %6894 = vmatpush1.bf16.msra.mxu0 %v1922
    %6895 = vmatprep.subr.bf16.mxu0 0
    %6896 = vmatpush1.bf16.msra.mxu0 %v1923
    %6897 = vmatprep.subr.bf16.mxu0 0
    %6898 = vmatpush1.bf16.msra.mxu0 %v1924
    %6899 = vmatprep.subr.bf16.mxu0 0
    %6900 = vmatpush1.bf16.msra.mxu0 %v1925
    %6901 = vmatprep.subr.bf16.mxu0 0
    %6902 = vmatpush1.bf16.msra.mxu0 %v1926
    %6903 = vmatprep.subr.bf16.mxu0 0
    %6904 = vmatpush1.bf16.msra.mxu0 %v1927
    %6905 = vmatprep.subr.bf16.mxu0 0
    %6906 = vmatpush1.bf16.msra.mxu0 %v1928
    %6907 = vmatprep.subr.bf16.mxu0 0
    %6908 = vmatpush1.bf16.msra.mxu0 %v1929
    %6909 = vmatprep.subr.bf16.mxu0 0
    %6910 = vmatpush1.bf16.msra.mxu0 %v1930
    %6911 = vmatprep.subr.bf16.mxu0 0
    %6912 = vmatpush1.bf16.msra.mxu0 %v1931
    %6913 = vmatprep.subr.bf16.mxu0 0
    %6914 = vmatpush1.bf16.msra.mxu0 %v1932
    %6915 = vmatprep.subr.bf16.mxu0 0
    %6916 = vmatpush1.bf16.msra.mxu0 %v1933
    %6917 = vmatprep.subr.bf16.mxu0 0
    %6918 = vmatpush1.bf16.msra.mxu0 %v1934
    %6919 = vmatprep.mubr.bf16.mxu0 %v6192
    %6920 = vmatmul.mubr.bf16.gmra.mrb[0].mxu0 %v6191
    %v6921 = vpop.f32.mrb[0].mxu0
    %v6922 = vadd.f32 %v6858, %v6921
    %v6923 = vpop.f32.mrb[0].mxu0
    %v6924 = vpop.f32.mrb[0].mxu0
    %v6925 = vadd.f32 %v6861, %v6924
    %v6926 = vpop.f32.mrb[0].mxu0
    %6927 = vmatprep.mubr.bf16.mxu0 %v6217
    %6928 = vmatmul.mubr.bf16.gmra.mrb[0].mxu0 %v6216
    %v6929 = vpop.f32.mrb[0].mxu0
    %v6930 = vadd.f32 %v6866, %v6929
    %v6931 = vpop.f32.mrb[0].mxu0
    %v6932 = vpop.f32.mrb[0].mxu0
    %v6933 = vadd.f32 %v6869, %v6932
    %v6934 = vpop.f32.mrb[0].mxu0
    %6935 = vmatprep.mubr.bf16.mxu0 %v6242
    %6936 = vmatmul.mubr.bf16.gmra.mrb[0].mxu0 %v6241
    %v6937 = vpop.f32.mrb[0].mxu0
    %v6938 = vadd.f32 %v6874, %v6937
    %v6939 = vpop.f32.mrb[0].mxu0
    %v6940 = vpop.f32.mrb[0].mxu0
    %v6941 = vadd.f32 %v6877, %v6940
    %v6942 = vpop.f32.mrb[0].mxu0
    %6943 = vmatprep.mubr.bf16.mxu0 %v6267
    %6944 = vmatmul.mubr.bf16.gmra.mrb[0].mxu0 %v6266
    %v6945 = vpop.f32.mrb[0].mxu0
    %v6946 = vadd.f32 %v6882, %v6945
    %v6947 = vpop.f32.mrb[0].mxu0
    %v6948 = vpop.f32.mrb[0].mxu0
    %v6949 = vpop.f32.mrb[0].mxu0
    %6950 = vdwg.mxu0
    %6951 = vmatprep.subr.bf16.mxu0 0
    %6952 = vmatpush1.bf16.msra.mxu0 %v1935
    %6953 = vmatprep.subr.bf16.mxu0 0
    %6954 = vmatpush1.bf16.msra.mxu0 %v1936
    %6955 = vmatprep.subr.bf16.mxu0 0
    %6956 = vmatpush1.bf16.msra.mxu0 %v1937
    %6957 = vmatprep.subr.bf16.mxu0 0
    %6958 = vmatpush1.bf16.msra.mxu0 %v1938
    %6959 = vmatprep.subr.bf16.mxu0 0
    %6960 = vmatpush1.bf16.msra.mxu0 %v1939
    %6961 = vmatprep.subr.bf16.mxu0 0
    %6962 = vmatpush1.bf16.msra.mxu0 %v1940
    %6963 = vmatprep.subr.bf16.mxu0 0
    %6964 = vmatpush1.bf16.msra.mxu0 %v1941
    %6965 = vmatprep.subr.bf16.mxu0 0
    %6966 = vmatpush1.bf16.msra.mxu0 %v1942
    %6967 = vmatprep.subr.bf16.mxu0 0
    %6968 = vmatpush1.bf16.msra.mxu0 %v1943
    %6969 = vmatprep.subr.bf16.mxu0 0
    %6970 = vmatpush1.bf16.msra.mxu0 %v1944
    %6971 = vmatprep.subr.bf16.mxu0 0
    %6972 = vmatpush1.bf16.msra.mxu0 %v1945
    %6973 = vmatprep.subr.bf16.mxu0 0
    %6974 = vmatpush1.bf16.msra.mxu0 %v1946
    %6975 = vmatprep.subr.bf16.mxu0 0
    %6976 = vmatpush1.bf16.msra.mxu0 %v1947
    %6977 = vmatprep.subr.bf16.mxu0 0
    %6978 = vmatpush1.bf16.msra.mxu0 %v1948
    %6979 = vmatprep.subr.bf16.mxu0 0
    %6980 = vmatpush1.bf16.msra.mxu0 %v1949
    %6981 = vmatprep.subr.bf16.mxu0 0
    %6982 = vmatpush1.bf16.msra.mxu0 %v1950
    %6983 = vmatprep.mubr.bf16.mxu0 %v6194
    %6984 = vmatmul.mubr.bf16.gmra.mrb[0].mxu0 %v6193
    %v6985 = vpop.f32.mrb[0].mxu0
    %v6986 = vadd.f32 %v6922, %v6985
    %v6987 = vpop.f32.mrb[0].mxu0
    %v6988 = vpop.f32.mrb[0].mxu0
    %v6989 = vadd.f32 %v6925, %v6988
    %v6990 = vpop.f32.mrb[0].mxu0
    %6991 = vmatprep.mubr.bf16.mxu0 %v6219
    %6992 = vmatmul.mubr.bf16.gmra.mrb[0].mxu0 %v6218
    %v6993 = vpop.f32.mrb[0].mxu0
    %v6994 = vadd.f32 %v6930, %v6993
    %v6995 = vpop.f32.mrb[0].mxu0
    %v6996 = vpop.f32.mrb[0].mxu0
    %v6997 = vadd.f32 %v6933, %v6996
    %v6998 = vpop.f32.mrb[0].mxu0
    %6999 = vmatprep.mubr.bf16.mxu0 %v6244
    %7000 = vmatmul.mubr.bf16.gmra.mrb[0].mxu0 %v6243
    %v7001 = vpop.f32.mrb[0].mxu0
    %v7002 = vadd.f32 %v6938, %v7001
    %v7003 = vpop.f32.mrb[0].mxu0
    %v7004 = vpop.f32.mrb[0].mxu0
    %v7005 = vadd.f32 %v6941, %v7004
    %v7006 = vpop.f32.mrb[0].mxu0
    %7007 = vmatprep.mubr.bf16.mxu0 %v6269
    %7008 = vmatmul.mubr.bf16.gmra.mrb[0].mxu0 %v6268
    %v7009 = vpop.f32.mrb[0].mxu0
    %v7010 = vadd.f32 %v6946, %v7009
    %v7011 = vpop.f32.mrb[0].mxu0
    %v7012 = vpop.f32.mrb[0].mxu0
    %v7013 = vpop.f32.mrb[0].mxu0
    %7014 = vdwg.mxu0
    %7015 = vmatprep.subr.bf16.mxu0 0
    %7016 = vmatpush1.bf16.msra.mxu0 %v1951
    %7017 = vmatprep.subr.bf16.mxu0 0
    %7018 = vmatpush1.bf16.msra.mxu0 %v1952
    %7019 = vmatprep.subr.bf16.mxu0 0
    %7020 = vmatpush1.bf16.msra.mxu0 %v1953
    %7021 = vmatprep.subr.bf16.mxu0 0
    %7022 = vmatpush1.bf16.msra.mxu0 %v1954
    %7023 = vmatprep.subr.bf16.mxu0 0
    %7024 = vmatpush1.bf16.msra.mxu0 %v1955
    %7025 = vmatprep.subr.bf16.mxu0 0
    %7026 = vmatpush1.bf16.msra.mxu0 %v1956
    %7027 = vmatprep.subr.bf16.mxu0 0
    %7028 = vmatpush1.bf16.msra.mxu0 %v1957
    %7029 = vmatprep.subr.bf16.mxu0 0
    %7030 = vmatpush1.bf16.msra.mxu0 %v1958
    %7031 = vmatprep.subr.bf16.mxu0 0
    %7032 = vmatpush1.bf16.msra.mxu0 %v1959
    %7033 = vmatprep.subr.bf16.mxu0 0
    %7034 = vmatpush1.bf16.msra.mxu0 %v1960
    %7035 = vmatprep.subr.bf16.mxu0 0
    %7036 = vmatpush1.bf16.msra.mxu0 %v1961
    %7037 = vmatprep.subr.bf16.mxu0 0
    %7038 = vmatpush1.bf16.msra.mxu0 %v1962
    %7039 = vmatprep.subr.bf16.mxu0 0
    %7040 = vmatpush1.bf16.msra.mxu0 %v1963
    %7041 = vmatprep.subr.bf16.mxu0 0
    %7042 = vmatpush1.bf16.msra.mxu0 %v1964
    %7043 = vmatprep.subr.bf16.mxu0 0
    %7044 = vmatpush1.bf16.msra.mxu0 %v1965
    %7045 = vmatprep.subr.bf16.mxu0 0
    %7046 = vmatpush1.bf16.msra.mxu0 %v1966
    %7047 = vmatprep.mubr.bf16.mxu0 %v6196
    %7048 = vmatmul.mubr.bf16.gmra.mrb[0].mxu0 %v6195
    %v7049 = vpop.f32.mrb[0].mxu0
    %v7050 = vadd.f32 %v6986, %v7049
    %v7051 = vpop.f32.mrb[0].mxu0
    %v7052 = vpop.f32.mrb[0].mxu0
    %v7053 = vadd.f32 %v6989, %v7052
    %v7054 = vpop.f32.mrb[0].mxu0
    %7055 = vmatprep.mubr.bf16.mxu0 %v6221
    %7056 = vmatmul.mubr.bf16.gmra.mrb[0].mxu0 %v6220
    %v7057 = vpop.f32.mrb[0].mxu0
    %v7058 = vadd.f32 %v6994, %v7057
    %v7059 = vpop.f32.mrb[0].mxu0
    %v7060 = vpop.f32.mrb[0].mxu0
    %v7061 = vadd.f32 %v6997, %v7060
    %v7062 = vpop.f32.mrb[0].mxu0
    %7063 = vmatprep.mubr.bf16.mxu0 %v6246
    %7064 = vmatmul.mubr.bf16.gmra.mrb[0].mxu0 %v6245
    %v7065 = vpop.f32.mrb[0].mxu0
    %v7066 = vadd.f32 %v7002, %v7065
    %v7067 = vpop.f32.mrb[0].mxu0
    %v7068 = vpop.f32.mrb[0].mxu0
    %v7069 = vadd.f32 %v7005, %v7068
    %v7070 = vpop.f32.mrb[0].mxu0
    %7071 = vmatprep.mubr.bf16.mxu0 %v6271
    %7072 = vmatmul.mubr.bf16.gmra.mrb[0].mxu0 %v6270
    %v7073 = vpop.f32.mrb[0].mxu0
    %v7074 = vadd.f32 %v7010, %v7073
    %v7075 = vpop.f32.mrb[0].mxu0
    %v7076 = vpop.f32.mrb[0].mxu0
    %v7077 = vpop.f32.mrb[0].mxu0
    %7078 = vdwg.mxu0
    %7079 = vmatprep.subr.bf16.mxu0 0
    %7080 = vmatpush1.bf16.msra.mxu0 %v1967
    %7081 = vmatprep.subr.bf16.mxu0 0
    %7082 = vmatpush1.bf16.msra.mxu0 %v1968
    %7083 = vmatprep.subr.bf16.mxu0 0
    %7084 = vmatpush1.bf16.msra.mxu0 %v1969
    %7085 = vmatprep.subr.bf16.mxu0 0
    %7086 = vmatpush1.bf16.msra.mxu0 %v1970
    %7087 = vmatprep.subr.bf16.mxu0 0
    %7088 = vmatpush1.bf16.msra.mxu0 %v1971
    %7089 = vmatprep.subr.bf16.mxu0 0
    %7090 = vmatpush1.bf16.msra.mxu0 %v1972
    %7091 = vmatprep.subr.bf16.mxu0 0
    %7092 = vmatpush1.bf16.msra.mxu0 %v1973
    %7093 = vmatprep.subr.bf16.mxu0 0
    %7094 = vmatpush1.bf16.msra.mxu0 %v1974
    %7095 = vmatprep.subr.bf16.mxu0 0
    %7096 = vmatpush1.bf16.msra.mxu0 %v1975
    %7097 = vmatprep.subr.bf16.mxu0 0
    %7098 = vmatpush1.bf16.msra.mxu0 %v1976
    %7099 = vmatprep.subr.bf16.mxu0 0
    %7100 = vmatpush1.bf16.msra.mxu0 %v1977
    %7101 = vmatprep.subr.bf16.mxu0 0
    %7102 = vmatpush1.bf16.msra.mxu0 %v1978
    %7103 = vmatprep.subr.bf16.mxu0 0
    %7104 = vmatpush1.bf16.msra.mxu0 %v1979
    %7105 = vmatprep.subr.bf16.mxu0 0
    %7106 = vmatpush1.bf16.msra.mxu0 %v1980
    %7107 = vmatprep.subr.bf16.mxu0 0
    %7108 = vmatpush1.bf16.msra.mxu0 %v1981
    %7109 = vmatprep.subr.bf16.mxu0 0
    %7110 = vmatpush1.bf16.msra.mxu0 %v1982
    %7111 = vmatprep.mubr.bf16.mxu0 %v6198
    %7112 = vmatmul.mubr.bf16.gmra.mrb[0].mxu0 %v6197
    %v7113 = vpop.f32.mrb[0].mxu0
    %v7114 = vadd.f32 %v7050, %v7113
    %v7115 = vpop.f32.mrb[0].mxu0
    %v7116 = vpop.f32.mrb[0].mxu0
    %v7117 = vadd.f32 %v7053, %v7116
    %v7118 = vpop.f32.mrb[0].mxu0
    %7119 = vmatprep.mubr.bf16.mxu0 %v6223
    %7120 = vmatmul.mubr.bf16.gmra.mrb[0].mxu0 %v6222
    %v7121 = vpop.f32.mrb[0].mxu0
    %v7122 = vadd.f32 %v7058, %v7121
    %v7123 = vpop.f32.mrb[0].mxu0
    %v7124 = vpop.f32.mrb[0].mxu0
    %v7125 = vadd.f32 %v7061, %v7124
    %v7126 = vpop.f32.mrb[0].mxu0
    %7127 = vmatprep.mubr.bf16.mxu0 %v6248
    %7128 = vmatmul.mubr.bf16.gmra.mrb[0].mxu0 %v6247
    %v7129 = vpop.f32.mrb[0].mxu0
    %v7130 = vadd.f32 %v7066, %v7129
    %v7131 = vpop.f32.mrb[0].mxu0
    %v7132 = vpop.f32.mrb[0].mxu0
    %v7133 = vadd.f32 %v7069, %v7132
    %v7134 = vpop.f32.mrb[0].mxu0
    %7135 = vmatprep.mubr.bf16.mxu0 %v6273
    %7136 = vmatmul.mubr.bf16.gmra.mrb[0].mxu0 %v6272
    %v7137 = vpop.f32.mrb[0].mxu0
    %v7138 = vadd.f32 %v7074, %v7137
    %v7139 = vpop.f32.mrb[0].mxu0
    %v7140 = vpop.f32.mrb[0].mxu0
    %v7141 = vpop.f32.mrb[0].mxu0
    %7142 = vdwg.mxu0
    %7143 = vmatprep.subr.bf16.mxu0 0
    %7144 = vmatpush1.bf16.msra.mxu0 %v1983
    %7145 = vmatprep.subr.bf16.mxu0 0
    %7146 = vmatpush1.bf16.msra.mxu0 %v1984
    %7147 = vmatprep.subr.bf16.mxu0 0
    %7148 = vmatpush1.bf16.msra.mxu0 %v1985
    %7149 = vmatprep.subr.bf16.mxu0 0
    %7150 = vmatpush1.bf16.msra.mxu0 %v1986
    %7151 = vmatprep.subr.bf16.mxu0 0
    %7152 = vmatpush1.bf16.msra.mxu0 %v1987
    %7153 = vmatprep.subr.bf16.mxu0 0
    %7154 = vmatpush1.bf16.msra.mxu0 %v1988
    %7155 = vmatprep.subr.bf16.mxu0 0
    %7156 = vmatpush1.bf16.msra.mxu0 %v1989
    %7157 = vmatprep.subr.bf16.mxu0 0
    %7158 = vmatpush1.bf16.msra.mxu0 %v1990
    %7159 = vmatprep.subr.bf16.mxu0 0
    %7160 = vmatpush1.bf16.msra.mxu0 0
    %7161 = vmatprep.subr.bf16.mxu0 0
    %7162 = vmatpush1.bf16.msra.mxu0 0
    %7163 = vmatprep.subr.bf16.mxu0 0
    %7164 = vmatpush1.bf16.msra.mxu0 0
    %7165 = vmatprep.subr.bf16.mxu0 0
    %7166 = vmatpush1.bf16.msra.mxu0 0
    %7167 = vmatprep.subr.bf16.mxu0 0
    %7168 = vmatpush1.bf16.msra.mxu0 0
    %7169 = vmatprep.subr.bf16.mxu0 0
    %7170 = vmatpush1.bf16.msra.mxu0 0
    %7171 = vmatprep.subr.bf16.mxu0 0
    %7172 = vmatpush1.bf16.msra.mxu0 0
    %7173 = vmatprep.subr.bf16.mxu0 0
    %7174 = vmatpush1.bf16.msra.mxu0 0
    %7175 = vmatprep.mubr.bf16.mxu0 0
    %7176 = vmatmul.mubr.bf16.gmra.mrb[0].mxu0 %v6199
    %v7177 = vpop.f32.mrb[0].mxu0
    %v7178 = vadd.f32 %v7114, %v7177
    %v7179 = vpop.f32.mrb[0].mxu0
    %v7180 = vpop.f32.mrb[0].mxu0
    %v7181 = vadd.f32 %v7117, %v7180
    %v7182 = vpop.f32.mrb[0].mxu0
    %7183 = vmatprep.mubr.bf16.mxu0 0
    %7184 = vmatmul.mubr.bf16.gmra.mrb[0].mxu0 %v6224
    %v7185 = vpop.f32.mrb[0].mxu0
    %v7186 = vadd.f32 %v7122, %v7185
    %v7187 = vpop.f32.mrb[0].mxu0
    %v7188 = vpop.f32.mrb[0].mxu0
    %v7189 = vadd.f32 %v7125, %v7188
    %v7190 = vpop.f32.mrb[0].mxu0
    %7191 = vmatprep.mubr.bf16.mxu0 0
    %7192 = vmatmul.mubr.bf16.gmra.mrb[0].mxu0 %v6249
    %v7193 = vpop.f32.mrb[0].mxu0
    %v7194 = vadd.f32 %v7130, %v7193
    %v7195 = vpop.f32.mrb[0].mxu0
    %v7196 = vpop.f32.mrb[0].mxu0
    %v7197 = vadd.f32 %v7133, %v7196
    %v7198 = vpop.f32.mrb[0].mxu0
    %7199 = vmatprep.mubr.bf16.mxu0 0
    %7200 = vmatmul.mubr.bf16.gmra.mrb[0].mxu0 %v6274
    %v7201 = vpop.f32.mrb[0].mxu0
    %v7202 = vadd.f32 %v7138, %v7201
    %v7203 = vpop.f32.mrb[0].mxu0
    %v7204 = vpop.f32.mrb[0].mxu0
    %v7205 = vpop.f32.mrb[0].mxu0
    %7206 = vdwg.mxu0
    %v7207 = vmax.f32 %v5810, %v7178
    %v7208 = vmax.f32 %v5811, %v7181
    %v7209 = vmax.f32 %v5812, %v7186
    %v7210 = vmax.f32 %v5813, %v7189
    %v7211 = vmax.f32 %v5814, %v7194
    %v7212 = vmax.f32 %v5815, %v7197
    %v7213 = vmax.f32 %v5816, %v7202
    %v7214 = vld [vmem:[%s2] sm:$0x1]
    %v7216 = vlaneseq
    %v7217 = vshrl.u32 %v7216, 7
    %v7218 = vsub.s32 0, %v7217
    %v7219 = vrot.slane %v7214, %v7218
    %v7221 = vadd.f32 %v7207, %v7219
    %v7222 = vadd.f32 %v7208, %v7219
    %v7223 = vadd.f32 %v7209, %v7219
    %v7224 = vadd.f32 %v7210, %v7219
    %v7225 = vadd.f32 %v7211, %v7219
    %v7226 = vadd.f32 %v7212, %v7219
    %v7227 = vadd.f32 %v7213, %v7219
    %v7228 = vmax.f32 %v7221, 0.0
    %v7229 = vmax.f32 %v7222, 0.0
    %v7230 = vmax.f32 %v7223, 0.0
    %v7231 = vmax.f32 %v7224, 0.0
    %v7232 = vmax.f32 %v7225, 0.0
    %v7233 = vmax.f32 %v7226, 0.0
    %v7234 = vmax.f32 %v7227, 0.0
    %v7235 = vpack.c.bf16 %v7229, %v7228
    %v7236 = vpack.c.bf16 %v7231, %v7230
    %v7237 = vpack.c.bf16 %v7233, %v7232
    %v7238 = vpack.c.bf16 %v7234, %v7234
    %v7243 = vunpack.c.l.b16 %v7235
    %v7244 = vunpack.c.h.b16 %v7235
    %v7245 = vunpack.c.l.b16 %v7236
    %v7246 = vunpack.c.h.b16 %v7236
    %v7247 = vunpack.c.l.b16 %v7237
    %v7248 = vunpack.c.h.b16 %v7237
    %v7249 = vunpack.c.l.b16 %v7238
    %v7250 = vpack.c.b16 %v7243, %v7243
    %v7251 = vpack.c.b16 %v7244, %v7244
    %v7252 = vpack.c.b16 %v7245, %v7245
    %v7253 = vpack.c.b16 %v7246, %v7246
    %v7254 = vpack.c.b16 %v7247, %v7247
    %v7255 = vpack.c.b16 %v7248, %v7248
    %v7256 = vpack.c.b16 %v7249, %v7249
    %7264 = vst [vmem:[#allocation2] sm:$0xf] %v7250
    %7265 = vst [vmem:[#allocation2 + $0x4] sm:$0xf] %v7251
    %7266 = vst [vmem:[#allocation2 + $0x8] sm:$0xf] %v7252
    %7267 = vst [vmem:[#allocation2 + $0xc] sm:$0xf] %v7253
    %7268 = vst [vmem:[#allocation2 + $0x10] sm:$0xf] %v7254
    %7269 = vst [vmem:[#allocation2 + $0x14] sm:$0xf] %v7255
    %7270 = vst [vmem:[#allocation2 + $0x18] sm:$0x1] %v7256
    %v7271 = vld [vmem:[#allocation2] sm:$0x1]
    %v7272 = vld [vmem:[%s3] sm:$0xf]
    %v7273 = vld [vmem:[%s3 + $0x4] sm:$0xf]
    %v7274 = vld [vmem:[%s3 + $0x8] sm:$0xf]
    %v7275 = vld [vmem:[%s3 + $0xc] sm:$0xf]
    %v7276 = vld [vmem:[%s3 + $0x10] sm:$0xf]
    %v7277 = vld [vmem:[%s3 + $0x14] sm:$0xf]
    %v7278 = vld [vmem:[%s3 + $0x18] sm:$0xf]
    %v7279 = vld [vmem:[%s3 + $0x1c] sm:$0xf]
    %v7280 = vld [vmem:[%s3 + $0x20] sm:$0xf]
    %v7281 = vld [vmem:[%s3 + $0x24] sm:$0xf]
    %v7282 = vld [vmem:[%s3 + $0x28] sm:$0xf]
    %v7283 = vld [vmem:[%s3 + $0x2c] sm:$0xf]
    %v7284 = vld [vmem:[%s3 + $0x30] sm:$0xf]
    %v7285 = vld [vmem:[%s3 + $0x34] sm:$0xf]
    %v7286 = vld [vmem:[%s3 + $0x38] sm:$0xf]
    %v7287 = vld [vmem:[%s3 + $0x3c] sm:$0xf]
    %v7288 = vld [vmem:[#allocation2] sm:$0x2]
    %v7289 = vld [vmem:[%s3 + $0x40] sm:$0xf]
    %v7290 = vld [vmem:[%s3 + $0x44] sm:$0xf]
    %v7291 = vld [vmem:[%s3 + $0x48] sm:$0xf]
    %v7292 = vld [vmem:[%s3 + $0x4c] sm:$0xf]
    %v7293 = vld [vmem:[%s3 + $0x50] sm:$0xf]
    %v7294 = vld [vmem:[%s3 + $0x54] sm:$0xf]
    %v7295 = vld [vmem:[%s3 + $0x58] sm:$0xf]
    %v7296 = vld [vmem:[%s3 + $0x5c] sm:$0xf]
    %v7297 = vld [vmem:[%s3 + $0x60] sm:$0xf]
    %v7298 = vld [vmem:[%s3 + $0x64] sm:$0xf]
    %v7299 = vld [vmem:[%s3 + $0x68] sm:$0xf]
    %v7300 = vld [vmem:[%s3 + $0x6c] sm:$0xf]
    %v7301 = vld [vmem:[%s3 + $0x70] sm:$0xf]
    %v7302 = vld [vmem:[%s3 + $0x74] sm:$0xf]
    %v7303 = vld [vmem:[%s3 + $0x78] sm:$0xf]
    %v7304 = vld [vmem:[%s3 + $0x7c] sm:$0xf]
    %v7306 = vunpack.c.l.b16 %v7288
    %v7307 = vpack.c.b16 %v7306, %v7306
    %v7308 = vrot.slane %v7307, 1
    %v7326 = vunpack.c.l.b16 %v7289
    %v7327 = vunpack.c.l.b16 %v7290
    %v7328 = vunpack.c.l.b16 %v7291
    %v7329 = vunpack.c.l.b16 %v7292
    %v7330 = vunpack.c.l.b16 %v7293
    %v7331 = vunpack.c.l.b16 %v7294
    %v7332 = vunpack.c.l.b16 %v7295
    %v7333 = vunpack.c.l.b16 %v7296
    %v7334 = vunpack.c.l.b16 %v7297
    %v7335 = vunpack.c.l.b16 %v7298
    %v7336 = vunpack.c.l.b16 %v7299
    %v7337 = vunpack.c.l.b16 %v7300
    %v7338 = vunpack.c.l.b16 %v7301
    %v7339 = vunpack.c.l.b16 %v7302
    %v7340 = vunpack.c.l.b16 %v7303
    %v7341 = vunpack.c.l.b16 %v7304
    %v7342 = vpack.c.b16 %v7327, %v7326
    %v7343 = vpack.c.b16 %v7329, %v7328
    %v7344 = vpack.c.b16 %v7331, %v7330
    %v7345 = vpack.c.b16 %v7333, %v7332
    %v7346 = vpack.c.b16 %v7335, %v7334
    %v7347 = vpack.c.b16 %v7337, %v7336
    %v7348 = vpack.c.b16 %v7339, %v7338
    %v7349 = vpack.c.b16 %v7341, %v7340
    %7358 = vmatprep.subr.bf16.mxu0 0
    %7359 = vmatpush1.bf16.msra.mxu0 %v7342
    %7360 = vmatprep.subr.bf16.mxu0 0
    %7361 = vmatpush1.bf16.msra.mxu0 %v7343
    %7362 = vmatprep.subr.bf16.mxu0 0
    %7363 = vmatpush1.bf16.msra.mxu0 %v7344
    %7364 = vmatprep.subr.bf16.mxu0 0
    %7365 = vmatpush1.bf16.msra.mxu0 %v7345
    %7366 = vmatprep.subr.bf16.mxu0 0
    %7367 = vmatpush1.bf16.msra.mxu0 %v7346
    %7368 = vmatprep.subr.bf16.mxu0 0
    %7369 = vmatpush1.bf16.msra.mxu0 %v7347
    %7370 = vmatprep.subr.bf16.mxu0 0
    %7371 = vmatpush1.bf16.msra.mxu0 %v7348
    %7372 = vmatprep.subr.bf16.mxu0 0
    %7373 = vmatpush1.bf16.msra.mxu0 %v7349
    %7374 = vmatprep.subr.bf16.mxu0 0
    %7375 = vmatpush1.bf16.msra.mxu0 0
    %7376 = vmatprep.subr.bf16.mxu0 0
    %7377 = vmatpush1.bf16.msra.mxu0 0
    %7378 = vmatprep.subr.bf16.mxu0 0
    %7379 = vmatpush1.bf16.msra.mxu0 0
    %7380 = vmatprep.subr.bf16.mxu0 0
    %7381 = vmatpush1.bf16.msra.mxu0 0
    %7382 = vmatprep.subr.bf16.mxu0 0
    %7383 = vmatpush1.bf16.msra.mxu0 0
    %7384 = vmatprep.subr.bf16.mxu0 0
    %7385 = vmatpush1.bf16.msra.mxu0 0
    %7386 = vmatprep.subr.bf16.mxu0 0
    %7387 = vmatpush1.bf16.msra.mxu0 0
    %7388 = vmatprep.subr.bf16.mxu0 0
    %7389 = vmatpush1.bf16.msra.mxu0 0
    %7390 = vmatprep.mubr.bf16.mxu0 0
    %7391 = vmatmul.mubr.bf16.gmra.mrb[0].mxu0 %v7308
    %v7392 = vpop.f32.mrb[0].mxu0
    %v7393 = vadd.f32 0.0, %v7392
    %v7394 = vpop.f32.mrb[0].mxu0
    %v7395 = vpop.f32.mrb[0].mxu0
    %v7396 = vpop.f32.mrb[0].mxu0
    %7397 = vdwg.mxu0
    %v7414 = vunpack.c.l.b16 %v7272
    %v7415 = vunpack.c.l.b16 %v7273
    %v7416 = vunpack.c.l.b16 %v7274
    %v7417 = vunpack.c.l.b16 %v7275
    %v7418 = vunpack.c.l.b16 %v7276
    %v7419 = vunpack.c.l.b16 %v7277
    %v7420 = vunpack.c.l.b16 %v7278
    %v7421 = vunpack.c.l.b16 %v7279
    %v7422 = vunpack.c.l.b16 %v7280
    %v7423 = vunpack.c.l.b16 %v7281
    %v7424 = vunpack.c.l.b16 %v7282
    %v7425 = vunpack.c.l.b16 %v7283
    %v7426 = vunpack.c.l.b16 %v7284
    %v7427 = vunpack.c.l.b16 %v7285
    %v7428 = vunpack.c.l.b16 %v7286
    %v7429 = vunpack.c.l.b16 %v7287
    %v7430 = vpack.c.b16 %v7415, %v7414
    %v7431 = vpack.c.b16 %v7417, %v7416
    %v7432 = vpack.c.b16 %v7419, %v7418
    %v7433 = vpack.c.b16 %v7421, %v7420
    %v7434 = vpack.c.b16 %v7423, %v7422
    %v7435 = vpack.c.b16 %v7425, %v7424
    %v7436 = vpack.c.b16 %v7427, %v7426
    %v7437 = vpack.c.b16 %v7429, %v7428
    %7446 = vmatprep.subr.bf16.mxu0 0
    %7447 = vmatpush1.bf16.msra.mxu0 %v7430
    %7448 = vmatprep.subr.bf16.mxu0 0
    %7449 = vmatpush1.bf16.msra.mxu0 %v7431
    %7450 = vmatprep.subr.bf16.mxu0 0
    %7451 = vmatpush1.bf16.msra.mxu0 %v7432
    %7452 = vmatprep.subr.bf16.mxu0 0
    %7453 = vmatpush1.bf16.msra.mxu0 %v7433
    %7454 = vmatprep.subr.bf16.mxu0 0
    %7455 = vmatpush1.bf16.msra.mxu0 %v7434
    %7456 = vmatprep.subr.bf16.mxu0 0
    %7457 = vmatpush1.bf16.msra.mxu0 %v7435
    %7458 = vmatprep.subr.bf16.mxu0 0
    %7459 = vmatpush1.bf16.msra.mxu0 %v7436
    %7460 = vmatprep.subr.bf16.mxu0 0
    %7461 = vmatpush1.bf16.msra.mxu0 %v7437
    %7462 = vmatprep.subr.bf16.mxu0 0
    %7463 = vmatpush1.bf16.msra.mxu0 0
    %7464 = vmatprep.subr.bf16.mxu0 0
    %7465 = vmatpush1.bf16.msra.mxu0 0
    %7466 = vmatprep.subr.bf16.mxu0 0
    %7467 = vmatpush1.bf16.msra.mxu0 0
    %7468 = vmatprep.subr.bf16.mxu0 0
    %7469 = vmatpush1.bf16.msra.mxu0 0
    %7470 = vmatprep.subr.bf16.mxu0 0
    %7471 = vmatpush1.bf16.msra.mxu0 0
    %7472 = vmatprep.subr.bf16.mxu0 0
    %7473 = vmatpush1.bf16.msra.mxu0 0
    %7474 = vmatprep.subr.bf16.mxu0 0
    %7475 = vmatpush1.bf16.msra.mxu0 0
    %7476 = vmatprep.subr.bf16.mxu0 0
    %7477 = vmatpush1.bf16.msra.mxu0 0
    %7478 = vmatprep.mubr.bf16.mxu0 0
    %7479 = vmatmul.mubr.bf16.gmra.mrb[0].mxu0 %v7271
    %v7480 = vpop.f32.mrb[0].mxu0
    %v7481 = vadd.f32 %v7393, %v7480
    %v7482 = vpop.f32.mrb[0].mxu0
    %v7483 = vpop.f32.mrb[0].mxu0
    %v7484 = vpop.f32.mrb[0].mxu0
    %7485 = vdwg.mxu0
    %v7486 = vld [vmem:[#allocation2] sm:$0x4]
    %v7487 = vld [vmem:[%s3 + $0x80] sm:$0xf]
    %v7488 = vld [vmem:[%s3 + $0x84] sm:$0xf]
    %v7489 = vld [vmem:[%s3 + $0x88] sm:$0xf]
    %v7490 = vld [vmem:[%s3 + $0x8c] sm:$0xf]
    %v7491 = vld [vmem:[%s3 + $0x90] sm:$0xf]
    %v7492 = vld [vmem:[%s3 + $0x94] sm:$0xf]
    %v7493 = vld [vmem:[%s3 + $0x98] sm:$0xf]
    %v7494 = vld [vmem:[%s3 + $0x9c] sm:$0xf]
    %v7495 = vld [vmem:[%s3 + $0xa0] sm:$0xf]
    %v7496 = vld [vmem:[%s3 + $0xa4] sm:$0xf]
    %v7497 = vld [vmem:[%s3 + $0xa8] sm:$0xf]
    %v7498 = vld [vmem:[%s3 + $0xac] sm:$0xf]
    %v7499 = vld [vmem:[%s3 + $0xb0] sm:$0xf]
    %v7500 = vld [vmem:[%s3 + $0xb4] sm:$0xf]
    %v7501 = vld [vmem:[%s3 + $0xb8] sm:$0xf]
    %v7502 = vld [vmem:[%s3 + $0xbc] sm:$0xf]
    %v7504 = vunpack.c.l.b16 %v7486
    %v7505 = vpack.c.b16 %v7504, %v7504
    %v7506 = vrot.slane %v7505, 2
    %v7524 = vunpack.c.l.b16 %v7487
    %v7525 = vunpack.c.l.b16 %v7488
    %v7526 = vunpack.c.l.b16 %v7489
    %v7527 = vunpack.c.l.b16 %v7490
    %v7528 = vunpack.c.l.b16 %v7491
    %v7529 = vunpack.c.l.b16 %v7492
    %v7530 = vunpack.c.l.b16 %v7493
    %v7531 = vunpack.c.l.b16 %v7494
    %v7532 = vunpack.c.l.b16 %v7495
    %v7533 = vunpack.c.l.b16 %v7496
    %v7534 = vunpack.c.l.b16 %v7497
    %v7535 = vunpack.c.l.b16 %v7498
    %v7536 = vunpack.c.l.b16 %v7499
    %v7537 = vunpack.c.l.b16 %v7500
    %v7538 = vunpack.c.l.b16 %v7501
    %v7539 = vunpack.c.l.b16 %v7502
    %v7540 = vpack.c.b16 %v7525, %v7524
    %v7541 = vpack.c.b16 %v7527, %v7526
    %v7542 = vpack.c.b16 %v7529, %v7528
    %v7543 = vpack.c.b16 %v7531, %v7530
    %v7544 = vpack.c.b16 %v7533, %v7532
    %v7545 = vpack.c.b16 %v7535, %v7534
    %v7546 = vpack.c.b16 %v7537, %v7536
    %v7547 = vpack.c.b16 %v7539, %v7538
    %7556 = vmatprep.subr.bf16.mxu0 0
    %7557 = vmatpush1.bf16.msra.mxu0 %v7540
    %7558 = vmatprep.subr.bf16.mxu0 0
    %7559 = vmatpush1.bf16.msra.mxu0 %v7541
    %7560 = vmatprep.subr.bf16.mxu0 0
    %7561 = vmatpush1.bf16.msra.mxu0 %v7542
    %7562 = vmatprep.subr.bf16.mxu0 0
    %7563 = vmatpush1.bf16.msra.mxu0 %v7543
    %7564 = vmatprep.subr.bf16.mxu0 0
    %7565 = vmatpush1.bf16.msra.mxu0 %v7544
    %7566 = vmatprep.subr.bf16.mxu0 0
    %7567 = vmatpush1.bf16.msra.mxu0 %v7545
    %7568 = vmatprep.subr.bf16.mxu0 0
    %7569 = vmatpush1.bf16.msra.mxu0 %v7546
    %7570 = vmatprep.subr.bf16.mxu0 0
    %7571 = vmatpush1.bf16.msra.mxu0 %v7547
    %7572 = vmatprep.subr.bf16.mxu0 0
    %7573 = vmatpush1.bf16.msra.mxu0 0
    %7574 = vmatprep.subr.bf16.mxu0 0
    %7575 = vmatpush1.bf16.msra.mxu0 0
    %7576 = vmatprep.subr.bf16.mxu0 0
    %7577 = vmatpush1.bf16.msra.mxu0 0
    %7578 = vmatprep.subr.bf16.mxu0 0
    %7579 = vmatpush1.bf16.msra.mxu0 0
    %7580 = vmatprep.subr.bf16.mxu0 0
    %7581 = vmatpush1.bf16.msra.mxu0 0
    %7582 = vmatprep.subr.bf16.mxu0 0
    %7583 = vmatpush1.bf16.msra.mxu0 0
    %7584 = vmatprep.subr.bf16.mxu0 0
    %7585 = vmatpush1.bf16.msra.mxu0 0
    %7586 = vmatprep.subr.bf16.mxu0 0
    %7587 = vmatpush1.bf16.msra.mxu0 0
    %7588 = vmatprep.mubr.bf16.mxu0 0
    %7589 = vmatmul.mubr.bf16.gmra.mrb[0].mxu0 %v7506
    %v7590 = vpop.f32.mrb[0].mxu0
    %v7591 = vadd.f32 0.0, %v7590
    %v7592 = vpop.f32.mrb[0].mxu0
    %v7593 = vpop.f32.mrb[0].mxu0
    %v7594 = vpop.f32.mrb[0].mxu0
    %7595 = vdwg.mxu0
    %v7596 = vadd.f32 %v7481, %v7591
    %v7597 = vld [vmem:[#allocation2] sm:$0x8]
    %v7598 = vld [vmem:[%s3 + $0xc0] sm:$0xf]
    %v7599 = vld [vmem:[%s3 + $0xc4] sm:$0xf]
    %v7600 = vld [vmem:[%s3 + $0xc8] sm:$0xf]
    %v7601 = vld [vmem:[%s3 + $0xcc] sm:$0xf]
    %v7602 = vld [vmem:[%s3 + $0xd0] sm:$0xf]
    %v7603 = vld [vmem:[%s3 + $0xd4] sm:$0xf]
    %v7604 = vld [vmem:[%s3 + $0xd8] sm:$0xf]
    %v7605 = vld [vmem:[%s3 + $0xdc] sm:$0xf]
    %v7606 = vld [vmem:[%s3 + $0xe0] sm:$0xf]
    %v7607 = vld [vmem:[%s3 + $0xe4] sm:$0xf]
    %v7608 = vld [vmem:[%s3 + $0xe8] sm:$0xf]
    %v7609 = vld [vmem:[%s3 + $0xec] sm:$0xf]
    %v7610 = vld [vmem:[%s3 + $0xf0] sm:$0xf]
    %v7611 = vld [vmem:[%s3 + $0xf4] sm:$0xf]
    %v7612 = vld [vmem:[%s3 + $0xf8] sm:$0xf]
    %v7613 = vld [vmem:[%s3 + $0xfc] sm:$0xf]
    %v7615 = vunpack.c.l.b16 %v7597
    %v7616 = vpack.c.b16 %v7615, %v7615
    %v7617 = vrot.slane %v7616, 3
    %v7635 = vunpack.c.l.b16 %v7598
    %v7636 = vunpack.c.l.b16 %v7599
    %v7637 = vunpack.c.l.b16 %v7600
    %v7638 = vunpack.c.l.b16 %v7601
    %v7639 = vunpack.c.l.b16 %v7602
    %v7640 = vunpack.c.l.b16 %v7603
    %v7641 = vunpack.c.l.b16 %v7604
    %v7642 = vunpack.c.l.b16 %v7605
    %v7643 = vunpack.c.l.b16 %v7606
    %v7644 = vunpack.c.l.b16 %v7607
    %v7645 = vunpack.c.l.b16 %v7608
    %v7646 = vunpack.c.l.b16 %v7609
    %v7647 = vunpack.c.l.b16 %v7610
    %v7648 = vunpack.c.l.b16 %v7611
    %v7649 = vunpack.c.l.b16 %v7612
    %v7650 = vunpack.c.l.b16 %v7613
    %v7651 = vpack.c.b16 %v7636, %v7635
    %v7652 = vpack.c.b16 %v7638, %v7637
    %v7653 = vpack.c.b16 %v7640, %v7639
    %v7654 = vpack.c.b16 %v7642, %v7641
    %v7655 = vpack.c.b16 %v7644, %v7643
    %v7656 = vpack.c.b16 %v7646, %v7645
    %v7657 = vpack.c.b16 %v7648, %v7647
    %v7658 = vpack.c.b16 %v7650, %v7649
    %7667 = vmatprep.subr.bf16.mxu0 0
    %7668 = vmatpush1.bf16.msra.mxu0 %v7651
    %7669 = vmatprep.subr.bf16.mxu0 0
    %7670 = vmatpush1.bf16.msra.mxu0 %v7652
    %7671 = vmatprep.subr.bf16.mxu0 0
    %7672 = vmatpush1.bf16.msra.mxu0 %v7653
    %7673 = vmatprep.subr.bf16.mxu0 0
    %7674 = vmatpush1.bf16.msra.mxu0 %v7654
    %7675 = vmatprep.subr.bf16.mxu0 0
    %7676 = vmatpush1.bf16.msra.mxu0 %v7655
    %7677 = vmatprep.subr.bf16.mxu0 0
    %7678 = vmatpush1.bf16.msra.mxu0 %v7656
    %7679 = vmatprep.subr.bf16.mxu0 0
    %7680 = vmatpush1.bf16.msra.mxu0 %v7657
    %7681 = vmatprep.subr.bf16.mxu0 0
    %7682 = vmatpush1.bf16.msra.mxu0 %v7658
    %7683 = vmatprep.subr.bf16.mxu0 0
    %7684 = vmatpush1.bf16.msra.mxu0 0
    %7685 = vmatprep.subr.bf16.mxu0 0
    %7686 = vmatpush1.bf16.msra.mxu0 0
    %7687 = vmatprep.subr.bf16.mxu0 0
    %7688 = vmatpush1.bf16.msra.mxu0 0
    %7689 = vmatprep.subr.bf16.mxu0 0
    %7690 = vmatpush1.bf16.msra.mxu0 0
    %7691 = vmatprep.subr.bf16.mxu0 0
    %7692 = vmatpush1.bf16.msra.mxu0 0
    %7693 = vmatprep.subr.bf16.mxu0 0
    %7694 = vmatpush1.bf16.msra.mxu0 0
    %7695 = vmatprep.subr.bf16.mxu0 0
    %7696 = vmatpush1.bf16.msra.mxu0 0
    %7697 = vmatprep.subr.bf16.mxu0 0
    %7698 = vmatpush1.bf16.msra.mxu0 0
    %7699 = vmatprep.mubr.bf16.mxu0 0
    %7700 = vmatmul.mubr.bf16.gmra.mrb[0].mxu0 %v7617
    %v7701 = vpop.f32.mrb[0].mxu0
    %v7702 = vadd.f32 0.0, %v7701
    %v7703 = vpop.f32.mrb[0].mxu0
    %v7704 = vpop.f32.mrb[0].mxu0
    %v7705 = vpop.f32.mrb[0].mxu0
    %7706 = vdwg.mxu0
    %v7707 = vadd.f32 %v7596, %v7702
    %v7708 = vld [vmem:[#allocation2 + $0x4] sm:$0x1]
    %v7709 = vld [vmem:[%s3 + $0x100] sm:$0xf]
    %v7710 = vld [vmem:[%s3 + $0x104] sm:$0xf]
    %v7711 = vld [vmem:[%s3 + $0x108] sm:$0xf]
    %v7712 = vld [vmem:[%s3 + $0x10c] sm:$0xf]
    %v7713 = vld [vmem:[%s3 + $0x110] sm:$0xf]
    %v7714 = vld [vmem:[%s3 + $0x114] sm:$0xf]
    %v7715 = vld [vmem:[%s3 + $0x118] sm:$0xf]
    %v7716 = vld [vmem:[%s3 + $0x11c] sm:$0xf]
    %v7717 = vld [vmem:[%s3 + $0x120] sm:$0xf]
    %v7718 = vld [vmem:[%s3 + $0x124] sm:$0xf]
    %v7719 = vld [vmem:[%s3 + $0x128] sm:$0xf]
    %v7720 = vld [vmem:[%s3 + $0x12c] sm:$0xf]
    %v7721 = vld [vmem:[%s3 + $0x130] sm:$0xf]
    %v7722 = vld [vmem:[%s3 + $0x134] sm:$0xf]
    %v7723 = vld [vmem:[%s3 + $0x138] sm:$0xf]
    %v7724 = vld [vmem:[%s3 + $0x13c] sm:$0xf]
    %v7741 = vunpack.c.l.b16 %v7709
    %v7742 = vunpack.c.l.b16 %v7710
    %v7743 = vunpack.c.l.b16 %v7711
    %v7744 = vunpack.c.l.b16 %v7712
    %v7745 = vunpack.c.l.b16 %v7713
    %v7746 = vunpack.c.l.b16 %v7714
    %v7747 = vunpack.c.l.b16 %v7715
    %v7748 = vunpack.c.l.b16 %v7716
    %v7749 = vunpack.c.l.b16 %v7717
    %v7750 = vunpack.c.l.b16 %v7718
    %v7751 = vunpack.c.l.b16 %v7719
    %v7752 = vunpack.c.l.b16 %v7720
    %v7753 = vunpack.c.l.b16 %v7721
    %v7754 = vunpack.c.l.b16 %v7722
    %v7755 = vunpack.c.l.b16 %v7723
    %v7756 = vunpack.c.l.b16 %v7724
    %v7757 = vpack.c.b16 %v7742, %v7741
    %v7758 = vpack.c.b16 %v7744, %v7743
    %v7759 = vpack.c.b16 %v7746, %v7745
    %v7760 = vpack.c.b16 %v7748, %v7747
    %v7761 = vpack.c.b16 %v7750, %v7749
    %v7762 = vpack.c.b16 %v7752, %v7751
    %v7763 = vpack.c.b16 %v7754, %v7753
    %v7764 = vpack.c.b16 %v7756, %v7755
    %7773 = vmatprep.subr.bf16.mxu0 0
    %7774 = vmatpush1.bf16.msra.mxu0 %v7757
    %7775 = vmatprep.subr.bf16.mxu0 0
    %7776 = vmatpush1.bf16.msra.mxu0 %v7758
    %7777 = vmatprep.subr.bf16.mxu0 0
    %7778 = vmatpush1.bf16.msra.mxu0 %v7759
    %7779 = vmatprep.subr.bf16.mxu0 0
    %7780 = vmatpush1.bf16.msra.mxu0 %v7760
    %7781 = vmatprep.subr.bf16.mxu0 0
    %7782 = vmatpush1.bf16.msra.mxu0 %v7761
    %7783 = vmatprep.subr.bf16.mxu0 0
    %7784 = vmatpush1.bf16.msra.mxu0 %v7762
    %7785 = vmatprep.subr.bf16.mxu0 0
    %7786 = vmatpush1.bf16.msra.mxu0 %v7763
    %7787 = vmatprep.subr.bf16.mxu0 0
    %7788 = vmatpush1.bf16.msra.mxu0 %v7764
    %7789 = vmatprep.subr.bf16.mxu0 0
    %7790 = vmatpush1.bf16.msra.mxu0 0
    %7791 = vmatprep.subr.bf16.mxu0 0
    %7792 = vmatpush1.bf16.msra.mxu0 0
    %7793 = vmatprep.subr.bf16.mxu0 0
    %7794 = vmatpush1.bf16.msra.mxu0 0
    %7795 = vmatprep.subr.bf16.mxu0 0
    %7796 = vmatpush1.bf16.msra.mxu0 0
    %7797 = vmatprep.subr.bf16.mxu0 0
    %7798 = vmatpush1.bf16.msra.mxu0 0
    %7799 = vmatprep.subr.bf16.mxu0 0
    %7800 = vmatpush1.bf16.msra.mxu0 0
    %7801 = vmatprep.subr.bf16.mxu0 0
    %7802 = vmatpush1.bf16.msra.mxu0 0
    %7803 = vmatprep.subr.bf16.mxu0 0
    %7804 = vmatpush1.bf16.msra.mxu0 0
    %7805 = vmatprep.mubr.bf16.mxu0 0
    %7806 = vmatmul.mubr.bf16.gmra.mrb[0].mxu0 %v7708
    %v7807 = vpop.f32.mrb[0].mxu0
    %v7808 = vadd.f32 0.0, %v7807
    %v7809 = vpop.f32.mrb[0].mxu0
    %v7810 = vpop.f32.mrb[0].mxu0
    %v7811 = vpop.f32.mrb[0].mxu0
    %7812 = vdwg.mxu0
    %v7813 = vadd.f32 %v7707, %v7808
    %v7814 = vld [vmem:[#allocation2 + $0x4] sm:$0x2]
    %v7815 = vld [vmem:[%s3 + $0x140] sm:$0xf]
    %v7816 = vld [vmem:[%s3 + $0x144] sm:$0xf]
    %v7817 = vld [vmem:[%s3 + $0x148] sm:$0xf]
    %v7818 = vld [vmem:[%s3 + $0x14c] sm:$0xf]
    %v7819 = vld [vmem:[%s3 + $0x150] sm:$0xf]
    %v7820 = vld [vmem:[%s3 + $0x154] sm:$0xf]
    %v7821 = vld [vmem:[%s3 + $0x158] sm:$0xf]
    %v7822 = vld [vmem:[%s3 + $0x15c] sm:$0xf]
    %v7823 = vld [vmem:[%s3 + $0x160] sm:$0xf]
    %v7824 = vld [vmem:[%s3 + $0x164] sm:$0xf]
    %v7825 = vld [vmem:[%s3 + $0x168] sm:$0xf]
    %v7826 = vld [vmem:[%s3 + $0x16c] sm:$0xf]
    %v7827 = vld [vmem:[%s3 + $0x170] sm:$0xf]
    %v7828 = vld [vmem:[%s3 + $0x174] sm:$0xf]
    %v7829 = vld [vmem:[%s3 + $0x178] sm:$0xf]
    %v7830 = vld [vmem:[%s3 + $0x17c] sm:$0xf]
    %v7832 = vunpack.c.l.b16 %v7814
    %v7833 = vpack.c.b16 %v7832, %v7832
    %v7834 = vrot.slane %v7833, 1
    %v7852 = vunpack.c.l.b16 %v7815
    %v7853 = vunpack.c.l.b16 %v7816
    %v7854 = vunpack.c.l.b16 %v7817
    %v7855 = vunpack.c.l.b16 %v7818
    %v7856 = vunpack.c.l.b16 %v7819
    %v7857 = vunpack.c.l.b16 %v7820
    %v7858 = vunpack.c.l.b16 %v7821
    %v7859 = vunpack.c.l.b16 %v7822
    %v7860 = vunpack.c.l.b16 %v7823
    %v7861 = vunpack.c.l.b16 %v7824
    %v7862 = vunpack.c.l.b16 %v7825
    %v7863 = vunpack.c.l.b16 %v7826
    %v7864 = vunpack.c.l.b16 %v7827
    %v7865 = vunpack.c.l.b16 %v7828
    %v7866 = vunpack.c.l.b16 %v7829
    %v7867 = vunpack.c.l.b16 %v7830
    %v7868 = vpack.c.b16 %v7853, %v7852
    %v7869 = vpack.c.b16 %v7855, %v7854
    %v7870 = vpack.c.b16 %v7857, %v7856
    %v7871 = vpack.c.b16 %v7859, %v7858
    %v7872 = vpack.c.b16 %v7861, %v7860
    %v7873 = vpack.c.b16 %v7863, %v7862
    %v7874 = vpack.c.b16 %v7865, %v7864
    %v7875 = vpack.c.b16 %v7867, %v7866
    %7884 = vmatprep.subr.bf16.mxu0 0
    %7885 = vmatpush1.bf16.msra.mxu0 %v7868
    %7886 = vmatprep.subr.bf16.mxu0 0
    %7887 = vmatpush1.bf16.msra.mxu0 %v7869
    %7888 = vmatprep.subr.bf16.mxu0 0
    %7889 = vmatpush1.bf16.msra.mxu0 %v7870
    %7890 = vmatprep.subr.bf16.mxu0 0
    %7891 = vmatpush1.bf16.msra.mxu0 %v7871
    %7892 = vmatprep.subr.bf16.mxu0 0
    %7893 = vmatpush1.bf16.msra.mxu0 %v7872
    %7894 = vmatprep.subr.bf16.mxu0 0
    %7895 = vmatpush1.bf16.msra.mxu0 %v7873
    %7896 = vmatprep.subr.bf16.mxu0 0
    %7897 = vmatpush1.bf16.msra.mxu0 %v7874
    %7898 = vmatprep.subr.bf16.mxu0 0
    %7899 = vmatpush1.bf16.msra.mxu0 %v7875
    %7900 = vmatprep.subr.bf16.mxu0 0
    %7901 = vmatpush1.bf16.msra.mxu0 0
    %7902 = vmatprep.subr.bf16.mxu0 0
    %7903 = vmatpush1.bf16.msra.mxu0 0
    %7904 = vmatprep.subr.bf16.mxu0 0
    %7905 = vmatpush1.bf16.msra.mxu0 0
    %7906 = vmatprep.subr.bf16.mxu0 0
    %7907 = vmatpush1.bf16.msra.mxu0 0
    %7908 = vmatprep.subr.bf16.mxu0 0
    %7909 = vmatpush1.bf16.msra.mxu0 0
    %7910 = vmatprep.subr.bf16.mxu0 0
    %7911 = vmatpush1.bf16.msra.mxu0 0
    %7912 = vmatprep.subr.bf16.mxu0 0
    %7913 = vmatpush1.bf16.msra.mxu0 0
    %7914 = vmatprep.subr.bf16.mxu0 0
    %7915 = vmatpush1.bf16.msra.mxu0 0
    %7916 = vmatprep.mubr.bf16.mxu0 0
    %7917 = vmatmul.mubr.bf16.gmra.mrb[0].mxu0 %v7834
    %v7918 = vpop.f32.mrb[0].mxu0
    %v7919 = vadd.f32 0.0, %v7918
    %v7920 = vpop.f32.mrb[0].mxu0
    %v7921 = vpop.f32.mrb[0].mxu0
    %v7922 = vpop.f32.mrb[0].mxu0
    %7923 = vdwg.mxu0
    %v7924 = vadd.f32 %v7813, %v7919
    %v7925 = vld [vmem:[#allocation2 + $0x4] sm:$0x4]
    %v7926 = vld [vmem:[%s3 + $0x180] sm:$0xf]
    %v7927 = vld [vmem:[%s3 + $0x184] sm:$0xf]
    %v7928 = vld [vmem:[%s3 + $0x188] sm:$0xf]
    %v7929 = vld [vmem:[%s3 + $0x18c] sm:$0xf]
    %v7930 = vld [vmem:[%s3 + $0x190] sm:$0xf]
    %v7931 = vld [vmem:[%s3 + $0x194] sm:$0xf]
    %v7932 = vld [vmem:[%s3 + $0x198] sm:$0xf]
    %v7933 = vld [vmem:[%s3 + $0x19c] sm:$0xf]
    %v7934 = vld [vmem:[%s3 + $0x1a0] sm:$0xf]
    %v7935 = vld [vmem:[%s3 + $0x1a4] sm:$0xf]
    %v7936 = vld [vmem:[%s3 + $0x1a8] sm:$0xf]
    %v7937 = vld [vmem:[%s3 + $0x1ac] sm:$0xf]
    %v7938 = vld [vmem:[%s3 + $0x1b0] sm:$0xf]
    %v7939 = vld [vmem:[%s3 + $0x1b4] sm:$0xf]
    %v7940 = vld [vmem:[%s3 + $0x1b8] sm:$0xf]
    %v7941 = vld [vmem:[%s3 + $0x1bc] sm:$0xf]
    %v7943 = vunpack.c.l.b16 %v7925
    %v7944 = vpack.c.b16 %v7943, %v7943
    %v7945 = vrot.slane %v7944, 2
    %v7963 = vunpack.c.l.b16 %v7926
    %v7964 = vunpack.c.l.b16 %v7927
    %v7965 = vunpack.c.l.b16 %v7928
    %v7966 = vunpack.c.l.b16 %v7929
    %v7967 = vunpack.c.l.b16 %v7930
    %v7968 = vunpack.c.l.b16 %v7931
    %v7969 = vunpack.c.l.b16 %v7932
    %v7970 = vunpack.c.l.b16 %v7933
    %v7971 = vunpack.c.l.b16 %v7934
    %v7972 = vunpack.c.l.b16 %v7935
    %v7973 = vunpack.c.l.b16 %v7936
    %v7974 = vunpack.c.l.b16 %v7937
    %v7975 = vunpack.c.l.b16 %v7938
    %v7976 = vunpack.c.l.b16 %v7939
    %v7977 = vunpack.c.l.b16 %v7940
    %v7978 = vunpack.c.l.b16 %v7941
    %v7979 = vpack.c.b16 %v7964, %v7963
    %v7980 = vpack.c.b16 %v7966, %v7965
    %v7981 = vpack.c.b16 %v7968, %v7967
    %v7982 = vpack.c.b16 %v7970, %v7969
    %v7983 = vpack.c.b16 %v7972, %v7971
    %v7984 = vpack.c.b16 %v7974, %v7973
    %v7985 = vpack.c.b16 %v7976, %v7975
    %v7986 = vpack.c.b16 %v7978, %v7977
    %7995 = vmatprep.subr.bf16.mxu0 0
    %7996 = vmatpush1.bf16.msra.mxu0 %v7979
    %7997 = vmatprep.subr.bf16.mxu0 0
    %7998 = vmatpush1.bf16.msra.mxu0 %v7980
    %7999 = vmatprep.subr.bf16.mxu0 0
    %8000 = vmatpush1.bf16.msra.mxu0 %v7981
    %8001 = vmatprep.subr.bf16.mxu0 0
    %8002 = vmatpush1.bf16.msra.mxu0 %v7982
    %8003 = vmatprep.subr.bf16.mxu0 0
    %8004 = vmatpush1.bf16.msra.mxu0 %v7983
    %8005 = vmatprep.subr.bf16.mxu0 0
    %8006 = vmatpush1.bf16.msra.mxu0 %v7984
    %8007 = vmatprep.subr.bf16.mxu0 0
    %8008 = vmatpush1.bf16.msra.mxu0 %v7985
    %8009 = vmatprep.subr.bf16.mxu0 0
    %8010 = vmatpush1.bf16.msra.mxu0 %v7986
    %8011 = vmatprep.subr.bf16.mxu0 0
    %8012 = vmatpush1.bf16.msra.mxu0 0
    %8013 = vmatprep.subr.bf16.mxu0 0
    %8014 = vmatpush1.bf16.msra.mxu0 0
    %8015 = vmatprep.subr.bf16.mxu0 0
    %8016 = vmatpush1.bf16.msra.mxu0 0
    %8017 = vmatprep.subr.bf16.mxu0 0
    %8018 = vmatpush1.bf16.msra.mxu0 0
    %8019 = vmatprep.subr.bf16.mxu0 0
    %8020 = vmatpush1.bf16.msra.mxu0 0
    %8021 = vmatprep.subr.bf16.mxu0 0
    %8022 = vmatpush1.bf16.msra.mxu0 0
    %8023 = vmatprep.subr.bf16.mxu0 0
    %8024 = vmatpush1.bf16.msra.mxu0 0
    %8025 = vmatprep.subr.bf16.mxu0 0
    %8026 = vmatpush1.bf16.msra.mxu0 0
    %8027 = vmatprep.mubr.bf16.mxu0 0
    %8028 = vmatmul.mubr.bf16.gmra.mrb[0].mxu0 %v7945
    %v8029 = vpop.f32.mrb[0].mxu0
    %v8030 = vadd.f32 0.0, %v8029
    %v8031 = vpop.f32.mrb[0].mxu0
    %v8032 = vpop.f32.mrb[0].mxu0
    %v8033 = vpop.f32.mrb[0].mxu0
    %8034 = vdwg.mxu0
    %v8035 = vadd.f32 %v7924, %v8030
    %v8036 = vld [vmem:[#allocation2 + $0x4] sm:$0x8]
    %v8037 = vld [vmem:[%s3 + $0x1c0] sm:$0xf]
    %v8038 = vld [vmem:[%s3 + $0x1c4] sm:$0xf]
    %v8039 = vld [vmem:[%s3 + $0x1c8] sm:$0xf]
    %v8040 = vld [vmem:[%s3 + $0x1cc] sm:$0xf]
    %v8041 = vld [vmem:[%s3 + $0x1d0] sm:$0xf]
    %v8042 = vld [vmem:[%s3 + $0x1d4] sm:$0xf]
    %v8043 = vld [vmem:[%s3 + $0x1d8] sm:$0xf]
    %v8044 = vld [vmem:[%s3 + $0x1dc] sm:$0xf]
    %v8045 = vld [vmem:[%s3 + $0x1e0] sm:$0xf]
    %v8046 = vld [vmem:[%s3 + $0x1e4] sm:$0xf]
    %v8047 = vld [vmem:[%s3 + $0x1e8] sm:$0xf]
    %v8048 = vld [vmem:[%s3 + $0x1ec] sm:$0xf]
    %v8049 = vld [vmem:[%s3 + $0x1f0] sm:$0xf]
    %v8050 = vld [vmem:[%s3 + $0x1f4] sm:$0xf]
    %v8051 = vld [vmem:[%s3 + $0x1f8] sm:$0xf]
    %v8052 = vld [vmem:[%s3 + $0x1fc] sm:$0xf]
    %v8054 = vunpack.c.l.b16 %v8036
    %v8055 = vpack.c.b16 %v8054, %v8054
    %v8056 = vrot.slane %v8055, 3
    %v8074 = vunpack.c.l.b16 %v8037
    %v8075 = vunpack.c.l.b16 %v8038
    %v8076 = vunpack.c.l.b16 %v8039
    %v8077 = vunpack.c.l.b16 %v8040
    %v8078 = vunpack.c.l.b16 %v8041
    %v8079 = vunpack.c.l.b16 %v8042
    %v8080 = vunpack.c.l.b16 %v8043
    %v8081 = vunpack.c.l.b16 %v8044
    %v8082 = vunpack.c.l.b16 %v8045
    %v8083 = vunpack.c.l.b16 %v8046
    %v8084 = vunpack.c.l.b16 %v8047
    %v8085 = vunpack.c.l.b16 %v8048
    %v8086 = vunpack.c.l.b16 %v8049
    %v8087 = vunpack.c.l.b16 %v8050
    %v8088 = vunpack.c.l.b16 %v8051
    %v8089 = vunpack.c.l.b16 %v8052
    %v8090 = vpack.c.b16 %v8075, %v8074
    %v8091 = vpack.c.b16 %v8077, %v8076
    %v8092 = vpack.c.b16 %v8079, %v8078
    %v8093 = vpack.c.b16 %v8081, %v8080
    %v8094 = vpack.c.b16 %v8083, %v8082
    %v8095 = vpack.c.b16 %v8085, %v8084
    %v8096 = vpack.c.b16 %v8087, %v8086
    %v8097 = vpack.c.b16 %v8089, %v8088
    %8106 = vmatprep.subr.bf16.mxu0 0
    %8107 = vmatpush1.bf16.msra.mxu0 %v8090
    %8108 = vmatprep.subr.bf16.mxu0 0
    %8109 = vmatpush1.bf16.msra.mxu0 %v8091
    %8110 = vmatprep.subr.bf16.mxu0 0
    %8111 = vmatpush1.bf16.msra.mxu0 %v8092
    %8112 = vmatprep.subr.bf16.mxu0 0
    %8113 = vmatpush1.bf16.msra.mxu0 %v8093
    %8114 = vmatprep.subr.bf16.mxu0 0
    %8115 = vmatpush1.bf16.msra.mxu0 %v8094
    %8116 = vmatprep.subr.bf16.mxu0 0
    %8117 = vmatpush1.bf16.msra.mxu0 %v8095
    %8118 = vmatprep.subr.bf16.mxu0 0
    %8119 = vmatpush1.bf16.msra.mxu0 %v8096
    %8120 = vmatprep.subr.bf16.mxu0 0
    %8121 = vmatpush1.bf16.msra.mxu0 %v8097
    %8122 = vmatprep.subr.bf16.mxu0 0
    %8123 = vmatpush1.bf16.msra.mxu0 0
    %8124 = vmatprep.subr.bf16.mxu0 0
    %8125 = vmatpush1.bf16.msra.mxu0 0
    %8126 = vmatprep.subr.bf16.mxu0 0
    %8127 = vmatpush1.bf16.msra.mxu0 0
    %8128 = vmatprep.subr.bf16.mxu0 0
    %8129 = vmatpush1.bf16.msra.mxu0 0
    %8130 = vmatprep.subr.bf16.mxu0 0
    %8131 = vmatpush1.bf16.msra.mxu0 0
    %8132 = vmatprep.subr.bf16.mxu0 0
    %8133 = vmatpush1.bf16.msra.mxu0 0
    %8134 = vmatprep.subr.bf16.mxu0 0
    %8135 = vmatpush1.bf16.msra.mxu0 0
    %8136 = vmatprep.subr.bf16.mxu0 0
    %8137 = vmatpush1.bf16.msra.mxu0 0
    %8138 = vmatprep.mubr.bf16.mxu0 0
    %8139 = vmatmul.mubr.bf16.gmra.mrb[0].mxu0 %v8056
    %v8140 = vpop.f32.mrb[0].mxu0
    %v8141 = vadd.f32 0.0, %v8140
    %v8142 = vpop.f32.mrb[0].mxu0
    %v8143 = vpop.f32.mrb[0].mxu0
    %v8144 = vpop.f32.mrb[0].mxu0
    %8145 = vdwg.mxu0
    %v8146 = vadd.f32 %v8035, %v8141
    %v8147 = vld [vmem:[#allocation2 + $0x8] sm:$0x1]
    %v8148 = vld [vmem:[%s3 + $0x200] sm:$0xf]
    %v8149 = vld [vmem:[%s3 + $0x204] sm:$0xf]
    %v8150 = vld [vmem:[%s3 + $0x208] sm:$0xf]
    %v8151 = vld [vmem:[%s3 + $0x20c] sm:$0xf]
    %v8152 = vld [vmem:[%s3 + $0x210] sm:$0xf]
    %v8153 = vld [vmem:[%s3 + $0x214] sm:$0xf]
    %v8154 = vld [vmem:[%s3 + $0x218] sm:$0xf]
    %v8155 = vld [vmem:[%s3 + $0x21c] sm:$0xf]
    %v8156 = vld [vmem:[%s3 + $0x220] sm:$0xf]
    %v8157 = vld [vmem:[%s3 + $0x224] sm:$0xf]
    %v8158 = vld [vmem:[%s3 + $0x228] sm:$0xf]
    %v8159 = vld [vmem:[%s3 + $0x22c] sm:$0xf]
    %v8160 = vld [vmem:[%s3 + $0x230] sm:$0xf]
    %v8161 = vld [vmem:[%s3 + $0x234] sm:$0xf]
    %v8162 = vld [vmem:[%s3 + $0x238] sm:$0xf]
    %v8163 = vld [vmem:[%s3 + $0x23c] sm:$0xf]
    %v8180 = vunpack.c.l.b16 %v8148
    %v8181 = vunpack.c.l.b16 %v8149
    %v8182 = vunpack.c.l.b16 %v8150
    %v8183 = vunpack.c.l.b16 %v8151
    %v8184 = vunpack.c.l.b16 %v8152
    %v8185 = vunpack.c.l.b16 %v8153
    %v8186 = vunpack.c.l.b16 %v8154
    %v8187 = vunpack.c.l.b16 %v8155
    %v8188 = vunpack.c.l.b16 %v8156
    %v8189 = vunpack.c.l.b16 %v8157
    %v8190 = vunpack.c.l.b16 %v8158
    %v8191 = vunpack.c.l.b16 %v8159
    %v8192 = vunpack.c.l.b16 %v8160
    %v8193 = vunpack.c.l.b16 %v8161
    %v8194 = vunpack.c.l.b16 %v8162
    %v8195 = vunpack.c.l.b16 %v8163
    %v8196 = vpack.c.b16 %v8181, %v8180
    %v8197 = vpack.c.b16 %v8183, %v8182
    %v8198 = vpack.c.b16 %v8185, %v8184
    %v8199 = vpack.c.b16 %v8187, %v8186
    %v8200 = vpack.c.b16 %v8189, %v8188
    %v8201 = vpack.c.b16 %v8191, %v8190
    %v8202 = vpack.c.b16 %v8193, %v8192
    %v8203 = vpack.c.b16 %v8195, %v8194
    %8212 = vmatprep.subr.bf16.mxu0 0
    %8213 = vmatpush1.bf16.msra.mxu0 %v8196
    %8214 = vmatprep.subr.bf16.mxu0 0
    %8215 = vmatpush1.bf16.msra.mxu0 %v8197
    %8216 = vmatprep.subr.bf16.mxu0 0
    %8217 = vmatpush1.bf16.msra.mxu0 %v8198
    %8218 = vmatprep.subr.bf16.mxu0 0
    %8219 = vmatpush1.bf16.msra.mxu0 %v8199
    %8220 = vmatprep.subr.bf16.mxu0 0
    %8221 = vmatpush1.bf16.msra.mxu0 %v8200
    %8222 = vmatprep.subr.bf16.mxu0 0
    %8223 = vmatpush1.bf16.msra.mxu0 %v8201
    %8224 = vmatprep.subr.bf16.mxu0 0
    %8225 = vmatpush1.bf16.msra.mxu0 %v8202
    %8226 = vmatprep.subr.bf16.mxu0 0
    %8227 = vmatpush1.bf16.msra.mxu0 %v8203
    %8228 = vmatprep.subr.bf16.mxu0 0
    %8229 = vmatpush1.bf16.msra.mxu0 0
    %8230 = vmatprep.subr.bf16.mxu0 0
    %8231 = vmatpush1.bf16.msra.mxu0 0
    %8232 = vmatprep.subr.bf16.mxu0 0
    %8233 = vmatpush1.bf16.msra.mxu0 0
    %8234 = vmatprep.subr.bf16.mxu0 0
    %8235 = vmatpush1.bf16.msra.mxu0 0
    %8236 = vmatprep.subr.bf16.mxu0 0
    %8237 = vmatpush1.bf16.msra.mxu0 0
    %8238 = vmatprep.subr.bf16.mxu0 0
    %8239 = vmatpush1.bf16.msra.mxu0 0
    %8240 = vmatprep.subr.bf16.mxu0 0
    %8241 = vmatpush1.bf16.msra.mxu0 0
    %8242 = vmatprep.subr.bf16.mxu0 0
    %8243 = vmatpush1.bf16.msra.mxu0 0
    %8244 = vmatprep.mubr.bf16.mxu0 0
    %8245 = vmatmul.mubr.bf16.gmra.mrb[0].mxu0 %v8147
    %v8246 = vpop.f32.mrb[0].mxu0
    %v8247 = vadd.f32 0.0, %v8246
    %v8248 = vpop.f32.mrb[0].mxu0
    %v8249 = vpop.f32.mrb[0].mxu0
    %v8250 = vpop.f32.mrb[0].mxu0
    %8251 = vdwg.mxu0
    %v8252 = vadd.f32 %v8146, %v8247
    %v8253 = vld [vmem:[#allocation2 + $0x8] sm:$0x2]
    %v8254 = vld [vmem:[%s3 + $0x240] sm:$0xf]
    %v8255 = vld [vmem:[%s3 + $0x244] sm:$0xf]
    %v8256 = vld [vmem:[%s3 + $0x248] sm:$0xf]
    %v8257 = vld [vmem:[%s3 + $0x24c] sm:$0xf]
    %v8258 = vld [vmem:[%s3 + $0x250] sm:$0xf]
    %v8259 = vld [vmem:[%s3 + $0x254] sm:$0xf]
    %v8260 = vld [vmem:[%s3 + $0x258] sm:$0xf]
    %v8261 = vld [vmem:[%s3 + $0x25c] sm:$0xf]
    %v8262 = vld [vmem:[%s3 + $0x260] sm:$0xf]
    %v8263 = vld [vmem:[%s3 + $0x264] sm:$0xf]
    %v8264 = vld [vmem:[%s3 + $0x268] sm:$0xf]
    %v8265 = vld [vmem:[%s3 + $0x26c] sm:$0xf]
    %v8266 = vld [vmem:[%s3 + $0x270] sm:$0xf]
    %v8267 = vld [vmem:[%s3 + $0x274] sm:$0xf]
    %v8268 = vld [vmem:[%s3 + $0x278] sm:$0xf]
    %v8269 = vld [vmem:[%s3 + $0x27c] sm:$0xf]
    %v8271 = vunpack.c.l.b16 %v8253
    %v8272 = vpack.c.b16 %v8271, %v8271
    %v8273 = vrot.slane %v8272, 1
    %v8291 = vunpack.c.l.b16 %v8254
    %v8292 = vunpack.c.l.b16 %v8255
    %v8293 = vunpack.c.l.b16 %v8256
    %v8294 = vunpack.c.l.b16 %v8257
    %v8295 = vunpack.c.l.b16 %v8258
    %v8296 = vunpack.c.l.b16 %v8259
    %v8297 = vunpack.c.l.b16 %v8260
    %v8298 = vunpack.c.l.b16 %v8261
    %v8299 = vunpack.c.l.b16 %v8262
    %v8300 = vunpack.c.l.b16 %v8263
    %v8301 = vunpack.c.l.b16 %v8264
    %v8302 = vunpack.c.l.b16 %v8265
    %v8303 = vunpack.c.l.b16 %v8266
    %v8304 = vunpack.c.l.b16 %v8267
    %v8305 = vunpack.c.l.b16 %v8268
    %v8306 = vunpack.c.l.b16 %v8269
    %v8307 = vpack.c.b16 %v8292, %v8291
    %v8308 = vpack.c.b16 %v8294, %v8293
    %v8309 = vpack.c.b16 %v8296, %v8295
    %v8310 = vpack.c.b16 %v8298, %v8297
    %v8311 = vpack.c.b16 %v8300, %v8299
    %v8312 = vpack.c.b16 %v8302, %v8301
    %v8313 = vpack.c.b16 %v8304, %v8303
    %v8314 = vpack.c.b16 %v8306, %v8305
    %8323 = vmatprep.subr.bf16.mxu0 0
    %8324 = vmatpush1.bf16.msra.mxu0 %v8307
    %8325 = vmatprep.subr.bf16.mxu0 0
    %8326 = vmatpush1.bf16.msra.mxu0 %v8308
    %8327 = vmatprep.subr.bf16.mxu0 0
    %8328 = vmatpush1.bf16.msra.mxu0 %v8309
    %8329 = vmatprep.subr.bf16.mxu0 0
    %8330 = vmatpush1.bf16.msra.mxu0 %v8310
    %8331 = vmatprep.subr.bf16.mxu0 0
    %8332 = vmatpush1.bf16.msra.mxu0 %v8311
    %8333 = vmatprep.subr.bf16.mxu0 0
    %8334 = vmatpush1.bf16.msra.mxu0 %v8312
    %8335 = vmatprep.subr.bf16.mxu0 0
    %8336 = vmatpush1.bf16.msra.mxu0 %v8313
    %8337 = vmatprep.subr.bf16.mxu0 0
    %8338 = vmatpush1.bf16.msra.mxu0 %v8314
    %8339 = vmatprep.subr.bf16.mxu0 0
    %8340 = vmatpush1.bf16.msra.mxu0 0
    %8341 = vmatprep.subr.bf16.mxu0 0
    %8342 = vmatpush1.bf16.msra.mxu0 0
    %8343 = vmatprep.subr.bf16.mxu0 0
    %8344 = vmatpush1.bf16.msra.mxu0 0
    %8345 = vmatprep.subr.bf16.mxu0 0
    %8346 = vmatpush1.bf16.msra.mxu0 0
    %8347 = vmatprep.subr.bf16.mxu0 0
    %8348 = vmatpush1.bf16.msra.mxu0 0
    %8349 = vmatprep.subr.bf16.mxu0 0
    %8350 = vmatpush1.bf16.msra.mxu0 0
    %8351 = vmatprep.subr.bf16.mxu0 0
    %8352 = vmatpush1.bf16.msra.mxu0 0
    %8353 = vmatprep.subr.bf16.mxu0 0
    %8354 = vmatpush1.bf16.msra.mxu0 0
    %8355 = vmatprep.mubr.bf16.mxu0 0
    %8356 = vmatmul.mubr.bf16.gmra.mrb[0].mxu0 %v8273
    %v8357 = vpop.f32.mrb[0].mxu0
    %v8358 = vadd.f32 0.0, %v8357
    %v8359 = vpop.f32.mrb[0].mxu0
    %v8360 = vpop.f32.mrb[0].mxu0
    %v8361 = vpop.f32.mrb[0].mxu0
    %8362 = vdwg.mxu0
    %v8363 = vadd.f32 %v8252, %v8358
    %v8364 = vld [vmem:[#allocation2 + $0x8] sm:$0x4]
    %v8365 = vld [vmem:[%s3 + $0x280] sm:$0xf]
    %v8366 = vld [vmem:[%s3 + $0x284] sm:$0xf]
    %v8367 = vld [vmem:[%s3 + $0x288] sm:$0xf]
    %v8368 = vld [vmem:[%s3 + $0x28c] sm:$0xf]
    %v8369 = vld [vmem:[%s3 + $0x290] sm:$0xf]
    %v8370 = vld [vmem:[%s3 + $0x294] sm:$0xf]
    %v8371 = vld [vmem:[%s3 + $0x298] sm:$0xf]
    %v8372 = vld [vmem:[%s3 + $0x29c] sm:$0xf]
    %v8373 = vld [vmem:[%s3 + $0x2a0] sm:$0xf]
    %v8374 = vld [vmem:[%s3 + $0x2a4] sm:$0xf]
    %v8375 = vld [vmem:[%s3 + $0x2a8] sm:$0xf]
    %v8376 = vld [vmem:[%s3 + $0x2ac] sm:$0xf]
    %v8377 = vld [vmem:[%s3 + $0x2b0] sm:$0xf]
    %v8378 = vld [vmem:[%s3 + $0x2b4] sm:$0xf]
    %v8379 = vld [vmem:[%s3 + $0x2b8] sm:$0xf]
    %v8380 = vld [vmem:[%s3 + $0x2bc] sm:$0xf]
    %v8382 = vunpack.c.l.b16 %v8364
    %v8383 = vpack.c.b16 %v8382, %v8382
    %v8384 = vrot.slane %v8383, 2
    %v8402 = vunpack.c.l.b16 %v8365
    %v8403 = vunpack.c.l.b16 %v8366
    %v8404 = vunpack.c.l.b16 %v8367
    %v8405 = vunpack.c.l.b16 %v8368
    %v8406 = vunpack.c.l.b16 %v8369
    %v8407 = vunpack.c.l.b16 %v8370
    %v8408 = vunpack.c.l.b16 %v8371
    %v8409 = vunpack.c.l.b16 %v8372
    %v8410 = vunpack.c.l.b16 %v8373
    %v8411 = vunpack.c.l.b16 %v8374
    %v8412 = vunpack.c.l.b16 %v8375
    %v8413 = vunpack.c.l.b16 %v8376
    %v8414 = vunpack.c.l.b16 %v8377
    %v8415 = vunpack.c.l.b16 %v8378
    %v8416 = vunpack.c.l.b16 %v8379
    %v8417 = vunpack.c.l.b16 %v8380
    %v8418 = vpack.c.b16 %v8403, %v8402
    %v8419 = vpack.c.b16 %v8405, %v8404
    %v8420 = vpack.c.b16 %v8407, %v8406
    %v8421 = vpack.c.b16 %v8409, %v8408
    %v8422 = vpack.c.b16 %v8411, %v8410
    %v8423 = vpack.c.b16 %v8413, %v8412
    %v8424 = vpack.c.b16 %v8415, %v8414
    %v8425 = vpack.c.b16 %v8417, %v8416
    %8434 = vmatprep.subr.bf16.mxu0 0
    %8435 = vmatpush1.bf16.msra.mxu0 %v8418
    %8436 = vmatprep.subr.bf16.mxu0 0
    %8437 = vmatpush1.bf16.msra.mxu0 %v8419
    %8438 = vmatprep.subr.bf16.mxu0 0
    %8439 = vmatpush1.bf16.msra.mxu0 %v8420
    %8440 = vmatprep.subr.bf16.mxu0 0
    %8441 = vmatpush1.bf16.msra.mxu0 %v8421
    %8442 = vmatprep.subr.bf16.mxu0 0
    %8443 = vmatpush1.bf16.msra.mxu0 %v8422
    %8444 = vmatprep.subr.bf16.mxu0 0
    %8445 = vmatpush1.bf16.msra.mxu0 %v8423
    %8446 = vmatprep.subr.bf16.mxu0 0
    %8447 = vmatpush1.bf16.msra.mxu0 %v8424
    %8448 = vmatprep.subr.bf16.mxu0 0
    %8449 = vmatpush1.bf16.msra.mxu0 %v8425
    %8450 = vmatprep.subr.bf16.mxu0 0
    %8451 = vmatpush1.bf16.msra.mxu0 0
    %8452 = vmatprep.subr.bf16.mxu0 0
    %8453 = vmatpush1.bf16.msra.mxu0 0
    %8454 = vmatprep.subr.bf16.mxu0 0
    %8455 = vmatpush1.bf16.msra.mxu0 0
    %8456 = vmatprep.subr.bf16.mxu0 0
    %8457 = vmatpush1.bf16.msra.mxu0 0
    %8458 = vmatprep.subr.bf16.mxu0 0
    %8459 = vmatpush1.bf16.msra.mxu0 0
    %8460 = vmatprep.subr.bf16.mxu0 0
    %8461 = vmatpush1.bf16.msra.mxu0 0
    %8462 = vmatprep.subr.bf16.mxu0 0
    %8463 = vmatpush1.bf16.msra.mxu0 0
    %8464 = vmatprep.subr.bf16.mxu0 0
    %8465 = vmatpush1.bf16.msra.mxu0 0
    %8466 = vmatprep.mubr.bf16.mxu0 0
    %8467 = vmatmul.mubr.bf16.gmra.mrb[0].mxu0 %v8384
    %v8468 = vpop.f32.mrb[0].mxu0
    %v8469 = vadd.f32 0.0, %v8468
    %v8470 = vpop.f32.mrb[0].mxu0
    %v8471 = vpop.f32.mrb[0].mxu0
    %v8472 = vpop.f32.mrb[0].mxu0
    %8473 = vdwg.mxu0
    %v8474 = vadd.f32 %v8363, %v8469
    %v8475 = vld [vmem:[#allocation2 + $0x8] sm:$0x8]
    %v8476 = vld [vmem:[%s3 + $0x2c0] sm:$0xf]
    %v8477 = vld [vmem:[%s3 + $0x2c4] sm:$0xf]
    %v8478 = vld [vmem:[%s3 + $0x2c8] sm:$0xf]
    %v8479 = vld [vmem:[%s3 + $0x2cc] sm:$0xf]
    %v8480 = vld [vmem:[%s3 + $0x2d0] sm:$0xf]
    %v8481 = vld [vmem:[%s3 + $0x2d4] sm:$0xf]
    %v8482 = vld [vmem:[%s3 + $0x2d8] sm:$0xf]
    %v8483 = vld [vmem:[%s3 + $0x2dc] sm:$0xf]
    %v8484 = vld [vmem:[%s3 + $0x2e0] sm:$0xf]
    %v8485 = vld [vmem:[%s3 + $0x2e4] sm:$0xf]
    %v8486 = vld [vmem:[%s3 + $0x2e8] sm:$0xf]
    %v8487 = vld [vmem:[%s3 + $0x2ec] sm:$0xf]
    %v8488 = vld [vmem:[%s3 + $0x2f0] sm:$0xf]
    %v8489 = vld [vmem:[%s3 + $0x2f4] sm:$0xf]
    %v8490 = vld [vmem:[%s3 + $0x2f8] sm:$0xf]
    %v8491 = vld [vmem:[%s3 + $0x2fc] sm:$0xf]
    %v8493 = vunpack.c.l.b16 %v8475
    %v8494 = vpack.c.b16 %v8493, %v8493
    %v8495 = vrot.slane %v8494, 3
    %v8513 = vunpack.c.l.b16 %v8476
    %v8514 = vunpack.c.l.b16 %v8477
    %v8515 = vunpack.c.l.b16 %v8478
    %v8516 = vunpack.c.l.b16 %v8479
    %v8517 = vunpack.c.l.b16 %v8480
    %v8518 = vunpack.c.l.b16 %v8481
    %v8519 = vunpack.c.l.b16 %v8482
    %v8520 = vunpack.c.l.b16 %v8483
    %v8521 = vunpack.c.l.b16 %v8484
    %v8522 = vunpack.c.l.b16 %v8485
    %v8523 = vunpack.c.l.b16 %v8486
    %v8524 = vunpack.c.l.b16 %v8487
    %v8525 = vunpack.c.l.b16 %v8488
    %v8526 = vunpack.c.l.b16 %v8489
    %v8527 = vunpack.c.l.b16 %v8490
    %v8528 = vunpack.c.l.b16 %v8491
    %v8529 = vpack.c.b16 %v8514, %v8513
    %v8530 = vpack.c.b16 %v8516, %v8515
    %v8531 = vpack.c.b16 %v8518, %v8517
    %v8532 = vpack.c.b16 %v8520, %v8519
    %v8533 = vpack.c.b16 %v8522, %v8521
    %v8534 = vpack.c.b16 %v8524, %v8523
    %v8535 = vpack.c.b16 %v8526, %v8525
    %v8536 = vpack.c.b16 %v8528, %v8527
    %8545 = vmatprep.subr.bf16.mxu0 0
    %8546 = vmatpush1.bf16.msra.mxu0 %v8529
    %8547 = vmatprep.subr.bf16.mxu0 0
    %8548 = vmatpush1.bf16.msra.mxu0 %v8530
    %8549 = vmatprep.subr.bf16.mxu0 0
    %8550 = vmatpush1.bf16.msra.mxu0 %v8531
    %8551 = vmatprep.subr.bf16.mxu0 0
    %8552 = vmatpush1.bf16.msra.mxu0 %v8532
    %8553 = vmatprep.subr.bf16.mxu0 0
    %8554 = vmatpush1.bf16.msra.mxu0 %v8533
    %8555 = vmatprep.subr.bf16.mxu0 0
    %8556 = vmatpush1.bf16.msra.mxu0 %v8534
    %8557 = vmatprep.subr.bf16.mxu0 0
    %8558 = vmatpush1.bf16.msra.mxu0 %v8535
    %8559 = vmatprep.subr.bf16.mxu0 0
    %8560 = vmatpush1.bf16.msra.mxu0 %v8536
    %8561 = vmatprep.subr.bf16.mxu0 0
    %8562 = vmatpush1.bf16.msra.mxu0 0
    %8563 = vmatprep.subr.bf16.mxu0 0
    %8564 = vmatpush1.bf16.msra.mxu0 0
    %8565 = vmatprep.subr.bf16.mxu0 0
    %8566 = vmatpush1.bf16.msra.mxu0 0
    %8567 = vmatprep.subr.bf16.mxu0 0
    %8568 = vmatpush1.bf16.msra.mxu0 0
    %8569 = vmatprep.subr.bf16.mxu0 0
    %8570 = vmatpush1.bf16.msra.mxu0 0
    %8571 = vmatprep.subr.bf16.mxu0 0
    %8572 = vmatpush1.bf16.msra.mxu0 0
    %8573 = vmatprep.subr.bf16.mxu0 0
    %8574 = vmatpush1.bf16.msra.mxu0 0
    %8575 = vmatprep.subr.bf16.mxu0 0
    %8576 = vmatpush1.bf16.msra.mxu0 0
    %8577 = vmatprep.mubr.bf16.mxu0 0
    %8578 = vmatmul.mubr.bf16.gmra.mrb[0].mxu0 %v8495
    %v8579 = vpop.f32.mrb[0].mxu0
    %v8580 = vadd.f32 0.0, %v8579
    %v8581 = vpop.f32.mrb[0].mxu0
    %v8582 = vpop.f32.mrb[0].mxu0
    %v8583 = vpop.f32.mrb[0].mxu0
    %8584 = vdwg.mxu0
    %v8585 = vadd.f32 %v8474, %v8580
    %v8586 = vld [vmem:[#allocation2 + $0xc] sm:$0x1]
    %v8587 = vld [vmem:[%s3 + $0x300] sm:$0xf]
    %v8588 = vld [vmem:[%s3 + $0x304] sm:$0xf]
    %v8589 = vld [vmem:[%s3 + $0x308] sm:$0xf]
    %v8590 = vld [vmem:[%s3 + $0x30c] sm:$0xf]
    %v8591 = vld [vmem:[%s3 + $0x310] sm:$0xf]
    %v8592 = vld [vmem:[%s3 + $0x314] sm:$0xf]
    %v8593 = vld [vmem:[%s3 + $0x318] sm:$0xf]
    %v8594 = vld [vmem:[%s3 + $0x31c] sm:$0xf]
    %v8595 = vld [vmem:[%s3 + $0x320] sm:$0xf]
    %v8596 = vld [vmem:[%s3 + $0x324] sm:$0xf]
    %v8597 = vld [vmem:[%s3 + $0x328] sm:$0xf]
    %v8598 = vld [vmem:[%s3 + $0x32c] sm:$0xf]
    %v8599 = vld [vmem:[%s3 + $0x330] sm:$0xf]
    %v8600 = vld [vmem:[%s3 + $0x334] sm:$0xf]
    %v8601 = vld [vmem:[%s3 + $0x338] sm:$0xf]
    %v8602 = vld [vmem:[%s3 + $0x33c] sm:$0xf]
    %v8619 = vunpack.c.l.b16 %v8587
    %v8620 = vunpack.c.l.b16 %v8588
    %v8621 = vunpack.c.l.b16 %v8589
    %v8622 = vunpack.c.l.b16 %v8590
    %v8623 = vunpack.c.l.b16 %v8591
    %v8624 = vunpack.c.l.b16 %v8592
    %v8625 = vunpack.c.l.b16 %v8593
    %v8626 = vunpack.c.l.b16 %v8594
    %v8627 = vunpack.c.l.b16 %v8595
    %v8628 = vunpack.c.l.b16 %v8596
    %v8629 = vunpack.c.l.b16 %v8597
    %v8630 = vunpack.c.l.b16 %v8598
    %v8631 = vunpack.c.l.b16 %v8599
    %v8632 = vunpack.c.l.b16 %v8600
    %v8633 = vunpack.c.l.b16 %v8601
    %v8634 = vunpack.c.l.b16 %v8602
    %v8635 = vpack.c.b16 %v8620, %v8619
    %v8636 = vpack.c.b16 %v8622, %v8621
    %v8637 = vpack.c.b16 %v8624, %v8623
    %v8638 = vpack.c.b16 %v8626, %v8625
    %v8639 = vpack.c.b16 %v8628, %v8627
    %v8640 = vpack.c.b16 %v8630, %v8629
    %v8641 = vpack.c.b16 %v8632, %v8631
    %v8642 = vpack.c.b16 %v8634, %v8633
    %8651 = vmatprep.subr.bf16.mxu0 0
    %8652 = vmatpush1.bf16.msra.mxu0 %v8635
    %8653 = vmatprep.subr.bf16.mxu0 0
    %8654 = vmatpush1.bf16.msra.mxu0 %v8636
    %8655 = vmatprep.subr.bf16.mxu0 0
    %8656 = vmatpush1.bf16.msra.mxu0 %v8637
    %8657 = vmatprep.subr.bf16.mxu0 0
    %8658 = vmatpush1.bf16.msra.mxu0 %v8638
    %8659 = vmatprep.subr.bf16.mxu0 0
    %8660 = vmatpush1.bf16.msra.mxu0 %v8639
    %8661 = vmatprep.subr.bf16.mxu0 0
    %8662 = vmatpush1.bf16.msra.mxu0 %v8640
    %8663 = vmatprep.subr.bf16.mxu0 0
    %8664 = vmatpush1.bf16.msra.mxu0 %v8641
    %8665 = vmatprep.subr.bf16.mxu0 0
    %8666 = vmatpush1.bf16.msra.mxu0 %v8642
    %8667 = vmatprep.subr.bf16.mxu0 0
    %8668 = vmatpush1.bf16.msra.mxu0 0
    %8669 = vmatprep.subr.bf16.mxu0 0
    %8670 = vmatpush1.bf16.msra.mxu0 0
    %8671 = vmatprep.subr.bf16.mxu0 0
    %8672 = vmatpush1.bf16.msra.mxu0 0
    %8673 = vmatprep.subr.bf16.mxu0 0
    %8674 = vmatpush1.bf16.msra.mxu0 0
    %8675 = vmatprep.subr.bf16.mxu0 0
    %8676 = vmatpush1.bf16.msra.mxu0 0
    %8677 = vmatprep.subr.bf16.mxu0 0
    %8678 = vmatpush1.bf16.msra.mxu0 0
    %8679 = vmatprep.subr.bf16.mxu0 0
    %8680 = vmatpush1.bf16.msra.mxu0 0
    %8681 = vmatprep.subr.bf16.mxu0 0
    %8682 = vmatpush1.bf16.msra.mxu0 0
    %8683 = vmatprep.mubr.bf16.mxu0 0
    %8684 = vmatmul.mubr.bf16.gmra.mrb[0].mxu0 %v8586
    %v8685 = vpop.f32.mrb[0].mxu0
    %v8686 = vadd.f32 0.0, %v8685
    %v8687 = vpop.f32.mrb[0].mxu0
    %v8688 = vpop.f32.mrb[0].mxu0
    %v8689 = vpop.f32.mrb[0].mxu0
    %8690 = vdwg.mxu0
    %v8691 = vadd.f32 %v8585, %v8686
    %v8692 = vld [vmem:[#allocation2 + $0xc] sm:$0x2]
    %v8693 = vld [vmem:[%s3 + $0x340] sm:$0xf]
    %v8694 = vld [vmem:[%s3 + $0x344] sm:$0xf]
    %v8695 = vld [vmem:[%s3 + $0x348] sm:$0xf]
    %v8696 = vld [vmem:[%s3 + $0x34c] sm:$0xf]
    %v8697 = vld [vmem:[%s3 + $0x350] sm:$0xf]
    %v8698 = vld [vmem:[%s3 + $0x354] sm:$0xf]
    %v8699 = vld [vmem:[%s3 + $0x358] sm:$0xf]
    %v8700 = vld [vmem:[%s3 + $0x35c] sm:$0xf]
    %v8701 = vld [vmem:[%s3 + $0x360] sm:$0xf]
    %v8702 = vld [vmem:[%s3 + $0x364] sm:$0xf]
    %v8703 = vld [vmem:[%s3 + $0x368] sm:$0xf]
    %v8704 = vld [vmem:[%s3 + $0x36c] sm:$0xf]
    %v8705 = vld [vmem:[%s3 + $0x370] sm:$0xf]
    %v8706 = vld [vmem:[%s3 + $0x374] sm:$0xf]
    %v8707 = vld [vmem:[%s3 + $0x378] sm:$0xf]
    %v8708 = vld [vmem:[%s3 + $0x37c] sm:$0xf]
    %v8710 = vunpack.c.l.b16 %v8692
    %v8711 = vpack.c.b16 %v8710, %v8710
    %v8712 = vrot.slane %v8711, 1
    %v8730 = vunpack.c.l.b16 %v8693
    %v8731 = vunpack.c.l.b16 %v8694
    %v8732 = vunpack.c.l.b16 %v8695
    %v8733 = vunpack.c.l.b16 %v8696
    %v8734 = vunpack.c.l.b16 %v8697
    %v8735 = vunpack.c.l.b16 %v8698
    %v8736 = vunpack.c.l.b16 %v8699
    %v8737 = vunpack.c.l.b16 %v8700
    %v8738 = vunpack.c.l.b16 %v8701
    %v8739 = vunpack.c.l.b16 %v8702
    %v8740 = vunpack.c.l.b16 %v8703
    %v8741 = vunpack.c.l.b16 %v8704
    %v8742 = vunpack.c.l.b16 %v8705
    %v8743 = vunpack.c.l.b16 %v8706
    %v8744 = vunpack.c.l.b16 %v8707
    %v8745 = vunpack.c.l.b16 %v8708
    %v8746 = vpack.c.b16 %v8731, %v8730
    %v8747 = vpack.c.b16 %v8733, %v8732
    %v8748 = vpack.c.b16 %v8735, %v8734
    %v8749 = vpack.c.b16 %v8737, %v8736
    %v8750 = vpack.c.b16 %v8739, %v8738
    %v8751 = vpack.c.b16 %v8741, %v8740
    %v8752 = vpack.c.b16 %v8743, %v8742
    %v8753 = vpack.c.b16 %v8745, %v8744
    %8762 = vmatprep.subr.bf16.mxu0 0
    %8763 = vmatpush1.bf16.msra.mxu0 %v8746
    %8764 = vmatprep.subr.bf16.mxu0 0
    %8765 = vmatpush1.bf16.msra.mxu0 %v8747
    %8766 = vmatprep.subr.bf16.mxu0 0
    %8767 = vmatpush1.bf16.msra.mxu0 %v8748
    %8768 = vmatprep.subr.bf16.mxu0 0
    %8769 = vmatpush1.bf16.msra.mxu0 %v8749
    %8770 = vmatprep.subr.bf16.mxu0 0
    %8771 = vmatpush1.bf16.msra.mxu0 %v8750
    %8772 = vmatprep.subr.bf16.mxu0 0
    %8773 = vmatpush1.bf16.msra.mxu0 %v8751
    %8774 = vmatprep.subr.bf16.mxu0 0
    %8775 = vmatpush1.bf16.msra.mxu0 %v8752
    %8776 = vmatprep.subr.bf16.mxu0 0
    %8777 = vmatpush1.bf16.msra.mxu0 %v8753
    %8778 = vmatprep.subr.bf16.mxu0 0
    %8779 = vmatpush1.bf16.msra.mxu0 0
    %8780 = vmatprep.subr.bf16.mxu0 0
    %8781 = vmatpush1.bf16.msra.mxu0 0
    %8782 = vmatprep.subr.bf16.mxu0 0
    %8783 = vmatpush1.bf16.msra.mxu0 0
    %8784 = vmatprep.subr.bf16.mxu0 0
    %8785 = vmatpush1.bf16.msra.mxu0 0
    %8786 = vmatprep.subr.bf16.mxu0 0
    %8787 = vmatpush1.bf16.msra.mxu0 0
    %8788 = vmatprep.subr.bf16.mxu0 0
    %8789 = vmatpush1.bf16.msra.mxu0 0
    %8790 = vmatprep.subr.bf16.mxu0 0
    %8791 = vmatpush1.bf16.msra.mxu0 0
    %8792 = vmatprep.subr.bf16.mxu0 0
    %8793 = vmatpush1.bf16.msra.mxu0 0
    %8794 = vmatprep.mubr.bf16.mxu0 0
    %8795 = vmatmul.mubr.bf16.gmra.mrb[0].mxu0 %v8712
    %v8796 = vpop.f32.mrb[0].mxu0
    %v8797 = vadd.f32 0.0, %v8796
    %v8798 = vpop.f32.mrb[0].mxu0
    %v8799 = vpop.f32.mrb[0].mxu0
    %v8800 = vpop.f32.mrb[0].mxu0
    %8801 = vdwg.mxu0
    %v8802 = vadd.f32 %v8691, %v8797
    %v8803 = vld [vmem:[#allocation2 + $0xc] sm:$0x4]
    %v8804 = vld [vmem:[%s3 + $0x380] sm:$0xf]
    %v8805 = vld [vmem:[%s3 + $0x384] sm:$0xf]
    %v8806 = vld [vmem:[%s3 + $0x388] sm:$0xf]
    %v8807 = vld [vmem:[%s3 + $0x38c] sm:$0xf]
    %v8808 = vld [vmem:[%s3 + $0x390] sm:$0xf]
    %v8809 = vld [vmem:[%s3 + $0x394] sm:$0xf]
    %v8810 = vld [vmem:[%s3 + $0x398] sm:$0xf]
    %v8811 = vld [vmem:[%s3 + $0x39c] sm:$0xf]
    %v8812 = vld [vmem:[%s3 + $0x3a0] sm:$0xf]
    %v8813 = vld [vmem:[%s3 + $0x3a4] sm:$0xf]
    %v8814 = vld [vmem:[%s3 + $0x3a8] sm:$0xf]
    %v8815 = vld [vmem:[%s3 + $0x3ac] sm:$0xf]
    %v8816 = vld [vmem:[%s3 + $0x3b0] sm:$0xf]
    %v8817 = vld [vmem:[%s3 + $0x3b4] sm:$0xf]
    %v8818 = vld [vmem:[%s3 + $0x3b8] sm:$0xf]
    %v8819 = vld [vmem:[%s3 + $0x3bc] sm:$0xf]
    %v8821 = vunpack.c.l.b16 %v8803
    %v8822 = vpack.c.b16 %v8821, %v8821
    %v8823 = vrot.slane %v8822, 2
    %v8841 = vunpack.c.l.b16 %v8804
    %v8842 = vunpack.c.l.b16 %v8805
    %v8843 = vunpack.c.l.b16 %v8806
    %v8844 = vunpack.c.l.b16 %v8807
    %v8845 = vunpack.c.l.b16 %v8808
    %v8846 = vunpack.c.l.b16 %v8809
    %v8847 = vunpack.c.l.b16 %v8810
    %v8848 = vunpack.c.l.b16 %v8811
    %v8849 = vunpack.c.l.b16 %v8812
    %v8850 = vunpack.c.l.b16 %v8813
    %v8851 = vunpack.c.l.b16 %v8814
    %v8852 = vunpack.c.l.b16 %v8815
    %v8853 = vunpack.c.l.b16 %v8816
    %v8854 = vunpack.c.l.b16 %v8817
    %v8855 = vunpack.c.l.b16 %v8818
    %v8856 = vunpack.c.l.b16 %v8819
    %v8857 = vpack.c.b16 %v8842, %v8841
    %v8858 = vpack.c.b16 %v8844, %v8843
    %v8859 = vpack.c.b16 %v8846, %v8845
    %v8860 = vpack.c.b16 %v8848, %v8847
    %v8861 = vpack.c.b16 %v8850, %v8849
    %v8862 = vpack.c.b16 %v8852, %v8851
    %v8863 = vpack.c.b16 %v8854, %v8853
    %v8864 = vpack.c.b16 %v8856, %v8855
    %8873 = vmatprep.subr.bf16.mxu0 0
    %8874 = vmatpush1.bf16.msra.mxu0 %v8857
    %8875 = vmatprep.subr.bf16.mxu0 0
    %8876 = vmatpush1.bf16.msra.mxu0 %v8858
    %8877 = vmatprep.subr.bf16.mxu0 0
    %8878 = vmatpush1.bf16.msra.mxu0 %v8859
    %8879 = vmatprep.subr.bf16.mxu0 0
    %8880 = vmatpush1.bf16.msra.mxu0 %v8860
    %8881 = vmatprep.subr.bf16.mxu0 0
    %8882 = vmatpush1.bf16.msra.mxu0 %v8861
    %8883 = vmatprep.subr.bf16.mxu0 0
    %8884 = vmatpush1.bf16.msra.mxu0 %v8862
    %8885 = vmatprep.subr.bf16.mxu0 0
    %8886 = vmatpush1.bf16.msra.mxu0 %v8863
    %8887 = vmatprep.subr.bf16.mxu0 0
    %8888 = vmatpush1.bf16.msra.mxu0 %v8864
    %8889 = vmatprep.subr.bf16.mxu0 0
    %8890 = vmatpush1.bf16.msra.mxu0 0
    %8891 = vmatprep.subr.bf16.mxu0 0
    %8892 = vmatpush1.bf16.msra.mxu0 0
    %8893 = vmatprep.subr.bf16.mxu0 0
    %8894 = vmatpush1.bf16.msra.mxu0 0
    %8895 = vmatprep.subr.bf16.mxu0 0
    %8896 = vmatpush1.bf16.msra.mxu0 0
    %8897 = vmatprep.subr.bf16.mxu0 0
    %8898 = vmatpush1.bf16.msra.mxu0 0
    %8899 = vmatprep.subr.bf16.mxu0 0
    %8900 = vmatpush1.bf16.msra.mxu0 0
    %8901 = vmatprep.subr.bf16.mxu0 0
    %8902 = vmatpush1.bf16.msra.mxu0 0
    %8903 = vmatprep.subr.bf16.mxu0 0
    %8904 = vmatpush1.bf16.msra.mxu0 0
    %8905 = vmatprep.mubr.bf16.mxu0 0
    %8906 = vmatmul.mubr.bf16.gmra.mrb[0].mxu0 %v8823
    %v8907 = vpop.f32.mrb[0].mxu0
    %v8908 = vadd.f32 0.0, %v8907
    %v8909 = vpop.f32.mrb[0].mxu0
    %v8910 = vpop.f32.mrb[0].mxu0
    %v8911 = vpop.f32.mrb[0].mxu0
    %8912 = vdwg.mxu0
    %v8913 = vadd.f32 %v8802, %v8908
    %v8914 = vld [vmem:[#allocation2 + $0xc] sm:$0x8]
    %v8915 = vld [vmem:[%s3 + $0x3c0] sm:$0xf]
    %v8916 = vld [vmem:[%s3 + $0x3c4] sm:$0xf]
    %v8917 = vld [vmem:[%s3 + $0x3c8] sm:$0xf]
    %v8918 = vld [vmem:[%s3 + $0x3cc] sm:$0xf]
    %v8919 = vld [vmem:[%s3 + $0x3d0] sm:$0xf]
    %v8920 = vld [vmem:[%s3 + $0x3d4] sm:$0xf]
    %v8921 = vld [vmem:[%s3 + $0x3d8] sm:$0xf]
    %v8922 = vld [vmem:[%s3 + $0x3dc] sm:$0xf]
    %v8923 = vld [vmem:[%s3 + $0x3e0] sm:$0xf]
    %v8924 = vld [vmem:[%s3 + $0x3e4] sm:$0xf]
    %v8925 = vld [vmem:[%s3 + $0x3e8] sm:$0xf]
    %v8926 = vld [vmem:[%s3 + $0x3ec] sm:$0xf]
    %v8927 = vld [vmem:[%s3 + $0x3f0] sm:$0xf]
    %v8928 = vld [vmem:[%s3 + $0x3f4] sm:$0xf]
    %v8929 = vld [vmem:[%s3 + $0x3f8] sm:$0xf]
    %v8930 = vld [vmem:[%s3 + $0x3fc] sm:$0xf]
    %v8932 = vunpack.c.l.b16 %v8914
    %v8933 = vpack.c.b16 %v8932, %v8932
    %v8934 = vrot.slane %v8933, 3
    %v8952 = vunpack.c.l.b16 %v8915
    %v8953 = vunpack.c.l.b16 %v8916
    %v8954 = vunpack.c.l.b16 %v8917
    %v8955 = vunpack.c.l.b16 %v8918
    %v8956 = vunpack.c.l.b16 %v8919
    %v8957 = vunpack.c.l.b16 %v8920
    %v8958 = vunpack.c.l.b16 %v8921
    %v8959 = vunpack.c.l.b16 %v8922
    %v8960 = vunpack.c.l.b16 %v8923
    %v8961 = vunpack.c.l.b16 %v8924
    %v8962 = vunpack.c.l.b16 %v8925
    %v8963 = vunpack.c.l.b16 %v8926
    %v8964 = vunpack.c.l.b16 %v8927
    %v8965 = vunpack.c.l.b16 %v8928
    %v8966 = vunpack.c.l.b16 %v8929
    %v8967 = vunpack.c.l.b16 %v8930
    %v8968 = vpack.c.b16 %v8953, %v8952
    %v8969 = vpack.c.b16 %v8955, %v8954
    %v8970 = vpack.c.b16 %v8957, %v8956
    %v8971 = vpack.c.b16 %v8959, %v8958
    %v8972 = vpack.c.b16 %v8961, %v8960
    %v8973 = vpack.c.b16 %v8963, %v8962
    %v8974 = vpack.c.b16 %v8965, %v8964
    %v8975 = vpack.c.b16 %v8967, %v8966
    %8984 = vmatprep.subr.bf16.mxu0 0
    %8985 = vmatpush1.bf16.msra.mxu0 %v8968
    %8986 = vmatprep.subr.bf16.mxu0 0
    %8987 = vmatpush1.bf16.msra.mxu0 %v8969
    %8988 = vmatprep.subr.bf16.mxu0 0
    %8989 = vmatpush1.bf16.msra.mxu0 %v8970
    %8990 = vmatprep.subr.bf16.mxu0 0
    %8991 = vmatpush1.bf16.msra.mxu0 %v8971
    %8992 = vmatprep.subr.bf16.mxu0 0
    %8993 = vmatpush1.bf16.msra.mxu0 %v8972
    %8994 = vmatprep.subr.bf16.mxu0 0
    %8995 = vmatpush1.bf16.msra.mxu0 %v8973
    %8996 = vmatprep.subr.bf16.mxu0 0
    %8997 = vmatpush1.bf16.msra.mxu0 %v8974
    %8998 = vmatprep.subr.bf16.mxu0 0
    %8999 = vmatpush1.bf16.msra.mxu0 %v8975
    %9000 = vmatprep.subr.bf16.mxu0 0
    %9001 = vmatpush1.bf16.msra.mxu0 0
    %9002 = vmatprep.subr.bf16.mxu0 0
    %9003 = vmatpush1.bf16.msra.mxu0 0
    %9004 = vmatprep.subr.bf16.mxu0 0
    %9005 = vmatpush1.bf16.msra.mxu0 0
    %9006 = vmatprep.subr.bf16.mxu0 0
    %9007 = vmatpush1.bf16.msra.mxu0 0
    %9008 = vmatprep.subr.bf16.mxu0 0
    %9009 = vmatpush1.bf16.msra.mxu0 0
    %9010 = vmatprep.subr.bf16.mxu0 0
    %9011 = vmatpush1.bf16.msra.mxu0 0
    %9012 = vmatprep.subr.bf16.mxu0 0
    %9013 = vmatpush1.bf16.msra.mxu0 0
    %9014 = vmatprep.subr.bf16.mxu0 0
    %9015 = vmatpush1.bf16.msra.mxu0 0
    %9016 = vmatprep.mubr.bf16.mxu0 0
    %9017 = vmatmul.mubr.bf16.gmra.mrb[0].mxu0 %v8934
    %v9018 = vpop.f32.mrb[0].mxu0
    %v9019 = vadd.f32 0.0, %v9018
    %v9020 = vpop.f32.mrb[0].mxu0
    %v9021 = vpop.f32.mrb[0].mxu0
    %v9022 = vpop.f32.mrb[0].mxu0
    %9023 = vdwg.mxu0
    %v9024 = vadd.f32 %v8913, %v9019
    %v9025 = vld [vmem:[#allocation2 + $0x10] sm:$0x1]
    %v9026 = vld [vmem:[%s3 + $0x400] sm:$0xf]
    %v9027 = vld [vmem:[%s3 + $0x404] sm:$0xf]
    %v9028 = vld [vmem:[%s3 + $0x408] sm:$0xf]
    %v9029 = vld [vmem:[%s3 + $0x40c] sm:$0xf]
    %v9030 = vld [vmem:[%s3 + $0x410] sm:$0xf]
    %v9031 = vld [vmem:[%s3 + $0x414] sm:$0xf]
    %v9032 = vld [vmem:[%s3 + $0x418] sm:$0xf]
    %v9033 = vld [vmem:[%s3 + $0x41c] sm:$0xf]
    %v9034 = vld [vmem:[%s3 + $0x420] sm:$0xf]
    %v9035 = vld [vmem:[%s3 + $0x424] sm:$0xf]
    %v9036 = vld [vmem:[%s3 + $0x428] sm:$0xf]
    %v9037 = vld [vmem:[%s3 + $0x42c] sm:$0xf]
    %v9038 = vld [vmem:[%s3 + $0x430] sm:$0xf]
    %v9039 = vld [vmem:[%s3 + $0x434] sm:$0xf]
    %v9040 = vld [vmem:[%s3 + $0x438] sm:$0xf]
    %v9041 = vld [vmem:[%s3 + $0x43c] sm:$0xf]
    %v9058 = vunpack.c.l.b16 %v9026
    %v9059 = vunpack.c.l.b16 %v9027
    %v9060 = vunpack.c.l.b16 %v9028
    %v9061 = vunpack.c.l.b16 %v9029
    %v9062 = vunpack.c.l.b16 %v9030
    %v9063 = vunpack.c.l.b16 %v9031
    %v9064 = vunpack.c.l.b16 %v9032
    %v9065 = vunpack.c.l.b16 %v9033
    %v9066 = vunpack.c.l.b16 %v9034
    %v9067 = vunpack.c.l.b16 %v9035
    %v9068 = vunpack.c.l.b16 %v9036
    %v9069 = vunpack.c.l.b16 %v9037
    %v9070 = vunpack.c.l.b16 %v9038
    %v9071 = vunpack.c.l.b16 %v9039
    %v9072 = vunpack.c.l.b16 %v9040
    %v9073 = vunpack.c.l.b16 %v9041
    %v9074 = vpack.c.b16 %v9059, %v9058
    %v9075 = vpack.c.b16 %v9061, %v9060
    %v9076 = vpack.c.b16 %v9063, %v9062
    %v9077 = vpack.c.b16 %v9065, %v9064
    %v9078 = vpack.c.b16 %v9067, %v9066
    %v9079 = vpack.c.b16 %v9069, %v9068
    %v9080 = vpack.c.b16 %v9071, %v9070
    %v9081 = vpack.c.b16 %v9073, %v9072
    %9090 = vmatprep.subr.bf16.mxu0 0
    %9091 = vmatpush1.bf16.msra.mxu0 %v9074
    %9092 = vmatprep.subr.bf16.mxu0 0
    %9093 = vmatpush1.bf16.msra.mxu0 %v9075
    %9094 = vmatprep.subr.bf16.mxu0 0
    %9095 = vmatpush1.bf16.msra.mxu0 %v9076
    %9096 = vmatprep.subr.bf16.mxu0 0
    %9097 = vmatpush1.bf16.msra.mxu0 %v9077
    %9098 = vmatprep.subr.bf16.mxu0 0
    %9099 = vmatpush1.bf16.msra.mxu0 %v9078
    %9100 = vmatprep.subr.bf16.mxu0 0
    %9101 = vmatpush1.bf16.msra.mxu0 %v9079
    %9102 = vmatprep.subr.bf16.mxu0 0
    %9103 = vmatpush1.bf16.msra.mxu0 %v9080
    %9104 = vmatprep.subr.bf16.mxu0 0
    %9105 = vmatpush1.bf16.msra.mxu0 %v9081
    %9106 = vmatprep.subr.bf16.mxu0 0
    %9107 = vmatpush1.bf16.msra.mxu0 0
    %9108 = vmatprep.subr.bf16.mxu0 0
    %9109 = vmatpush1.bf16.msra.mxu0 0
    %9110 = vmatprep.subr.bf16.mxu0 0
    %9111 = vmatpush1.bf16.msra.mxu0 0
    %9112 = vmatprep.subr.bf16.mxu0 0
    %9113 = vmatpush1.bf16.msra.mxu0 0
    %9114 = vmatprep.subr.bf16.mxu0 0
    %9115 = vmatpush1.bf16.msra.mxu0 0
    %9116 = vmatprep.subr.bf16.mxu0 0
    %9117 = vmatpush1.bf16.msra.mxu0 0
    %9118 = vmatprep.subr.bf16.mxu0 0
    %9119 = vmatpush1.bf16.msra.mxu0 0
    %9120 = vmatprep.subr.bf16.mxu0 0
    %9121 = vmatpush1.bf16.msra.mxu0 0
    %9122 = vmatprep.mubr.bf16.mxu0 0
    %9123 = vmatmul.mubr.bf16.gmra.mrb[0].mxu0 %v9025
    %v9124 = vpop.f32.mrb[0].mxu0
    %v9125 = vadd.f32 0.0, %v9124
    %v9126 = vpop.f32.mrb[0].mxu0
    %v9127 = vpop.f32.mrb[0].mxu0
    %v9128 = vpop.f32.mrb[0].mxu0
    %9129 = vdwg.mxu0
    %v9130 = vadd.f32 %v9024, %v9125
    %v9131 = vld [vmem:[#allocation2 + $0x10] sm:$0x2]
    %v9132 = vld [vmem:[%s3 + $0x440] sm:$0xf]
    %v9133 = vld [vmem:[%s3 + $0x444] sm:$0xf]
    %v9134 = vld [vmem:[%s3 + $0x448] sm:$0xf]
    %v9135 = vld [vmem:[%s3 + $0x44c] sm:$0xf]
    %v9136 = vld [vmem:[%s3 + $0x450] sm:$0xf]
    %v9137 = vld [vmem:[%s3 + $0x454] sm:$0xf]
    %v9138 = vld [vmem:[%s3 + $0x458] sm:$0xf]
    %v9139 = vld [vmem:[%s3 + $0x45c] sm:$0xf]
    %v9140 = vld [vmem:[%s3 + $0x460] sm:$0xf]
    %v9141 = vld [vmem:[%s3 + $0x464] sm:$0xf]
    %v9142 = vld [vmem:[%s3 + $0x468] sm:$0xf]
    %v9143 = vld [vmem:[%s3 + $0x46c] sm:$0xf]
    %v9144 = vld [vmem:[%s3 + $0x470] sm:$0xf]
    %v9145 = vld [vmem:[%s3 + $0x474] sm:$0xf]
    %v9146 = vld [vmem:[%s3 + $0x478] sm:$0xf]
    %v9147 = vld [vmem:[%s3 + $0x47c] sm:$0xf]
    %v9149 = vunpack.c.l.b16 %v9131
    %v9150 = vpack.c.b16 %v9149, %v9149
    %v9151 = vrot.slane %v9150, 1
    %v9169 = vunpack.c.l.b16 %v9132
    %v9170 = vunpack.c.l.b16 %v9133
    %v9171 = vunpack.c.l.b16 %v9134
    %v9172 = vunpack.c.l.b16 %v9135
    %v9173 = vunpack.c.l.b16 %v9136
    %v9174 = vunpack.c.l.b16 %v9137
    %v9175 = vunpack.c.l.b16 %v9138
    %v9176 = vunpack.c.l.b16 %v9139
    %v9177 = vunpack.c.l.b16 %v9140
    %v9178 = vunpack.c.l.b16 %v9141
    %v9179 = vunpack.c.l.b16 %v9142
    %v9180 = vunpack.c.l.b16 %v9143
    %v9181 = vunpack.c.l.b16 %v9144
    %v9182 = vunpack.c.l.b16 %v9145
    %v9183 = vunpack.c.l.b16 %v9146
    %v9184 = vunpack.c.l.b16 %v9147
    %v9185 = vpack.c.b16 %v9170, %v9169
    %v9186 = vpack.c.b16 %v9172, %v9171
    %v9187 = vpack.c.b16 %v9174, %v9173
    %v9188 = vpack.c.b16 %v9176, %v9175
    %v9189 = vpack.c.b16 %v9178, %v9177
    %v9190 = vpack.c.b16 %v9180, %v9179
    %v9191 = vpack.c.b16 %v9182, %v9181
    %v9192 = vpack.c.b16 %v9184, %v9183
    %9201 = vmatprep.subr.bf16.mxu0 0
    %9202 = vmatpush1.bf16.msra.mxu0 %v9185
    %9203 = vmatprep.subr.bf16.mxu0 0
    %9204 = vmatpush1.bf16.msra.mxu0 %v9186
    %9205 = vmatprep.subr.bf16.mxu0 0
    %9206 = vmatpush1.bf16.msra.mxu0 %v9187
    %9207 = vmatprep.subr.bf16.mxu0 0
    %9208 = vmatpush1.bf16.msra.mxu0 %v9188
    %9209 = vmatprep.subr.bf16.mxu0 0
    %9210 = vmatpush1.bf16.msra.mxu0 %v9189
    %9211 = vmatprep.subr.bf16.mxu0 0
    %9212 = vmatpush1.bf16.msra.mxu0 %v9190
    %9213 = vmatprep.subr.bf16.mxu0 0
    %9214 = vmatpush1.bf16.msra.mxu0 %v9191
    %9215 = vmatprep.subr.bf16.mxu0 0
    %9216 = vmatpush1.bf16.msra.mxu0 %v9192
    %9217 = vmatprep.subr.bf16.mxu0 0
    %9218 = vmatpush1.bf16.msra.mxu0 0
    %9219 = vmatprep.subr.bf16.mxu0 0
    %9220 = vmatpush1.bf16.msra.mxu0 0
    %9221 = vmatprep.subr.bf16.mxu0 0
    %9222 = vmatpush1.bf16.msra.mxu0 0
    %9223 = vmatprep.subr.bf16.mxu0 0
    %9224 = vmatpush1.bf16.msra.mxu0 0
    %9225 = vmatprep.subr.bf16.mxu0 0
    %9226 = vmatpush1.bf16.msra.mxu0 0
    %9227 = vmatprep.subr.bf16.mxu0 0
    %9228 = vmatpush1.bf16.msra.mxu0 0
    %9229 = vmatprep.subr.bf16.mxu0 0
    %9230 = vmatpush1.bf16.msra.mxu0 0
    %9231 = vmatprep.subr.bf16.mxu0 0
    %9232 = vmatpush1.bf16.msra.mxu0 0
    %9233 = vmatprep.mubr.bf16.mxu0 0
    %9234 = vmatmul.mubr.bf16.gmra.mrb[0].mxu0 %v9151
    %v9235 = vpop.f32.mrb[0].mxu0
    %v9236 = vadd.f32 0.0, %v9235
    %v9237 = vpop.f32.mrb[0].mxu0
    %v9238 = vpop.f32.mrb[0].mxu0
    %v9239 = vpop.f32.mrb[0].mxu0
    %9240 = vdwg.mxu0
    %v9241 = vadd.f32 %v9130, %v9236
    %v9242 = vld [vmem:[#allocation2 + $0x10] sm:$0x4]
    %v9243 = vld [vmem:[%s3 + $0x480] sm:$0xf]
    %v9244 = vld [vmem:[%s3 + $0x484] sm:$0xf]
    %v9245 = vld [vmem:[%s3 + $0x488] sm:$0xf]
    %v9246 = vld [vmem:[%s3 + $0x48c] sm:$0xf]
    %v9247 = vld [vmem:[%s3 + $0x490] sm:$0xf]
    %v9248 = vld [vmem:[%s3 + $0x494] sm:$0xf]
    %v9249 = vld [vmem:[%s3 + $0x498] sm:$0xf]
    %v9250 = vld [vmem:[%s3 + $0x49c] sm:$0xf]
    %v9251 = vld [vmem:[%s3 + $0x4a0] sm:$0xf]
    %v9252 = vld [vmem:[%s3 + $0x4a4] sm:$0xf]
    %v9253 = vld [vmem:[%s3 + $0x4a8] sm:$0xf]
    %v9254 = vld [vmem:[%s3 + $0x4ac] sm:$0xf]
    %v9255 = vld [vmem:[%s3 + $0x4b0] sm:$0xf]
    %v9256 = vld [vmem:[%s3 + $0x4b4] sm:$0xf]
    %v9257 = vld [vmem:[%s3 + $0x4b8] sm:$0xf]
    %v9258 = vld [vmem:[%s3 + $0x4bc] sm:$0xf]
    %v9260 = vunpack.c.l.b16 %v9242
    %v9261 = vpack.c.b16 %v9260, %v9260
    %v9262 = vrot.slane %v9261, 2
    %v9280 = vunpack.c.l.b16 %v9243
    %v9281 = vunpack.c.l.b16 %v9244
    %v9282 = vunpack.c.l.b16 %v9245
    %v9283 = vunpack.c.l.b16 %v9246
    %v9284 = vunpack.c.l.b16 %v9247
    %v9285 = vunpack.c.l.b16 %v9248
    %v9286 = vunpack.c.l.b16 %v9249
    %v9287 = vunpack.c.l.b16 %v9250
    %v9288 = vunpack.c.l.b16 %v9251
    %v9289 = vunpack.c.l.b16 %v9252
    %v9290 = vunpack.c.l.b16 %v9253
    %v9291 = vunpack.c.l.b16 %v9254
    %v9292 = vunpack.c.l.b16 %v9255
    %v9293 = vunpack.c.l.b16 %v9256
    %v9294 = vunpack.c.l.b16 %v9257
    %v9295 = vunpack.c.l.b16 %v9258
    %v9296 = vpack.c.b16 %v9281, %v9280
    %v9297 = vpack.c.b16 %v9283, %v9282
    %v9298 = vpack.c.b16 %v9285, %v9284
    %v9299 = vpack.c.b16 %v9287, %v9286
    %v9300 = vpack.c.b16 %v9289, %v9288
    %v9301 = vpack.c.b16 %v9291, %v9290
    %v9302 = vpack.c.b16 %v9293, %v9292
    %v9303 = vpack.c.b16 %v9295, %v9294
    %9312 = vmatprep.subr.bf16.mxu0 0
    %9313 = vmatpush1.bf16.msra.mxu0 %v9296
    %9314 = vmatprep.subr.bf16.mxu0 0
    %9315 = vmatpush1.bf16.msra.mxu0 %v9297
    %9316 = vmatprep.subr.bf16.mxu0 0
    %9317 = vmatpush1.bf16.msra.mxu0 %v9298
    %9318 = vmatprep.subr.bf16.mxu0 0
    %9319 = vmatpush1.bf16.msra.mxu0 %v9299
    %9320 = vmatprep.subr.bf16.mxu0 0
    %9321 = vmatpush1.bf16.msra.mxu0 %v9300
    %9322 = vmatprep.subr.bf16.mxu0 0
    %9323 = vmatpush1.bf16.msra.mxu0 %v9301
    %9324 = vmatprep.subr.bf16.mxu0 0
    %9325 = vmatpush1.bf16.msra.mxu0 %v9302
    %9326 = vmatprep.subr.bf16.mxu0 0
    %9327 = vmatpush1.bf16.msra.mxu0 %v9303
    %9328 = vmatprep.subr.bf16.mxu0 0
    %9329 = vmatpush1.bf16.msra.mxu0 0
    %9330 = vmatprep.subr.bf16.mxu0 0
    %9331 = vmatpush1.bf16.msra.mxu0 0
    %9332 = vmatprep.subr.bf16.mxu0 0
    %9333 = vmatpush1.bf16.msra.mxu0 0
    %9334 = vmatprep.subr.bf16.mxu0 0
    %9335 = vmatpush1.bf16.msra.mxu0 0
    %9336 = vmatprep.subr.bf16.mxu0 0
    %9337 = vmatpush1.bf16.msra.mxu0 0
    %9338 = vmatprep.subr.bf16.mxu0 0
    %9339 = vmatpush1.bf16.msra.mxu0 0
    %9340 = vmatprep.subr.bf16.mxu0 0
    %9341 = vmatpush1.bf16.msra.mxu0 0
    %9342 = vmatprep.subr.bf16.mxu0 0
    %9343 = vmatpush1.bf16.msra.mxu0 0
    %9344 = vmatprep.mubr.bf16.mxu0 0
    %9345 = vmatmul.mubr.bf16.gmra.mrb[0].mxu0 %v9262
    %v9346 = vpop.f32.mrb[0].mxu0
    %v9347 = vadd.f32 0.0, %v9346
    %v9348 = vpop.f32.mrb[0].mxu0
    %v9349 = vpop.f32.mrb[0].mxu0
    %v9350 = vpop.f32.mrb[0].mxu0
    %9351 = vdwg.mxu0
    %v9352 = vadd.f32 %v9241, %v9347
    %v9353 = vld [vmem:[#allocation2 + $0x10] sm:$0x8]
    %v9354 = vld [vmem:[%s3 + $0x4c0] sm:$0xf]
    %v9355 = vld [vmem:[%s3 + $0x4c4] sm:$0xf]
    %v9356 = vld [vmem:[%s3 + $0x4c8] sm:$0xf]
    %v9357 = vld [vmem:[%s3 + $0x4cc] sm:$0xf]
    %v9358 = vld [vmem:[%s3 + $0x4d0] sm:$0xf]
    %v9359 = vld [vmem:[%s3 + $0x4d4] sm:$0xf]
    %v9360 = vld [vmem:[%s3 + $0x4d8] sm:$0xf]
    %v9361 = vld [vmem:[%s3 + $0x4dc] sm:$0xf]
    %v9362 = vld [vmem:[%s3 + $0x4e0] sm:$0xf]
    %v9363 = vld [vmem:[%s3 + $0x4e4] sm:$0xf]
    %v9364 = vld [vmem:[%s3 + $0x4e8] sm:$0xf]
    %v9365 = vld [vmem:[%s3 + $0x4ec] sm:$0xf]
    %v9366 = vld [vmem:[%s3 + $0x4f0] sm:$0xf]
    %v9367 = vld [vmem:[%s3 + $0x4f4] sm:$0xf]
    %v9368 = vld [vmem:[%s3 + $0x4f8] sm:$0xf]
    %v9369 = vld [vmem:[%s3 + $0x4fc] sm:$0xf]
    %v9371 = vunpack.c.l.b16 %v9353
    %v9372 = vpack.c.b16 %v9371, %v9371
    %v9373 = vrot.slane %v9372, 3
    %v9391 = vunpack.c.l.b16 %v9354
    %v9392 = vunpack.c.l.b16 %v9355
    %v9393 = vunpack.c.l.b16 %v9356
    %v9394 = vunpack.c.l.b16 %v9357
    %v9395 = vunpack.c.l.b16 %v9358
    %v9396 = vunpack.c.l.b16 %v9359
    %v9397 = vunpack.c.l.b16 %v9360
    %v9398 = vunpack.c.l.b16 %v9361
    %v9399 = vunpack.c.l.b16 %v9362
    %v9400 = vunpack.c.l.b16 %v9363
    %v9401 = vunpack.c.l.b16 %v9364
    %v9402 = vunpack.c.l.b16 %v9365
    %v9403 = vunpack.c.l.b16 %v9366
    %v9404 = vunpack.c.l.b16 %v9367
    %v9405 = vunpack.c.l.b16 %v9368
    %v9406 = vunpack.c.l.b16 %v9369
    %v9407 = vpack.c.b16 %v9392, %v9391
    %v9408 = vpack.c.b16 %v9394, %v9393
    %v9409 = vpack.c.b16 %v9396, %v9395
    %v9410 = vpack.c.b16 %v9398, %v9397
    %v9411 = vpack.c.b16 %v9400, %v9399
    %v9412 = vpack.c.b16 %v9402, %v9401
    %v9413 = vpack.c.b16 %v9404, %v9403
    %v9414 = vpack.c.b16 %v9406, %v9405
    %9423 = vmatprep.subr.bf16.mxu0 0
    %9424 = vmatpush1.bf16.msra.mxu0 %v9407
    %9425 = vmatprep.subr.bf16.mxu0 0
    %9426 = vmatpush1.bf16.msra.mxu0 %v9408
    %9427 = vmatprep.subr.bf16.mxu0 0
    %9428 = vmatpush1.bf16.msra.mxu0 %v9409
    %9429 = vmatprep.subr.bf16.mxu0 0
    %9430 = vmatpush1.bf16.msra.mxu0 %v9410
    %9431 = vmatprep.subr.bf16.mxu0 0
    %9432 = vmatpush1.bf16.msra.mxu0 %v9411
    %9433 = vmatprep.subr.bf16.mxu0 0
    %9434 = vmatpush1.bf16.msra.mxu0 %v9412
    %9435 = vmatprep.subr.bf16.mxu0 0
    %9436 = vmatpush1.bf16.msra.mxu0 %v9413
    %9437 = vmatprep.subr.bf16.mxu0 0
    %9438 = vmatpush1.bf16.msra.mxu0 %v9414
    %9439 = vmatprep.subr.bf16.mxu0 0
    %9440 = vmatpush1.bf16.msra.mxu0 0
    %9441 = vmatprep.subr.bf16.mxu0 0
    %9442 = vmatpush1.bf16.msra.mxu0 0
    %9443 = vmatprep.subr.bf16.mxu0 0
    %9444 = vmatpush1.bf16.msra.mxu0 0
    %9445 = vmatprep.subr.bf16.mxu0 0
    %9446 = vmatpush1.bf16.msra.mxu0 0
    %9447 = vmatprep.subr.bf16.mxu0 0
    %9448 = vmatpush1.bf16.msra.mxu0 0
    %9449 = vmatprep.subr.bf16.mxu0 0
    %9450 = vmatpush1.bf16.msra.mxu0 0
    %9451 = vmatprep.subr.bf16.mxu0 0
    %9452 = vmatpush1.bf16.msra.mxu0 0
    %9453 = vmatprep.subr.bf16.mxu0 0
    %9454 = vmatpush1.bf16.msra.mxu0 0
    %9455 = vmatprep.mubr.bf16.mxu0 0
    %9456 = vmatmul.mubr.bf16.gmra.mrb[0].mxu0 %v9373
    %v9457 = vpop.f32.mrb[0].mxu0
    %v9458 = vadd.f32 0.0, %v9457
    %v9459 = vpop.f32.mrb[0].mxu0
    %v9460 = vpop.f32.mrb[0].mxu0
    %v9461 = vpop.f32.mrb[0].mxu0
    %9462 = vdwg.mxu0
    %v9463 = vadd.f32 %v9352, %v9458
    %v9464 = vld [vmem:[#allocation2 + $0x14] sm:$0x1]
    %v9465 = vld [vmem:[%s3 + $0x500] sm:$0xf]
    %v9466 = vld [vmem:[%s3 + $0x504] sm:$0xf]
    %v9467 = vld [vmem:[%s3 + $0x508] sm:$0xf]
    %v9468 = vld [vmem:[%s3 + $0x50c] sm:$0xf]
    %v9469 = vld [vmem:[%s3 + $0x510] sm:$0xf]
    %v9470 = vld [vmem:[%s3 + $0x514] sm:$0xf]
    %v9471 = vld [vmem:[%s3 + $0x518] sm:$0xf]
    %v9472 = vld [vmem:[%s3 + $0x51c] sm:$0xf]
    %v9473 = vld [vmem:[%s3 + $0x520] sm:$0xf]
    %v9474 = vld [vmem:[%s3 + $0x524] sm:$0xf]
    %v9475 = vld [vmem:[%s3 + $0x528] sm:$0xf]
    %v9476 = vld [vmem:[%s3 + $0x52c] sm:$0xf]
    %v9477 = vld [vmem:[%s3 + $0x530] sm:$0xf]
    %v9478 = vld [vmem:[%s3 + $0x534] sm:$0xf]
    %v9479 = vld [vmem:[%s3 + $0x538] sm:$0xf]
    %v9480 = vld [vmem:[%s3 + $0x53c] sm:$0xf]
    %v9497 = vunpack.c.l.b16 %v9465
    %v9498 = vunpack.c.l.b16 %v9466
    %v9499 = vunpack.c.l.b16 %v9467
    %v9500 = vunpack.c.l.b16 %v9468
    %v9501 = vunpack.c.l.b16 %v9469
    %v9502 = vunpack.c.l.b16 %v9470
    %v9503 = vunpack.c.l.b16 %v9471
    %v9504 = vunpack.c.l.b16 %v9472
    %v9505 = vunpack.c.l.b16 %v9473
    %v9506 = vunpack.c.l.b16 %v9474
    %v9507 = vunpack.c.l.b16 %v9475
    %v9508 = vunpack.c.l.b16 %v9476
    %v9509 = vunpack.c.l.b16 %v9477
    %v9510 = vunpack.c.l.b16 %v9478
    %v9511 = vunpack.c.l.b16 %v9479
    %v9512 = vunpack.c.l.b16 %v9480
    %v9513 = vpack.c.b16 %v9498, %v9497
    %v9514 = vpack.c.b16 %v9500, %v9499
    %v9515 = vpack.c.b16 %v9502, %v9501
    %v9516 = vpack.c.b16 %v9504, %v9503
    %v9517 = vpack.c.b16 %v9506, %v9505
    %v9518 = vpack.c.b16 %v9508, %v9507
    %v9519 = vpack.c.b16 %v9510, %v9509
    %v9520 = vpack.c.b16 %v9512, %v9511
    %9529 = vmatprep.subr.bf16.mxu0 0
    %9530 = vmatpush1.bf16.msra.mxu0 %v9513
    %9531 = vmatprep.subr.bf16.mxu0 0
    %9532 = vmatpush1.bf16.msra.mxu0 %v9514
    %9533 = vmatprep.subr.bf16.mxu0 0
    %9534 = vmatpush1.bf16.msra.mxu0 %v9515
    %9535 = vmatprep.subr.bf16.mxu0 0
    %9536 = vmatpush1.bf16.msra.mxu0 %v9516
    %9537 = vmatprep.subr.bf16.mxu0 0
    %9538 = vmatpush1.bf16.msra.mxu0 %v9517
    %9539 = vmatprep.subr.bf16.mxu0 0
    %9540 = vmatpush1.bf16.msra.mxu0 %v9518
    %9541 = vmatprep.subr.bf16.mxu0 0
    %9542 = vmatpush1.bf16.msra.mxu0 %v9519
    %9543 = vmatprep.subr.bf16.mxu0 0
    %9544 = vmatpush1.bf16.msra.mxu0 %v9520
    %9545 = vmatprep.subr.bf16.mxu0 0
    %9546 = vmatpush1.bf16.msra.mxu0 0
    %9547 = vmatprep.subr.bf16.mxu0 0
    %9548 = vmatpush1.bf16.msra.mxu0 0
    %9549 = vmatprep.subr.bf16.mxu0 0
    %9550 = vmatpush1.bf16.msra.mxu0 0
    %9551 = vmatprep.subr.bf16.mxu0 0
    %9552 = vmatpush1.bf16.msra.mxu0 0
    %9553 = vmatprep.subr.bf16.mxu0 0
    %9554 = vmatpush1.bf16.msra.mxu0 0
    %9555 = vmatprep.subr.bf16.mxu0 0
    %9556 = vmatpush1.bf16.msra.mxu0 0
    %9557 = vmatprep.subr.bf16.mxu0 0
    %9558 = vmatpush1.bf16.msra.mxu0 0
    %9559 = vmatprep.subr.bf16.mxu0 0
    %9560 = vmatpush1.bf16.msra.mxu0 0
    %9561 = vmatprep.mubr.bf16.mxu0 0
    %9562 = vmatmul.mubr.bf16.gmra.mrb[0].mxu0 %v9464
    %v9563 = vpop.f32.mrb[0].mxu0
    %v9564 = vadd.f32 0.0, %v9563
    %v9565 = vpop.f32.mrb[0].mxu0
    %v9566 = vpop.f32.mrb[0].mxu0
    %v9567 = vpop.f32.mrb[0].mxu0
    %9568 = vdwg.mxu0
    %v9569 = vadd.f32 %v9463, %v9564
    %v9570 = vld [vmem:[#allocation2 + $0x14] sm:$0x2]
    %v9571 = vld [vmem:[%s3 + $0x540] sm:$0xf]
    %v9572 = vld [vmem:[%s3 + $0x544] sm:$0xf]
    %v9573 = vld [vmem:[%s3 + $0x548] sm:$0xf]
    %v9574 = vld [vmem:[%s3 + $0x54c] sm:$0xf]
    %v9575 = vld [vmem:[%s3 + $0x550] sm:$0xf]
    %v9576 = vld [vmem:[%s3 + $0x554] sm:$0xf]
    %v9577 = vld [vmem:[%s3 + $0x558] sm:$0xf]
    %v9578 = vld [vmem:[%s3 + $0x55c] sm:$0xf]
    %v9579 = vld [vmem:[%s3 + $0x560] sm:$0xf]
    %v9580 = vld [vmem:[%s3 + $0x564] sm:$0xf]
    %v9581 = vld [vmem:[%s3 + $0x568] sm:$0xf]
    %v9582 = vld [vmem:[%s3 + $0x56c] sm:$0xf]
    %v9583 = vld [vmem:[%s3 + $0x570] sm:$0xf]
    %v9584 = vld [vmem:[%s3 + $0x574] sm:$0xf]
    %v9585 = vld [vmem:[%s3 + $0x578] sm:$0xf]
    %v9586 = vld [vmem:[%s3 + $0x57c] sm:$0xf]
    %v9588 = vunpack.c.l.b16 %v9570
    %v9589 = vpack.c.b16 %v9588, %v9588
    %v9590 = vrot.slane %v9589, 1
    %v9608 = vunpack.c.l.b16 %v9571
    %v9609 = vunpack.c.l.b16 %v9572
    %v9610 = vunpack.c.l.b16 %v9573
    %v9611 = vunpack.c.l.b16 %v9574
    %v9612 = vunpack.c.l.b16 %v9575
    %v9613 = vunpack.c.l.b16 %v9576
    %v9614 = vunpack.c.l.b16 %v9577
    %v9615 = vunpack.c.l.b16 %v9578
    %v9616 = vunpack.c.l.b16 %v9579
    %v9617 = vunpack.c.l.b16 %v9580
    %v9618 = vunpack.c.l.b16 %v9581
    %v9619 = vunpack.c.l.b16 %v9582
    %v9620 = vunpack.c.l.b16 %v9583
    %v9621 = vunpack.c.l.b16 %v9584
    %v9622 = vunpack.c.l.b16 %v9585
    %v9623 = vunpack.c.l.b16 %v9586
    %v9624 = vpack.c.b16 %v9609, %v9608
    %v9625 = vpack.c.b16 %v9611, %v9610
    %v9626 = vpack.c.b16 %v9613, %v9612
    %v9627 = vpack.c.b16 %v9615, %v9614
    %v9628 = vpack.c.b16 %v9617, %v9616
    %v9629 = vpack.c.b16 %v9619, %v9618
    %v9630 = vpack.c.b16 %v9621, %v9620
    %v9631 = vpack.c.b16 %v9623, %v9622
    %9640 = vmatprep.subr.bf16.mxu0 0
    %9641 = vmatpush1.bf16.msra.mxu0 %v9624
    %9642 = vmatprep.subr.bf16.mxu0 0
    %9643 = vmatpush1.bf16.msra.mxu0 %v9625
    %9644 = vmatprep.subr.bf16.mxu0 0
    %9645 = vmatpush1.bf16.msra.mxu0 %v9626
    %9646 = vmatprep.subr.bf16.mxu0 0
    %9647 = vmatpush1.bf16.msra.mxu0 %v9627
    %9648 = vmatprep.subr.bf16.mxu0 0
    %9649 = vmatpush1.bf16.msra.mxu0 %v9628
    %9650 = vmatprep.subr.bf16.mxu0 0
    %9651 = vmatpush1.bf16.msra.mxu0 %v9629
    %9652 = vmatprep.subr.bf16.mxu0 0
    %9653 = vmatpush1.bf16.msra.mxu0 %v9630
    %9654 = vmatprep.subr.bf16.mxu0 0
    %9655 = vmatpush1.bf16.msra.mxu0 %v9631
    %9656 = vmatprep.subr.bf16.mxu0 0
    %9657 = vmatpush1.bf16.msra.mxu0 0
    %9658 = vmatprep.subr.bf16.mxu0 0
    %9659 = vmatpush1.bf16.msra.mxu0 0
    %9660 = vmatprep.subr.bf16.mxu0 0
    %9661 = vmatpush1.bf16.msra.mxu0 0
    %9662 = vmatprep.subr.bf16.mxu0 0
    %9663 = vmatpush1.bf16.msra.mxu0 0
    %9664 = vmatprep.subr.bf16.mxu0 0
    %9665 = vmatpush1.bf16.msra.mxu0 0
    %9666 = vmatprep.subr.bf16.mxu0 0
    %9667 = vmatpush1.bf16.msra.mxu0 0
    %9668 = vmatprep.subr.bf16.mxu0 0
    %9669 = vmatpush1.bf16.msra.mxu0 0
    %9670 = vmatprep.subr.bf16.mxu0 0
    %9671 = vmatpush1.bf16.msra.mxu0 0
    %9672 = vmatprep.mubr.bf16.mxu0 0
    %9673 = vmatmul.mubr.bf16.gmra.mrb[0].mxu0 %v9590
    %v9674 = vpop.f32.mrb[0].mxu0
    %v9675 = vadd.f32 0.0, %v9674
    %v9676 = vpop.f32.mrb[0].mxu0
    %v9677 = vpop.f32.mrb[0].mxu0
    %v9678 = vpop.f32.mrb[0].mxu0
    %9679 = vdwg.mxu0
    %v9680 = vadd.f32 %v9569, %v9675
    %v9681 = vld [vmem:[#allocation2 + $0x14] sm:$0x4]
    %v9682 = vld [vmem:[%s3 + $0x580] sm:$0xf]
    %v9683 = vld [vmem:[%s3 + $0x584] sm:$0xf]
    %v9684 = vld [vmem:[%s3 + $0x588] sm:$0xf]
    %v9685 = vld [vmem:[%s3 + $0x58c] sm:$0xf]
    %v9686 = vld [vmem:[%s3 + $0x590] sm:$0xf]
    %v9687 = vld [vmem:[%s3 + $0x594] sm:$0xf]
    %v9688 = vld [vmem:[%s3 + $0x598] sm:$0xf]
    %v9689 = vld [vmem:[%s3 + $0x59c] sm:$0xf]
    %v9690 = vld [vmem:[%s3 + $0x5a0] sm:$0xf]
    %v9691 = vld [vmem:[%s3 + $0x5a4] sm:$0xf]
    %v9692 = vld [vmem:[%s3 + $0x5a8] sm:$0xf]
    %v9693 = vld [vmem:[%s3 + $0x5ac] sm:$0xf]
    %v9694 = vld [vmem:[%s3 + $0x5b0] sm:$0xf]
    %v9695 = vld [vmem:[%s3 + $0x5b4] sm:$0xf]
    %v9696 = vld [vmem:[%s3 + $0x5b8] sm:$0xf]
    %v9697 = vld [vmem:[%s3 + $0x5bc] sm:$0xf]
    %v9699 = vunpack.c.l.b16 %v9681
    %v9700 = vpack.c.b16 %v9699, %v9699
    %v9701 = vrot.slane %v9700, 2
    %v9719 = vunpack.c.l.b16 %v9682
    %v9720 = vunpack.c.l.b16 %v9683
    %v9721 = vunpack.c.l.b16 %v9684
    %v9722 = vunpack.c.l.b16 %v9685
    %v9723 = vunpack.c.l.b16 %v9686
    %v9724 = vunpack.c.l.b16 %v9687
    %v9725 = vunpack.c.l.b16 %v9688
    %v9726 = vunpack.c.l.b16 %v9689
    %v9727 = vunpack.c.l.b16 %v9690
    %v9728 = vunpack.c.l.b16 %v9691
    %v9729 = vunpack.c.l.b16 %v9692
    %v9730 = vunpack.c.l.b16 %v9693
    %v9731 = vunpack.c.l.b16 %v9694
    %v9732 = vunpack.c.l.b16 %v9695
    %v9733 = vunpack.c.l.b16 %v9696
    %v9734 = vunpack.c.l.b16 %v9697
    %v9735 = vpack.c.b16 %v9720, %v9719
    %v9736 = vpack.c.b16 %v9722, %v9721
    %v9737 = vpack.c.b16 %v9724, %v9723
    %v9738 = vpack.c.b16 %v9726, %v9725
    %v9739 = vpack.c.b16 %v9728, %v9727
    %v9740 = vpack.c.b16 %v9730, %v9729
    %v9741 = vpack.c.b16 %v9732, %v9731
    %v9742 = vpack.c.b16 %v9734, %v9733
    %9751 = vmatprep.subr.bf16.mxu0 0
    %9752 = vmatpush1.bf16.msra.mxu0 %v9735
    %9753 = vmatprep.subr.bf16.mxu0 0
    %9754 = vmatpush1.bf16.msra.mxu0 %v9736
    %9755 = vmatprep.subr.bf16.mxu0 0
    %9756 = vmatpush1.bf16.msra.mxu0 %v9737
    %9757 = vmatprep.subr.bf16.mxu0 0
    %9758 = vmatpush1.bf16.msra.mxu0 %v9738
    %9759 = vmatprep.subr.bf16.mxu0 0
    %9760 = vmatpush1.bf16.msra.mxu0 %v9739
    %9761 = vmatprep.subr.bf16.mxu0 0
    %9762 = vmatpush1.bf16.msra.mxu0 %v9740
    %9763 = vmatprep.subr.bf16.mxu0 0
    %9764 = vmatpush1.bf16.msra.mxu0 %v9741
    %9765 = vmatprep.subr.bf16.mxu0 0
    %9766 = vmatpush1.bf16.msra.mxu0 %v9742
    %9767 = vmatprep.subr.bf16.mxu0 0
    %9768 = vmatpush1.bf16.msra.mxu0 0
    %9769 = vmatprep.subr.bf16.mxu0 0
    %9770 = vmatpush1.bf16.msra.mxu0 0
    %9771 = vmatprep.subr.bf16.mxu0 0
    %9772 = vmatpush1.bf16.msra.mxu0 0
    %9773 = vmatprep.subr.bf16.mxu0 0
    %9774 = vmatpush1.bf16.msra.mxu0 0
    %9775 = vmatprep.subr.bf16.mxu0 0
    %9776 = vmatpush1.bf16.msra.mxu0 0
    %9777 = vmatprep.subr.bf16.mxu0 0
    %9778 = vmatpush1.bf16.msra.mxu0 0
    %9779 = vmatprep.subr.bf16.mxu0 0
    %9780 = vmatpush1.bf16.msra.mxu0 0
    %9781 = vmatprep.subr.bf16.mxu0 0
    %9782 = vmatpush1.bf16.msra.mxu0 0
    %9783 = vmatprep.mubr.bf16.mxu0 0
    %9784 = vmatmul.mubr.bf16.gmra.mrb[0].mxu0 %v9701
    %v9785 = vpop.f32.mrb[0].mxu0
    %v9786 = vadd.f32 0.0, %v9785
    %v9787 = vpop.f32.mrb[0].mxu0
    %v9788 = vpop.f32.mrb[0].mxu0
    %v9789 = vpop.f32.mrb[0].mxu0
    %9790 = vdwg.mxu0
    %v9791 = vadd.f32 %v9680, %v9786
    %v9792 = vld [vmem:[#allocation2 + $0x14] sm:$0x8]
    %v9793 = vld [vmem:[%s3 + $0x5c0] sm:$0xf]
    %v9794 = vld [vmem:[%s3 + $0x5c4] sm:$0xf]
    %v9795 = vld [vmem:[%s3 + $0x5c8] sm:$0xf]
    %v9796 = vld [vmem:[%s3 + $0x5cc] sm:$0xf]
    %v9797 = vld [vmem:[%s3 + $0x5d0] sm:$0xf]
    %v9798 = vld [vmem:[%s3 + $0x5d4] sm:$0xf]
    %v9799 = vld [vmem:[%s3 + $0x5d8] sm:$0xf]
    %v9800 = vld [vmem:[%s3 + $0x5dc] sm:$0xf]
    %v9801 = vld [vmem:[%s3 + $0x5e0] sm:$0xf]
    %v9802 = vld [vmem:[%s3 + $0x5e4] sm:$0xf]
    %v9803 = vld [vmem:[%s3 + $0x5e8] sm:$0xf]
    %v9804 = vld [vmem:[%s3 + $0x5ec] sm:$0xf]
    %v9805 = vld [vmem:[%s3 + $0x5f0] sm:$0xf]
    %v9806 = vld [vmem:[%s3 + $0x5f4] sm:$0xf]
    %v9807 = vld [vmem:[%s3 + $0x5f8] sm:$0xf]
    %v9808 = vld [vmem:[%s3 + $0x5fc] sm:$0xf]
    %v9810 = vunpack.c.l.b16 %v9792
    %v9811 = vpack.c.b16 %v9810, %v9810
    %v9812 = vrot.slane %v9811, 3
    %v9830 = vunpack.c.l.b16 %v9793
    %v9831 = vunpack.c.l.b16 %v9794
    %v9832 = vunpack.c.l.b16 %v9795
    %v9833 = vunpack.c.l.b16 %v9796
    %v9834 = vunpack.c.l.b16 %v9797
    %v9835 = vunpack.c.l.b16 %v9798
    %v9836 = vunpack.c.l.b16 %v9799
    %v9837 = vunpack.c.l.b16 %v9800
    %v9838 = vunpack.c.l.b16 %v9801
    %v9839 = vunpack.c.l.b16 %v9802
    %v9840 = vunpack.c.l.b16 %v9803
    %v9841 = vunpack.c.l.b16 %v9804
    %v9842 = vunpack.c.l.b16 %v9805
    %v9843 = vunpack.c.l.b16 %v9806
    %v9844 = vunpack.c.l.b16 %v9807
    %v9845 = vunpack.c.l.b16 %v9808
    %v9846 = vpack.c.b16 %v9831, %v9830
    %v9847 = vpack.c.b16 %v9833, %v9832
    %v9848 = vpack.c.b16 %v9835, %v9834
    %v9849 = vpack.c.b16 %v9837, %v9836
    %v9850 = vpack.c.b16 %v9839, %v9838
    %v9851 = vpack.c.b16 %v9841, %v9840
    %v9852 = vpack.c.b16 %v9843, %v9842
    %v9853 = vpack.c.b16 %v9845, %v9844
    %9862 = vmatprep.subr.bf16.mxu0 0
    %9863 = vmatpush1.bf16.msra.mxu0 %v9846
    %9864 = vmatprep.subr.bf16.mxu0 0
    %9865 = vmatpush1.bf16.msra.mxu0 %v9847
    %9866 = vmatprep.subr.bf16.mxu0 0
    %9867 = vmatpush1.bf16.msra.mxu0 %v9848
    %9868 = vmatprep.subr.bf16.mxu0 0
    %9869 = vmatpush1.bf16.msra.mxu0 %v9849
    %9870 = vmatprep.subr.bf16.mxu0 0
    %9871 = vmatpush1.bf16.msra.mxu0 %v9850
    %9872 = vmatprep.subr.bf16.mxu0 0
    %9873 = vmatpush1.bf16.msra.mxu0 %v9851
    %9874 = vmatprep.subr.bf16.mxu0 0
    %9875 = vmatpush1.bf16.msra.mxu0 %v9852
    %9876 = vmatprep.subr.bf16.mxu0 0
    %9877 = vmatpush1.bf16.msra.mxu0 %v9853
    %9878 = vmatprep.subr.bf16.mxu0 0
    %9879 = vmatpush1.bf16.msra.mxu0 0
    %9880 = vmatprep.subr.bf16.mxu0 0
    %9881 = vmatpush1.bf16.msra.mxu0 0
    %9882 = vmatprep.subr.bf16.mxu0 0
    %9883 = vmatpush1.bf16.msra.mxu0 0
    %9884 = vmatprep.subr.bf16.mxu0 0
    %9885 = vmatpush1.bf16.msra.mxu0 0
    %9886 = vmatprep.subr.bf16.mxu0 0
    %9887 = vmatpush1.bf16.msra.mxu0 0
    %9888 = vmatprep.subr.bf16.mxu0 0
    %9889 = vmatpush1.bf16.msra.mxu0 0
    %9890 = vmatprep.subr.bf16.mxu0 0
    %9891 = vmatpush1.bf16.msra.mxu0 0
    %9892 = vmatprep.subr.bf16.mxu0 0
    %9893 = vmatpush1.bf16.msra.mxu0 0
    %9894 = vmatprep.mubr.bf16.mxu0 0
    %9895 = vmatmul.mubr.bf16.gmra.mrb[0].mxu0 %v9812
    %v9896 = vpop.f32.mrb[0].mxu0
    %v9897 = vadd.f32 0.0, %v9896
    %v9898 = vpop.f32.mrb[0].mxu0
    %v9899 = vpop.f32.mrb[0].mxu0
    %v9900 = vpop.f32.mrb[0].mxu0
    %9901 = vdwg.mxu0
    %v9902 = vadd.f32 %v9791, %v9897
    %v9903 = vld [vmem:[#allocation2 + $0x18] sm:$0x1]
    %v9904 = vld [vmem:[%s3 + $0x600] sm:$0xf]
    %v9905 = vld [vmem:[%s3 + $0x604] sm:$0xf]
    %v9906 = vld [vmem:[%s3 + $0x608] sm:$0xf]
    %v9907 = vld [vmem:[%s3 + $0x60c] sm:$0xf]
    %v9908 = vld [vmem:[%s3 + $0x610] sm:$0xf]
    %v9909 = vld [vmem:[%s3 + $0x614] sm:$0xf]
    %v9910 = vld [vmem:[%s3 + $0x618] sm:$0xf]
    %v9911 = vld [vmem:[%s3 + $0x61c] sm:$0xf]
    %v9912 = vld [vmem:[%s3 + $0x620] sm:$0xf]
    %v9913 = vld [vmem:[%s3 + $0x624] sm:$0xf]
    %v9914 = vld [vmem:[%s3 + $0x628] sm:$0xf]
    %v9915 = vld [vmem:[%s3 + $0x62c] sm:$0xf]
    %v9916 = vld [vmem:[%s3 + $0x630] sm:$0xf]
    %v9917 = vld [vmem:[%s3 + $0x634] sm:$0xf]
    %v9918 = vld [vmem:[%s3 + $0x638] sm:$0xf]
    %v9919 = vld [vmem:[%s3 + $0x63c] sm:$0xf]
    %v9936 = vunpack.c.l.b16 %v9904
    %v9937 = vunpack.c.l.b16 %v9905
    %v9938 = vunpack.c.l.b16 %v9906
    %v9939 = vunpack.c.l.b16 %v9907
    %v9940 = vunpack.c.l.b16 %v9908
    %v9941 = vunpack.c.l.b16 %v9909
    %v9942 = vunpack.c.l.b16 %v9910
    %v9943 = vunpack.c.l.b16 %v9911
    %v9944 = vunpack.c.l.b16 %v9912
    %v9945 = vunpack.c.l.b16 %v9913
    %v9946 = vunpack.c.l.b16 %v9914
    %v9947 = vunpack.c.l.b16 %v9915
    %v9948 = vunpack.c.l.b16 %v9916
    %v9949 = vunpack.c.l.b16 %v9917
    %v9950 = vunpack.c.l.b16 %v9918
    %v9951 = vunpack.c.l.b16 %v9919
    %v9952 = vpack.c.b16 %v9937, %v9936
    %v9953 = vpack.c.b16 %v9939, %v9938
    %v9954 = vpack.c.b16 %v9941, %v9940
    %v9955 = vpack.c.b16 %v9943, %v9942
    %v9956 = vpack.c.b16 %v9945, %v9944
    %v9957 = vpack.c.b16 %v9947, %v9946
    %v9958 = vpack.c.b16 %v9949, %v9948
    %v9959 = vpack.c.b16 %v9951, %v9950
    %9968 = vmatprep.subr.bf16.mxu0 0
    %9969 = vmatpush1.bf16.msra.mxu0 %v9952
    %9970 = vmatprep.subr.bf16.mxu0 0
    %9971 = vmatpush1.bf16.msra.mxu0 %v9953
    %9972 = vmatprep.subr.bf16.mxu0 0
    %9973 = vmatpush1.bf16.msra.mxu0 %v9954
    %9974 = vmatprep.subr.bf16.mxu0 0
    %9975 = vmatpush1.bf16.msra.mxu0 %v9955
    %9976 = vmatprep.subr.bf16.mxu0 0
    %9977 = vmatpush1.bf16.msra.mxu0 %v9956
    %9978 = vmatprep.subr.bf16.mxu0 0
    %9979 = vmatpush1.bf16.msra.mxu0 %v9957
    %9980 = vmatprep.subr.bf16.mxu0 0
    %9981 = vmatpush1.bf16.msra.mxu0 %v9958
    %9982 = vmatprep.subr.bf16.mxu0 0
    %9983 = vmatpush1.bf16.msra.mxu0 %v9959
    %9984 = vmatprep.subr.bf16.mxu0 0
    %9985 = vmatpush1.bf16.msra.mxu0 0
    %9986 = vmatprep.subr.bf16.mxu0 0
    %9987 = vmatpush1.bf16.msra.mxu0 0
    %9988 = vmatprep.subr.bf16.mxu0 0
    %9989 = vmatpush1.bf16.msra.mxu0 0
    %9990 = vmatprep.subr.bf16.mxu0 0
    %9991 = vmatpush1.bf16.msra.mxu0 0
    %9992 = vmatprep.subr.bf16.mxu0 0
    %9993 = vmatpush1.bf16.msra.mxu0 0
    %9994 = vmatprep.subr.bf16.mxu0 0
    %9995 = vmatpush1.bf16.msra.mxu0 0
    %9996 = vmatprep.subr.bf16.mxu0 0
    %9997 = vmatpush1.bf16.msra.mxu0 0
    %9998 = vmatprep.subr.bf16.mxu0 0
    %9999 = vmatpush1.bf16.msra.mxu0 0
    %10000 = vmatprep.mubr.bf16.mxu0 0
    %10001 = vmatmul.mubr.bf16.gmra.mrb[0].mxu0 %v9903
    %v10002 = vpop.f32.mrb[0].mxu0
    %v10003 = vadd.f32 0.0, %v10002
    %v10004 = vpop.f32.mrb[0].mxu0
    %v10005 = vpop.f32.mrb[0].mxu0
    %v10006 = vpop.f32.mrb[0].mxu0
    %10007 = vdwg.mxu0
    %v10008 = vadd.f32 %v9902, %v10003
    %v10009 = vld [vmem:[%s4] sm:$0x1]
    %v10011 = vlaneseq
    %v10012 = vshrl.u32 %v10011, 7
    %v10013 = vsub.s32 0, %v10012
    %v10014 = vrot.slane %v10009, %v10013
    %v10016 = vadd.f32 %v10008, %v10014
    %v10017 = vmax.f32 %v10016, 0.0
    %v10018 = vpack.c.bf16 %v10017, %v10017
    %v10019 = vld [vmem:[%s5] sm:$0xf]
    %v10020 = vld [vmem:[%s5 + $0x4] sm:$0xf]
    %v10021 = vld [vmem:[%s5 + $0x8] sm:$0xf]
    %v10022 = vld [vmem:[%s5 + $0xc] sm:$0xf]
    %v10023 = vld [vmem:[%s5 + $0x10] sm:$0xf]
    %v10024 = vld [vmem:[%s5 + $0x14] sm:$0xf]
    %v10025 = vld [vmem:[%s5 + $0x18] sm:$0xf]
    %v10026 = vld [vmem:[%s5 + $0x1c] sm:$0xf]
    %v10027 = vld [vmem:[%s5 + $0x20] sm:$0xf]
    %v10028 = vld [vmem:[%s5 + $0x24] sm:$0xf]
    %v10029 = vld [vmem:[%s5 + $0x28] sm:$0xf]
    %v10030 = vld [vmem:[%s5 + $0x2c] sm:$0xf]
    %v10031 = vld [vmem:[%s5 + $0x30] sm:$0xf]
    %v10032 = vld [vmem:[%s5 + $0x34] sm:$0xf]
    %v10033 = vld [vmem:[%s5 + $0x38] sm:$0xf]
    %v10034 = vld [vmem:[%s5 + $0x3c] sm:$0xf]
    %v10035 = vld [vmem:[%s6] sm:$0x1]
    %v10037 = vlaneseq
    %v10038 = vshrl.u32 %v10037, 7
    %v10039 = vsub.s32 0, %v10038
    %v10040 = vrot.slane %v10035, %v10039
    %v10058 = vunpack.c.l.b16 %v10019
    %v10059 = vunpack.c.l.b16 %v10020
    %v10060 = vunpack.c.l.b16 %v10021
    %v10061 = vunpack.c.l.b16 %v10022
    %v10062 = vunpack.c.l.b16 %v10023
    %v10063 = vunpack.c.l.b16 %v10024
    %v10064 = vunpack.c.l.b16 %v10025
    %v10065 = vunpack.c.l.b16 %v10026
    %v10066 = vunpack.c.l.b16 %v10027
    %v10067 = vunpack.c.l.b16 %v10028
    %v10068 = vunpack.c.l.b16 %v10029
    %v10069 = vunpack.c.l.b16 %v10030
    %v10070 = vunpack.c.l.b16 %v10031
    %v10071 = vunpack.c.l.b16 %v10032
    %v10072 = vunpack.c.l.b16 %v10033
    %v10073 = vunpack.c.l.b16 %v10034
    %v10074 = vpack.c.b16 %v10059, %v10058
    %v10075 = vpack.c.b16 %v10061, %v10060
    %v10076 = vpack.c.b16 %v10063, %v10062
    %v10077 = vpack.c.b16 %v10065, %v10064
    %v10078 = vpack.c.b16 %v10067, %v10066
    %v10079 = vpack.c.b16 %v10069, %v10068
    %v10080 = vpack.c.b16 %v10071, %v10070
    %v10081 = vpack.c.b16 %v10073, %v10072
    %10090 = vmatprep.subr.bf16.mxu0 0
    %10091 = vmatpush1.bf16.msra.mxu0 %v10074
    %10092 = vmatprep.subr.bf16.mxu0 0
    %10093 = vmatpush1.bf16.msra.mxu0 %v10075
    %10094 = vmatprep.subr.bf16.mxu0 0
    %10095 = vmatpush1.bf16.msra.mxu0 %v10076
    %10096 = vmatprep.subr.bf16.mxu0 0
    %10097 = vmatpush1.bf16.msra.mxu0 %v10077
    %10098 = vmatprep.subr.bf16.mxu0 0
    %10099 = vmatpush1.bf16.msra.mxu0 %v10078
    %10100 = vmatprep.subr.bf16.mxu0 0
    %10101 = vmatpush1.bf16.msra.mxu0 %v10079
    %10102 = vmatprep.subr.bf16.mxu0 0
    %10103 = vmatpush1.bf16.msra.mxu0 %v10080
    %10104 = vmatprep.subr.bf16.mxu0 0
    %10105 = vmatpush1.bf16.msra.mxu0 %v10081
    %10106 = vmatprep.subr.bf16.mxu0 0
    %10107 = vmatpush1.bf16.msra.mxu0 0
    %10108 = vmatprep.subr.bf16.mxu0 0
    %10109 = vmatpush1.bf16.msra.mxu0 0
    %10110 = vmatprep.subr.bf16.mxu0 0
    %10111 = vmatpush1.bf16.msra.mxu0 0
    %10112 = vmatprep.subr.bf16.mxu0 0
    %10113 = vmatpush1.bf16.msra.mxu0 0
    %10114 = vmatprep.subr.bf16.mxu0 0
    %10115 = vmatpush1.bf16.msra.mxu0 0
    %10116 = vmatprep.subr.bf16.mxu0 0
    %10117 = vmatpush1.bf16.msra.mxu0 0
    %10118 = vmatprep.subr.bf16.mxu0 0
    %10119 = vmatpush1.bf16.msra.mxu0 0
    %10120 = vmatprep.subr.bf16.mxu0 0
    %10121 = vmatpush1.bf16.msra.mxu0 0
    %10122 = vmatprep.mubr.bf16.mxu0 0
    %10123 = vmatmul.mubr.bf16.gmra.mrb[0].mxu0 %v10018
    %v10124 = vpop.f32.mrb[0].mxu0
    %v10125 = vadd.f32 %v10040, %v10124
    %v10126 = vpop.f32.mrb[0].mxu0
    %v10127 = vpop.f32.mrb[0].mxu0
    %v10128 = vpop.f32.mrb[0].mxu0
    %10129 = vdwg.mxu0
    %v10130 = vmax.f32 %v10125, 0.0
    %v10131 = vpack.c.bf16 %v10130, %v10130
    %v10132 = vld [vmem:[%s7] sm:$0xf]
    %v10133 = vld [vmem:[%s7 + $0x4] sm:$0xf]
    %v10134 = vld [vmem:[%s7 + $0x8] sm:$0xf]
    %v10135 = vld [vmem:[%s7 + $0xc] sm:$0xf]
    %v10136 = vld [vmem:[%s7 + $0x10] sm:$0xf]
    %v10137 = vld [vmem:[%s7 + $0x14] sm:$0xf]
    %v10138 = vld [vmem:[%s7 + $0x18] sm:$0xf]
    %v10139 = vld [vmem:[%s7 + $0x1c] sm:$0xf]
    %v10140 = vld [vmem:[%s7 + $0x20] sm:$0xf]
    %v10141 = vld [vmem:[%s7 + $0x24] sm:$0xf]
    %v10142 = vld [vmem:[%s7 + $0x28] sm:$0xf]
    %v10143 = vld [vmem:[%s7 + $0x2c] sm:$0xf]
    %v10144 = vld [vmem:[%s7 + $0x30] sm:$0xf]
    %v10145 = vld [vmem:[%s7 + $0x34] sm:$0xf]
    %v10146 = vld [vmem:[%s7 + $0x38] sm:$0xf]
    %v10147 = vld [vmem:[%s7 + $0x3c] sm:$0xf]
    %v10148 = vld [vmem:[%s8] sm:$0x1]
    %v10150 = vlaneseq
    %v10151 = vshrl.u32 %v10150, 7
    %v10152 = vsub.s32 0, %v10151
    %v10153 = vrot.slane %v10148, %v10152
    %v10171 = vunpack.c.l.b16 %v10132
    %v10172 = vunpack.c.l.b16 %v10133
    %v10173 = vunpack.c.l.b16 %v10134
    %v10174 = vunpack.c.l.b16 %v10135
    %v10175 = vunpack.c.l.b16 %v10136
    %v10176 = vunpack.c.l.b16 %v10137
    %v10177 = vunpack.c.l.b16 %v10138
    %v10178 = vunpack.c.l.b16 %v10139
    %v10179 = vunpack.c.l.b16 %v10140
    %v10180 = vunpack.c.l.b16 %v10141
    %v10181 = vunpack.c.l.b16 %v10142
    %v10182 = vunpack.c.l.b16 %v10143
    %v10183 = vunpack.c.l.b16 %v10144
    %v10184 = vunpack.c.l.b16 %v10145
    %v10185 = vunpack.c.l.b16 %v10146
    %v10186 = vunpack.c.l.b16 %v10147
    %v10187 = vpack.c.b16 %v10172, %v10171
    %v10188 = vpack.c.b16 %v10174, %v10173
    %v10189 = vpack.c.b16 %v10176, %v10175
    %v10190 = vpack.c.b16 %v10178, %v10177
    %v10191 = vpack.c.b16 %v10180, %v10179
    %v10192 = vpack.c.b16 %v10182, %v10181
    %v10193 = vpack.c.b16 %v10184, %v10183
    %v10194 = vpack.c.b16 %v10186, %v10185
    %10203 = vmatprep.subr.bf16.mxu0 0
    %10204 = vmatpush1.bf16.msra.mxu0 %v10187
    %10205 = vmatprep.subr.bf16.mxu0 0
    %10206 = vmatpush1.bf16.msra.mxu0 %v10188
    %10207 = vmatprep.subr.bf16.mxu0 0
    %10208 = vmatpush1.bf16.msra.mxu0 %v10189
    %10209 = vmatprep.subr.bf16.mxu0 0
    %10210 = vmatpush1.bf16.msra.mxu0 %v10190
    %10211 = vmatprep.subr.bf16.mxu0 0
    %10212 = vmatpush1.bf16.msra.mxu0 %v10191
    %10213 = vmatprep.subr.bf16.mxu0 0
    %10214 = vmatpush1.bf16.msra.mxu0 %v10192
    %10215 = vmatprep.subr.bf16.mxu0 0
    %10216 = vmatpush1.bf16.msra.mxu0 %v10193
    %10217 = vmatprep.subr.bf16.mxu0 0
    %10218 = vmatpush1.bf16.msra.mxu0 %v10194
    %10219 = vmatprep.subr.bf16.mxu0 0
    %10220 = vmatpush1.bf16.msra.mxu0 0
    %10221 = vmatprep.subr.bf16.mxu0 0
    %10222 = vmatpush1.bf16.msra.mxu0 0
    %10223 = vmatprep.subr.bf16.mxu0 0
    %10224 = vmatpush1.bf16.msra.mxu0 0
    %10225 = vmatprep.subr.bf16.mxu0 0
    %10226 = vmatpush1.bf16.msra.mxu0 0
    %10227 = vmatprep.subr.bf16.mxu0 0
    %10228 = vmatpush1.bf16.msra.mxu0 0
    %10229 = vmatprep.subr.bf16.mxu0 0
    %10230 = vmatpush1.bf16.msra.mxu0 0
    %10231 = vmatprep.subr.bf16.mxu0 0
    %10232 = vmatpush1.bf16.msra.mxu0 0
    %10233 = vmatprep.subr.bf16.mxu0 0
    %10234 = vmatpush1.bf16.msra.mxu0 0
    %10235 = vmatprep.mubr.bf16.mxu0 0
    %10236 = vmatmul.mubr.bf16.gmra.mrb[0].mxu0 %v10131
    %v10237 = vpop.f32.mrb[0].mxu0
    %v10238 = vadd.f32 %v10153, %v10237
    %v10239 = vpop.f32.mrb[0].mxu0
    %v10240 = vpop.f32.mrb[0].mxu0
    %v10241 = vpop.f32.mrb[0].mxu0
    %10242 = vdwg.mxu0
    %10243 = vst [vmem:[#allocation3] sm:$0x3] %v10238
    // Predicated region
    $region38: #{lenet_forward.3} parent=1 // pred_check
      _
    $region39: #{lenet_forward.3} parent=1 // pred_check_branch
      %10245 = sbr.rel (0) target = $region41
    $region40: #{lenet_forward.3} parent=1 // pred_region
      %s10247 = ssub.s32 32, 32
      %10248 = vsyncadd [#allocation4], %s10247
      %s10250 = sshll.u32 [#allocation3], 4
      %s10251 = int_to_ptr.vmem [resolvable:$true] %s10250
      %10253 = dma.vmem_to_hbm [thread:$0]  %s10251, 32, %s9, [#allocation4]
    $region41: #{lenet_forward.3} parent=1 // pred_fallthru
      _
    // Predicated region
    $region42: #{lenet_forward.3} parent=1 // pred_check
      _
    $region43: #{lenet_forward.3} parent=1 // pred_check_branch
      %10255 = sbr.rel (0) target = $region45
    $region44: #{lenet_forward.3} parent=1 // pred_region
      %10256 = dma.done [#allocation4], 32
    $region45: #{lenet_forward.3} parent=1 // pred_fallthru
      _
    %10257 = vsyncpa [#allocation4], 1

</llo_original>
